<compile_context>
chip_gen: v5e
topology: v5e:2x2
jax: 0.10.0
libtpu: 0.0.40
codegen_flags: <defaults>
</compile_context>

<pallas_src>
import jax
import jax.numpy as jnp
from jax import lax
from jax.experimental import pallas as pl
from jax.experimental.pallas import tpu as pltpu


def uncertainty_kernel(x_ref, out_ref, pad_ref, len_ref,
                       w1t_ref, w2_ref, fcwt_ref, fcb_ref,
                       wih_f_ref, whh_f_ref, wih_b_ref, gru_b_ref,
                       logsigma_ref, attn_ref):
    BT, T, D = x_ref.shape
    H3 = wih_f_ref.shape[1]
    H = H3 // 3

    x3 = x_ref[...]                         # (BT, T, D)
    out3 = out_ref[...]                     # (BT, T, D)  (batch-major, no host transpose)
    pad = pad_ref[...]                      # (BT, T) float, 1.0 = pad
    len_i = len_ref[...]                    # (BT, 1) int32 sequence lengths

    # ---------------- self-attention pooling (n_head = 1) -----------------
    x2 = x3.reshape(BT * T, D)
    h2 = jnp.tanh(jnp.dot(x2, w1t_ref[...],
                          preferred_element_type=jnp.float32))    # one flat MXU gemm
    h3 = h2.reshape(BT, T, -1)                                    # (BT, T, d_h)
    logits = jnp.sum(h3 * w2_ref[...][None, :, :], axis=-1)       # (BT, T), lane-dense
    # finite mask constant (robust to an all-padded row, unlike -inf)
    logits = jnp.where(pad > 0.5, -1e30, logits)
    m = jnp.max(logits, axis=1, keepdims=True)                    # (BT, 1)
    e = jnp.exp(logits - m)                                       # pads underflow to 0
    denom = jnp.sum(e, axis=1, keepdims=True)
    attn = e * pl.reciprocal(denom, approx=False)                 # exact softmax over T
    attn_ref[...] = attn                                          # lane-dense (BT, T) store

    residual = jnp.sum(attn[:, :, None] * x3, axis=1)             # (BT, D)
    fc_out = jnp.dot(residual, fcwt_ref[...],
                     preferred_element_type=jnp.float32) + fcb_ref[...]  # (BT, d_out)

    # GRU biases, packed row-wise: [bih_f ; bhh_f ; bih_b ; bhh_b]
    gb = gru_b_ref[...]                                           # (4, 3H)
    bih_f, bhh_f = gb[0:1, :], gb[1:2, :]
    bih_b, bhh_b = gb[2:3, :], gb[3:4, :]

    # -------- backward GRU direction: gather-before-gemm at t = len-1 --------
    # The gathered step is the FIRST reverse step (h_prev = 0), so whh_b drops
    # out entirely; pick the row first, then one (BT, D) x (D, 3H) gemm.
    t_ids = lax.broadcasted_iota(jnp.int32, (BT, T), 1)
    sel = (t_ids == (len_i - 1)).astype(jnp.float32)              # one-hot at t = len-1
    x_last = jnp.sum(sel[:, :, None] * out3, axis=1)              # (BT, D)
    gi_b = jnp.dot(x_last, wih_b_ref[...],
                   preferred_element_type=jnp.float32) + bih_b    # (BT, 3H)
    r_b = jax.nn.sigmoid(gi_b[:, :H] + bhh_b[:, :H])
    z_b = jax.nn.sigmoid(gi_b[:, H:2 * H] + bhh_b[:, H:2 * H])
    n_b = jnp.tanh(gi_b[:, 2 * H:] + r_b * bhh_b[:, 2 * H:])
    h_b = (1.0 - z_b) * n_b                                       # h_prev = 0

    # -------- forward GRU direction: hoisted input projection + recurrence ---
    gi_f = (jnp.dot(out3.reshape(BT * T, D), wih_f_ref[...],
                    preferred_element_type=jnp.float32)
            + bih_f).reshape(BT, T, H3)                           # (BT, T, 3H)
    whh_f = whh_f_ref[...]                                        # loop-invariant loads
    h_f = jnp.zeros((BT, H), jnp.float32)
    # Statically unrolled (T is small & fixed).  Lengths outside [1, T] would
    # silently yield h_b = 0 / full-T h_f; the driver guarantees 1 <= len <= T.
    # TODO(synk): for large H, keep whh_f MXU-resident via pltpu.matmul_push_rhs.
    for t in range(T):
        gi_t = gi_f[:, t, :]                                      # (BT, 3H), static slice
        gh = jnp.dot(h_f, whh_f, preferred_element_type=jnp.float32) + bhh_f
        r = jax.nn.sigmoid(gi_t[:, :H] + gh[:, :H])
        z = jax.nn.sigmoid(gi_t[:, H:2 * H] + gh[:, H:2 * H])
        n = jnp.tanh(gi_t[:, 2 * H:] + r * gh[:, 2 * H:])
        h_new = (1.0 - z) * n + z * h_f
        h_f = jnp.where(len_i > t, h_new, h_f)                    # freeze past length

    logsigma_ref[...] = fc_out + jnp.concatenate([h_f, h_b], axis=-1)


def _num_tensorcores():
    """Best-effort TensorCore count (1 on v5e/v6e, 2 on v7x)."""
    try:
        return max(1, int(getattr(jax.devices()[0], "num_cores", 1)))
    except Exception:
        return 1


def uncertainty_module_text(out, x, pad_mask, lengths, params, *, block_b=None):
    """out, x: (B, T, d_in) f32; pad_mask: (B, T) bool (True = pad); lengths: (B,) int."""
    B, T, D = x.shape
    d_h = params['w1t'].shape[1]
    d_out = params['fcwt'].shape[1]
    H3 = params['wih_f'].shape[1]

    if block_b is None:
        # grid=(1,) on single-TC chips (v5e/v6e); split the batch across both
        # TensorCores on v7x so the serial GRU chain halves in wall-clock.
        n_tc = _num_tensorcores()
        block_b = B // n_tc if (1 < n_tc <= B and B % n_tc == 0) else B
    if block_b < B and block_b % 8 != 0:      # keep 2-D blocks sublane-aligned
        block_b = B
    assert B % block_b == 0, "batch must be divisible by the batch tile"
    nb = B // block_b

    pad_f = pad_mask.astype(jnp.float32)                          # (B, T)
    lens2 = lengths.astype(jnp.int32).reshape(B, 1)               # (B, 1) -> VMEM block
    gru_bias = jnp.concatenate([params['bih_f'], params['bhh_f'],
                                params['bih_b'], params['bhh_b']], axis=0)  # (4, 3H)

    tile_x = lambda b: (b, 0, 0)
    tile_2d = lambda b: (b, 0)
    whole = lambda b: (0, 0)

    logsigma, attn2 = pl.pallas_call(
        uncertainty_kernel,
        grid=(nb,),
        in_specs=[
            pl.BlockSpec((block_b, T, D), tile_x),     # x
            pl.BlockSpec((block_b, T, D), tile_x),     # out (batch-major, same spec)
            pl.BlockSpec((block_b, T), tile_2d),       # pad mask (float)
            pl.BlockSpec((block_b, 1), tile_2d),       # lengths (int32)
            pl.BlockSpec((D, d_h), whole),             # w1t
            pl.BlockSpec((1, d_h), whole),             # w2
            pl.BlockSpec((D, d_out), whole),           # fcwt
            pl.BlockSpec((1, d_out), whole),           # fcb
            pl.BlockSpec((D, H3), whole),              # wih_f  (gates fused [r|z|n])
            pl.BlockSpec(params['whh_f'].shape, whole),  # whh_f
            pl.BlockSpec((D, H3), whole),              # wih_b
            pl.BlockSpec((4, H3), whole),              # packed GRU biases
        ],
        out_specs=(
            pl.BlockSpec((block_b, d_out), tile_2d),   # logsigma
            pl.BlockSpec((block_b, T), tile_2d),       # attention (lane-dense)
        ),
        out_shape=(jax.ShapeDtypeStruct((B, d_out), jnp.float32),
                   jax.ShapeDtypeStruct((B, T), jnp.float32)),
        compiler_params=pltpu.CompilerParams(
            dimension_semantics=("parallel",)),
    )(x, out, pad_f, lens2,
      params['w1t'], params['w2'], params['fcwt'], params['fcb'],
      params['wih_f'], params['whh_f'], params['wih_b'], gru_bias)

    # free reshape to the module's (B, T, 1) attention layout
    return {'logsigma': logsigma, 'attention': attn2[:, :, None]}


def reference(out, x, pad_mask, lengths, P):
    """Pure-JAX reference with identical semantics (for validation)."""
    h = jnp.tanh(jnp.einsum('btd,dh->bth', x, P['w1t']))
    logits = jnp.einsum('bth,nh->btn', h, P['w2'])                # (B, T, 1)
    logits = jnp.where(pad_mask[..., None], -jnp.inf, logits)
    attn = jax.nn.softmax(logits, axis=1)
    residual = jnp.sum(attn * x, axis=1)
    fc_out = residual @ P['fcwt'] + P['fcb']

    B, T, _ = x.shape
    H = P['whh_f'].shape[0]

    def cell(xt, hp, wih, whh, bih, bhh):
        gi = xt @ wih + bih
        gh = hp @ whh + bhh
        r = jax.nn.sigmoid(gi[:, :H] + gh[:, :H])
        z = jax.nn.sigmoid(gi[:, H:2 * H] + gh[:, H:2 * H])
        n = jnp.tanh(gi[:, 2 * H:] + r * gh[:, 2 * H:])
        return (1.0 - z) * n + z * hp

    lens = lengths[:, None]
    zeros = jnp.zeros((B, H), jnp.float32)
    hf, hb = zeros, zeros
    for t in range(T):
        xt = out[:, t, :]
        hf = jnp.where(t < lens,
                       cell(xt, hf, P['wih_f'], P['whh_f'], P['bih_f'], P['bhh_f']), hf)
        hb_step = cell(xt, zeros, P['wih_b'], P['whh_b'], P['bih_b'], P['bhh_b'])
        hb = jnp.where(t == lens - 1, hb_step, hb)
    logsigma = fc_out + jnp.concatenate([hf, hb], axis=-1)
    return logsigma, attn


def init_params(key, d_in, d_out, d_h):
    H = d_out // 2
    ks = jax.random.split(key, 11)
    u = lambda k, shape, s: jax.random.uniform(k, shape, jnp.float32, -s, s)
    xav = lambda fi, fo: (6.0 / (fi + fo)) ** 0.5
    g = 1.0 / (H ** 0.5)                         # PyTorch GRU default init scale
    return {
        # attention: w_1.weight.T (input-dim first), w_2.weight as-is (n_head=1, d_h)
        'w1t':  u(ks[0], (d_in, d_h), xav(d_in, d_h)),
        'w2':   u(ks[1], (1, d_h), xav(d_h, 1)),
        # fc: weight.T, bias initialized to 0 (as in the module)
        'fcwt': u(ks[2], (d_in, d_out), xav(d_in, d_out)),
        'fcb':  jnp.zeros((1, d_out), jnp.float32),
        # GRU weights packed gate-major along the last axis: [r | z | n]
        # (== PyTorch weight_*_l0.T / bias_*_l0 with the 3H axis last)
        'wih_f': u(ks[3], (d_in, 3 * H), g),
        'whh_f': u(ks[4], (H, 3 * H), g),
        'bih_f': u(ks[5], (1, 3 * H), g),
        'bhh_f': u(ks[6], (1, 3 * H), g),
        'wih_b': u(ks[7], (d_in, 3 * H), g),
        'whh_b': u(ks[8], (H, 3 * H), g),        # inert at the gathered step (h_prev=0);
                                                 # kept for parameter fidelity only
        'bih_b': u(ks[9], (1, 3 * H), g),
        'bhh_b': u(ks[10], (1, 3 * H), g),
    }


if __name__ == "__main__":
    B, T, d_in, d_h, d_out = 16, 8, 32, 32, 32

    key = jax.random.PRNGKey(0)
    kx, ko, kl, kp = jax.random.split(key, 4)
    x = jax.random.normal(kx, (B, T, d_in), jnp.float32)
    out = jax.random.normal(ko, (B, T, d_in), jnp.float32)
    # lengths in [1, T], sorted descending (pack_padded_sequence convention)
    lengths = jnp.sort(jax.random.randint(kl, (B,), 1, T + 1))[::-1].astype(jnp.int32)
    pad_mask = jnp.arange(T)[None, :] >= lengths[:, None]        # (B, T), True = pad
    params = init_params(kp, d_in, d_out, d_h)

    res = uncertainty_module_text(out, x, pad_mask, lengths, params)
    jax.block_until_ready(res)

    ref_logsigma, ref_attn = reference(out, x, pad_mask, lengths, params)
    assert res['logsigma'].shape == (B, d_out)
    assert res['attention'].shape == (B, T, 1)
    assert jnp.allclose(res['logsigma'], ref_logsigma, atol=1e-3, rtol=1e-3)
    assert jnp.allclose(res['attention'], ref_attn, atol=1e-3, rtol=1e-3)

    print("KERNEL_OK")
</pallas_src>

<mosaic_0001>
module attributes {stable_mosaic.version = 11 : i64} {
  func.func @uncertainty_kernel(%arg0: i32, %arg1: memref<16x8x32xf32, #tpu.memory_space<vmem>>, %arg2: memref<16x8x32xf32, #tpu.memory_space<vmem>>, %arg3: memref<16x8xf32, #tpu.memory_space<vmem>>, %arg4: memref<16x1xi32, #tpu.memory_space<vmem>>, %arg5: memref<32x32xf32, #tpu.memory_space<vmem>>, %arg6: memref<1x32xf32, #tpu.memory_space<vmem>>, %arg7: memref<32x32xf32, #tpu.memory_space<vmem>>, %arg8: memref<1x32xf32, #tpu.memory_space<vmem>>, %arg9: memref<32x48xf32, #tpu.memory_space<vmem>>, %arg10: memref<16x48xf32, #tpu.memory_space<vmem>>, %arg11: memref<32x48xf32, #tpu.memory_space<vmem>>, %arg12: memref<4x48xf32, #tpu.memory_space<vmem>>, %arg13: memref<16x32xf32, #tpu.memory_space<vmem>>, %arg14: memref<16x8xf32, #tpu.memory_space<vmem>>) attributes {dimension_semantics = [#tpu.dimension_semantics<parallel>], iteration_bounds = array<i64: 1>, scalar_prefetch = 0 : i64, scratch_operands = 0 : i64, tpu.core_type = #tpu.core_type<tc>, window_params = [{transform_indices = @transform_0, window_bounds = array<i64: 16, 8, 32>}, {transform_indices = @transform_1, window_bounds = array<i64: 16, 8, 32>}, {transform_indices = @transform_2, window_bounds = array<i64: 16, 8>}, {transform_indices = @transform_3, window_bounds = array<i64: 16, 1>}, {pipeline_mode = #tpu.pipeline_mode<synchronous>, transform_indices = @transform_4, window_bounds = array<i64: 32, 32>}, {pipeline_mode = #tpu.pipeline_mode<synchronous>, transform_indices = @transform_5, window_bounds = array<i64: 1, 32>}, {pipeline_mode = #tpu.pipeline_mode<synchronous>, transform_indices = @transform_6, window_bounds = array<i64: 32, 32>}, {pipeline_mode = #tpu.pipeline_mode<synchronous>, transform_indices = @transform_7, window_bounds = array<i64: 1, 32>}, {pipeline_mode = #tpu.pipeline_mode<synchronous>, transform_indices = @transform_8, window_bounds = array<i64: 32, 48>}, {pipeline_mode = #tpu.pipeline_mode<synchronous>, transform_indices = @transform_9, window_bounds = array<i64: 16, 48>}, {pipeline_mode = #tpu.pipeline_mode<synchronous>, transform_indices = @transform_10, window_bounds = array<i64: 32, 48>}, {pipeline_mode = #tpu.pipeline_mode<synchronous>, transform_indices = @transform_11, window_bounds = array<i64: 4, 48>}, {transform_indices = @transform_12, window_bounds = array<i64: 16, 32>}, {transform_indices = @transform_13, window_bounds = array<i64: 16, 8>}]} {
    %c0 = arith.constant 0 : index
    %c0_0 = arith.constant 0 : index
    %c0_1 = arith.constant 0 : index
    %0 = vector.load %arg1[%c0, %c0_0, %c0_1] : memref<16x8x32xf32, #tpu.memory_space<vmem>>, vector<16x8x32xf32>
    %c0_2 = arith.constant 0 : index
    %c0_3 = arith.constant 0 : index
    %c0_4 = arith.constant 0 : index
    %1 = vector.load %arg2[%c0_2, %c0_3, %c0_4] : memref<16x8x32xf32, #tpu.memory_space<vmem>>, vector<16x8x32xf32>
    %c0_5 = arith.constant 0 : index
    %c0_6 = arith.constant 0 : index
    %2 = vector.load %arg3[%c0_5, %c0_6] : memref<16x8xf32, #tpu.memory_space<vmem>>, vector<16x8xf32>
    %c0_7 = arith.constant 0 : index
    %c0_8 = arith.constant 0 : index
    %3 = vector.load %arg4[%c0_7, %c0_8] : memref<16x1xi32, #tpu.memory_space<vmem>>, vector<16x1xi32>
    %4 = vector.shape_cast %0 : vector<16x8x32xf32> to vector<128x32xf32>
    %c0_9 = arith.constant 0 : index
    %c0_10 = arith.constant 0 : index
    %5 = vector.load %arg5[%c0_9, %c0_10] : memref<32x32xf32, #tpu.memory_space<vmem>>, vector<32x32xf32>
    %cst = arith.constant dense<0.000000e+00> : vector<128x32xf32>
    %6 = tpu.matmul %4, %5, %cst {dimension_numbers = #tpu.dot_dimension_numbers<[1], [0], [0], [1], [0, 0, 1, 1], [], []>} : vector<128x32xf32>, vector<32x32xf32>, vector<128x32xf32> -> vector<128x32xf32>
    %7 = math.tanh %6 : vector<128x32xf32>
    %8 = vector.shape_cast %7 : vector<128x32xf32> to vector<16x8x32xf32>
    %c0_11 = arith.constant 0 : index
    %c0_12 = arith.constant 0 : index
    %9 = vector.load %arg6[%c0_11, %c0_12] : memref<1x32xf32, #tpu.memory_space<vmem>>, vector<1x32xf32>
    %10 = vector.shape_cast %9 : vector<1x32xf32> to vector<1x1x32xf32>
    %11 = vector.broadcast %10 : vector<1x1x32xf32> to vector<16x8x32xf32>
    %12 = arith.mulf %8, %11 : vector<16x8x32xf32>
    %cst_13 = arith.constant dense<0.000000e+00> : vector<16x8xf32>
    %13 = vector.multi_reduction <add>, %12, %cst_13 [2] : vector<16x8x32xf32> to vector<16x8xf32>
    %cst_14 = arith.constant 5.000000e-01 : f32
    %14 = vector.broadcast %cst_14 : f32 to vector<16x8xf32>
    %15 = arith.cmpf ogt, %2, %14 : vector<16x8xf32>
    %cst_15 = arith.constant -1.000000e+30 : f32
    %16 = vector.broadcast %cst_15 : f32 to vector<16x8xf32>
    %17 = arith.select %15, %16, %13 : vector<16x8xi1>, vector<16x8xf32>
    %cst_16 = arith.constant dense<0xFF800000> : vector<16xf32>
    %18 = vector.multi_reduction <maximumf>, %17, %cst_16 [1] : vector<16x8xf32> to vector<16xf32>
    %19 = vector.shape_cast %18 : vector<16xf32> to vector<16x1xf32>
    %20 = vector.broadcast %19 : vector<16x1xf32> to vector<16x8xf32>
    %21 = arith.subf %17, %20 : vector<16x8xf32>
    %22 = math.exp %21 : vector<16x8xf32>
    %cst_17 = arith.constant dense<0.000000e+00> : vector<16xf32>
    %23 = vector.multi_reduction <add>, %22, %cst_17 [1] : vector<16x8xf32> to vector<16xf32>
    %24 = vector.shape_cast %23 : vector<16xf32> to vector<16x1xf32>
    %25 = tpu.reciprocal %24 : vector<16x1xf32> -> vector<16x1xf32>
    %26 = vector.broadcast %25 : vector<16x1xf32> to vector<16x8xf32>
    %27 = arith.mulf %22, %26 : vector<16x8xf32>
    %c0_18 = arith.constant 0 : index
    %c0_19 = arith.constant 0 : index
    %28 = vector.load %arg14[%c0_18, %c0_19] : memref<16x8xf32, #tpu.memory_space<vmem>>, vector<16x8xf32>
    tpu.vector_store %arg14[%c0_18, %c0_19], %27 {strides = array<i32>} : memref<16x8xf32, #tpu.memory_space<vmem>>, vector<16x8xf32>,
    %29 = vector.shape_cast %27 : vector<16x8xf32> to vector<16x8x1xf32>
    %30 = vector.broadcast %29 : vector<16x8x1xf32> to vector<16x8x32xf32>
    %31 = arith.mulf %30, %0 : vector<16x8x32xf32>
    %cst_20 = arith.constant dense<0.000000e+00> : vector<16x32xf32>
    %32 = vector.multi_reduction <add>, %31, %cst_20 [1] : vector<16x8x32xf32> to vector<16x32xf32>
    %c0_21 = arith.constant 0 : index
    %c0_22 = arith.constant 0 : index
    %33 = vector.load %arg7[%c0_21, %c0_22] : memref<32x32xf32, #tpu.memory_space<vmem>>, vector<32x32xf32>
    %cst_23 = arith.constant dense<0.000000e+00> : vector<16x32xf32>
    %34 = tpu.matmul %32, %33, %cst_23 {dimension_numbers = #tpu.dot_dimension_numbers<[1], [0], [0], [1], [0, 0, 1, 1], [], []>} : vector<16x32xf32>, vector<32x32xf32>, vector<16x32xf32> -> vector<16x32xf32>
    %c0_24 = arith.constant 0 : index
    %c0_25 = arith.constant 0 : index
    %35 = vector.load %arg8[%c0_24, %c0_25] : memref<1x32xf32, #tpu.memory_space<vmem>>, vector<1x32xf32>
    %36 = vector.broadcast %35 : vector<1x32xf32> to vector<16x32xf32>
    %37 = arith.addf %34, %36 : vector<16x32xf32>
    %c0_26 = arith.constant 0 : index
    %c0_27 = arith.constant 0 : index
    %38 = vector.load %arg12[%c0_26, %c0_27] : memref<4x48xf32, #tpu.memory_space<vmem>>, vector<4x48xf32>
    %39 = vector.extract_strided_slice %38 {offsets = [0, 0], sizes = [1, 48], strides = [1, 1]} : vector<4x48xf32> to vector<1x48xf32>
    %40 = vector.extract_strided_slice %38 {offsets = [1, 0], sizes = [1, 48], strides = [1, 1]} : vector<4x48xf32> to vector<1x48xf32>
    %41 = vector.extract_strided_slice %38 {offsets = [2, 0], sizes = [1, 48], strides = [1, 1]} : vector<4x48xf32> to vector<1x48xf32>
    %42 = vector.extract_strided_slice %38 {offsets = [3, 0], sizes = [1, 48], strides = [1, 1]} : vector<4x48xf32> to vector<1x48xf32>
    %43 = tpu.iota {dimensions = array<i32: 1>} : vector<16x8xi32>
    %c1_i32 = arith.constant 1 : i32
    %44 = vector.broadcast %c1_i32 : i32 to vector<16x1xi32>
    %45 = arith.subi %3, %44 : vector<16x1xi32>
    %46 = vector.broadcast %45 : vector<16x1xi32> to vector<16x8xi32>
    %47 = arith.cmpi eq, %43, %46 : vector<16x8xi32>
    %48 = arith.extui %47 : vector<16x8xi1> to vector<16x8xi32>
    %49 = arith.sitofp %48 : vector<16x8xi32> to vector<16x8xf32>
    %50 = vector.shape_cast %49 : vector<16x8xf32> to vector<16x8x1xf32>
    %51 = vector.broadcast %50 : vector<16x8x1xf32> to vector<16x8x32xf32>
    %52 = arith.mulf %51, %1 : vector<16x8x32xf32>
    %cst_28 = arith.constant dense<0.000000e+00> : vector<16x32xf32>
    %53 = vector.multi_reduction <add>, %52, %cst_28 [1] : vector<16x8x32xf32> to vector<16x32xf32>
    %c0_29 = arith.constant 0 : index
    %c0_30 = arith.constant 0 : index
    %54 = vector.load %arg11[%c0_29, %c0_30] : memref<32x48xf32, #tpu.memory_space<vmem>>, vector<32x48xf32>
    %cst_31 = arith.constant dense<0.000000e+00> : vector<16x48xf32>
    %55 = tpu.matmul %53, %54, %cst_31 {dimension_numbers = #tpu.dot_dimension_numbers<[1], [0], [0], [1], [0, 0, 1, 1], [], []>} : vector<16x32xf32>, vector<32x48xf32>, vector<16x48xf32> -> vector<16x48xf32>
    %56 = vector.broadcast %41 : vector<1x48xf32> to vector<16x48xf32>
    %57 = arith.addf %55, %56 : vector<16x48xf32>
    %58 = vector.extract_strided_slice %57 {offsets = [0, 0], sizes = [16, 16], strides = [1, 1]} : vector<16x48xf32> to vector<16x16xf32>
    %59 = vector.extract_strided_slice %42 {offsets = [0, 0], sizes = [1, 16], strides = [1, 1]} : vector<1x48xf32> to vector<1x16xf32>
    %60 = vector.broadcast %59 : vector<1x16xf32> to vector<16x16xf32>
    %61 = arith.addf %58, %60 : vector<16x16xf32>
    %62 = arith.negf %61 : vector<16x16xf32>
    %63 = math.exp %62 : vector<16x16xf32>
    %cst_32 = arith.constant 1.000000e+00 : f32
    %64 = vector.broadcast %cst_32 : f32 to vector<16x16xf32>
    %65 = arith.addf %64, %63 : vector<16x16xf32>
    %66 = arith.divf %64, %65 : vector<16x16xf32>
    %67 = vector.extract_strided_slice %57 {offsets = [0, 16], sizes = [16, 16], strides = [1, 1]} : vector<16x48xf32> to vector<16x16xf32>
    %68 = vector.extract_strided_slice %42 {offsets = [0, 16], sizes = [1, 16], strides = [1, 1]} : vector<1x48xf32> to vector<1x16xf32>
    %69 = vector.broadcast %68 : vector<1x16xf32> to vector<16x16xf32>
    %70 = arith.addf %67, %69 : vector<16x16xf32>
    %71 = arith.negf %70 : vector<16x16xf32>
    %72 = math.exp %71 : vector<16x16xf32>
    %cst_33 = arith.constant 1.000000e+00 : f32
    %73 = vector.broadcast %cst_33 : f32 to vector<16x16xf32>
    %74 = arith.addf %73, %72 : vector<16x16xf32>
    %75 = arith.divf %73, %74 : vector<16x16xf32>
    %76 = vector.extract_strided_slice %57 {offsets = [0, 32], sizes = [16, 16], strides = [1, 1]} : vector<16x48xf32> to vector<16x16xf32>
    %77 = vector.extract_strided_slice %42 {offsets = [0, 32], sizes = [1, 16], strides = [1, 1]} : vector<1x48xf32> to vector<1x16xf32>
    %78 = vector.broadcast %77 : vector<1x16xf32> to vector<16x16xf32>
    %79 = arith.mulf %66, %78 : vector<16x16xf32>
    %80 = arith.addf %76, %79 : vector<16x16xf32>
    %81 = math.tanh %80 : vector<16x16xf32>
    %cst_34 = arith.constant 1.000000e+00 : f32
    %82 = vector.broadcast %cst_34 : f32 to vector<16x16xf32>
    %83 = arith.subf %82, %75 : vector<16x16xf32>
    %84 = arith.mulf %83, %81 : vector<16x16xf32>
    %85 = vector.shape_cast %1 : vector<16x8x32xf32> to vector<128x32xf32>
    %c0_35 = arith.constant 0 : index
    %c0_36 = arith.constant 0 : index
    %86 = vector.load %arg9[%c0_35, %c0_36] : memref<32x48xf32, #tpu.memory_space<vmem>>, vector<32x48xf32>
    %cst_37 = arith.constant dense<0.000000e+00> : vector<128x48xf32>
    %87 = tpu.matmul %85, %86, %cst_37 {dimension_numbers = #tpu.dot_dimension_numbers<[1], [0], [0], [1], [0, 0, 1, 1], [], []>} : vector<128x32xf32>, vector<32x48xf32>, vector<128x48xf32> -> vector<128x48xf32>
    %88 = vector.broadcast %39 : vector<1x48xf32> to vector<128x48xf32>
    %89 = arith.addf %87, %88 : vector<128x48xf32>
    %90 = vector.shape_cast %89 : vector<128x48xf32> to vector<16x8x48xf32>
    %c0_38 = arith.constant 0 : index
    %c0_39 = arith.constant 0 : index
    %91 = vector.load %arg10[%c0_38, %c0_39] : memref<16x48xf32, #tpu.memory_space<vmem>>, vector<16x48xf32>
    %cst_40 = arith.constant 0.000000e+00 : f32
    %92 = vector.broadcast %cst_40 : f32 to vector<16x16xf32>
    %93 = vector.extract_strided_slice %90 {offsets = [0, 0, 0], sizes = [16, 1, 48], strides = [1, 1, 1]} : vector<16x8x48xf32> to vector<16x1x48xf32>
    %94 = vector.shape_cast %93 : vector<16x1x48xf32> to vector<16x48xf32>
    %cst_41 = arith.constant dense<0.000000e+00> : vector<16x48xf32>
    %95 = tpu.matmul %92, %91, %cst_41 {dimension_numbers = #tpu.dot_dimension_numbers<[1], [0], [0], [1], [0, 0, 1, 1], [], []>} : vector<16x16xf32>, vector<16x48xf32>, vector<16x48xf32> -> vector<16x48xf32>
    %96 = vector.broadcast %40 : vector<1x48xf32> to vector<16x48xf32>
    %97 = arith.addf %95, %96 : vector<16x48xf32>
    %98 = vector.extract_strided_slice %94 {offsets = [0, 0], sizes = [16, 16], strides = [1, 1]} : vector<16x48xf32> to vector<16x16xf32>
    %99 = vector.extract_strided_slice %97 {offsets = [0, 0], sizes = [16, 16], strides = [1, 1]} : vector<16x48xf32> to vector<16x16xf32>
    %100 = arith.addf %98, %99 : vector<16x16xf32>
    %101 = arith.negf %100 : vector<16x16xf32>
    %102 = math.exp %101 : vector<16x16xf32>
    %cst_42 = arith.constant 1.000000e+00 : f32
    %103 = vector.broadcast %cst_42 : f32 to vector<16x16xf32>
    %104 = arith.addf %103, %102 : vector<16x16xf32>
    %105 = arith.divf %103, %104 : vector<16x16xf32>
    %106 = vector.extract_strided_slice %94 {offsets = [0, 16], sizes = [16, 16], strides = [1, 1]} : vector<16x48xf32> to vector<16x16xf32>
    %107 = vector.extract_strided_slice %97 {offsets = [0, 16], sizes = [16, 16], strides = [1, 1]} : vector<16x48xf32> to vector<16x16xf32>
    %108 = arith.addf %106, %107 : vector<16x16xf32>
    %109 = arith.negf %108 : vector<16x16xf32>
    %110 = math.exp %109 : vector<16x16xf32>
    %cst_43 = arith.constant 1.000000e+00 : f32
    %111 = vector.broadcast %cst_43 : f32 to vector<16x16xf32>
    %112 = arith.addf %111, %110 : vector<16x16xf32>
    %113 = arith.divf %111, %112 : vector<16x16xf32>
    %114 = vector.extract_strided_slice %94 {offsets = [0, 32], sizes = [16, 16], strides = [1, 1]} : vector<16x48xf32> to vector<16x16xf32>
    %115 = vector.extract_strided_slice %97 {offsets = [0, 32], sizes = [16, 16], strides = [1, 1]} : vector<16x48xf32> to vector<16x16xf32>
    %116 = arith.mulf %105, %115 : vector<16x16xf32>
    %117 = arith.addf %114, %116 : vector<16x16xf32>
    %118 = math.tanh %117 : vector<16x16xf32>
    %cst_44 = arith.constant 1.000000e+00 : f32
    %119 = vector.broadcast %cst_44 : f32 to vector<16x16xf32>
    %120 = arith.subf %119, %113 : vector<16x16xf32>
    %121 = arith.mulf %120, %118 : vector<16x16xf32>
    %122 = arith.mulf %113, %92 : vector<16x16xf32>
    %123 = arith.addf %121, %122 : vector<16x16xf32>
    %c0_i32 = arith.constant 0 : i32
    %124 = vector.broadcast %c0_i32 : i32 to vector<16x1xi32>
    %125 = arith.cmpi sgt, %3, %124 : vector<16x1xi32>
    %126 = vector.shape_cast %125 : vector<16x1xi1> to vector<16x1xi1>
    %127 = vector.broadcast %126 : vector<16x1xi1> to vector<16x16xi1>
    %128 = arith.select %127, %123, %92 : vector<16x16xi1>, vector<16x16xf32>
    %129 = vector.extract_strided_slice %90 {offsets = [0, 1, 0], sizes = [16, 1, 48], strides = [1, 1, 1]} : vector<16x8x48xf32> to vector<16x1x48xf32>
    %130 = vector.shape_cast %129 : vector<16x1x48xf32> to vector<16x48xf32>
    %cst_45 = arith.constant dense<0.000000e+00> : vector<16x48xf32>
    %131 = tpu.matmul %128, %91, %cst_45 {dimension_numbers = #tpu.dot_dimension_numbers<[1], [0], [0], [1], [0, 0, 1, 1], [], []>} : vector<16x16xf32>, vector<16x48xf32>, vector<16x48xf32> -> vector<16x48xf32>
    %132 = vector.broadcast %40 : vector<1x48xf32> to vector<16x48xf32>
    %133 = arith.addf %131, %132 : vector<16x48xf32>
    %134 = vector.extract_strided_slice %130 {offsets = [0, 0], sizes = [16, 16], strides = [1, 1]} : vector<16x48xf32> to vector<16x16xf32>
    %135 = vector.extract_strided_slice %133 {offsets = [0, 0], sizes = [16, 16], strides = [1, 1]} : vector<16x48xf32> to vector<16x16xf32>
    %136 = arith.addf %134, %135 : vector<16x16xf32>
    %137 = arith.negf %136 : vector<16x16xf32>
    %138 = math.exp %137 : vector<16x16xf32>
    %cst_46 = arith.constant 1.000000e+00 : f32
    %139 = vector.broadcast %cst_46 : f32 to vector<16x16xf32>
    %140 = arith.addf %139, %138 : vector<16x16xf32>
    %141 = arith.divf %139, %140 : vector<16x16xf32>
    %142 = vector.extract_strided_slice %130 {offsets = [0, 16], sizes = [16, 16], strides = [1, 1]} : vector<16x48xf32> to vector<16x16xf32>
    %143 = vector.extract_strided_slice %133 {offsets = [0, 16], sizes = [16, 16], strides = [1, 1]} : vector<16x48xf32> to vector<16x16xf32>
    %144 = arith.addf %142, %143 : vector<16x16xf32>
    %145 = arith.negf %144 : vector<16x16xf32>
    %146 = math.exp %145 : vector<16x16xf32>
    %cst_47 = arith.constant 1.000000e+00 : f32
    %147 = vector.broadcast %cst_47 : f32 to vector<16x16xf32>
    %148 = arith.addf %147, %146 : vector<16x16xf32>
    %149 = arith.divf %147, %148 : vector<16x16xf32>
    %150 = vector.extract_strided_slice %130 {offsets = [0, 32], sizes = [16, 16], strides = [1, 1]} : vector<16x48xf32> to vector<16x16xf32>
    %151 = vector.extract_strided_slice %133 {offsets = [0, 32], sizes = [16, 16], strides = [1, 1]} : vector<16x48xf32> to vector<16x16xf32>
    %152 = arith.mulf %141, %151 : vector<16x16xf32>
    %153 = arith.addf %150, %152 : vector<16x16xf32>
    %154 = math.tanh %153 : vector<16x16xf32>
    %cst_48 = arith.constant 1.000000e+00 : f32
    %155 = vector.broadcast %cst_48 : f32 to vector<16x16xf32>
    %156 = arith.subf %155, %149 : vector<16x16xf32>
    %157 = arith.mulf %156, %154 : vector<16x16xf32>
    %158 = arith.mulf %149, %128 : vector<16x16xf32>
    %159 = arith.addf %157, %158 : vector<16x16xf32>
    %c1_i32_49 = arith.constant 1 : i32
    %160 = vector.broadcast %c1_i32_49 : i32 to vector<16x1xi32>
    %161 = arith.cmpi sgt, %3, %160 : vector<16x1xi32>
    %162 = vector.shape_cast %161 : vector<16x1xi1> to vector<16x1xi1>
    %163 = vector.broadcast %162 : vector<16x1xi1> to vector<16x16xi1>
    %164 = arith.select %163, %159, %128 : vector<16x16xi1>, vector<16x16xf32>
    %165 = vector.extract_strided_slice %90 {offsets = [0, 2, 0], sizes = [16, 1, 48], strides = [1, 1, 1]} : vector<16x8x48xf32> to vector<16x1x48xf32>
    %166 = vector.shape_cast %165 : vector<16x1x48xf32> to vector<16x48xf32>
    %cst_50 = arith.constant dense<0.000000e+00> : vector<16x48xf32>
    %167 = tpu.matmul %164, %91, %cst_50 {dimension_numbers = #tpu.dot_dimension_numbers<[1], [0], [0], [1], [0, 0, 1, 1], [], []>} : vector<16x16xf32>, vector<16x48xf32>, vector<16x48xf32> -> vector<16x48xf32>
    %168 = vector.broadcast %40 : vector<1x48xf32> to vector<16x48xf32>
    %169 = arith.addf %167, %168 : vector<16x48xf32>
    %170 = vector.extract_strided_slice %166 {offsets = [0, 0], sizes = [16, 16], strides = [1, 1]} : vector<16x48xf32> to vector<16x16xf32>
    %171 = vector.extract_strided_slice %169 {offsets = [0, 0], sizes = [16, 16], strides = [1, 1]} : vector<16x48xf32> to vector<16x16xf32>
    %172 = arith.addf %170, %171 : vector<16x16xf32>
    %173 = arith.negf %172 : vector<16x16xf32>
    %174 = math.exp %173 : vector<16x16xf32>
    %cst_51 = arith.constant 1.000000e+00 : f32
    %175 = vector.broadcast %cst_51 : f32 to vector<16x16xf32>
    %176 = arith.addf %175, %174 : vector<16x16xf32>
    %177 = arith.divf %175, %176 : vector<16x16xf32>
    %178 = vector.extract_strided_slice %166 {offsets = [0, 16], sizes = [16, 16], strides = [1, 1]} : vector<16x48xf32> to vector<16x16xf32>
    %179 = vector.extract_strided_slice %169 {offsets = [0, 16], sizes = [16, 16], strides = [1, 1]} : vector<16x48xf32> to vector<16x16xf32>
    %180 = arith.addf %178, %179 : vector<16x16xf32>
    %181 = arith.negf %180 : vector<16x16xf32>
    %182 = math.exp %181 : vector<16x16xf32>
    %cst_52 = arith.constant 1.000000e+00 : f32
    %183 = vector.broadcast %cst_52 : f32 to vector<16x16xf32>
    %184 = arith.addf %183, %182 : vector<16x16xf32>
    %185 = arith.divf %183, %184 : vector<16x16xf32>
    %186 = vector.extract_strided_slice %166 {offsets = [0, 32], sizes = [16, 16], strides = [1, 1]} : vector<16x48xf32> to vector<16x16xf32>
    %187 = vector.extract_strided_slice %169 {offsets = [0, 32], sizes = [16, 16], strides = [1, 1]} : vector<16x48xf32> to vector<16x16xf32>
    %188 = arith.mulf %177, %187 : vector<16x16xf32>
    %189 = arith.addf %186, %188 : vector<16x16xf32>
    %190 = math.tanh %189 : vector<16x16xf32>
    %cst_53 = arith.constant 1.000000e+00 : f32
    %191 = vector.broadcast %cst_53 : f32 to vector<16x16xf32>
    %192 = arith.subf %191, %185 : vector<16x16xf32>
    %193 = arith.mulf %192, %190 : vector<16x16xf32>
    %194 = arith.mulf %185, %164 : vector<16x16xf32>
    %195 = arith.addf %193, %194 : vector<16x16xf32>
    %c2_i32 = arith.constant 2 : i32
    %196 = vector.broadcast %c2_i32 : i32 to vector<16x1xi32>
    %197 = arith.cmpi sgt, %3, %196 : vector<16x1xi32>
    %198 = vector.shape_cast %197 : vector<16x1xi1> to vector<16x1xi1>
    %199 = vector.broadcast %198 : vector<16x1xi1> to vector<16x16xi1>
    %200 = arith.select %199, %195, %164 : vector<16x16xi1>, vector<16x16xf32>
    %201 = vector.extract_strided_slice %90 {offsets = [0, 3, 0], sizes = [16, 1, 48], strides = [1, 1, 1]} : vector<16x8x48xf32> to vector<16x1x48xf32>
    %202 = vector.shape_cast %201 : vector<16x1x48xf32> to vector<16x48xf32>
    %cst_54 = arith.constant dense<0.000000e+00> : vector<16x48xf32>
    %203 = tpu.matmul %200, %91, %cst_54 {dimension_numbers = #tpu.dot_dimension_numbers<[1], [0], [0], [1], [0, 0, 1, 1], [], []>} : vector<16x16xf32>, vector<16x48xf32>, vector<16x48xf32> -> vector<16x48xf32>
    %204 = vector.broadcast %40 : vector<1x48xf32> to vector<16x48xf32>
    %205 = arith.addf %203, %204 : vector<16x48xf32>
    %206 = vector.extract_strided_slice %202 {offsets = [0, 0], sizes = [16, 16], strides = [1, 1]} : vector<16x48xf32> to vector<16x16xf32>
    %207 = vector.extract_strided_slice %205 {offsets = [0, 0], sizes = [16, 16], strides = [1, 1]} : vector<16x48xf32> to vector<16x16xf32>
    %208 = arith.addf %206, %207 : vector<16x16xf32>
    %209 = arith.negf %208 : vector<16x16xf32>
    %210 = math.exp %209 : vector<16x16xf32>
    %cst_55 = arith.constant 1.000000e+00 : f32
    %211 = vector.broadcast %cst_55 : f32 to vector<16x16xf32>
    %212 = arith.addf %211, %210 : vector<16x16xf32>
    %213 = arith.divf %211, %212 : vector<16x16xf32>
    %214 = vector.extract_strided_slice %202 {offsets = [0, 16], sizes = [16, 16], strides = [1, 1]} : vector<16x48xf32> to vector<16x16xf32>
    %215 = vector.extract_strided_slice %205 {offsets = [0, 16], sizes = [16, 16], strides = [1, 1]} : vector<16x48xf32> to vector<16x16xf32>
    %216 = arith.addf %214, %215 : vector<16x16xf32>
    %217 = arith.negf %216 : vector<16x16xf32>
    %218 = math.exp %217 : vector<16x16xf32>
    %cst_56 = arith.constant 1.000000e+00 : f32
    %219 = vector.broadcast %cst_56 : f32 to vector<16x16xf32>
    %220 = arith.addf %219, %218 : vector<16x16xf32>
    %221 = arith.divf %219, %220 : vector<16x16xf32>
    %222 = vector.extract_strided_slice %202 {offsets = [0, 32], sizes = [16, 16], strides = [1, 1]} : vector<16x48xf32> to vector<16x16xf32>
    %223 = vector.extract_strided_slice %205 {offsets = [0, 32], sizes = [16, 16], strides = [1, 1]} : vector<16x48xf32> to vector<16x16xf32>
    %224 = arith.mulf %213, %223 : vector<16x16xf32>
    %225 = arith.addf %222, %224 : vector<16x16xf32>
    %226 = math.tanh %225 : vector<16x16xf32>
    %cst_57 = arith.constant 1.000000e+00 : f32
    %227 = vector.broadcast %cst_57 : f32 to vector<16x16xf32>
    %228 = arith.subf %227, %221 : vector<16x16xf32>
    %229 = arith.mulf %228, %226 : vector<16x16xf32>
    %230 = arith.mulf %221, %200 : vector<16x16xf32>
    %231 = arith.addf %229, %230 : vector<16x16xf32>
    %c3_i32 = arith.constant 3 : i32
    %232 = vector.broadcast %c3_i32 : i32 to vector<16x1xi32>
    %233 = arith.cmpi sgt, %3, %232 : vector<16x1xi32>
    %234 = vector.shape_cast %233 : vector<16x1xi1> to vector<16x1xi1>
    %235 = vector.broadcast %234 : vector<16x1xi1> to vector<16x16xi1>
    %236 = arith.select %235, %231, %200 : vector<16x16xi1>, vector<16x16xf32>
    %237 = vector.extract_strided_slice %90 {offsets = [0, 4, 0], sizes = [16, 1, 48], strides = [1, 1, 1]} : vector<16x8x48xf32> to vector<16x1x48xf32>
    %238 = vector.shape_cast %237 : vector<16x1x48xf32> to vector<16x48xf32>
    %cst_58 = arith.constant dense<0.000000e+00> : vector<16x48xf32>
    %239 = tpu.matmul %236, %91, %cst_58 {dimension_numbers = #tpu.dot_dimension_numbers<[1], [0], [0], [1], [0, 0, 1, 1], [], []>} : vector<16x16xf32>, vector<16x48xf32>, vector<16x48xf32> -> vector<16x48xf32>
    %240 = vector.broadcast %40 : vector<1x48xf32> to vector<16x48xf32>
    %241 = arith.addf %239, %240 : vector<16x48xf32>
    %242 = vector.extract_strided_slice %238 {offsets = [0, 0], sizes = [16, 16], strides = [1, 1]} : vector<16x48xf32> to vector<16x16xf32>
    %243 = vector.extract_strided_slice %241 {offsets = [0, 0], sizes = [16, 16], strides = [1, 1]} : vector<16x48xf32> to vector<16x16xf32>
    %244 = arith.addf %242, %243 : vector<16x16xf32>
    %245 = arith.negf %244 : vector<16x16xf32>
    %246 = math.exp %245 : vector<16x16xf32>
    %cst_59 = arith.constant 1.000000e+00 : f32
    %247 = vector.broadcast %cst_59 : f32 to vector<16x16xf32>
    %248 = arith.addf %247, %246 : vector<16x16xf32>
    %249 = arith.divf %247, %248 : vector<16x16xf32>
    %250 = vector.extract_strided_slice %238 {offsets = [0, 16], sizes = [16, 16], strides = [1, 1]} : vector<16x48xf32> to vector<16x16xf32>
    %251 = vector.extract_strided_slice %241 {offsets = [0, 16], sizes = [16, 16], strides = [1, 1]} : vector<16x48xf32> to vector<16x16xf32>
    %252 = arith.addf %250, %251 : vector<16x16xf32>
    %253 = arith.negf %252 : vector<16x16xf32>
    %254 = math.exp %253 : vector<16x16xf32>
    %cst_60 = arith.constant 1.000000e+00 : f32
    %255 = vector.broadcast %cst_60 : f32 to vector<16x16xf32>
    %256 = arith.addf %255, %254 : vector<16x16xf32>
    %257 = arith.divf %255, %256 : vector<16x16xf32>
    %258 = vector.extract_strided_slice %238 {offsets = [0, 32], sizes = [16, 16], strides = [1, 1]} : vector<16x48xf32> to vector<16x16xf32>
    %259 = vector.extract_strided_slice %241 {offsets = [0, 32], sizes = [16, 16], strides = [1, 1]} : vector<16x48xf32> to vector<16x16xf32>
    %260 = arith.mulf %249, %259 : vector<16x16xf32>
    %261 = arith.addf %258, %260 : vector<16x16xf32>
    %262 = math.tanh %261 : vector<16x16xf32>
    %cst_61 = arith.constant 1.000000e+00 : f32
    %263 = vector.broadcast %cst_61 : f32 to vector<16x16xf32>
    %264 = arith.subf %263, %257 : vector<16x16xf32>
    %265 = arith.mulf %264, %262 : vector<16x16xf32>
    %266 = arith.mulf %257, %236 : vector<16x16xf32>
    %267 = arith.addf %265, %266 : vector<16x16xf32>
    %c4_i32 = arith.constant 4 : i32
    %268 = vector.broadcast %c4_i32 : i32 to vector<16x1xi32>
    %269 = arith.cmpi sgt, %3, %268 : vector<16x1xi32>
    %270 = vector.shape_cast %269 : vector<16x1xi1> to vector<16x1xi1>
    %271 = vector.broadcast %270 : vector<16x1xi1> to vector<16x16xi1>
    %272 = arith.select %271, %267, %236 : vector<16x16xi1>, vector<16x16xf32>
    %273 = vector.extract_strided_slice %90 {offsets = [0, 5, 0], sizes = [16, 1, 48], strides = [1, 1, 1]} : vector<16x8x48xf32> to vector<16x1x48xf32>
    %274 = vector.shape_cast %273 : vector<16x1x48xf32> to vector<16x48xf32>
    %cst_62 = arith.constant dense<0.000000e+00> : vector<16x48xf32>
    %275 = tpu.matmul %272, %91, %cst_62 {dimension_numbers = #tpu.dot_dimension_numbers<[1], [0], [0], [1], [0, 0, 1, 1], [], []>} : vector<16x16xf32>, vector<16x48xf32>, vector<16x48xf32> -> vector<16x48xf32>
    %276 = vector.broadcast %40 : vector<1x48xf32> to vector<16x48xf32>
    %277 = arith.addf %275, %276 : vector<16x48xf32>
    %278 = vector.extract_strided_slice %274 {offsets = [0, 0], sizes = [16, 16], strides = [1, 1]} : vector<16x48xf32> to vector<16x16xf32>
    %279 = vector.extract_strided_slice %277 {offsets = [0, 0], sizes = [16, 16], strides = [1, 1]} : vector<16x48xf32> to vector<16x16xf32>
    %280 = arith.addf %278, %279 : vector<16x16xf32>
    %281 = arith.negf %280 : vector<16x16xf32>
    %282 = math.exp %281 : vector<16x16xf32>
    %cst_63 = arith.constant 1.000000e+00 : f32
    %283 = vector.broadcast %cst_63 : f32 to vector<16x16xf32>
    %284 = arith.addf %283, %282 : vector<16x16xf32>
    %285 = arith.divf %283, %284 : vector<16x16xf32>
    %286 = vector.extract_strided_slice %274 {offsets = [0, 16], sizes = [16, 16], strides = [1, 1]} : vector<16x48xf32> to vector<16x16xf32>
    %287 = vector.extract_strided_slice %277 {offsets = [0, 16], sizes = [16, 16], strides = [1, 1]} : vector<16x48xf32> to vector<16x16xf32>
    %288 = arith.addf %286, %287 : vector<16x16xf32>
    %289 = arith.negf %288 : vector<16x16xf32>
    %290 = math.exp %289 : vector<16x16xf32>
    %cst_64 = arith.constant 1.000000e+00 : f32
    %291 = vector.broadcast %cst_64 : f32 to vector<16x16xf32>
    %292 = arith.addf %291, %290 : vector<16x16xf32>
    %293 = arith.divf %291, %292 : vector<16x16xf32>
    %294 = vector.extract_strided_slice %274 {offsets = [0, 32], sizes = [16, 16], strides = [1, 1]} : vector<16x48xf32> to vector<16x16xf32>
    %295 = vector.extract_strided_slice %277 {offsets = [0, 32], sizes = [16, 16], strides = [1, 1]} : vector<16x48xf32> to vector<16x16xf32>
    %296 = arith.mulf %285, %295 : vector<16x16xf32>
    %297 = arith.addf %294, %296 : vector<16x16xf32>
    %298 = math.tanh %297 : vector<16x16xf32>
    %cst_65 = arith.constant 1.000000e+00 : f32
    %299 = vector.broadcast %cst_65 : f32 to vector<16x16xf32>
    %300 = arith.subf %299, %293 : vector<16x16xf32>
    %301 = arith.mulf %300, %298 : vector<16x16xf32>
    %302 = arith.mulf %293, %272 : vector<16x16xf32>
    %303 = arith.addf %301, %302 : vector<16x16xf32>
    %c5_i32 = arith.constant 5 : i32
    %304 = vector.broadcast %c5_i32 : i32 to vector<16x1xi32>
    %305 = arith.cmpi sgt, %3, %304 : vector<16x1xi32>
    %306 = vector.shape_cast %305 : vector<16x1xi1> to vector<16x1xi1>
    %307 = vector.broadcast %306 : vector<16x1xi1> to vector<16x16xi1>
    %308 = arith.select %307, %303, %272 : vector<16x16xi1>, vector<16x16xf32>
    %309 = vector.extract_strided_slice %90 {offsets = [0, 6, 0], sizes = [16, 1, 48], strides = [1, 1, 1]} : vector<16x8x48xf32> to vector<16x1x48xf32>
    %310 = vector.shape_cast %309 : vector<16x1x48xf32> to vector<16x48xf32>
    %cst_66 = arith.constant dense<0.000000e+00> : vector<16x48xf32>
    %311 = tpu.matmul %308, %91, %cst_66 {dimension_numbers = #tpu.dot_dimension_numbers<[1], [0], [0], [1], [0, 0, 1, 1], [], []>} : vector<16x16xf32>, vector<16x48xf32>, vector<16x48xf32> -> vector<16x48xf32>
    %312 = vector.broadcast %40 : vector<1x48xf32> to vector<16x48xf32>
    %313 = arith.addf %311, %312 : vector<16x48xf32>
    %314 = vector.extract_strided_slice %310 {offsets = [0, 0], sizes = [16, 16], strides = [1, 1]} : vector<16x48xf32> to vector<16x16xf32>
    %315 = vector.extract_strided_slice %313 {offsets = [0, 0], sizes = [16, 16], strides = [1, 1]} : vector<16x48xf32> to vector<16x16xf32>
    %316 = arith.addf %314, %315 : vector<16x16xf32>
    %317 = arith.negf %316 : vector<16x16xf32>
    %318 = math.exp %317 : vector<16x16xf32>
    %cst_67 = arith.constant 1.000000e+00 : f32
    %319 = vector.broadcast %cst_67 : f32 to vector<16x16xf32>
    %320 = arith.addf %319, %318 : vector<16x16xf32>
    %321 = arith.divf %319, %320 : vector<16x16xf32>
    %322 = vector.extract_strided_slice %310 {offsets = [0, 16], sizes = [16, 16], strides = [1, 1]} : vector<16x48xf32> to vector<16x16xf32>
    %323 = vector.extract_strided_slice %313 {offsets = [0, 16], sizes = [16, 16], strides = [1, 1]} : vector<16x48xf32> to vector<16x16xf32>
    %324 = arith.addf %322, %323 : vector<16x16xf32>
    %325 = arith.negf %324 : vector<16x16xf32>
    %326 = math.exp %325 : vector<16x16xf32>
    %cst_68 = arith.constant 1.000000e+00 : f32
    %327 = vector.broadcast %cst_68 : f32 to vector<16x16xf32>
    %328 = arith.addf %327, %326 : vector<16x16xf32>
    %329 = arith.divf %327, %328 : vector<16x16xf32>
    %330 = vector.extract_strided_slice %310 {offsets = [0, 32], sizes = [16, 16], strides = [1, 1]} : vector<16x48xf32> to vector<16x16xf32>
    %331 = vector.extract_strided_slice %313 {offsets = [0, 32], sizes = [16, 16], strides = [1, 1]} : vector<16x48xf32> to vector<16x16xf32>
    %332 = arith.mulf %321, %331 : vector<16x16xf32>
    %333 = arith.addf %330, %332 : vector<16x16xf32>
    %334 = math.tanh %333 : vector<16x16xf32>
    %cst_69 = arith.constant 1.000000e+00 : f32
    %335 = vector.broadcast %cst_69 : f32 to vector<16x16xf32>
    %336 = arith.subf %335, %329 : vector<16x16xf32>
    %337 = arith.mulf %336, %334 : vector<16x16xf32>
    %338 = arith.mulf %329, %308 : vector<16x16xf32>
    %339 = arith.addf %337, %338 : vector<16x16xf32>
    %c6_i32 = arith.constant 6 : i32
    %340 = vector.broadcast %c6_i32 : i32 to vector<16x1xi32>
    %341 = arith.cmpi sgt, %3, %340 : vector<16x1xi32>
    %342 = vector.shape_cast %341 : vector<16x1xi1> to vector<16x1xi1>
    %343 = vector.broadcast %342 : vector<16x1xi1> to vector<16x16xi1>
    %344 = arith.select %343, %339, %308 : vector<16x16xi1>, vector<16x16xf32>
    %345 = vector.extract_strided_slice %90 {offsets = [0, 7, 0], sizes = [16, 1, 48], strides = [1, 1, 1]} : vector<16x8x48xf32> to vector<16x1x48xf32>
    %346 = vector.shape_cast %345 : vector<16x1x48xf32> to vector<16x48xf32>
    %cst_70 = arith.constant dense<0.000000e+00> : vector<16x48xf32>
    %347 = tpu.matmul %344, %91, %cst_70 {dimension_numbers = #tpu.dot_dimension_numbers<[1], [0], [0], [1], [0, 0, 1, 1], [], []>} : vector<16x16xf32>, vector<16x48xf32>, vector<16x48xf32> -> vector<16x48xf32>
    %348 = vector.broadcast %40 : vector<1x48xf32> to vector<16x48xf32>
    %349 = arith.addf %347, %348 : vector<16x48xf32>
    %350 = vector.extract_strided_slice %346 {offsets = [0, 0], sizes = [16, 16], strides = [1, 1]} : vector<16x48xf32> to vector<16x16xf32>
    %351 = vector.extract_strided_slice %349 {offsets = [0, 0], sizes = [16, 16], strides = [1, 1]} : vector<16x48xf32> to vector<16x16xf32>
    %352 = arith.addf %350, %351 : vector<16x16xf32>
    %353 = arith.negf %352 : vector<16x16xf32>
    %354 = math.exp %353 : vector<16x16xf32>
    %cst_71 = arith.constant 1.000000e+00 : f32
    %355 = vector.broadcast %cst_71 : f32 to vector<16x16xf32>
    %356 = arith.addf %355, %354 : vector<16x16xf32>
    %357 = arith.divf %355, %356 : vector<16x16xf32>
    %358 = vector.extract_strided_slice %346 {offsets = [0, 16], sizes = [16, 16], strides = [1, 1]} : vector<16x48xf32> to vector<16x16xf32>
    %359 = vector.extract_strided_slice %349 {offsets = [0, 16], sizes = [16, 16], strides = [1, 1]} : vector<16x48xf32> to vector<16x16xf32>
    %360 = arith.addf %358, %359 : vector<16x16xf32>
    %361 = arith.negf %360 : vector<16x16xf32>
    %362 = math.exp %361 : vector<16x16xf32>
    %cst_72 = arith.constant 1.000000e+00 : f32
    %363 = vector.broadcast %cst_72 : f32 to vector<16x16xf32>
    %364 = arith.addf %363, %362 : vector<16x16xf32>
    %365 = arith.divf %363, %364 : vector<16x16xf32>
    %366 = vector.extract_strided_slice %346 {offsets = [0, 32], sizes = [16, 16], strides = [1, 1]} : vector<16x48xf32> to vector<16x16xf32>
    %367 = vector.extract_strided_slice %349 {offsets = [0, 32], sizes = [16, 16], strides = [1, 1]} : vector<16x48xf32> to vector<16x16xf32>
    %368 = arith.mulf %357, %367 : vector<16x16xf32>
    %369 = arith.addf %366, %368 : vector<16x16xf32>
    %370 = math.tanh %369 : vector<16x16xf32>
    %cst_73 = arith.constant 1.000000e+00 : f32
    %371 = vector.broadcast %cst_73 : f32 to vector<16x16xf32>
    %372 = arith.subf %371, %365 : vector<16x16xf32>
    %373 = arith.mulf %372, %370 : vector<16x16xf32>
    %374 = arith.mulf %365, %344 : vector<16x16xf32>
    %375 = arith.addf %373, %374 : vector<16x16xf32>
    %c7_i32 = arith.constant 7 : i32
    %376 = vector.broadcast %c7_i32 : i32 to vector<16x1xi32>
    %377 = arith.cmpi sgt, %3, %376 : vector<16x1xi32>
    %378 = vector.shape_cast %377 : vector<16x1xi1> to vector<16x1xi1>
    %379 = vector.broadcast %378 : vector<16x1xi1> to vector<16x16xi1>
    %380 = arith.select %379, %375, %344 : vector<16x16xi1>, vector<16x16xf32>
    %381 = tpu.concatenate %380, %84 in 1 : vector<16x16xf32>, vector<16x16xf32> -> vector<16x32xf32>
    %382 = arith.addf %37, %381 : vector<16x32xf32>
    %c0_74 = arith.constant 0 : index
    %c0_75 = arith.constant 0 : index
    %383 = vector.load %arg13[%c0_74, %c0_75] : memref<16x32xf32, #tpu.memory_space<vmem>>, vector<16x32xf32>
    tpu.vector_store %arg13[%c0_74, %c0_75], %382 {strides = array<i32>} : memref<16x32xf32, #tpu.memory_space<vmem>>, vector<16x32xf32>,
    return
  }
  func.func @transform_0(%arg0: i32) -> (i32, i32, i32) {
    %c0_i32 = arith.constant 0 : i32
    %c0_i32_0 = arith.constant 0 : i32
    %c0_i32_1 = arith.constant 0 : i32
    return %arg0, %c0_i32, %c0_i32_0 : i32, i32, i32
  }
  func.func @transform_1(%arg0: i32) -> (i32, i32, i32) {
    %c0_i32 = arith.constant 0 : i32
    %c0_i32_0 = arith.constant 0 : i32
    %c0_i32_1 = arith.constant 0 : i32
    return %arg0, %c0_i32, %c0_i32_0 : i32, i32, i32
  }
  func.func @transform_2(%arg0: i32) -> (i32, i32) {
    %c0_i32 = arith.constant 0 : i32
    %c0_i32_0 = arith.constant 0 : i32
    return %arg0, %c0_i32 : i32, i32
  }
  func.func @transform_3(%arg0: i32) -> (i32, i32) {
    %c0_i32 = arith.constant 0 : i32
    %c0_i32_0 = arith.constant 0 : i32
    return %arg0, %c0_i32 : i32, i32
  }
  func.func @transform_4(%arg0: i32) -> (i32, i32) {
    %c0_i32 = arith.constant 0 : i32
    %c0_i32_0 = arith.constant 0 : i32
    %c0_i32_1 = arith.constant 0 : i32
    return %c0_i32, %c0_i32_0 : i32, i32
  }
  func.func @transform_5(%arg0: i32) -> (i32, i32) {
    %c0_i32 = arith.constant 0 : i32
    %c0_i32_0 = arith.constant 0 : i32
    %c0_i32_1 = arith.constant 0 : i32
    return %c0_i32, %c0_i32_0 : i32, i32
  }
  func.func @transform_6(%arg0: i32) -> (i32, i32) {
    %c0_i32 = arith.constant 0 : i32
    %c0_i32_0 = arith.constant 0 : i32
    %c0_i32_1 = arith.constant 0 : i32
    return %c0_i32, %c0_i32_0 : i32, i32
  }
  func.func @transform_7(%arg0: i32) -> (i32, i32) {
    %c0_i32 = arith.constant 0 : i32
    %c0_i32_0 = arith.constant 0 : i32
    %c0_i32_1 = arith.constant 0 : i32
    return %c0_i32, %c0_i32_0 : i32, i32
  }
  func.func @transform_8(%arg0: i32) -> (i32, i32) {
    %c0_i32 = arith.constant 0 : i32
    %c0_i32_0 = arith.constant 0 : i32
    %c0_i32_1 = arith.constant 0 : i32
    return %c0_i32, %c0_i32_0 : i32, i32
  }
  func.func @transform_9(%arg0: i32) -> (i32, i32) {
    %c0_i32 = arith.constant 0 : i32
    %c0_i32_0 = arith.constant 0 : i32
    %c0_i32_1 = arith.constant 0 : i32
    return %c0_i32, %c0_i32_0 : i32, i32
  }
  func.func @transform_10(%arg0: i32) -> (i32, i32) {
    %c0_i32 = arith.constant 0 : i32
    %c0_i32_0 = arith.constant 0 : i32
    %c0_i32_1 = arith.constant 0 : i32
    return %c0_i32, %c0_i32_0 : i32, i32
  }
  func.func @transform_11(%arg0: i32) -> (i32, i32) {
    %c0_i32 = arith.constant 0 : i32
    %c0_i32_0 = arith.constant 0 : i32
    %c0_i32_1 = arith.constant 0 : i32
    return %c0_i32, %c0_i32_0 : i32, i32
  }
  func.func @transform_12(%arg0: i32) -> (i32, i32) {
    %c0_i32 = arith.constant 0 : i32
    %c0_i32_0 = arith.constant 0 : i32
    return %arg0, %c0_i32 : i32, i32
  }
  func.func @transform_13(%arg0: i32) -> (i32, i32) {
    %c0_i32 = arith.constant 0 : i32
    %c0_i32_0 = arith.constant 0 : i32
    return %arg0, %c0_i32 : i32, i32
  }
}

</mosaic_0001>

<llo_original>
// kernel: tpu_custom_call.1
$region0: #{tpu_custom_call.1}
  #allocation0 [shape = 'u32[]', space=smem, size = 0x4, offset = 0x4, fixed_abs, tag = 'smem constant byte address 0x4 - core index']
  #allocation1 [shape = 'u32[72,128]{1,0:T(1,128)}', space=vmem, size = 0x9000, scoped, tag = 'internal scratch']
  %s0 = inlined_call_operand.hbm [shape: f32[16,8,32], index: 0, kind: input, shape index: {}]
  %s1 = inlined_call_operand.hbm [shape: f32[16,8,32], index: 1, kind: input, shape index: {}]
  %s2 = inlined_call_operand.vmem [shape: f32[16,8], index: 2, kind: input, shape index: {}]
  %s3 = inlined_call_operand.vmem [shape: s32[16,1], index: 3, kind: input, shape index: {}]
  %s4 = inlined_call_operand.vmem [shape: f32[32,32], index: 4, kind: input, shape index: {}]
  %s5 = inlined_call_operand.hbm [shape: f32[1,32], index: 5, kind: input, shape index: {}]
  %s6 = inlined_call_operand.hbm [shape: f32[32,32], index: 6, kind: input, shape index: {}]
  %s7 = inlined_call_operand.hbm [shape: f32[1,32], index: 7, kind: input, shape index: {}]
  %s8 = inlined_call_operand.hbm [shape: f32[32,48], index: 8, kind: input, shape index: {}]
  %s9 = inlined_call_operand.vmem [shape: f32[16,48], index: 9, kind: input, shape index: {}]
  %s10 = inlined_call_operand.hbm [shape: f32[32,48], index: 10, kind: input, shape index: {}]
  %s11 = inlined_call_operand.hbm [shape: f32[4,48], index: 11, kind: input, shape index: {}]
  %s12 = inlined_call_operand.hbm [shape: f32[16,32], index: 12, kind: output, shape index: {0}]
  %s13 = inlined_call_operand.vmem [shape: f32[16,8], index: 13, kind: output, shape index: {1}]
  %14 = xla_tuple %s12, %s13
  %s15 = sld [smem:[#allocation0]]
  $region98: #{tpu_custom_call.1} parent=0
    _
  %s17 = ssub.s32 1, %s15
  %s18 = scalar_select 0, %s17, %s15
  $region1: #{tpu_custom_call.1} parent=0
    #allocation2 [shape = 'u8[65536]{0}', space=vmem, size = 0x10000, scoped, tag = 'input window, operand 0, single buffered']
    #allocation3 [shape = 's32[1]{0}', space=sflag, size = 0x4, scoped, tag = 'scoped memory for tpu_custom_call.1']
    #allocation4 [shape = 's32[1]{0}', space=sflag, size = 0x4, scoped, tag = 'scoped memory for tpu_custom_call.1']
    #allocation5 [shape = 'u8[65536]{0}', space=vmem, size = 0x10000, scoped, tag = 'input window, operand 1, single buffered']
    #allocation6 [shape = 's32[1]{0}', space=sflag, size = 0x4, scoped, tag = 'scoped memory for tpu_custom_call.1']
    #allocation7 [shape = 'u8[512]{0}', space=vmem, size = 0x400, scoped, tag = 'input window, operand 5, single buffered']
    #allocation8 [shape = 'u8[16384]{0}', space=vmem, size = 0x4000, scoped, tag = 'input window, operand 6, single buffered']
    #allocation9 [shape = 's32[1]{0}', space=sflag, size = 0x4, scoped, tag = 'scoped memory for tpu_custom_call.1']
    #allocation10 [shape = 'u8[512]{0}', space=vmem, size = 0x400, scoped, tag = 'input window, operand 7, single buffered']
    #allocation11 [shape = 'u8[16384]{0}', space=vmem, size = 0x4000, scoped, tag = 'input window, operand 8, single buffered']
    #allocation12 [shape = 's32[1]{0}', space=sflag, size = 0x4, scoped, tag = 'scoped memory for tpu_custom_call.1']
    #allocation13 [shape = 'u8[16384]{0}', space=vmem, size = 0x4000, scoped, tag = 'input window, operand 10, single buffered']
    #allocation14 [shape = 'u8[2048]{0}', space=vmem, size = 0x800, scoped, tag = 'input window, operand 11, single buffered']
    #allocation15 [shape = 's32[1]{0}', space=sflag, size = 0x4, scoped, tag = 'scoped memory for tpu_custom_call.1']
    #allocation16 [shape = 'u8[8192]{0}', space=vmem, size = 0x2000, scoped, tag = 'output window, operand 0, single buffered']
    %19 = vsyncpa [#allocation3], 0
    %20 = vsyncpa [#allocation6], 0
    %21 = vsyncpa [#allocation9], 0
    %22 = vsyncpa [#allocation12], 0
    %23 = vsyncpa [#allocation15], 0
    %24 = vsyncpa [#allocation4], 0
    // Predicated region
    $region2: #{tpu_custom_call.1} parent=1 // pred_check
      _
    $region3: #{tpu_custom_call.1} parent=1 // pred_check_branch
      %26 = sbr.rel (0) target = $region5
    $region4: #{tpu_custom_call.1} parent=1 // pred_region
      %28 = vsyncadd [#allocation3], 0
      %s29 = sshll.u32 %s0, 4
      %s30 = int_to_ptr.hbm [resolvable:$true] %s29
      %s31 = sshll.u32 [#allocation2], 4
      %s32 = int_to_ptr.vmem [resolvable:$true] %s31
      %37 = dma.hbm_to_vmem [thread:$0]  %s30, 2048, %s32, [#allocation3], 128, 128, 8
    $region5: #{tpu_custom_call.1} parent=1 // pred_fallthru
      _
    // Predicated region
    $region6: #{tpu_custom_call.1} parent=1 // pred_check
      _
    $region7: #{tpu_custom_call.1} parent=1 // pred_check_branch
      %39 = sbr.rel (0) target = $region9
    $region8: #{tpu_custom_call.1} parent=1 // pred_region
      %41 = vsyncadd [#allocation6], 0
      %s42 = sshll.u32 %s1, 4
      %s43 = int_to_ptr.hbm [resolvable:$true] %s42
      %s44 = sshll.u32 [#allocation5], 4
      %s45 = int_to_ptr.vmem [resolvable:$true] %s44
      %50 = dma.hbm_to_vmem [thread:$0]  %s43, 2048, %s45, [#allocation6], 128, 128, 8
    $region9: #{tpu_custom_call.1} parent=1 // pred_fallthru
      _
    // Predicated region
    $region10: #{tpu_custom_call.1} parent=1 // pred_check
      _
    $region11: #{tpu_custom_call.1} parent=1 // pred_check_branch
      %52 = sbr.rel (0) target = $region13
    $region12: #{tpu_custom_call.1} parent=1 // pred_region
      _
    $region13: #{tpu_custom_call.1} parent=1 // pred_fallthru
      _
    // Predicated region
    $region14: #{tpu_custom_call.1} parent=1 // pred_check
      _
    $region15: #{tpu_custom_call.1} parent=1 // pred_check_branch
      %54 = sbr.rel (0) target = $region17
    $region16: #{tpu_custom_call.1} parent=1 // pred_region
      _
    $region17: #{tpu_custom_call.1} parent=1 // pred_fallthru
      _
    // Predicated region
    $region18: #{tpu_custom_call.1} parent=1 // pred_check
      _
    $region19: #{tpu_custom_call.1} parent=1 // pred_check_branch
      %56 = sbr.rel (0) target = $region21
    $region20: #{tpu_custom_call.1} parent=1 // pred_region
      _
    $region21: #{tpu_custom_call.1} parent=1 // pred_fallthru
      _
    // Predicated region
    $region22: #{tpu_custom_call.1} parent=1 // pred_check
      _
    $region23: #{tpu_custom_call.1} parent=1 // pred_check_branch
      %58 = sbr.rel (0) target = $region25
    $region24: #{tpu_custom_call.1} parent=1 // pred_region
      %60 = vsyncadd [#allocation6], 0
      %s62 = sshll.u32 %s5, 4
      %s63 = int_to_ptr.hbm [resolvable:$true] %s62
      %s64 = sshll.u32 [#allocation7], 4
      %s65 = int_to_ptr.vmem [resolvable:$true] %s64
      %67 = dma.hbm_to_vmem [thread:$0]  %s63, 16, %s65, [#allocation6]
    $region25: #{tpu_custom_call.1} parent=1 // pred_fallthru
      _
    // Predicated region
    $region26: #{tpu_custom_call.1} parent=1 // pred_check
      _
    $region27: #{tpu_custom_call.1} parent=1 // pred_check_branch
      %69 = sbr.rel (0) target = $region29
    $region28: #{tpu_custom_call.1} parent=1 // pred_region
      %71 = vsyncadd [#allocation9], 0
      %s72 = sshll.u32 %s6, 4
      %s73 = int_to_ptr.hbm [resolvable:$true] %s72
      %s74 = sshll.u32 [#allocation8], 4
      %s75 = int_to_ptr.vmem [resolvable:$true] %s74
      %80 = dma.hbm_to_vmem [thread:$0]  %s73, 512, %s75, [#allocation9], 128, 128, 8
    $region29: #{tpu_custom_call.1} parent=1 // pred_fallthru
      _
    // Predicated region
    $region30: #{tpu_custom_call.1} parent=1 // pred_check
      _
    $region31: #{tpu_custom_call.1} parent=1 // pred_check_branch
      %82 = sbr.rel (0) target = $region33
    $region32: #{tpu_custom_call.1} parent=1 // pred_region
      %84 = vsyncadd [#allocation9], 0
      %s86 = sshll.u32 %s7, 4
      %s87 = int_to_ptr.hbm [resolvable:$true] %s86
      %s88 = sshll.u32 [#allocation10], 4
      %s89 = int_to_ptr.vmem [resolvable:$true] %s88
      %91 = dma.hbm_to_vmem [thread:$0]  %s87, 16, %s89, [#allocation9]
    $region33: #{tpu_custom_call.1} parent=1 // pred_fallthru
      _
    // Predicated region
    $region34: #{tpu_custom_call.1} parent=1 // pred_check
      _
    $region35: #{tpu_custom_call.1} parent=1 // pred_check_branch
      %93 = sbr.rel (0) target = $region37
    $region36: #{tpu_custom_call.1} parent=1 // pred_region
      %95 = vsyncadd [#allocation12], 0
      %s96 = sshll.u32 %s8, 4
      %s97 = int_to_ptr.hbm [resolvable:$true] %s96
      %s98 = sshll.u32 [#allocation11], 4
      %s99 = int_to_ptr.vmem [resolvable:$true] %s98
      %104 = dma.hbm_to_vmem [thread:$0]  %s97, 512, %s99, [#allocation12], 128, 128, 8
    $region37: #{tpu_custom_call.1} parent=1 // pred_fallthru
      _
    // Predicated region
    $region38: #{tpu_custom_call.1} parent=1 // pred_check
      _
    $region39: #{tpu_custom_call.1} parent=1 // pred_check_branch
      %106 = sbr.rel (0) target = $region41
    $region40: #{tpu_custom_call.1} parent=1 // pred_region
      _
    $region41: #{tpu_custom_call.1} parent=1 // pred_fallthru
      _
    // Predicated region
    $region42: #{tpu_custom_call.1} parent=1 // pred_check
      _
    $region43: #{tpu_custom_call.1} parent=1 // pred_check_branch
      %108 = sbr.rel (0) target = $region45
    $region44: #{tpu_custom_call.1} parent=1 // pred_region
      %110 = vsyncadd [#allocation12], 0
      %s111 = sshll.u32 %s10, 4
      %s112 = int_to_ptr.hbm [resolvable:$true] %s111
      %s113 = sshll.u32 [#allocation13], 4
      %s114 = int_to_ptr.vmem [resolvable:$true] %s113
      %119 = dma.hbm_to_vmem [thread:$0]  %s112, 512, %s114, [#allocation12], 128, 128, 8
    $region45: #{tpu_custom_call.1} parent=1 // pred_fallthru
      _
    // Predicated region
    $region46: #{tpu_custom_call.1} parent=1 // pred_check
      _
    $region47: #{tpu_custom_call.1} parent=1 // pred_check_branch
      %121 = sbr.rel (0) target = $region49
    $region48: #{tpu_custom_call.1} parent=1 // pred_region
      %123 = vsyncadd [#allocation15], 0
      %s125 = sshll.u32 %s11, 4
      %s126 = int_to_ptr.hbm [resolvable:$true] %s125
      %s127 = sshll.u32 [#allocation14], 4
      %s128 = int_to_ptr.vmem [resolvable:$true] %s127
      %130 = dma.hbm_to_vmem [thread:$0]  %s126, 64, %s128, [#allocation15]
    $region49: #{tpu_custom_call.1} parent=1 // pred_fallthru
      _
    // Predicated region
    $region50: #{tpu_custom_call.1} parent=1 // pred_check
      _
    $region51: #{tpu_custom_call.1} parent=1 // pred_check_branch
      %132 = sbr.rel (0) target = $region53
    $region52: #{tpu_custom_call.1} parent=1 // pred_region
      %134 = dma.done [#allocation3], 2048
    $region53: #{tpu_custom_call.1} parent=1 // pred_fallthru
      _
    // Predicated region
    $region54: #{tpu_custom_call.1} parent=1 // pred_check
      _
    $region55: #{tpu_custom_call.1} parent=1 // pred_check_branch
      %136 = sbr.rel (0) target = $region57
    $region56: #{tpu_custom_call.1} parent=1 // pred_region
      %138 = dma.done [#allocation6], 2048
    $region57: #{tpu_custom_call.1} parent=1 // pred_fallthru
      _
    // Predicated region
    $region58: #{tpu_custom_call.1} parent=1 // pred_check
      _
    $region59: #{tpu_custom_call.1} parent=1 // pred_check_branch
      %140 = sbr.rel (0) target = $region61
    $region60: #{tpu_custom_call.1} parent=1 // pred_region
      %142 = dma.done [#allocation6], 16
    $region61: #{tpu_custom_call.1} parent=1 // pred_fallthru
      _
    // Predicated region
    $region62: #{tpu_custom_call.1} parent=1 // pred_check
      _
    $region63: #{tpu_custom_call.1} parent=1 // pred_check_branch
      %144 = sbr.rel (0) target = $region65
    $region64: #{tpu_custom_call.1} parent=1 // pred_region
      %146 = dma.done [#allocation9], 512
    $region65: #{tpu_custom_call.1} parent=1 // pred_fallthru
      _
    // Predicated region
    $region66: #{tpu_custom_call.1} parent=1 // pred_check
      _
    $region67: #{tpu_custom_call.1} parent=1 // pred_check_branch
      %148 = sbr.rel (0) target = $region69
    $region68: #{tpu_custom_call.1} parent=1 // pred_region
      %150 = dma.done [#allocation9], 16
    $region69: #{tpu_custom_call.1} parent=1 // pred_fallthru
      _
    // Predicated region
    $region70: #{tpu_custom_call.1} parent=1 // pred_check
      _
    $region71: #{tpu_custom_call.1} parent=1 // pred_check_branch
      %152 = sbr.rel (0) target = $region73
    $region72: #{tpu_custom_call.1} parent=1 // pred_region
      %154 = dma.done [#allocation12], 512
    $region73: #{tpu_custom_call.1} parent=1 // pred_fallthru
      _
    // Predicated region
    $region74: #{tpu_custom_call.1} parent=1 // pred_check
      _
    $region75: #{tpu_custom_call.1} parent=1 // pred_check_branch
      %156 = sbr.rel (0) target = $region77
    $region76: #{tpu_custom_call.1} parent=1 // pred_region
      %158 = dma.done [#allocation12], 512
    $region77: #{tpu_custom_call.1} parent=1 // pred_fallthru
      _
    // Predicated region
    $region78: #{tpu_custom_call.1} parent=1 // pred_check
      _
    $region79: #{tpu_custom_call.1} parent=1 // pred_check_branch
      %160 = sbr.rel (0) target = $region81
    $region80: #{tpu_custom_call.1} parent=1 // pred_region
      %162 = dma.done [#allocation15], 64
    $region81: #{tpu_custom_call.1} parent=1 // pred_fallthru
      _
    %v163 = vld [vmem:[#allocation2] sm:$0xff]
    %v164 = vld [vmem:[#allocation2 + $0x8] sm:$0xff]
    %v165 = vld [vmem:[#allocation2 + $0x10] sm:$0xff]
    %v166 = vld [vmem:[#allocation2 + $0x18] sm:$0xff]
    %v167 = vld [vmem:[#allocation2 + $0x20] sm:$0xff]
    %v168 = vld [vmem:[#allocation2 + $0x28] sm:$0xff]
    %v169 = vld [vmem:[#allocation2 + $0x30] sm:$0xff]
    %v170 = vld [vmem:[#allocation2 + $0x38] sm:$0xff]
    %v171 = vld [vmem:[#allocation2 + $0x40] sm:$0xff]
    %v172 = vld [vmem:[#allocation2 + $0x48] sm:$0xff]
    %v173 = vld [vmem:[#allocation2 + $0x50] sm:$0xff]
    %v174 = vld [vmem:[#allocation2 + $0x58] sm:$0xff]
    %v175 = vld [vmem:[#allocation2 + $0x60] sm:$0xff]
    %v176 = vld [vmem:[#allocation2 + $0x68] sm:$0xff]
    %v177 = vld [vmem:[#allocation2 + $0x70] sm:$0xff]
    %v178 = vld [vmem:[#allocation2 + $0x78] sm:$0xff]
    %v179 = vld [vmem:[#allocation5] sm:$0xff]
    %v180 = vld [vmem:[#allocation5 + $0x8] sm:$0xff]
    %v181 = vld [vmem:[#allocation5 + $0x10] sm:$0xff]
    %v182 = vld [vmem:[#allocation5 + $0x18] sm:$0xff]
    %v183 = vld [vmem:[#allocation5 + $0x20] sm:$0xff]
    %v184 = vld [vmem:[#allocation5 + $0x28] sm:$0xff]
    %v185 = vld [vmem:[#allocation5 + $0x30] sm:$0xff]
    %v186 = vld [vmem:[#allocation5 + $0x38] sm:$0xff]
    %v187 = vld [vmem:[#allocation5 + $0x40] sm:$0xff]
    %v188 = vld [vmem:[#allocation5 + $0x48] sm:$0xff]
    %v189 = vld [vmem:[#allocation5 + $0x50] sm:$0xff]
    %v190 = vld [vmem:[#allocation5 + $0x58] sm:$0xff]
    %v191 = vld [vmem:[#allocation5 + $0x60] sm:$0xff]
    %v192 = vld [vmem:[#allocation5 + $0x68] sm:$0xff]
    %v193 = vld [vmem:[#allocation5 + $0x70] sm:$0xff]
    %v194 = vld [vmem:[#allocation5 + $0x78] sm:$0xff]
    %v195 = vld [vmem:[%s2] sm:$0xff]
    %v196 = vld [vmem:[%s2 + $0x8] sm:$0xff]
    %v197 = vld [vmem:[%s3] sm:$0xff]
    %v198 = vld [vmem:[%s3 + $0x8] sm:$0xff]
    %v199 = vld [vmem:[%s4] sm:$0xff]
    %v200 = vld [vmem:[%s4 + $0x8] sm:$0xff]
    %v201 = vld [vmem:[%s4 + $0x10] sm:$0xff]
    %v202 = vld [vmem:[%s4 + $0x18] sm:$0xff]
    %vm203 = vcmask 261120
    %v205 = vsel %vm203, %v163, 0
    %v208 = vsel %vm203, %v164, 0
    %v211 = vsel %vm203, %v165, 0
    %v214 = vsel %vm203, %v166, 0
    %v217 = vsel %vm203, %v167, 0
    %v220 = vsel %vm203, %v168, 0
    %v223 = vsel %vm203, %v169, 0
    %v226 = vsel %vm203, %v170, 0
    %v229 = vsel %vm203, %v171, 0
    %v232 = vsel %vm203, %v172, 0
    %v235 = vsel %vm203, %v173, 0
    %v238 = vsel %vm203, %v174, 0
    %v241 = vsel %vm203, %v175, 0
    %v244 = vsel %vm203, %v176, 0
    %v247 = vsel %vm203, %v177, 0
    %v250 = vsel %vm203, %v178, 0
    %252 = vmatpush.msra.mxu0 0.0
    %253 = vmatpush.msra.mxu0 0.0
    %254 = vmatpush.msra.mxu0 0.0
    %255 = vmatpush.msra.mxu0 0.0
    %256 = vmatpush.msra.mxu0 0.0
    %257 = vmatpush.msra.mxu0 0.0
    %258 = vmatpush.msra.mxu0 0.0
    %259 = vmatpush.msra.mxu0 0.0
    %260 = vmatpush.msra.mxu0 0.0
    %261 = vmatpush.msra.mxu0 0.0
    %262 = vmatpush.msra.mxu0 0.0
    %263 = vmatpush.msra.mxu0 0.0
    %264 = vmatpush.msra.mxu0 %v202
    %265 = vmatpush.msra.mxu0 %v201
    %266 = vmatpush.msra.mxu0 %v200
    %267 = vmatpush.msra.mxu0 %v199
    %268 = vmatmul.f32.gmra.mxu0 %v205
    %v269 = vpop.f32.mrf.mxu0
    %v270 = vadd.f32 0.0, %v269
    %271 = vmatmul.f32.gmra.mxu0 %v208
    %v272 = vpop.f32.mrf.mxu0
    %v273 = vadd.f32 0.0, %v272
    %274 = vmatmul.f32.gmra.mxu0 %v211
    %v275 = vpop.f32.mrf.mxu0
    %v276 = vadd.f32 0.0, %v275
    %277 = vmatmul.f32.gmra.mxu0 %v214
    %v278 = vpop.f32.mrf.mxu0
    %v279 = vadd.f32 0.0, %v278
    %280 = vmatmul.f32.gmra.mxu0 %v217
    %v281 = vpop.f32.mrf.mxu0
    %v282 = vadd.f32 0.0, %v281
    %283 = vmatmul.f32.gmra.mxu0 %v220
    %v284 = vpop.f32.mrf.mxu0
    %v285 = vadd.f32 0.0, %v284
    %286 = vmatmul.f32.gmra.mxu0 %v223
    %v287 = vpop.f32.mrf.mxu0
    %v288 = vadd.f32 0.0, %v287
    %289 = vmatmul.f32.gmra.mxu0 %v226
    %v290 = vpop.f32.mrf.mxu0
    %v291 = vadd.f32 0.0, %v290
    %292 = vmatmul.f32.gmra.mxu0 %v229
    %v293 = vpop.f32.mrf.mxu0
    %v294 = vadd.f32 0.0, %v293
    %295 = vmatmul.f32.gmra.mxu0 %v232
    %v296 = vpop.f32.mrf.mxu0
    %v297 = vadd.f32 0.0, %v296
    %298 = vmatmul.f32.gmra.mxu0 %v235
    %v299 = vpop.f32.mrf.mxu0
    %v300 = vadd.f32 0.0, %v299
    %301 = vmatmul.f32.gmra.mxu0 %v238
    %v302 = vpop.f32.mrf.mxu0
    %v303 = vadd.f32 0.0, %v302
    %304 = vmatmul.f32.gmra.mxu0 %v241
    %v305 = vpop.f32.mrf.mxu0
    %v306 = vadd.f32 0.0, %v305
    %307 = vmatmul.f32.gmra.mxu0 %v244
    %v308 = vpop.f32.mrf.mxu0
    %v309 = vadd.f32 0.0, %v308
    %310 = vmatmul.f32.gmra.mxu0 %v247
    %v311 = vpop.f32.mrf.mxu0
    %v312 = vadd.f32 0.0, %v311
    %313 = vmatmul.f32.gmra.mxu0 %v250
    %v314 = vpop.f32.mrf.mxu0
    %v315 = vadd.f32 0.0, %v314
    %316 = vdwg.mxu0
    %v317 = vtanh.pop %v270
    %v318 = vtanh.pop %v273
    %v319 = vtanh.pop %v276
    %v320 = vtanh.pop %v279
    %v321 = vtanh.pop %v282
    %v322 = vtanh.pop %v285
    %v323 = vtanh.pop %v288
    %v324 = vtanh.pop %v291
    %v325 = vtanh.pop %v294
    %v326 = vtanh.pop %v297
    %v327 = vtanh.pop %v300
    %v328 = vtanh.pop %v303
    %v329 = vtanh.pop %v306
    %v330 = vtanh.pop %v309
    %v331 = vtanh.pop %v312
    %v332 = vtanh.pop %v315
    %v333 = vld [vmem:[#allocation7] sm:$0x1]
    %v335 = vperm.slane %v333, 0
    %v337 = vmul.f32 %v317, %v335
    %v338 = vmul.f32 %v318, %v335
    %v339 = vmul.f32 %v319, %v335
    %v340 = vmul.f32 %v320, %v335
    %v341 = vmul.f32 %v321, %v335
    %v342 = vmul.f32 %v322, %v335
    %v343 = vmul.f32 %v323, %v335
    %v344 = vmul.f32 %v324, %v335
    %v345 = vmul.f32 %v325, %v335
    %v346 = vmul.f32 %v326, %v335
    %v347 = vmul.f32 %v327, %v335
    %v348 = vmul.f32 %v328, %v335
    %v349 = vmul.f32 %v329, %v335
    %v350 = vmul.f32 %v330, %v335
    %v351 = vmul.f32 %v331, %v335
    %v352 = vmul.f32 %v332, %v335
    %v353 = vsel %vm203, %v337, 0.0
    %354 = vadd.xlane.f32.xlu0 %v353
    %v355 = vpop.xlane.xlu0 %354
    %v356 = vsel %vm203, %v338, 0.0
    %357 = vadd.xlane.f32.xlu0 %v356
    %v358 = vpop.xlane.xlu0 %357
    %v359 = vsel %vm203, %v339, 0.0
    %360 = vadd.xlane.f32.xlu0 %v359
    %v361 = vpop.xlane.xlu0 %360
    %v362 = vsel %vm203, %v340, 0.0
    %363 = vadd.xlane.f32.xlu0 %v362
    %v364 = vpop.xlane.xlu0 %363
    %v365 = vsel %vm203, %v341, 0.0
    %366 = vadd.xlane.f32.xlu0 %v365
    %v367 = vpop.xlane.xlu0 %366
    %v368 = vsel %vm203, %v342, 0.0
    %369 = vadd.xlane.f32.xlu0 %v368
    %v370 = vpop.xlane.xlu0 %369
    %v371 = vsel %vm203, %v343, 0.0
    %372 = vadd.xlane.f32.xlu0 %v371
    %v373 = vpop.xlane.xlu0 %372
    %v374 = vsel %vm203, %v344, 0.0
    %375 = vadd.xlane.f32.xlu0 %v374
    %v376 = vpop.xlane.xlu0 %375
    %v377 = vsel %vm203, %v345, 0.0
    %378 = vadd.xlane.f32.xlu0 %v377
    %v379 = vpop.xlane.xlu0 %378
    %v380 = vsel %vm203, %v346, 0.0
    %381 = vadd.xlane.f32.xlu0 %v380
    %v382 = vpop.xlane.xlu0 %381
    %v383 = vsel %vm203, %v347, 0.0
    %384 = vadd.xlane.f32.xlu0 %v383
    %v385 = vpop.xlane.xlu0 %384
    %v386 = vsel %vm203, %v348, 0.0
    %387 = vadd.xlane.f32.xlu0 %v386
    %v388 = vpop.xlane.xlu0 %387
    %v389 = vsel %vm203, %v349, 0.0
    %390 = vadd.xlane.f32.xlu0 %v389
    %v391 = vpop.xlane.xlu0 %390
    %v392 = vsel %vm203, %v350, 0.0
    %393 = vadd.xlane.f32.xlu0 %v392
    %v394 = vpop.xlane.xlu0 %393
    %v395 = vsel %vm203, %v351, 0.0
    %396 = vadd.xlane.f32.xlu0 %v395
    %v397 = vpop.xlane.xlu0 %396
    %v398 = vsel %vm203, %v352, 0.0
    %399 = vadd.xlane.f32.xlu0 %v398
    %v400 = vpop.xlane.xlu0 %399
    %vm401 = vcmp.gt.f32.partialorder %v195, 0.5
    %vm402 = vcmp.gt.f32.partialorder %v196, 0.5
    %v419 = vlaneseq
    %v420 = vand.u32 %v419, 127
    %v421 = vperm.slane %v355, %v420
    %v422 = vperm.slane %v358, %v420
    %v423 = vperm.slane %v361, %v420
    %v424 = vperm.slane %v364, %v420
    %v425 = vperm.slane %v367, %v420
    %v426 = vperm.slane %v370, %v420
    %v427 = vperm.slane %v373, %v420
    %v428 = vperm.slane %v376, %v420
    %v429 = vperm.slane %v379, %v420
    %v430 = vperm.slane %v382, %v420
    %v431 = vperm.slane %v385, %v420
    %v432 = vperm.slane %v388, %v420
    %v433 = vperm.slane %v391, %v420
    %v434 = vperm.slane %v394, %v420
    %v435 = vperm.slane %v397, %v420
    %v436 = vperm.slane %v400, %v420
    %vm437 = vcmask 1041409
    %v438 = vsel %vm437, %v422, %v421
    %vm439 = vcmask 1042434
    %v440 = vsel %vm439, %v423, %v438
    %vm441 = vcmask 1043459
    %v442 = vsel %vm441, %v424, %v440
    %vm443 = vcmask 1044484
    %v444 = vsel %vm443, %v425, %v442
    %vm445 = vcmask 1045509
    %v446 = vsel %vm445, %v426, %v444
    %vm447 = vcmask 1046534
    %v448 = vsel %vm447, %v427, %v446
    %vm449 = vcmask 1047559
    %v450 = vsel %vm449, %v428, %v448
    %v451 = vsel %vm437, %v430, %v429
    %v452 = vsel %vm439, %v431, %v451
    %v453 = vsel %vm441, %v432, %v452
    %v454 = vsel %vm443, %v433, %v453
    %v455 = vsel %vm445, %v434, %v454
    %v456 = vsel %vm447, %v435, %v455
    %v457 = vsel %vm449, %v436, %v456
    %v460 = vsel %vm401, -1e+30, %v450
    %v461 = vsel %vm402, -1e+30, %v457
    %vm462 = vcmask 64512
    %v463 = vsel %vm462, %v460, -inf
    %464 = vmax.xlane.f32.xlu0 %v463
    %v465 = vpop.xlane.xlu0 %464
    %v466 = vsel %vm462, %v461, -inf
    %467 = vmax.xlane.f32.xlu0 %v466
    %v468 = vpop.xlane.xlu0 %467
    %v469 = vsub.f32 %v460, %v465
    %v470 = vsub.f32 %v461, %v468
    %v471 = vmul.f32 %v469, 1.442695
    %v472 = vpow.pop %v471
    %v473 = vmul.f32 %v470, 1.442695
    %v474 = vpow.pop %v473
    %v475 = vsel %vm462, %v472, 0.0
    %476 = vadd.xlane.f32.xlu0 %v475
    %v477 = vpop.xlane.xlu0 %476
    %v478 = vsel %vm462, %v474, 0.0
    %479 = vadd.xlane.f32.xlu0 %v478
    %v480 = vpop.xlane.xlu0 %479
    %v481 = vrcp.pop %v477
    %v482 = vmul.f32 %v477, %v481
    %v483 = vsub.f32 1.0, %v482
    %v484 = vmul.f32 %v481, %v483
    %v485 = vadd.f32 %v481, %v484
    %vm486 = vweird.f32 %v477
    %vm487 = vweird.f32 %v481
    %vm488 = vmor %vm486, %vm487
    %v489 = vsel %vm488, %v481, %v485
    %v490 = vand.u32 2147483647, %v477
    %vm491 = vcmp.eq.f32.partialorder %v490, 8.507059e+37
    %v492 = vand.u32 %v477, 2147483648
    %v493 = vor.u32 1.1754944e-38, %v492
    %v494 = vsel %vm491, %v493, %v489
    %v495 = vrcp.pop %v480
    %v496 = vmul.f32 %v480, %v495
    %v497 = vsub.f32 1.0, %v496
    %v498 = vmul.f32 %v495, %v497
    %v499 = vadd.f32 %v495, %v498
    %vm500 = vweird.f32 %v480
    %vm501 = vweird.f32 %v495
    %vm502 = vmor %vm500, %vm501
    %v503 = vsel %vm502, %v495, %v499
    %v504 = vand.u32 2147483647, %v480
    %vm505 = vcmp.eq.f32.partialorder %v504, 8.507059e+37
    %v506 = vand.u32 %v480, 2147483648
    %v507 = vor.u32 1.1754944e-38, %v506
    %v508 = vsel %vm505, %v507, %v503
    %v509 = vmul.f32 %v472, %v494
    %v510 = vmul.f32 %v474, %v508
    %511 = vst.msk [vmem:[%s13] sm:$0xff] %vm462, %v509
    %512 = vst.msk [vmem:[%s13 + $0x8] sm:$0xff] %vm462, %v510
    %v513 = vperm.slane %v509, 0
    %v514 = vlaneseq
    %v515 = vshrl.u32 %v514, 7
    %517 = vset.pattern.permute.xlu0 %v515
    %518 = vperm.xlu0 %517, %v513
    %v519 = vpop.permute.xlu0 %518
    %v520 = vperm.slane %v509, 1
    %v521 = vlaneseq
    %v522 = vshrl.u32 %v521, 7
    %524 = vset.pattern.permute.xlu0 %v522
    %525 = vperm.xlu0 %524, %v520
    %v526 = vpop.permute.xlu0 %525
    %v527 = vperm.slane %v509, 2
    %v528 = vlaneseq
    %v529 = vshrl.u32 %v528, 7
    %531 = vset.pattern.permute.xlu0 %v529
    %532 = vperm.xlu0 %531, %v527
    %v533 = vpop.permute.xlu0 %532
    %v534 = vperm.slane %v509, 3
    %v535 = vlaneseq
    %v536 = vshrl.u32 %v535, 7
    %538 = vset.pattern.permute.xlu0 %v536
    %539 = vperm.xlu0 %538, %v534
    %v540 = vpop.permute.xlu0 %539
    %v541 = vperm.slane %v509, 4
    %v542 = vlaneseq
    %v543 = vshrl.u32 %v542, 7
    %545 = vset.pattern.permute.xlu0 %v543
    %546 = vperm.xlu0 %545, %v541
    %v547 = vpop.permute.xlu0 %546
    %v548 = vperm.slane %v509, 5
    %v549 = vlaneseq
    %v550 = vshrl.u32 %v549, 7
    %552 = vset.pattern.permute.xlu0 %v550
    %553 = vperm.xlu0 %552, %v548
    %v554 = vpop.permute.xlu0 %553
    %v555 = vperm.slane %v509, 6
    %v556 = vlaneseq
    %v557 = vshrl.u32 %v556, 7
    %559 = vset.pattern.permute.xlu0 %v557
    %560 = vperm.xlu0 %559, %v555
    %v561 = vpop.permute.xlu0 %560
    %v562 = vperm.slane %v509, 7
    %v563 = vlaneseq
    %v564 = vshrl.u32 %v563, 7
    %566 = vset.pattern.permute.xlu0 %v564
    %567 = vperm.xlu0 %566, %v562
    %v568 = vpop.permute.xlu0 %567
    %v569 = vperm.slane %v510, 0
    %v570 = vlaneseq
    %v571 = vshrl.u32 %v570, 7
    %573 = vset.pattern.permute.xlu0 %v571
    %574 = vperm.xlu0 %573, %v569
    %v575 = vpop.permute.xlu0 %574
    %v576 = vperm.slane %v510, 1
    %v577 = vlaneseq
    %v578 = vshrl.u32 %v577, 7
    %580 = vset.pattern.permute.xlu0 %v578
    %581 = vperm.xlu0 %580, %v576
    %v582 = vpop.permute.xlu0 %581
    %v583 = vperm.slane %v510, 2
    %v584 = vlaneseq
    %v585 = vshrl.u32 %v584, 7
    %587 = vset.pattern.permute.xlu0 %v585
    %588 = vperm.xlu0 %587, %v583
    %v589 = vpop.permute.xlu0 %588
    %v590 = vperm.slane %v510, 3
    %v591 = vlaneseq
    %v592 = vshrl.u32 %v591, 7
    %594 = vset.pattern.permute.xlu0 %v592
    %595 = vperm.xlu0 %594, %v590
    %v596 = vpop.permute.xlu0 %595
    %v597 = vperm.slane %v510, 4
    %v598 = vlaneseq
    %v599 = vshrl.u32 %v598, 7
    %601 = vset.pattern.permute.xlu0 %v599
    %602 = vperm.xlu0 %601, %v597
    %v603 = vpop.permute.xlu0 %602
    %v604 = vperm.slane %v510, 5
    %v605 = vlaneseq
    %v606 = vshrl.u32 %v605, 7
    %608 = vset.pattern.permute.xlu0 %v606
    %609 = vperm.xlu0 %608, %v604
    %v610 = vpop.permute.xlu0 %609
    %v611 = vperm.slane %v510, 6
    %v612 = vlaneseq
    %v613 = vshrl.u32 %v612, 7
    %615 = vset.pattern.permute.xlu0 %v613
    %616 = vperm.xlu0 %615, %v611
    %v617 = vpop.permute.xlu0 %616
    %v618 = vperm.slane %v510, 7
    %v619 = vlaneseq
    %v620 = vshrl.u32 %v619, 7
    %622 = vset.pattern.permute.xlu0 %v620
    %623 = vperm.xlu0 %622, %v618
    %v624 = vpop.permute.xlu0 %623
    %v625 = vmul.f32 %v519, %v163
    %v626 = vmul.f32 %v526, %v164
    %v627 = vmul.f32 %v533, %v165
    %v628 = vmul.f32 %v540, %v166
    %v629 = vmul.f32 %v547, %v167
    %v630 = vmul.f32 %v554, %v168
    %v631 = vmul.f32 %v561, %v169
    %v632 = vmul.f32 %v568, %v170
    %v633 = vmul.f32 %v575, %v171
    %v634 = vmul.f32 %v582, %v172
    %v635 = vmul.f32 %v589, %v173
    %v636 = vmul.f32 %v596, %v174
    %v637 = vmul.f32 %v603, %v175
    %v638 = vmul.f32 %v610, %v176
    %v639 = vmul.f32 %v617, %v177
    %v640 = vmul.f32 %v624, %v178
    %v641 = vsel %vm203, %v625, 0.0
    %v642 = vrot.slane %v641, 4
    %v643 = vadd.f32 %v641, %v642
    %v644 = vrot.slane %v643, 2
    %v645 = vadd.f32 %v643, %v644
    %v646 = vrot.slane %v645, 1
    %v647 = vadd.f32 %v645, %v646
    %v648 = vsel %vm203, %v626, 0.0
    %v649 = vrot.slane %v648, 4
    %v650 = vadd.f32 %v648, %v649
    %v651 = vrot.slane %v650, 2
    %v652 = vadd.f32 %v650, %v651
    %v653 = vrot.slane %v652, 1
    %v654 = vadd.f32 %v652, %v653
    %v655 = vsel %vm203, %v627, 0.0
    %v656 = vrot.slane %v655, 4
    %v657 = vadd.f32 %v655, %v656
    %v658 = vrot.slane %v657, 2
    %v659 = vadd.f32 %v657, %v658
    %v660 = vrot.slane %v659, 1
    %v661 = vadd.f32 %v659, %v660
    %v662 = vsel %vm203, %v628, 0.0
    %v663 = vrot.slane %v662, 4
    %v664 = vadd.f32 %v662, %v663
    %v665 = vrot.slane %v664, 2
    %v666 = vadd.f32 %v664, %v665
    %v667 = vrot.slane %v666, 1
    %v668 = vadd.f32 %v666, %v667
    %v669 = vsel %vm203, %v629, 0.0
    %v670 = vrot.slane %v669, 4
    %v671 = vadd.f32 %v669, %v670
    %v672 = vrot.slane %v671, 2
    %v673 = vadd.f32 %v671, %v672
    %v674 = vrot.slane %v673, 1
    %v675 = vadd.f32 %v673, %v674
    %v676 = vsel %vm203, %v630, 0.0
    %v677 = vrot.slane %v676, 4
    %v678 = vadd.f32 %v676, %v677
    %v679 = vrot.slane %v678, 2
    %v680 = vadd.f32 %v678, %v679
    %v681 = vrot.slane %v680, 1
    %v682 = vadd.f32 %v680, %v681
    %v683 = vsel %vm203, %v631, 0.0
    %v684 = vrot.slane %v683, 4
    %v685 = vadd.f32 %v683, %v684
    %v686 = vrot.slane %v685, 2
    %v687 = vadd.f32 %v685, %v686
    %v688 = vrot.slane %v687, 1
    %v689 = vadd.f32 %v687, %v688
    %v690 = vsel %vm203, %v632, 0.0
    %v691 = vrot.slane %v690, 4
    %v692 = vadd.f32 %v690, %v691
    %v693 = vrot.slane %v692, 2
    %v694 = vadd.f32 %v692, %v693
    %v695 = vrot.slane %v694, 1
    %v696 = vadd.f32 %v694, %v695
    %v697 = vsel %vm203, %v633, 0.0
    %v698 = vrot.slane %v697, 4
    %v699 = vadd.f32 %v697, %v698
    %v700 = vrot.slane %v699, 2
    %v701 = vadd.f32 %v699, %v700
    %v702 = vrot.slane %v701, 1
    %v703 = vadd.f32 %v701, %v702
    %v704 = vsel %vm203, %v634, 0.0
    %v705 = vrot.slane %v704, 4
    %v706 = vadd.f32 %v704, %v705
    %v707 = vrot.slane %v706, 2
    %v708 = vadd.f32 %v706, %v707
    %v709 = vrot.slane %v708, 1
    %v710 = vadd.f32 %v708, %v709
    %v711 = vsel %vm203, %v635, 0.0
    %v712 = vrot.slane %v711, 4
    %v713 = vadd.f32 %v711, %v712
    %v714 = vrot.slane %v713, 2
    %v715 = vadd.f32 %v713, %v714
    %v716 = vrot.slane %v715, 1
    %v717 = vadd.f32 %v715, %v716
    %v718 = vsel %vm203, %v636, 0.0
    %v719 = vrot.slane %v718, 4
    %v720 = vadd.f32 %v718, %v719
    %v721 = vrot.slane %v720, 2
    %v722 = vadd.f32 %v720, %v721
    %v723 = vrot.slane %v722, 1
    %v724 = vadd.f32 %v722, %v723
    %v725 = vsel %vm203, %v637, 0.0
    %v726 = vrot.slane %v725, 4
    %v727 = vadd.f32 %v725, %v726
    %v728 = vrot.slane %v727, 2
    %v729 = vadd.f32 %v727, %v728
    %v730 = vrot.slane %v729, 1
    %v731 = vadd.f32 %v729, %v730
    %v732 = vsel %vm203, %v638, 0.0
    %v733 = vrot.slane %v732, 4
    %v734 = vadd.f32 %v732, %v733
    %v735 = vrot.slane %v734, 2
    %v736 = vadd.f32 %v734, %v735
    %v737 = vrot.slane %v736, 1
    %v738 = vadd.f32 %v736, %v737
    %v739 = vsel %vm203, %v639, 0.0
    %v740 = vrot.slane %v739, 4
    %v741 = vadd.f32 %v739, %v740
    %v742 = vrot.slane %v741, 2
    %v743 = vadd.f32 %v741, %v742
    %v744 = vrot.slane %v743, 1
    %v745 = vadd.f32 %v743, %v744
    %v746 = vsel %vm203, %v640, 0.0
    %v747 = vrot.slane %v746, 4
    %v748 = vadd.f32 %v746, %v747
    %v749 = vrot.slane %v748, 2
    %v750 = vadd.f32 %v748, %v749
    %v751 = vrot.slane %v750, 1
    %v752 = vadd.f32 %v750, %v751
    %v753 = vld [vmem:[#allocation8] sm:$0xff]
    %v754 = vld [vmem:[#allocation8 + $0x8] sm:$0xff]
    %v755 = vld [vmem:[#allocation8 + $0x10] sm:$0xff]
    %v756 = vld [vmem:[#allocation8 + $0x18] sm:$0xff]
    %v757 = vld [vmem:[#allocation10] sm:$0x1]
    %v759 = vperm.slane %v757, 0
    %v777 = vsel %vm437, %v654, %v647
    %v778 = vsel %vm439, %v661, %v777
    %v779 = vsel %vm441, %v668, %v778
    %v780 = vsel %vm443, %v675, %v779
    %v781 = vsel %vm445, %v682, %v780
    %v782 = vsel %vm447, %v689, %v781
    %v783 = vsel %vm449, %v696, %v782
    %v784 = vsel %vm437, %v710, %v703
    %v785 = vsel %vm439, %v717, %v784
    %v786 = vsel %vm441, %v724, %v785
    %v787 = vsel %vm443, %v731, %v786
    %v788 = vsel %vm445, %v738, %v787
    %v789 = vsel %vm447, %v745, %v788
    %v790 = vsel %vm449, %v752, %v789
    %v791 = vsel %vm203, %v783, 0
    %v793 = vsel %vm203, %v790, 0
    %795 = vmatpush.msra.mxu0 0.0
    %796 = vmatpush.msra.mxu0 0.0
    %797 = vmatpush.msra.mxu0 0.0
    %798 = vmatpush.msra.mxu0 0.0
    %799 = vmatpush.msra.mxu0 0.0
    %800 = vmatpush.msra.mxu0 0.0
    %801 = vmatpush.msra.mxu0 0.0
    %802 = vmatpush.msra.mxu0 0.0
    %803 = vmatpush.msra.mxu0 0.0
    %804 = vmatpush.msra.mxu0 0.0
    %805 = vmatpush.msra.mxu0 0.0
    %806 = vmatpush.msra.mxu0 0.0
    %807 = vmatpush.msra.mxu0 %v756
    %808 = vmatpush.msra.mxu0 %v755
    %809 = vmatpush.msra.mxu0 %v754
    %810 = vmatpush.msra.mxu0 %v753
    %811 = vmatmul.f32.gmra.mxu0 %v791
    %v812 = vpop.f32.mrf.mxu0
    %v813 = vadd.f32 %v759, %v812
    %814 = vmatmul.f32.gmra.mxu0 %v793
    %v815 = vpop.f32.mrf.mxu0
    %v816 = vadd.f32 %v759, %v815
    %817 = vdwg.mxu0
    %v818 = vld [vmem:[#allocation14] sm:$0xf]
    %v819 = vsub.s32 %v197, 1
    %v820 = vsub.s32 %v198, 1
    %821 = vset.pattern.permute.xlu0 0
    %822 = vperm.xlu0 %821, %v819
    %v823 = vpop.permute.xlu0 %822
    %824 = vset.pattern.permute.xlu0 0
    %825 = vperm.xlu0 %824, %v820
    %v826 = vpop.permute.xlu0 %825
    %vm827 = vcmp.eq.s32.totalorder %v420, %v823
    %vm828 = vcmp.eq.s32.totalorder %v420, %v826
    %v829 = vsel %vm827, 1, 0
    %v830 = vsel %vm828, 1, 0
    %v831 = vcvt.s32.f32 %v829
    %v832 = vcvt.s32.f32 %v830
    %v833 = vperm.slane %v831, 0
    %v834 = vlaneseq
    %v835 = vshrl.u32 %v834, 7
    %837 = vset.pattern.permute.xlu0 %v835
    %838 = vperm.xlu0 %837, %v833
    %v839 = vpop.permute.xlu0 %838
    %v840 = vperm.slane %v831, 1
    %v841 = vlaneseq
    %v842 = vshrl.u32 %v841, 7
    %844 = vset.pattern.permute.xlu0 %v842
    %845 = vperm.xlu0 %844, %v840
    %v846 = vpop.permute.xlu0 %845
    %v847 = vperm.slane %v831, 2
    %v848 = vlaneseq
    %v849 = vshrl.u32 %v848, 7
    %851 = vset.pattern.permute.xlu0 %v849
    %852 = vperm.xlu0 %851, %v847
    %v853 = vpop.permute.xlu0 %852
    %v854 = vperm.slane %v831, 3
    %v855 = vlaneseq
    %v856 = vshrl.u32 %v855, 7
    %858 = vset.pattern.permute.xlu0 %v856
    %859 = vperm.xlu0 %858, %v854
    %v860 = vpop.permute.xlu0 %859
    %v861 = vperm.slane %v831, 4
    %v862 = vlaneseq
    %v863 = vshrl.u32 %v862, 7
    %865 = vset.pattern.permute.xlu0 %v863
    %866 = vperm.xlu0 %865, %v861
    %v867 = vpop.permute.xlu0 %866
    %v868 = vperm.slane %v831, 5
    %v869 = vlaneseq
    %v870 = vshrl.u32 %v869, 7
    %872 = vset.pattern.permute.xlu0 %v870
    %873 = vperm.xlu0 %872, %v868
    %v874 = vpop.permute.xlu0 %873
    %v875 = vperm.slane %v831, 6
    %v876 = vlaneseq
    %v877 = vshrl.u32 %v876, 7
    %879 = vset.pattern.permute.xlu0 %v877
    %880 = vperm.xlu0 %879, %v875
    %v881 = vpop.permute.xlu0 %880
    %v882 = vperm.slane %v831, 7
    %v883 = vlaneseq
    %v884 = vshrl.u32 %v883, 7
    %886 = vset.pattern.permute.xlu0 %v884
    %887 = vperm.xlu0 %886, %v882
    %v888 = vpop.permute.xlu0 %887
    %v889 = vperm.slane %v832, 0
    %v890 = vlaneseq
    %v891 = vshrl.u32 %v890, 7
    %893 = vset.pattern.permute.xlu0 %v891
    %894 = vperm.xlu0 %893, %v889
    %v895 = vpop.permute.xlu0 %894
    %v896 = vperm.slane %v832, 1
    %v897 = vlaneseq
    %v898 = vshrl.u32 %v897, 7
    %900 = vset.pattern.permute.xlu0 %v898
    %901 = vperm.xlu0 %900, %v896
    %v902 = vpop.permute.xlu0 %901
    %v903 = vperm.slane %v832, 2
    %v904 = vlaneseq
    %v905 = vshrl.u32 %v904, 7
    %907 = vset.pattern.permute.xlu0 %v905
    %908 = vperm.xlu0 %907, %v903
    %v909 = vpop.permute.xlu0 %908
    %v910 = vperm.slane %v832, 3
    %v911 = vlaneseq
    %v912 = vshrl.u32 %v911, 7
    %914 = vset.pattern.permute.xlu0 %v912
    %915 = vperm.xlu0 %914, %v910
    %v916 = vpop.permute.xlu0 %915
    %v917 = vperm.slane %v832, 4
    %v918 = vlaneseq
    %v919 = vshrl.u32 %v918, 7
    %921 = vset.pattern.permute.xlu0 %v919
    %922 = vperm.xlu0 %921, %v917
    %v923 = vpop.permute.xlu0 %922
    %v924 = vperm.slane %v832, 5
    %v925 = vlaneseq
    %v926 = vshrl.u32 %v925, 7
    %928 = vset.pattern.permute.xlu0 %v926
    %929 = vperm.xlu0 %928, %v924
    %v930 = vpop.permute.xlu0 %929
    %v931 = vperm.slane %v832, 6
    %v932 = vlaneseq
    %v933 = vshrl.u32 %v932, 7
    %935 = vset.pattern.permute.xlu0 %v933
    %936 = vperm.xlu0 %935, %v931
    %v937 = vpop.permute.xlu0 %936
    %v938 = vperm.slane %v832, 7
    %v939 = vlaneseq
    %v940 = vshrl.u32 %v939, 7
    %942 = vset.pattern.permute.xlu0 %v940
    %943 = vperm.xlu0 %942, %v938
    %v944 = vpop.permute.xlu0 %943
    %v945 = vmul.f32 %v839, %v179
    %v946 = vmul.f32 %v846, %v180
    %v947 = vmul.f32 %v853, %v181
    %v948 = vmul.f32 %v860, %v182
    %v949 = vmul.f32 %v867, %v183
    %v950 = vmul.f32 %v874, %v184
    %v951 = vmul.f32 %v881, %v185
    %v952 = vmul.f32 %v888, %v186
    %v953 = vmul.f32 %v895, %v187
    %v954 = vmul.f32 %v902, %v188
    %v955 = vmul.f32 %v909, %v189
    %v956 = vmul.f32 %v916, %v190
    %v957 = vmul.f32 %v923, %v191
    %v958 = vmul.f32 %v930, %v192
    %v959 = vmul.f32 %v937, %v193
    %v960 = vmul.f32 %v944, %v194
    %v961 = vsel %vm203, %v945, 0.0
    %v962 = vrot.slane %v961, 4
    %v963 = vadd.f32 %v961, %v962
    %v964 = vrot.slane %v963, 2
    %v965 = vadd.f32 %v963, %v964
    %v966 = vrot.slane %v965, 1
    %v967 = vadd.f32 %v965, %v966
    %v968 = vsel %vm203, %v946, 0.0
    %v969 = vrot.slane %v968, 4
    %v970 = vadd.f32 %v968, %v969
    %v971 = vrot.slane %v970, 2
    %v972 = vadd.f32 %v970, %v971
    %v973 = vrot.slane %v972, 1
    %v974 = vadd.f32 %v972, %v973
    %v975 = vsel %vm203, %v947, 0.0
    %v976 = vrot.slane %v975, 4
    %v977 = vadd.f32 %v975, %v976
    %v978 = vrot.slane %v977, 2
    %v979 = vadd.f32 %v977, %v978
    %v980 = vrot.slane %v979, 1
    %v981 = vadd.f32 %v979, %v980
    %v982 = vsel %vm203, %v948, 0.0
    %v983 = vrot.slane %v982, 4
    %v984 = vadd.f32 %v982, %v983
    %v985 = vrot.slane %v984, 2
    %v986 = vadd.f32 %v984, %v985
    %v987 = vrot.slane %v986, 1
    %v988 = vadd.f32 %v986, %v987
    %v989 = vsel %vm203, %v949, 0.0
    %v990 = vrot.slane %v989, 4
    %v991 = vadd.f32 %v989, %v990
    %v992 = vrot.slane %v991, 2
    %v993 = vadd.f32 %v991, %v992
    %v994 = vrot.slane %v993, 1
    %v995 = vadd.f32 %v993, %v994
    %v996 = vsel %vm203, %v950, 0.0
    %v997 = vrot.slane %v996, 4
    %v998 = vadd.f32 %v996, %v997
    %v999 = vrot.slane %v998, 2
    %v1000 = vadd.f32 %v998, %v999
    %v1001 = vrot.slane %v1000, 1
    %v1002 = vadd.f32 %v1000, %v1001
    %v1003 = vsel %vm203, %v951, 0.0
    %v1004 = vrot.slane %v1003, 4
    %v1005 = vadd.f32 %v1003, %v1004
    %v1006 = vrot.slane %v1005, 2
    %v1007 = vadd.f32 %v1005, %v1006
    %v1008 = vrot.slane %v1007, 1
    %v1009 = vadd.f32 %v1007, %v1008
    %v1010 = vsel %vm203, %v952, 0.0
    %v1011 = vrot.slane %v1010, 4
    %v1012 = vadd.f32 %v1010, %v1011
    %v1013 = vrot.slane %v1012, 2
    %v1014 = vadd.f32 %v1012, %v1013
    %v1015 = vrot.slane %v1014, 1
    %v1016 = vadd.f32 %v1014, %v1015
    %v1017 = vsel %vm203, %v953, 0.0
    %v1018 = vrot.slane %v1017, 4
    %v1019 = vadd.f32 %v1017, %v1018
    %v1020 = vrot.slane %v1019, 2
    %v1021 = vadd.f32 %v1019, %v1020
    %v1022 = vrot.slane %v1021, 1
    %v1023 = vadd.f32 %v1021, %v1022
    %v1024 = vsel %vm203, %v954, 0.0
    %v1025 = vrot.slane %v1024, 4
    %v1026 = vadd.f32 %v1024, %v1025
    %v1027 = vrot.slane %v1026, 2
    %v1028 = vadd.f32 %v1026, %v1027
    %v1029 = vrot.slane %v1028, 1
    %v1030 = vadd.f32 %v1028, %v1029
    %v1031 = vsel %vm203, %v955, 0.0
    %v1032 = vrot.slane %v1031, 4
    %v1033 = vadd.f32 %v1031, %v1032
    %v1034 = vrot.slane %v1033, 2
    %v1035 = vadd.f32 %v1033, %v1034
    %v1036 = vrot.slane %v1035, 1
    %v1037 = vadd.f32 %v1035, %v1036
    %v1038 = vsel %vm203, %v956, 0.0
    %v1039 = vrot.slane %v1038, 4
    %v1040 = vadd.f32 %v1038, %v1039
    %v1041 = vrot.slane %v1040, 2
    %v1042 = vadd.f32 %v1040, %v1041
    %v1043 = vrot.slane %v1042, 1
    %v1044 = vadd.f32 %v1042, %v1043
    %v1045 = vsel %vm203, %v957, 0.0
    %v1046 = vrot.slane %v1045, 4
    %v1047 = vadd.f32 %v1045, %v1046
    %v1048 = vrot.slane %v1047, 2
    %v1049 = vadd.f32 %v1047, %v1048
    %v1050 = vrot.slane %v1049, 1
    %v1051 = vadd.f32 %v1049, %v1050
    %v1052 = vsel %vm203, %v958, 0.0
    %v1053 = vrot.slane %v1052, 4
    %v1054 = vadd.f32 %v1052, %v1053
    %v1055 = vrot.slane %v1054, 2
    %v1056 = vadd.f32 %v1054, %v1055
    %v1057 = vrot.slane %v1056, 1
    %v1058 = vadd.f32 %v1056, %v1057
    %v1059 = vsel %vm203, %v959, 0.0
    %v1060 = vrot.slane %v1059, 4
    %v1061 = vadd.f32 %v1059, %v1060
    %v1062 = vrot.slane %v1061, 2
    %v1063 = vadd.f32 %v1061, %v1062
    %v1064 = vrot.slane %v1063, 1
    %v1065 = vadd.f32 %v1063, %v1064
    %v1066 = vsel %vm203, %v960, 0.0
    %v1067 = vrot.slane %v1066, 4
    %v1068 = vadd.f32 %v1066, %v1067
    %v1069 = vrot.slane %v1068, 2
    %v1070 = vadd.f32 %v1068, %v1069
    %v1071 = vrot.slane %v1070, 1
    %v1072 = vadd.f32 %v1070, %v1071
    %v1073 = vld [vmem:[#allocation13] sm:$0xff]
    %v1074 = vld [vmem:[#allocation13 + $0x8] sm:$0xff]
    %v1075 = vld [vmem:[#allocation13 + $0x10] sm:$0xff]
    %v1076 = vld [vmem:[#allocation13 + $0x18] sm:$0xff]
    %v1077 = vperm.slane %v818, 2
    %v1094 = vsel %vm437, %v974, %v967
    %v1095 = vsel %vm439, %v981, %v1094
    %v1096 = vsel %vm441, %v988, %v1095
    %v1097 = vsel %vm443, %v995, %v1096
    %v1098 = vsel %vm445, %v1002, %v1097
    %v1099 = vsel %vm447, %v1009, %v1098
    %v1100 = vsel %vm449, %v1016, %v1099
    %v1101 = vsel %vm437, %v1030, %v1023
    %v1102 = vsel %vm439, %v1037, %v1101
    %v1103 = vsel %vm441, %v1044, %v1102
    %v1104 = vsel %vm443, %v1051, %v1103
    %v1105 = vsel %vm445, %v1058, %v1104
    %v1106 = vsel %vm447, %v1065, %v1105
    %v1107 = vsel %vm449, %v1072, %v1106
    %v1108 = vsel %vm203, %v1100, 0
    %v1110 = vsel %vm203, %v1107, 0
    %1112 = vmatpush.msra.mxu0 0.0
    %1113 = vmatpush.msra.mxu0 0.0
    %1114 = vmatpush.msra.mxu0 0.0
    %1115 = vmatpush.msra.mxu0 0.0
    %1116 = vmatpush.msra.mxu0 0.0
    %1117 = vmatpush.msra.mxu0 0.0
    %1118 = vmatpush.msra.mxu0 0.0
    %1119 = vmatpush.msra.mxu0 0.0
    %1120 = vmatpush.msra.mxu0 0.0
    %1121 = vmatpush.msra.mxu0 0.0
    %1122 = vmatpush.msra.mxu0 0.0
    %1123 = vmatpush.msra.mxu0 0.0
    %1124 = vmatpush.msra.mxu0 %v1076
    %1125 = vmatpush.msra.mxu0 %v1075
    %1126 = vmatpush.msra.mxu0 %v1074
    %1127 = vmatpush.msra.mxu0 %v1073
    %1128 = vmatmul.f32.gmra.mxu0 %v1108
    %v1129 = vpop.f32.mrf.mxu0
    %v1130 = vadd.f32 %v1077, %v1129
    %1131 = vmatmul.f32.gmra.mxu0 %v1110
    %v1132 = vpop.f32.mrf.mxu0
    %v1133 = vadd.f32 %v1077, %v1132
    %1134 = vdwg.mxu0
    %v1135 = vperm.slane %v818, 3
    %v1136 = vadd.f32 %v1130, %v1135
    %v1137 = vadd.f32 %v1133, %v1135
    %v1138 = vxor.u32 %v1136, 2147483648
    %v1139 = vxor.u32 %v1137, 2147483648
    %v1140 = vmul.f32 %v1138, 1.442695
    %v1141 = vpow.pop %v1140
    %v1142 = vmul.f32 %v1139, 1.442695
    %v1143 = vpow.pop %v1142
    %v1144 = vadd.f32 %v1141, 1.0
    %v1145 = vadd.f32 %v1143, 1.0
    %v1146 = vrcp.pop %v1144
    %v1147 = vmul.f32 %v1144, %v1146
    %v1148 = vsub.f32 1.0, %v1147
    %v1149 = vmul.f32 %v1146, %v1148
    %v1150 = vadd.f32 %v1146, %v1149
    %vm1151 = vweird.f32 %v1144
    %vm1152 = vweird.f32 %v1146
    %vm1153 = vmor %vm1151, %vm1152
    %v1154 = vsel %vm1153, %v1146, %v1150
    %v1155 = vand.u32 2147483647, %v1144
    %vm1156 = vcmp.eq.f32.partialorder %v1155, 8.507059e+37
    %v1157 = vand.u32 %v1144, 2147483648
    %v1158 = vor.u32 1.1754944e-38, %v1157
    %v1159 = vsel %vm1156, %v1158, %v1154
    %v1160 = vmul.f32 1.0, %v1159
    %v1161 = vrcp.pop %v1145
    %v1162 = vmul.f32 %v1145, %v1161
    %v1163 = vsub.f32 1.0, %v1162
    %v1164 = vmul.f32 %v1161, %v1163
    %v1165 = vadd.f32 %v1161, %v1164
    %vm1166 = vweird.f32 %v1145
    %vm1167 = vweird.f32 %v1161
    %vm1168 = vmor %vm1166, %vm1167
    %v1169 = vsel %vm1168, %v1161, %v1165
    %v1170 = vand.u32 2147483647, %v1145
    %vm1171 = vcmp.eq.f32.partialorder %v1170, 8.507059e+37
    %v1172 = vand.u32 %v1145, 2147483648
    %v1173 = vor.u32 1.1754944e-38, %v1172
    %v1174 = vsel %vm1171, %v1173, %v1169
    %v1175 = vmul.f32 1.0, %v1174
    %1177 = vrot.lane.b32.xlu0 %v1135, 96
    %v1178 = vpop.permute.xlu0 %1177
    %v1180 = vmul.f32 %v1160, %v1178
    %v1181 = vmul.f32 %v1175, %v1178
    %1184 = vrot.lane.b32.xlu0 %v1180, 32
    %v1185 = vpop.permute.xlu0 %1184
    %1186 = vrot.lane.b32.xlu0 %v1181, 32
    %v1187 = vpop.permute.xlu0 %1186
    %v1190 = vadd.f32 %v1130, %v1185
    %v1191 = vadd.f32 %v1133, %v1187
    %v1192 = vtanh.pop %v1190
    %v1193 = vtanh.pop %v1191
    %v1194 = vsub.f32 1.0, %v1160
    %v1195 = vsub.f32 1.0, %v1175
    %1198 = vrot.lane.b32.xlu0 %v1192, 112
    %v1199 = vpop.permute.xlu0 %1198
    %1200 = vrot.lane.b32.xlu0 %v1193, 112
    %v1201 = vpop.permute.xlu0 %1200
    %v1204 = vmul.f32 %v1194, %v1199
    %v1205 = vmul.f32 %v1195, %v1201
    %v1206 = vld [vmem:[#allocation11] sm:$0xff]
    %v1207 = vld [vmem:[#allocation11 + $0x8] sm:$0xff]
    %v1208 = vld [vmem:[#allocation11 + $0x10] sm:$0xff]
    %v1209 = vld [vmem:[#allocation11 + $0x18] sm:$0xff]
    %v1210 = vperm.slane %v818, 0
    %v1212 = vsel %vm203, %v179, 0
    %v1215 = vsel %vm203, %v180, 0
    %v1218 = vsel %vm203, %v181, 0
    %v1221 = vsel %vm203, %v182, 0
    %v1224 = vsel %vm203, %v183, 0
    %v1227 = vsel %vm203, %v184, 0
    %v1230 = vsel %vm203, %v185, 0
    %v1233 = vsel %vm203, %v186, 0
    %v1236 = vsel %vm203, %v187, 0
    %v1239 = vsel %vm203, %v188, 0
    %v1242 = vsel %vm203, %v189, 0
    %v1245 = vsel %vm203, %v190, 0
    %v1248 = vsel %vm203, %v191, 0
    %v1251 = vsel %vm203, %v192, 0
    %v1254 = vsel %vm203, %v193, 0
    %v1257 = vsel %vm203, %v194, 0
    %1259 = vmatpush.msra.mxu0 0.0
    %1260 = vmatpush.msra.mxu0 0.0
    %1261 = vmatpush.msra.mxu0 0.0
    %1262 = vmatpush.msra.mxu0 0.0
    %1263 = vmatpush.msra.mxu0 0.0
    %1264 = vmatpush.msra.mxu0 0.0
    %1265 = vmatpush.msra.mxu0 0.0
    %1266 = vmatpush.msra.mxu0 0.0
    %1267 = vmatpush.msra.mxu0 0.0
    %1268 = vmatpush.msra.mxu0 0.0
    %1269 = vmatpush.msra.mxu0 0.0
    %1270 = vmatpush.msra.mxu0 0.0
    %1271 = vmatpush.msra.mxu0 %v1209
    %1272 = vmatpush.msra.mxu0 %v1208
    %1273 = vmatpush.msra.mxu0 %v1207
    %1274 = vmatpush.msra.mxu0 %v1206
    %1275 = vmatmul.f32.gmra.mxu0 %v1212
    %v1276 = vpop.f32.mrf.mxu0
    %v1277 = vadd.f32 %v1210, %v1276
    %1278 = vmatmul.f32.gmra.mxu0 %v1215
    %v1279 = vpop.f32.mrf.mxu0
    %v1280 = vadd.f32 %v1210, %v1279
    %1281 = vmatmul.f32.gmra.mxu0 %v1218
    %v1282 = vpop.f32.mrf.mxu0
    %v1283 = vadd.f32 %v1210, %v1282
    %1284 = vmatmul.f32.gmra.mxu0 %v1221
    %v1285 = vpop.f32.mrf.mxu0
    %v1286 = vadd.f32 %v1210, %v1285
    %1287 = vmatmul.f32.gmra.mxu0 %v1224
    %v1288 = vpop.f32.mrf.mxu0
    %v1289 = vadd.f32 %v1210, %v1288
    %1290 = vmatmul.f32.gmra.mxu0 %v1227
    %v1291 = vpop.f32.mrf.mxu0
    %v1292 = vadd.f32 %v1210, %v1291
    %1293 = vmatmul.f32.gmra.mxu0 %v1230
    %v1294 = vpop.f32.mrf.mxu0
    %v1295 = vadd.f32 %v1210, %v1294
    %1296 = vmatmul.f32.gmra.mxu0 %v1233
    %v1297 = vpop.f32.mrf.mxu0
    %v1298 = vadd.f32 %v1210, %v1297
    %1299 = vmatmul.f32.gmra.mxu0 %v1236
    %v1300 = vpop.f32.mrf.mxu0
    %v1301 = vadd.f32 %v1210, %v1300
    %1302 = vmatmul.f32.gmra.mxu0 %v1239
    %v1303 = vpop.f32.mrf.mxu0
    %v1304 = vadd.f32 %v1210, %v1303
    %1305 = vmatmul.f32.gmra.mxu0 %v1242
    %v1306 = vpop.f32.mrf.mxu0
    %v1307 = vadd.f32 %v1210, %v1306
    %1308 = vmatmul.f32.gmra.mxu0 %v1245
    %v1309 = vpop.f32.mrf.mxu0
    %v1310 = vadd.f32 %v1210, %v1309
    %1311 = vmatmul.f32.gmra.mxu0 %v1248
    %v1312 = vpop.f32.mrf.mxu0
    %v1313 = vadd.f32 %v1210, %v1312
    %1314 = vmatmul.f32.gmra.mxu0 %v1251
    %v1315 = vpop.f32.mrf.mxu0
    %v1316 = vadd.f32 %v1210, %v1315
    %1317 = vmatmul.f32.gmra.mxu0 %v1254
    %v1318 = vpop.f32.mrf.mxu0
    %v1319 = vadd.f32 %v1210, %v1318
    %1320 = vmatmul.f32.gmra.mxu0 %v1257
    %v1321 = vpop.f32.mrf.mxu0
    %v1322 = vadd.f32 %v1210, %v1321
    %1323 = vdwg.mxu0
    %v1324 = vld [vmem:[%s9] sm:$0xff]
    %v1325 = vld [vmem:[%s9 + $0x8] sm:$0xff]
    %v1326 = vperm.slane %v818, 1
    %vm1327 = vcmask 130048
    %v1329 = vsel %vm1327, 0.0, 0
    %1331 = vmatpush.msra.mxu0 0.0
    %1332 = vmatpush.msra.mxu0 0.0
    %1333 = vmatpush.msra.mxu0 0.0
    %1334 = vmatpush.msra.mxu0 0.0
    %1335 = vmatpush.msra.mxu0 0.0
    %1336 = vmatpush.msra.mxu0 0.0
    %1337 = vmatpush.msra.mxu0 0.0
    %1338 = vmatpush.msra.mxu0 0.0
    %1339 = vmatpush.msra.mxu0 0.0
    %1340 = vmatpush.msra.mxu0 0.0
    %1341 = vmatpush.msra.mxu0 0.0
    %1342 = vmatpush.msra.mxu0 0.0
    %1343 = vmatpush.msra.mxu0 0.0
    %1344 = vmatpush.msra.mxu0 0.0
    %1345 = vmatpush.msra.mxu0 %v1325
    %1346 = vmatpush.msra.mxu0 %v1324
    %1347 = vmatmul.f32.gmra.mxu0 %v1329
    %v1348 = vpop.f32.mrf.mxu0
    %v1349 = vadd.f32 %v1326, %v1348
    %1350 = vmatmul.f32.gmra.mxu0 %v1329
    %v1351 = vpop.f32.mrf.mxu0
    %v1352 = vadd.f32 %v1326, %v1351
    %1353 = vdwg.mxu0
    %v1356 = vrot.slane %v1349, 1
    %v1357 = vrot.slane %v1349, 2
    %v1358 = vrot.slane %v1349, 3
    %v1359 = vrot.slane %v1349, 4
    %v1360 = vrot.slane %v1349, 5
    %v1361 = vrot.slane %v1349, 6
    %v1362 = vrot.slane %v1349, 7
    %v1363 = vrot.slane %v1352, 1
    %v1364 = vrot.slane %v1352, 2
    %v1365 = vrot.slane %v1352, 3
    %v1366 = vrot.slane %v1352, 4
    %v1367 = vrot.slane %v1352, 5
    %v1368 = vrot.slane %v1352, 6
    %v1369 = vrot.slane %v1352, 7
    %v1386 = vadd.f32 %v1277, %v1349
    %v1387 = vadd.f32 %v1280, %v1356
    %v1388 = vadd.f32 %v1283, %v1357
    %v1389 = vadd.f32 %v1286, %v1358
    %v1390 = vadd.f32 %v1289, %v1359
    %v1391 = vadd.f32 %v1292, %v1360
    %v1392 = vadd.f32 %v1295, %v1361
    %v1393 = vadd.f32 %v1298, %v1362
    %v1394 = vadd.f32 %v1301, %v1352
    %v1395 = vadd.f32 %v1304, %v1363
    %v1396 = vadd.f32 %v1307, %v1364
    %v1397 = vadd.f32 %v1310, %v1365
    %v1398 = vadd.f32 %v1313, %v1366
    %v1399 = vadd.f32 %v1316, %v1367
    %v1400 = vadd.f32 %v1319, %v1368
    %v1401 = vadd.f32 %v1322, %v1369
    %v1402 = vxor.u32 %v1386, 2147483648
    %v1403 = vxor.u32 %v1387, 2147483648
    %v1404 = vxor.u32 %v1388, 2147483648
    %v1405 = vxor.u32 %v1389, 2147483648
    %v1406 = vxor.u32 %v1390, 2147483648
    %v1407 = vxor.u32 %v1391, 2147483648
    %v1408 = vxor.u32 %v1392, 2147483648
    %v1409 = vxor.u32 %v1393, 2147483648
    %v1410 = vxor.u32 %v1394, 2147483648
    %v1411 = vxor.u32 %v1395, 2147483648
    %v1412 = vxor.u32 %v1396, 2147483648
    %v1413 = vxor.u32 %v1397, 2147483648
    %v1414 = vxor.u32 %v1398, 2147483648
    %v1415 = vxor.u32 %v1399, 2147483648
    %v1416 = vxor.u32 %v1400, 2147483648
    %v1417 = vxor.u32 %v1401, 2147483648
    %v1418 = vmul.f32 %v1402, 1.442695
    %v1419 = vpow.pop %v1418
    %v1420 = vmul.f32 %v1403, 1.442695
    %v1421 = vpow.pop %v1420
    %v1422 = vmul.f32 %v1404, 1.442695
    %v1423 = vpow.pop %v1422
    %v1424 = vmul.f32 %v1405, 1.442695
    %v1425 = vpow.pop %v1424
    %v1426 = vmul.f32 %v1406, 1.442695
    %v1427 = vpow.pop %v1426
    %v1428 = vmul.f32 %v1407, 1.442695
    %v1429 = vpow.pop %v1428
    %v1430 = vmul.f32 %v1408, 1.442695
    %v1431 = vpow.pop %v1430
    %v1432 = vmul.f32 %v1409, 1.442695
    %v1433 = vpow.pop %v1432
    %v1434 = vmul.f32 %v1410, 1.442695
    %v1435 = vpow.pop %v1434
    %v1436 = vmul.f32 %v1411, 1.442695
    %v1437 = vpow.pop %v1436
    %v1438 = vmul.f32 %v1412, 1.442695
    %v1439 = vpow.pop %v1438
    %v1440 = vmul.f32 %v1413, 1.442695
    %v1441 = vpow.pop %v1440
    %v1442 = vmul.f32 %v1414, 1.442695
    %v1443 = vpow.pop %v1442
    %v1444 = vmul.f32 %v1415, 1.442695
    %v1445 = vpow.pop %v1444
    %v1446 = vmul.f32 %v1416, 1.442695
    %v1447 = vpow.pop %v1446
    %v1448 = vmul.f32 %v1417, 1.442695
    %v1449 = vpow.pop %v1448
    %v1450 = vadd.f32 %v1419, 1.0
    %v1451 = vadd.f32 %v1421, 1.0
    %v1452 = vadd.f32 %v1423, 1.0
    %v1453 = vadd.f32 %v1425, 1.0
    %v1454 = vadd.f32 %v1427, 1.0
    %v1455 = vadd.f32 %v1429, 1.0
    %v1456 = vadd.f32 %v1431, 1.0
    %v1457 = vadd.f32 %v1433, 1.0
    %v1458 = vadd.f32 %v1435, 1.0
    %v1459 = vadd.f32 %v1437, 1.0
    %v1460 = vadd.f32 %v1439, 1.0
    %v1461 = vadd.f32 %v1441, 1.0
    %v1462 = vadd.f32 %v1443, 1.0
    %v1463 = vadd.f32 %v1445, 1.0
    %v1464 = vadd.f32 %v1447, 1.0
    %v1465 = vadd.f32 %v1449, 1.0
    %v1466 = vrcp.pop %v1450
    %v1467 = vmul.f32 %v1450, %v1466
    %v1468 = vsub.f32 1.0, %v1467
    %v1469 = vmul.f32 %v1466, %v1468
    %v1470 = vadd.f32 %v1466, %v1469
    %vm1471 = vweird.f32 %v1450
    %vm1472 = vweird.f32 %v1466
    %vm1473 = vmor %vm1471, %vm1472
    %v1474 = vsel %vm1473, %v1466, %v1470
    %v1475 = vand.u32 2147483647, %v1450
    %vm1476 = vcmp.eq.f32.partialorder %v1475, 8.507059e+37
    %v1477 = vand.u32 %v1450, 2147483648
    %v1478 = vor.u32 1.1754944e-38, %v1477
    %v1479 = vsel %vm1476, %v1478, %v1474
    %v1480 = vmul.f32 1.0, %v1479
    %v1481 = vrcp.pop %v1451
    %v1482 = vmul.f32 %v1451, %v1481
    %v1483 = vsub.f32 1.0, %v1482
    %v1484 = vmul.f32 %v1481, %v1483
    %v1485 = vadd.f32 %v1481, %v1484
    %vm1486 = vweird.f32 %v1451
    %vm1487 = vweird.f32 %v1481
    %vm1488 = vmor %vm1486, %vm1487
    %v1489 = vsel %vm1488, %v1481, %v1485
    %v1490 = vand.u32 2147483647, %v1451
    %vm1491 = vcmp.eq.f32.partialorder %v1490, 8.507059e+37
    %v1492 = vand.u32 %v1451, 2147483648
    %v1493 = vor.u32 1.1754944e-38, %v1492
    %v1494 = vsel %vm1491, %v1493, %v1489
    %v1495 = vmul.f32 1.0, %v1494
    %v1496 = vrcp.pop %v1452
    %v1497 = vmul.f32 %v1452, %v1496
    %v1498 = vsub.f32 1.0, %v1497
    %v1499 = vmul.f32 %v1496, %v1498
    %v1500 = vadd.f32 %v1496, %v1499
    %vm1501 = vweird.f32 %v1452
    %vm1502 = vweird.f32 %v1496
    %vm1503 = vmor %vm1501, %vm1502
    %v1504 = vsel %vm1503, %v1496, %v1500
    %v1505 = vand.u32 2147483647, %v1452
    %vm1506 = vcmp.eq.f32.partialorder %v1505, 8.507059e+37
    %v1507 = vand.u32 %v1452, 2147483648
    %v1508 = vor.u32 1.1754944e-38, %v1507
    %v1509 = vsel %vm1506, %v1508, %v1504
    %v1510 = vmul.f32 1.0, %v1509
    %v1511 = vrcp.pop %v1453
    %v1512 = vmul.f32 %v1453, %v1511
    %v1513 = vsub.f32 1.0, %v1512
    %v1514 = vmul.f32 %v1511, %v1513
    %v1515 = vadd.f32 %v1511, %v1514
    %vm1516 = vweird.f32 %v1453
    %vm1517 = vweird.f32 %v1511
    %vm1518 = vmor %vm1516, %vm1517
    %v1519 = vsel %vm1518, %v1511, %v1515
    %v1520 = vand.u32 2147483647, %v1453
    %vm1521 = vcmp.eq.f32.partialorder %v1520, 8.507059e+37
    %v1522 = vand.u32 %v1453, 2147483648
    %v1523 = vor.u32 1.1754944e-38, %v1522
    %v1524 = vsel %vm1521, %v1523, %v1519
    %v1525 = vmul.f32 1.0, %v1524
    %v1526 = vrcp.pop %v1454
    %v1527 = vmul.f32 %v1454, %v1526
    %v1528 = vsub.f32 1.0, %v1527
    %v1529 = vmul.f32 %v1526, %v1528
    %v1530 = vadd.f32 %v1526, %v1529
    %vm1531 = vweird.f32 %v1454
    %vm1532 = vweird.f32 %v1526
    %vm1533 = vmor %vm1531, %vm1532
    %v1534 = vsel %vm1533, %v1526, %v1530
    %v1535 = vand.u32 2147483647, %v1454
    %vm1536 = vcmp.eq.f32.partialorder %v1535, 8.507059e+37
    %v1537 = vand.u32 %v1454, 2147483648
    %v1538 = vor.u32 1.1754944e-38, %v1537
    %v1539 = vsel %vm1536, %v1538, %v1534
    %v1540 = vmul.f32 1.0, %v1539
    %v1541 = vrcp.pop %v1455
    %v1542 = vmul.f32 %v1455, %v1541
    %v1543 = vsub.f32 1.0, %v1542
    %v1544 = vmul.f32 %v1541, %v1543
    %v1545 = vadd.f32 %v1541, %v1544
    %vm1546 = vweird.f32 %v1455
    %vm1547 = vweird.f32 %v1541
    %vm1548 = vmor %vm1546, %vm1547
    %v1549 = vsel %vm1548, %v1541, %v1545
    %v1550 = vand.u32 2147483647, %v1455
    %vm1551 = vcmp.eq.f32.partialorder %v1550, 8.507059e+37
    %v1552 = vand.u32 %v1455, 2147483648
    %v1553 = vor.u32 1.1754944e-38, %v1552
    %v1554 = vsel %vm1551, %v1553, %v1549
    %v1555 = vmul.f32 1.0, %v1554
    %v1556 = vrcp.pop %v1456
    %v1557 = vmul.f32 %v1456, %v1556
    %v1558 = vsub.f32 1.0, %v1557
    %v1559 = vmul.f32 %v1556, %v1558
    %v1560 = vadd.f32 %v1556, %v1559
    %vm1561 = vweird.f32 %v1456
    %vm1562 = vweird.f32 %v1556
    %vm1563 = vmor %vm1561, %vm1562
    %v1564 = vsel %vm1563, %v1556, %v1560
    %v1565 = vand.u32 2147483647, %v1456
    %vm1566 = vcmp.eq.f32.partialorder %v1565, 8.507059e+37
    %v1567 = vand.u32 %v1456, 2147483648
    %v1568 = vor.u32 1.1754944e-38, %v1567
    %v1569 = vsel %vm1566, %v1568, %v1564
    %v1570 = vmul.f32 1.0, %v1569
    %v1571 = vrcp.pop %v1457
    %v1572 = vmul.f32 %v1457, %v1571
    %v1573 = vsub.f32 1.0, %v1572
    %v1574 = vmul.f32 %v1571, %v1573
    %v1575 = vadd.f32 %v1571, %v1574
    %vm1576 = vweird.f32 %v1457
    %vm1577 = vweird.f32 %v1571
    %vm1578 = vmor %vm1576, %vm1577
    %v1579 = vsel %vm1578, %v1571, %v1575
    %v1580 = vand.u32 2147483647, %v1457
    %vm1581 = vcmp.eq.f32.partialorder %v1580, 8.507059e+37
    %v1582 = vand.u32 %v1457, 2147483648
    %v1583 = vor.u32 1.1754944e-38, %v1582
    %v1584 = vsel %vm1581, %v1583, %v1579
    %v1585 = vmul.f32 1.0, %v1584
    %v1586 = vrcp.pop %v1458
    %v1587 = vmul.f32 %v1458, %v1586
    %v1588 = vsub.f32 1.0, %v1587
    %v1589 = vmul.f32 %v1586, %v1588
    %v1590 = vadd.f32 %v1586, %v1589
    %vm1591 = vweird.f32 %v1458
    %vm1592 = vweird.f32 %v1586
    %vm1593 = vmor %vm1591, %vm1592
    %v1594 = vsel %vm1593, %v1586, %v1590
    %v1595 = vand.u32 2147483647, %v1458
    %vm1596 = vcmp.eq.f32.partialorder %v1595, 8.507059e+37
    %v1597 = vand.u32 %v1458, 2147483648
    %v1598 = vor.u32 1.1754944e-38, %v1597
    %v1599 = vsel %vm1596, %v1598, %v1594
    %v1600 = vmul.f32 1.0, %v1599
    %v1601 = vrcp.pop %v1459
    %v1602 = vmul.f32 %v1459, %v1601
    %v1603 = vsub.f32 1.0, %v1602
    %v1604 = vmul.f32 %v1601, %v1603
    %v1605 = vadd.f32 %v1601, %v1604
    %vm1606 = vweird.f32 %v1459
    %vm1607 = vweird.f32 %v1601
    %vm1608 = vmor %vm1606, %vm1607
    %v1609 = vsel %vm1608, %v1601, %v1605
    %v1610 = vand.u32 2147483647, %v1459
    %vm1611 = vcmp.eq.f32.partialorder %v1610, 8.507059e+37
    %v1612 = vand.u32 %v1459, 2147483648
    %v1613 = vor.u32 1.1754944e-38, %v1612
    %v1614 = vsel %vm1611, %v1613, %v1609
    %v1615 = vmul.f32 1.0, %v1614
    %v1616 = vrcp.pop %v1460
    %v1617 = vmul.f32 %v1460, %v1616
    %v1618 = vsub.f32 1.0, %v1617
    %v1619 = vmul.f32 %v1616, %v1618
    %v1620 = vadd.f32 %v1616, %v1619
    %vm1621 = vweird.f32 %v1460
    %vm1622 = vweird.f32 %v1616
    %vm1623 = vmor %vm1621, %vm1622
    %v1624 = vsel %vm1623, %v1616, %v1620
    %v1625 = vand.u32 2147483647, %v1460
    %vm1626 = vcmp.eq.f32.partialorder %v1625, 8.507059e+37
    %v1627 = vand.u32 %v1460, 2147483648
    %v1628 = vor.u32 1.1754944e-38, %v1627
    %v1629 = vsel %vm1626, %v1628, %v1624
    %v1630 = vmul.f32 1.0, %v1629
    %v1631 = vrcp.pop %v1461
    %v1632 = vmul.f32 %v1461, %v1631
    %v1633 = vsub.f32 1.0, %v1632
    %v1634 = vmul.f32 %v1631, %v1633
    %v1635 = vadd.f32 %v1631, %v1634
    %vm1636 = vweird.f32 %v1461
    %vm1637 = vweird.f32 %v1631
    %vm1638 = vmor %vm1636, %vm1637
    %v1639 = vsel %vm1638, %v1631, %v1635
    %v1640 = vand.u32 2147483647, %v1461
    %vm1641 = vcmp.eq.f32.partialorder %v1640, 8.507059e+37
    %v1642 = vand.u32 %v1461, 2147483648
    %v1643 = vor.u32 1.1754944e-38, %v1642
    %v1644 = vsel %vm1641, %v1643, %v1639
    %v1645 = vmul.f32 1.0, %v1644
    %v1646 = vrcp.pop %v1462
    %v1647 = vmul.f32 %v1462, %v1646
    %v1648 = vsub.f32 1.0, %v1647
    %v1649 = vmul.f32 %v1646, %v1648
    %v1650 = vadd.f32 %v1646, %v1649
    %vm1651 = vweird.f32 %v1462
    %vm1652 = vweird.f32 %v1646
    %vm1653 = vmor %vm1651, %vm1652
    %v1654 = vsel %vm1653, %v1646, %v1650
    %v1655 = vand.u32 2147483647, %v1462
    %vm1656 = vcmp.eq.f32.partialorder %v1655, 8.507059e+37
    %v1657 = vand.u32 %v1462, 2147483648
    %v1658 = vor.u32 1.1754944e-38, %v1657
    %v1659 = vsel %vm1656, %v1658, %v1654
    %v1660 = vmul.f32 1.0, %v1659
    %v1661 = vrcp.pop %v1463
    %v1662 = vmul.f32 %v1463, %v1661
    %v1663 = vsub.f32 1.0, %v1662
    %v1664 = vmul.f32 %v1661, %v1663
    %v1665 = vadd.f32 %v1661, %v1664
    %vm1666 = vweird.f32 %v1463
    %vm1667 = vweird.f32 %v1661
    %vm1668 = vmor %vm1666, %vm1667
    %v1669 = vsel %vm1668, %v1661, %v1665
    %v1670 = vand.u32 2147483647, %v1463
    %vm1671 = vcmp.eq.f32.partialorder %v1670, 8.507059e+37
    %v1672 = vand.u32 %v1463, 2147483648
    %v1673 = vor.u32 1.1754944e-38, %v1672
    %v1674 = vsel %vm1671, %v1673, %v1669
    %v1675 = vmul.f32 1.0, %v1674
    %v1676 = vrcp.pop %v1464
    %v1677 = vmul.f32 %v1464, %v1676
    %v1678 = vsub.f32 1.0, %v1677
    %v1679 = vmul.f32 %v1676, %v1678
    %v1680 = vadd.f32 %v1676, %v1679
    %vm1681 = vweird.f32 %v1464
    %vm1682 = vweird.f32 %v1676
    %vm1683 = vmor %vm1681, %vm1682
    %v1684 = vsel %vm1683, %v1676, %v1680
    %v1685 = vand.u32 2147483647, %v1464
    %vm1686 = vcmp.eq.f32.partialorder %v1685, 8.507059e+37
    %v1687 = vand.u32 %v1464, 2147483648
    %v1688 = vor.u32 1.1754944e-38, %v1687
    %v1689 = vsel %vm1686, %v1688, %v1684
    %v1690 = vmul.f32 1.0, %v1689
    %v1691 = vrcp.pop %v1465
    %v1692 = vmul.f32 %v1465, %v1691
    %v1693 = vsub.f32 1.0, %v1692
    %v1694 = vmul.f32 %v1691, %v1693
    %v1695 = vadd.f32 %v1691, %v1694
    %vm1696 = vweird.f32 %v1465
    %vm1697 = vweird.f32 %v1691
    %vm1698 = vmor %vm1696, %vm1697
    %v1699 = vsel %vm1698, %v1691, %v1695
    %v1700 = vand.u32 2147483647, %v1465
    %vm1701 = vcmp.eq.f32.partialorder %v1700, 8.507059e+37
    %v1702 = vand.u32 %v1465, 2147483648
    %v1703 = vor.u32 1.1754944e-38, %v1702
    %v1704 = vsel %vm1701, %v1703, %v1699
    %v1705 = vmul.f32 1.0, %v1704
    %1706 = vrot.lane.b32.xlu0 %v1349, 96
    %v1707 = vpop.permute.xlu0 %1706
    %1708 = vrot.lane.b32.xlu0 %v1356, 96
    %v1709 = vpop.permute.xlu0 %1708
    %1710 = vrot.lane.b32.xlu0 %v1357, 96
    %v1711 = vpop.permute.xlu0 %1710
    %1712 = vrot.lane.b32.xlu0 %v1358, 96
    %v1713 = vpop.permute.xlu0 %1712
    %1714 = vrot.lane.b32.xlu0 %v1359, 96
    %v1715 = vpop.permute.xlu0 %1714
    %1716 = vrot.lane.b32.xlu0 %v1360, 96
    %v1717 = vpop.permute.xlu0 %1716
    %1718 = vrot.lane.b32.xlu0 %v1361, 96
    %v1719 = vpop.permute.xlu0 %1718
    %1720 = vrot.lane.b32.xlu0 %v1362, 96
    %v1721 = vpop.permute.xlu0 %1720
    %1722 = vrot.lane.b32.xlu0 %v1352, 96
    %v1723 = vpop.permute.xlu0 %1722
    %1724 = vrot.lane.b32.xlu0 %v1363, 96
    %v1725 = vpop.permute.xlu0 %1724
    %1726 = vrot.lane.b32.xlu0 %v1364, 96
    %v1727 = vpop.permute.xlu0 %1726
    %1728 = vrot.lane.b32.xlu0 %v1365, 96
    %v1729 = vpop.permute.xlu0 %1728
    %1730 = vrot.lane.b32.xlu0 %v1366, 96
    %v1731 = vpop.permute.xlu0 %1730
    %1732 = vrot.lane.b32.xlu0 %v1367, 96
    %v1733 = vpop.permute.xlu0 %1732
    %1734 = vrot.lane.b32.xlu0 %v1368, 96
    %v1735 = vpop.permute.xlu0 %1734
    %1736 = vrot.lane.b32.xlu0 %v1369, 96
    %v1737 = vpop.permute.xlu0 %1736
    %v1754 = vmul.f32 %v1480, %v1707
    %v1755 = vmul.f32 %v1495, %v1709
    %v1756 = vmul.f32 %v1510, %v1711
    %v1757 = vmul.f32 %v1525, %v1713
    %v1758 = vmul.f32 %v1540, %v1715
    %v1759 = vmul.f32 %v1555, %v1717
    %v1760 = vmul.f32 %v1570, %v1719
    %v1761 = vmul.f32 %v1585, %v1721
    %v1762 = vmul.f32 %v1600, %v1723
    %v1763 = vmul.f32 %v1615, %v1725
    %v1764 = vmul.f32 %v1630, %v1727
    %v1765 = vmul.f32 %v1645, %v1729
    %v1766 = vmul.f32 %v1660, %v1731
    %v1767 = vmul.f32 %v1675, %v1733
    %v1768 = vmul.f32 %v1690, %v1735
    %v1769 = vmul.f32 %v1705, %v1737
    %1786 = vrot.lane.b32.xlu0 %v1754, 32
    %v1787 = vpop.permute.xlu0 %1786
    %1788 = vrot.lane.b32.xlu0 %v1755, 32
    %v1789 = vpop.permute.xlu0 %1788
    %1790 = vrot.lane.b32.xlu0 %v1756, 32
    %v1791 = vpop.permute.xlu0 %1790
    %1792 = vrot.lane.b32.xlu0 %v1757, 32
    %v1793 = vpop.permute.xlu0 %1792
    %1794 = vrot.lane.b32.xlu0 %v1758, 32
    %v1795 = vpop.permute.xlu0 %1794
    %1796 = vrot.lane.b32.xlu0 %v1759, 32
    %v1797 = vpop.permute.xlu0 %1796
    %1798 = vrot.lane.b32.xlu0 %v1760, 32
    %v1799 = vpop.permute.xlu0 %1798
    %1800 = vrot.lane.b32.xlu0 %v1761, 32
    %v1801 = vpop.permute.xlu0 %1800
    %1802 = vrot.lane.b32.xlu0 %v1762, 32
    %v1803 = vpop.permute.xlu0 %1802
    %1804 = vrot.lane.b32.xlu0 %v1763, 32
    %v1805 = vpop.permute.xlu0 %1804
    %1806 = vrot.lane.b32.xlu0 %v1764, 32
    %v1807 = vpop.permute.xlu0 %1806
    %1808 = vrot.lane.b32.xlu0 %v1765, 32
    %v1809 = vpop.permute.xlu0 %1808
    %1810 = vrot.lane.b32.xlu0 %v1766, 32
    %v1811 = vpop.permute.xlu0 %1810
    %1812 = vrot.lane.b32.xlu0 %v1767, 32
    %v1813 = vpop.permute.xlu0 %1812
    %1814 = vrot.lane.b32.xlu0 %v1768, 32
    %v1815 = vpop.permute.xlu0 %1814
    %1816 = vrot.lane.b32.xlu0 %v1769, 32
    %v1817 = vpop.permute.xlu0 %1816
    %v1834 = vadd.f32 %v1277, %v1787
    %v1835 = vadd.f32 %v1280, %v1789
    %v1836 = vadd.f32 %v1283, %v1791
    %v1837 = vadd.f32 %v1286, %v1793
    %v1838 = vadd.f32 %v1289, %v1795
    %v1839 = vadd.f32 %v1292, %v1797
    %v1840 = vadd.f32 %v1295, %v1799
    %v1841 = vadd.f32 %v1298, %v1801
    %v1842 = vadd.f32 %v1301, %v1803
    %v1843 = vadd.f32 %v1304, %v1805
    %v1844 = vadd.f32 %v1307, %v1807
    %v1845 = vadd.f32 %v1310, %v1809
    %v1846 = vadd.f32 %v1313, %v1811
    %v1847 = vadd.f32 %v1316, %v1813
    %v1848 = vadd.f32 %v1319, %v1815
    %v1849 = vadd.f32 %v1322, %v1817
    %v1850 = vtanh.pop %v1834
    %v1851 = vtanh.pop %v1835
    %v1852 = vtanh.pop %v1836
    %v1853 = vtanh.pop %v1837
    %v1854 = vtanh.pop %v1838
    %v1855 = vtanh.pop %v1839
    %v1856 = vtanh.pop %v1840
    %v1857 = vtanh.pop %v1841
    %v1858 = vtanh.pop %v1842
    %v1859 = vtanh.pop %v1843
    %v1860 = vtanh.pop %v1844
    %v1861 = vtanh.pop %v1845
    %v1862 = vtanh.pop %v1846
    %v1863 = vtanh.pop %v1847
    %v1864 = vtanh.pop %v1848
    %v1865 = vtanh.pop %v1849
    %v1866 = vsub.f32 1.0, %v1480
    %v1867 = vsub.f32 1.0, %v1495
    %v1868 = vsub.f32 1.0, %v1510
    %v1869 = vsub.f32 1.0, %v1525
    %v1870 = vsub.f32 1.0, %v1540
    %v1871 = vsub.f32 1.0, %v1555
    %v1872 = vsub.f32 1.0, %v1570
    %v1873 = vsub.f32 1.0, %v1585
    %v1874 = vsub.f32 1.0, %v1600
    %v1875 = vsub.f32 1.0, %v1615
    %v1876 = vsub.f32 1.0, %v1630
    %v1877 = vsub.f32 1.0, %v1645
    %v1878 = vsub.f32 1.0, %v1660
    %v1879 = vsub.f32 1.0, %v1675
    %v1880 = vsub.f32 1.0, %v1690
    %v1881 = vsub.f32 1.0, %v1705
    %1898 = vrot.lane.b32.xlu0 %v1850, 112
    %v1899 = vpop.permute.xlu0 %1898
    %1900 = vrot.lane.b32.xlu0 %v1851, 112
    %v1901 = vpop.permute.xlu0 %1900
    %1902 = vrot.lane.b32.xlu0 %v1852, 112
    %v1903 = vpop.permute.xlu0 %1902
    %1904 = vrot.lane.b32.xlu0 %v1853, 112
    %v1905 = vpop.permute.xlu0 %1904
    %1906 = vrot.lane.b32.xlu0 %v1854, 112
    %v1907 = vpop.permute.xlu0 %1906
    %1908 = vrot.lane.b32.xlu0 %v1855, 112
    %v1909 = vpop.permute.xlu0 %1908
    %1910 = vrot.lane.b32.xlu0 %v1856, 112
    %v1911 = vpop.permute.xlu0 %1910
    %1912 = vrot.lane.b32.xlu0 %v1857, 112
    %v1913 = vpop.permute.xlu0 %1912
    %1914 = vrot.lane.b32.xlu0 %v1858, 112
    %v1915 = vpop.permute.xlu0 %1914
    %1916 = vrot.lane.b32.xlu0 %v1859, 112
    %v1917 = vpop.permute.xlu0 %1916
    %1918 = vrot.lane.b32.xlu0 %v1860, 112
    %v1919 = vpop.permute.xlu0 %1918
    %1920 = vrot.lane.b32.xlu0 %v1861, 112
    %v1921 = vpop.permute.xlu0 %1920
    %1922 = vrot.lane.b32.xlu0 %v1862, 112
    %v1923 = vpop.permute.xlu0 %1922
    %1924 = vrot.lane.b32.xlu0 %v1863, 112
    %v1925 = vpop.permute.xlu0 %1924
    %1926 = vrot.lane.b32.xlu0 %v1864, 112
    %v1927 = vpop.permute.xlu0 %1926
    %1928 = vrot.lane.b32.xlu0 %v1865, 112
    %v1929 = vpop.permute.xlu0 %1928
    %v1946 = vmul.f32 %v1866, %v1899
    %v1947 = vmul.f32 %v1867, %v1901
    %v1948 = vmul.f32 %v1868, %v1903
    %v1949 = vmul.f32 %v1869, %v1905
    %v1950 = vmul.f32 %v1870, %v1907
    %v1951 = vmul.f32 %v1871, %v1909
    %v1952 = vmul.f32 %v1872, %v1911
    %v1953 = vmul.f32 %v1873, %v1913
    %v1954 = vmul.f32 %v1874, %v1915
    %v1955 = vmul.f32 %v1875, %v1917
    %v1956 = vmul.f32 %v1876, %v1919
    %v1957 = vmul.f32 %v1877, %v1921
    %v1958 = vmul.f32 %v1878, %v1923
    %v1959 = vmul.f32 %v1879, %v1925
    %v1960 = vmul.f32 %v1880, %v1927
    %v1961 = vmul.f32 %v1881, %v1929
    %v1962 = vmul.f32 %v1480, 0.0
    %v1963 = vmul.f32 %v1495, 0.0
    %v1964 = vmul.f32 %v1510, 0.0
    %v1965 = vmul.f32 %v1525, 0.0
    %v1966 = vmul.f32 %v1540, 0.0
    %v1967 = vmul.f32 %v1555, 0.0
    %v1968 = vmul.f32 %v1570, 0.0
    %v1969 = vmul.f32 %v1585, 0.0
    %v1970 = vmul.f32 %v1600, 0.0
    %v1971 = vmul.f32 %v1615, 0.0
    %v1972 = vmul.f32 %v1630, 0.0
    %v1973 = vmul.f32 %v1645, 0.0
    %v1974 = vmul.f32 %v1660, 0.0
    %v1975 = vmul.f32 %v1675, 0.0
    %v1976 = vmul.f32 %v1690, 0.0
    %v1977 = vmul.f32 %v1705, 0.0
    %v1978 = vadd.f32 %v1946, %v1962
    %v1979 = vadd.f32 %v1947, %v1963
    %v1980 = vadd.f32 %v1948, %v1964
    %v1981 = vadd.f32 %v1949, %v1965
    %v1982 = vadd.f32 %v1950, %v1966
    %v1983 = vadd.f32 %v1951, %v1967
    %v1984 = vadd.f32 %v1952, %v1968
    %v1985 = vadd.f32 %v1953, %v1969
    %v1986 = vadd.f32 %v1954, %v1970
    %v1987 = vadd.f32 %v1955, %v1971
    %v1988 = vadd.f32 %v1956, %v1972
    %v1989 = vadd.f32 %v1957, %v1973
    %v1990 = vadd.f32 %v1958, %v1974
    %v1991 = vadd.f32 %v1959, %v1975
    %v1992 = vadd.f32 %v1960, %v1976
    %v1993 = vadd.f32 %v1961, %v1977
    %vm1994 = vcmp.gt.s32.totalorder %v197, 0
    %vm1995 = vcmp.gt.s32.totalorder %v198, 0
    %v1996 = vsel %vm1994, 1, 0
    %v1997 = vsel %vm1995, 1, 0
    %1998 = vset.pattern.permute.xlu0 0
    %1999 = vperm.xlu0 %1998, %v1996
    %v2000 = vpop.permute.xlu0 %1999
    %2001 = vset.pattern.permute.xlu0 0
    %2002 = vperm.xlu0 %2001, %v1997
    %v2003 = vpop.permute.xlu0 %2002
    %vm2004 = vcmp.eq.s32.totalorder %v2000, 1
    %vm2005 = vcmp.eq.s32.totalorder %v2003, 1
    %v2022 = vrot.slane %v1979, 7
    %v2023 = vsel %vm437, %v2022, %v1978
    %v2024 = vrot.slane %v1980, 6
    %v2025 = vsel %vm439, %v2024, %v2023
    %v2026 = vrot.slane %v1981, 5
    %v2027 = vsel %vm441, %v2026, %v2025
    %v2028 = vrot.slane %v1982, 4
    %v2029 = vsel %vm443, %v2028, %v2027
    %v2030 = vrot.slane %v1983, 3
    %v2031 = vsel %vm445, %v2030, %v2029
    %v2032 = vrot.slane %v1984, 2
    %v2033 = vsel %vm447, %v2032, %v2031
    %v2034 = vrot.slane %v1985, 1
    %v2035 = vsel %vm449, %v2034, %v2033
    %v2036 = vrot.slane %v1987, 7
    %v2037 = vsel %vm437, %v2036, %v1986
    %v2038 = vrot.slane %v1988, 6
    %v2039 = vsel %vm439, %v2038, %v2037
    %v2040 = vrot.slane %v1989, 5
    %v2041 = vsel %vm441, %v2040, %v2039
    %v2042 = vrot.slane %v1990, 4
    %v2043 = vsel %vm443, %v2042, %v2041
    %v2044 = vrot.slane %v1991, 3
    %v2045 = vsel %vm445, %v2044, %v2043
    %v2046 = vrot.slane %v1992, 2
    %v2047 = vsel %vm447, %v2046, %v2045
    %v2048 = vrot.slane %v1993, 1
    %v2049 = vsel %vm449, %v2048, %v2047
    %2050 = vrot.lane.b32.xlu0 %v2035, 112
    %v2051 = vpop.permute.xlu0 %2050
    %2052 = vrot.lane.b32.xlu0 %v2049, 112
    %v2053 = vpop.permute.xlu0 %2052
    %v2056 = vsel %vm2004, %v2051, 0.0
    %v2057 = vsel %vm2005, %v2053, 0.0
    %v2059 = vsel %vm1327, %v2056, 0
    %v2062 = vsel %vm1327, %v2057, 0
    %2064 = vmatpush.msra.mxu0 0.0
    %2065 = vmatpush.msra.mxu0 0.0
    %2066 = vmatpush.msra.mxu0 0.0
    %2067 = vmatpush.msra.mxu0 0.0
    %2068 = vmatpush.msra.mxu0 0.0
    %2069 = vmatpush.msra.mxu0 0.0
    %2070 = vmatpush.msra.mxu0 0.0
    %2071 = vmatpush.msra.mxu0 0.0
    %2072 = vmatpush.msra.mxu0 0.0
    %2073 = vmatpush.msra.mxu0 0.0
    %2074 = vmatpush.msra.mxu0 0.0
    %2075 = vmatpush.msra.mxu0 0.0
    %2076 = vmatpush.msra.mxu0 0.0
    %2077 = vmatpush.msra.mxu0 0.0
    %2078 = vmatpush.msra.mxu0 %v1325
    %2079 = vmatpush.msra.mxu0 %v1324
    %2080 = vmatmul.f32.gmra.mxu0 %v2059
    %v2081 = vpop.f32.mrf.mxu0
    %v2082 = vadd.f32 %v1326, %v2081
    %2083 = vmatmul.f32.gmra.mxu0 %v2062
    %v2084 = vpop.f32.mrf.mxu0
    %v2085 = vadd.f32 %v1326, %v2084
    %2086 = vdwg.mxu0
    %v2089 = vrot.slane %v2082, 7
    %v2090 = vrot.slane %v2082, 1
    %v2091 = vrot.slane %v2082, 2
    %v2092 = vrot.slane %v2082, 3
    %v2093 = vrot.slane %v2082, 4
    %v2094 = vrot.slane %v2082, 5
    %v2095 = vrot.slane %v2082, 6
    %v2096 = vrot.slane %v2085, 7
    %v2097 = vrot.slane %v2085, 1
    %v2098 = vrot.slane %v2085, 2
    %v2099 = vrot.slane %v2085, 3
    %v2100 = vrot.slane %v2085, 4
    %v2101 = vrot.slane %v2085, 5
    %v2102 = vrot.slane %v2085, 6
    %v2119 = vadd.f32 %v1277, %v2089
    %v2120 = vadd.f32 %v1280, %v2082
    %v2121 = vadd.f32 %v1283, %v2090
    %v2122 = vadd.f32 %v1286, %v2091
    %v2123 = vadd.f32 %v1289, %v2092
    %v2124 = vadd.f32 %v1292, %v2093
    %v2125 = vadd.f32 %v1295, %v2094
    %v2126 = vadd.f32 %v1298, %v2095
    %v2127 = vadd.f32 %v1301, %v2096
    %v2128 = vadd.f32 %v1304, %v2085
    %v2129 = vadd.f32 %v1307, %v2097
    %v2130 = vadd.f32 %v1310, %v2098
    %v2131 = vadd.f32 %v1313, %v2099
    %v2132 = vadd.f32 %v1316, %v2100
    %v2133 = vadd.f32 %v1319, %v2101
    %v2134 = vadd.f32 %v1322, %v2102
    %v2135 = vxor.u32 %v2119, 2147483648
    %v2136 = vxor.u32 %v2120, 2147483648
    %v2137 = vxor.u32 %v2121, 2147483648
    %v2138 = vxor.u32 %v2122, 2147483648
    %v2139 = vxor.u32 %v2123, 2147483648
    %v2140 = vxor.u32 %v2124, 2147483648
    %v2141 = vxor.u32 %v2125, 2147483648
    %v2142 = vxor.u32 %v2126, 2147483648
    %v2143 = vxor.u32 %v2127, 2147483648
    %v2144 = vxor.u32 %v2128, 2147483648
    %v2145 = vxor.u32 %v2129, 2147483648
    %v2146 = vxor.u32 %v2130, 2147483648
    %v2147 = vxor.u32 %v2131, 2147483648
    %v2148 = vxor.u32 %v2132, 2147483648
    %v2149 = vxor.u32 %v2133, 2147483648
    %v2150 = vxor.u32 %v2134, 2147483648
    %v2151 = vmul.f32 %v2135, 1.442695
    %v2152 = vpow.pop %v2151
    %v2153 = vmul.f32 %v2136, 1.442695
    %v2154 = vpow.pop %v2153
    %v2155 = vmul.f32 %v2137, 1.442695
    %v2156 = vpow.pop %v2155
    %v2157 = vmul.f32 %v2138, 1.442695
    %v2158 = vpow.pop %v2157
    %v2159 = vmul.f32 %v2139, 1.442695
    %v2160 = vpow.pop %v2159
    %v2161 = vmul.f32 %v2140, 1.442695
    %v2162 = vpow.pop %v2161
    %v2163 = vmul.f32 %v2141, 1.442695
    %v2164 = vpow.pop %v2163
    %v2165 = vmul.f32 %v2142, 1.442695
    %v2166 = vpow.pop %v2165
    %v2167 = vmul.f32 %v2143, 1.442695
    %v2168 = vpow.pop %v2167
    %v2169 = vmul.f32 %v2144, 1.442695
    %v2170 = vpow.pop %v2169
    %v2171 = vmul.f32 %v2145, 1.442695
    %v2172 = vpow.pop %v2171
    %v2173 = vmul.f32 %v2146, 1.442695
    %v2174 = vpow.pop %v2173
    %v2175 = vmul.f32 %v2147, 1.442695
    %v2176 = vpow.pop %v2175
    %v2177 = vmul.f32 %v2148, 1.442695
    %v2178 = vpow.pop %v2177
    %v2179 = vmul.f32 %v2149, 1.442695
    %v2180 = vpow.pop %v2179
    %v2181 = vmul.f32 %v2150, 1.442695
    %v2182 = vpow.pop %v2181
    %v2183 = vadd.f32 %v2152, 1.0
    %v2184 = vadd.f32 %v2154, 1.0
    %v2185 = vadd.f32 %v2156, 1.0
    %v2186 = vadd.f32 %v2158, 1.0
    %v2187 = vadd.f32 %v2160, 1.0
    %v2188 = vadd.f32 %v2162, 1.0
    %v2189 = vadd.f32 %v2164, 1.0
    %v2190 = vadd.f32 %v2166, 1.0
    %v2191 = vadd.f32 %v2168, 1.0
    %v2192 = vadd.f32 %v2170, 1.0
    %v2193 = vadd.f32 %v2172, 1.0
    %v2194 = vadd.f32 %v2174, 1.0
    %v2195 = vadd.f32 %v2176, 1.0
    %v2196 = vadd.f32 %v2178, 1.0
    %v2197 = vadd.f32 %v2180, 1.0
    %v2198 = vadd.f32 %v2182, 1.0
    %v2199 = vrcp.pop %v2183
    %v2200 = vmul.f32 %v2183, %v2199
    %v2201 = vsub.f32 1.0, %v2200
    %v2202 = vmul.f32 %v2199, %v2201
    %v2203 = vadd.f32 %v2199, %v2202
    %vm2204 = vweird.f32 %v2183
    %vm2205 = vweird.f32 %v2199
    %vm2206 = vmor %vm2204, %vm2205
    %v2207 = vsel %vm2206, %v2199, %v2203
    %v2208 = vand.u32 2147483647, %v2183
    %vm2209 = vcmp.eq.f32.partialorder %v2208, 8.507059e+37
    %v2210 = vand.u32 %v2183, 2147483648
    %v2211 = vor.u32 1.1754944e-38, %v2210
    %v2212 = vsel %vm2209, %v2211, %v2207
    %v2213 = vmul.f32 1.0, %v2212
    %v2214 = vrcp.pop %v2184
    %v2215 = vmul.f32 %v2184, %v2214
    %v2216 = vsub.f32 1.0, %v2215
    %v2217 = vmul.f32 %v2214, %v2216
    %v2218 = vadd.f32 %v2214, %v2217
    %vm2219 = vweird.f32 %v2184
    %vm2220 = vweird.f32 %v2214
    %vm2221 = vmor %vm2219, %vm2220
    %v2222 = vsel %vm2221, %v2214, %v2218
    %v2223 = vand.u32 2147483647, %v2184
    %vm2224 = vcmp.eq.f32.partialorder %v2223, 8.507059e+37
    %v2225 = vand.u32 %v2184, 2147483648
    %v2226 = vor.u32 1.1754944e-38, %v2225
    %v2227 = vsel %vm2224, %v2226, %v2222
    %v2228 = vmul.f32 1.0, %v2227
    %v2229 = vrcp.pop %v2185
    %v2230 = vmul.f32 %v2185, %v2229
    %v2231 = vsub.f32 1.0, %v2230
    %v2232 = vmul.f32 %v2229, %v2231
    %v2233 = vadd.f32 %v2229, %v2232
    %vm2234 = vweird.f32 %v2185
    %vm2235 = vweird.f32 %v2229
    %vm2236 = vmor %vm2234, %vm2235
    %v2237 = vsel %vm2236, %v2229, %v2233
    %v2238 = vand.u32 2147483647, %v2185
    %vm2239 = vcmp.eq.f32.partialorder %v2238, 8.507059e+37
    %v2240 = vand.u32 %v2185, 2147483648
    %v2241 = vor.u32 1.1754944e-38, %v2240
    %v2242 = vsel %vm2239, %v2241, %v2237
    %v2243 = vmul.f32 1.0, %v2242
    %v2244 = vrcp.pop %v2186
    %v2245 = vmul.f32 %v2186, %v2244
    %v2246 = vsub.f32 1.0, %v2245
    %v2247 = vmul.f32 %v2244, %v2246
    %v2248 = vadd.f32 %v2244, %v2247
    %vm2249 = vweird.f32 %v2186
    %vm2250 = vweird.f32 %v2244
    %vm2251 = vmor %vm2249, %vm2250
    %v2252 = vsel %vm2251, %v2244, %v2248
    %v2253 = vand.u32 2147483647, %v2186
    %vm2254 = vcmp.eq.f32.partialorder %v2253, 8.507059e+37
    %v2255 = vand.u32 %v2186, 2147483648
    %v2256 = vor.u32 1.1754944e-38, %v2255
    %v2257 = vsel %vm2254, %v2256, %v2252
    %v2258 = vmul.f32 1.0, %v2257
    %v2259 = vrcp.pop %v2187
    %v2260 = vmul.f32 %v2187, %v2259
    %v2261 = vsub.f32 1.0, %v2260
    %v2262 = vmul.f32 %v2259, %v2261
    %v2263 = vadd.f32 %v2259, %v2262
    %vm2264 = vweird.f32 %v2187
    %vm2265 = vweird.f32 %v2259
    %vm2266 = vmor %vm2264, %vm2265
    %v2267 = vsel %vm2266, %v2259, %v2263
    %v2268 = vand.u32 2147483647, %v2187
    %vm2269 = vcmp.eq.f32.partialorder %v2268, 8.507059e+37
    %v2270 = vand.u32 %v2187, 2147483648
    %v2271 = vor.u32 1.1754944e-38, %v2270
    %v2272 = vsel %vm2269, %v2271, %v2267
    %v2273 = vmul.f32 1.0, %v2272
    %v2274 = vrcp.pop %v2188
    %v2275 = vmul.f32 %v2188, %v2274
    %v2276 = vsub.f32 1.0, %v2275
    %v2277 = vmul.f32 %v2274, %v2276
    %v2278 = vadd.f32 %v2274, %v2277
    %vm2279 = vweird.f32 %v2188
    %vm2280 = vweird.f32 %v2274
    %vm2281 = vmor %vm2279, %vm2280
    %v2282 = vsel %vm2281, %v2274, %v2278
    %v2283 = vand.u32 2147483647, %v2188
    %vm2284 = vcmp.eq.f32.partialorder %v2283, 8.507059e+37
    %v2285 = vand.u32 %v2188, 2147483648
    %v2286 = vor.u32 1.1754944e-38, %v2285
    %v2287 = vsel %vm2284, %v2286, %v2282
    %v2288 = vmul.f32 1.0, %v2287
    %v2289 = vrcp.pop %v2189
    %v2290 = vmul.f32 %v2189, %v2289
    %v2291 = vsub.f32 1.0, %v2290
    %v2292 = vmul.f32 %v2289, %v2291
    %v2293 = vadd.f32 %v2289, %v2292
    %vm2294 = vweird.f32 %v2189
    %vm2295 = vweird.f32 %v2289
    %vm2296 = vmor %vm2294, %vm2295
    %v2297 = vsel %vm2296, %v2289, %v2293
    %v2298 = vand.u32 2147483647, %v2189
    %vm2299 = vcmp.eq.f32.partialorder %v2298, 8.507059e+37
    %v2300 = vand.u32 %v2189, 2147483648
    %v2301 = vor.u32 1.1754944e-38, %v2300
    %v2302 = vsel %vm2299, %v2301, %v2297
    %v2303 = vmul.f32 1.0, %v2302
    %v2304 = vrcp.pop %v2190
    %v2305 = vmul.f32 %v2190, %v2304
    %v2306 = vsub.f32 1.0, %v2305
    %v2307 = vmul.f32 %v2304, %v2306
    %v2308 = vadd.f32 %v2304, %v2307
    %vm2309 = vweird.f32 %v2190
    %vm2310 = vweird.f32 %v2304
    %vm2311 = vmor %vm2309, %vm2310
    %v2312 = vsel %vm2311, %v2304, %v2308
    %v2313 = vand.u32 2147483647, %v2190
    %vm2314 = vcmp.eq.f32.partialorder %v2313, 8.507059e+37
    %v2315 = vand.u32 %v2190, 2147483648
    %v2316 = vor.u32 1.1754944e-38, %v2315
    %v2317 = vsel %vm2314, %v2316, %v2312
    %v2318 = vmul.f32 1.0, %v2317
    %v2319 = vrcp.pop %v2191
    %v2320 = vmul.f32 %v2191, %v2319
    %v2321 = vsub.f32 1.0, %v2320
    %v2322 = vmul.f32 %v2319, %v2321
    %v2323 = vadd.f32 %v2319, %v2322
    %vm2324 = vweird.f32 %v2191
    %vm2325 = vweird.f32 %v2319
    %vm2326 = vmor %vm2324, %vm2325
    %v2327 = vsel %vm2326, %v2319, %v2323
    %v2328 = vand.u32 2147483647, %v2191
    %vm2329 = vcmp.eq.f32.partialorder %v2328, 8.507059e+37
    %v2330 = vand.u32 %v2191, 2147483648
    %v2331 = vor.u32 1.1754944e-38, %v2330
    %v2332 = vsel %vm2329, %v2331, %v2327
    %v2333 = vmul.f32 1.0, %v2332
    %v2334 = vrcp.pop %v2192
    %v2335 = vmul.f32 %v2192, %v2334
    %v2336 = vsub.f32 1.0, %v2335
    %v2337 = vmul.f32 %v2334, %v2336
    %v2338 = vadd.f32 %v2334, %v2337
    %vm2339 = vweird.f32 %v2192
    %vm2340 = vweird.f32 %v2334
    %vm2341 = vmor %vm2339, %vm2340
    %v2342 = vsel %vm2341, %v2334, %v2338
    %v2343 = vand.u32 2147483647, %v2192
    %vm2344 = vcmp.eq.f32.partialorder %v2343, 8.507059e+37
    %v2345 = vand.u32 %v2192, 2147483648
    %v2346 = vor.u32 1.1754944e-38, %v2345
    %v2347 = vsel %vm2344, %v2346, %v2342
    %v2348 = vmul.f32 1.0, %v2347
    %v2349 = vrcp.pop %v2193
    %v2350 = vmul.f32 %v2193, %v2349
    %v2351 = vsub.f32 1.0, %v2350
    %v2352 = vmul.f32 %v2349, %v2351
    %v2353 = vadd.f32 %v2349, %v2352
    %vm2354 = vweird.f32 %v2193
    %vm2355 = vweird.f32 %v2349
    %vm2356 = vmor %vm2354, %vm2355
    %v2357 = vsel %vm2356, %v2349, %v2353
    %v2358 = vand.u32 2147483647, %v2193
    %vm2359 = vcmp.eq.f32.partialorder %v2358, 8.507059e+37
    %v2360 = vand.u32 %v2193, 2147483648
    %v2361 = vor.u32 1.1754944e-38, %v2360
    %v2362 = vsel %vm2359, %v2361, %v2357
    %v2363 = vmul.f32 1.0, %v2362
    %v2364 = vrcp.pop %v2194
    %v2365 = vmul.f32 %v2194, %v2364
    %v2366 = vsub.f32 1.0, %v2365
    %v2367 = vmul.f32 %v2364, %v2366
    %v2368 = vadd.f32 %v2364, %v2367
    %vm2369 = vweird.f32 %v2194
    %vm2370 = vweird.f32 %v2364
    %vm2371 = vmor %vm2369, %vm2370
    %v2372 = vsel %vm2371, %v2364, %v2368
    %v2373 = vand.u32 2147483647, %v2194
    %vm2374 = vcmp.eq.f32.partialorder %v2373, 8.507059e+37
    %v2375 = vand.u32 %v2194, 2147483648
    %v2376 = vor.u32 1.1754944e-38, %v2375
    %v2377 = vsel %vm2374, %v2376, %v2372
    %v2378 = vmul.f32 1.0, %v2377
    %v2379 = vrcp.pop %v2195
    %v2380 = vmul.f32 %v2195, %v2379
    %v2381 = vsub.f32 1.0, %v2380
    %v2382 = vmul.f32 %v2379, %v2381
    %v2383 = vadd.f32 %v2379, %v2382
    %vm2384 = vweird.f32 %v2195
    %vm2385 = vweird.f32 %v2379
    %vm2386 = vmor %vm2384, %vm2385
    %v2387 = vsel %vm2386, %v2379, %v2383
    %v2388 = vand.u32 2147483647, %v2195
    %vm2389 = vcmp.eq.f32.partialorder %v2388, 8.507059e+37
    %v2390 = vand.u32 %v2195, 2147483648
    %v2391 = vor.u32 1.1754944e-38, %v2390
    %v2392 = vsel %vm2389, %v2391, %v2387
    %v2393 = vmul.f32 1.0, %v2392
    %v2394 = vrcp.pop %v2196
    %v2395 = vmul.f32 %v2196, %v2394
    %v2396 = vsub.f32 1.0, %v2395
    %v2397 = vmul.f32 %v2394, %v2396
    %v2398 = vadd.f32 %v2394, %v2397
    %vm2399 = vweird.f32 %v2196
    %vm2400 = vweird.f32 %v2394
    %vm2401 = vmor %vm2399, %vm2400
    %v2402 = vsel %vm2401, %v2394, %v2398
    %v2403 = vand.u32 2147483647, %v2196
    %vm2404 = vcmp.eq.f32.partialorder %v2403, 8.507059e+37
    %v2405 = vand.u32 %v2196, 2147483648
    %v2406 = vor.u32 1.1754944e-38, %v2405
    %v2407 = vsel %vm2404, %v2406, %v2402
    %v2408 = vmul.f32 1.0, %v2407
    %v2409 = vrcp.pop %v2197
    %v2410 = vmul.f32 %v2197, %v2409
    %v2411 = vsub.f32 1.0, %v2410
    %v2412 = vmul.f32 %v2409, %v2411
    %v2413 = vadd.f32 %v2409, %v2412
    %vm2414 = vweird.f32 %v2197
    %vm2415 = vweird.f32 %v2409
    %vm2416 = vmor %vm2414, %vm2415
    %v2417 = vsel %vm2416, %v2409, %v2413
    %v2418 = vand.u32 2147483647, %v2197
    %vm2419 = vcmp.eq.f32.partialorder %v2418, 8.507059e+37
    %v2420 = vand.u32 %v2197, 2147483648
    %v2421 = vor.u32 1.1754944e-38, %v2420
    %v2422 = vsel %vm2419, %v2421, %v2417
    %v2423 = vmul.f32 1.0, %v2422
    %v2424 = vrcp.pop %v2198
    %v2425 = vmul.f32 %v2198, %v2424
    %v2426 = vsub.f32 1.0, %v2425
    %v2427 = vmul.f32 %v2424, %v2426
    %v2428 = vadd.f32 %v2424, %v2427
    %vm2429 = vweird.f32 %v2198
    %vm2430 = vweird.f32 %v2424
    %vm2431 = vmor %vm2429, %vm2430
    %v2432 = vsel %vm2431, %v2424, %v2428
    %v2433 = vand.u32 2147483647, %v2198
    %vm2434 = vcmp.eq.f32.partialorder %v2433, 8.507059e+37
    %v2435 = vand.u32 %v2198, 2147483648
    %v2436 = vor.u32 1.1754944e-38, %v2435
    %v2437 = vsel %vm2434, %v2436, %v2432
    %v2438 = vmul.f32 1.0, %v2437
    %2439 = vrot.lane.b32.xlu0 %v2089, 96
    %v2440 = vpop.permute.xlu0 %2439
    %2441 = vrot.lane.b32.xlu0 %v2082, 96
    %v2442 = vpop.permute.xlu0 %2441
    %2443 = vrot.lane.b32.xlu0 %v2090, 96
    %v2444 = vpop.permute.xlu0 %2443
    %2445 = vrot.lane.b32.xlu0 %v2091, 96
    %v2446 = vpop.permute.xlu0 %2445
    %2447 = vrot.lane.b32.xlu0 %v2092, 96
    %v2448 = vpop.permute.xlu0 %2447
    %2449 = vrot.lane.b32.xlu0 %v2093, 96
    %v2450 = vpop.permute.xlu0 %2449
    %2451 = vrot.lane.b32.xlu0 %v2094, 96
    %v2452 = vpop.permute.xlu0 %2451
    %2453 = vrot.lane.b32.xlu0 %v2095, 96
    %v2454 = vpop.permute.xlu0 %2453
    %2455 = vrot.lane.b32.xlu0 %v2096, 96
    %v2456 = vpop.permute.xlu0 %2455
    %2457 = vrot.lane.b32.xlu0 %v2085, 96
    %v2458 = vpop.permute.xlu0 %2457
    %2459 = vrot.lane.b32.xlu0 %v2097, 96
    %v2460 = vpop.permute.xlu0 %2459
    %2461 = vrot.lane.b32.xlu0 %v2098, 96
    %v2462 = vpop.permute.xlu0 %2461
    %2463 = vrot.lane.b32.xlu0 %v2099, 96
    %v2464 = vpop.permute.xlu0 %2463
    %2465 = vrot.lane.b32.xlu0 %v2100, 96
    %v2466 = vpop.permute.xlu0 %2465
    %2467 = vrot.lane.b32.xlu0 %v2101, 96
    %v2468 = vpop.permute.xlu0 %2467
    %2469 = vrot.lane.b32.xlu0 %v2102, 96
    %v2470 = vpop.permute.xlu0 %2469
    %v2487 = vmul.f32 %v2213, %v2440
    %v2488 = vmul.f32 %v2228, %v2442
    %v2489 = vmul.f32 %v2243, %v2444
    %v2490 = vmul.f32 %v2258, %v2446
    %v2491 = vmul.f32 %v2273, %v2448
    %v2492 = vmul.f32 %v2288, %v2450
    %v2493 = vmul.f32 %v2303, %v2452
    %v2494 = vmul.f32 %v2318, %v2454
    %v2495 = vmul.f32 %v2333, %v2456
    %v2496 = vmul.f32 %v2348, %v2458
    %v2497 = vmul.f32 %v2363, %v2460
    %v2498 = vmul.f32 %v2378, %v2462
    %v2499 = vmul.f32 %v2393, %v2464
    %v2500 = vmul.f32 %v2408, %v2466
    %v2501 = vmul.f32 %v2423, %v2468
    %v2502 = vmul.f32 %v2438, %v2470
    %2519 = vrot.lane.b32.xlu0 %v2487, 32
    %v2520 = vpop.permute.xlu0 %2519
    %2521 = vrot.lane.b32.xlu0 %v2488, 32
    %v2522 = vpop.permute.xlu0 %2521
    %2523 = vrot.lane.b32.xlu0 %v2489, 32
    %v2524 = vpop.permute.xlu0 %2523
    %2525 = vrot.lane.b32.xlu0 %v2490, 32
    %v2526 = vpop.permute.xlu0 %2525
    %2527 = vrot.lane.b32.xlu0 %v2491, 32
    %v2528 = vpop.permute.xlu0 %2527
    %2529 = vrot.lane.b32.xlu0 %v2492, 32
    %v2530 = vpop.permute.xlu0 %2529
    %2531 = vrot.lane.b32.xlu0 %v2493, 32
    %v2532 = vpop.permute.xlu0 %2531
    %2533 = vrot.lane.b32.xlu0 %v2494, 32
    %v2534 = vpop.permute.xlu0 %2533
    %2535 = vrot.lane.b32.xlu0 %v2495, 32
    %v2536 = vpop.permute.xlu0 %2535
    %2537 = vrot.lane.b32.xlu0 %v2496, 32
    %v2538 = vpop.permute.xlu0 %2537
    %2539 = vrot.lane.b32.xlu0 %v2497, 32
    %v2540 = vpop.permute.xlu0 %2539
    %2541 = vrot.lane.b32.xlu0 %v2498, 32
    %v2542 = vpop.permute.xlu0 %2541
    %2543 = vrot.lane.b32.xlu0 %v2499, 32
    %v2544 = vpop.permute.xlu0 %2543
    %2545 = vrot.lane.b32.xlu0 %v2500, 32
    %v2546 = vpop.permute.xlu0 %2545
    %2547 = vrot.lane.b32.xlu0 %v2501, 32
    %v2548 = vpop.permute.xlu0 %2547
    %2549 = vrot.lane.b32.xlu0 %v2502, 32
    %v2550 = vpop.permute.xlu0 %2549
    %v2567 = vadd.f32 %v1277, %v2520
    %v2568 = vadd.f32 %v1280, %v2522
    %v2569 = vadd.f32 %v1283, %v2524
    %v2570 = vadd.f32 %v1286, %v2526
    %v2571 = vadd.f32 %v1289, %v2528
    %v2572 = vadd.f32 %v1292, %v2530
    %v2573 = vadd.f32 %v1295, %v2532
    %v2574 = vadd.f32 %v1298, %v2534
    %v2575 = vadd.f32 %v1301, %v2536
    %v2576 = vadd.f32 %v1304, %v2538
    %v2577 = vadd.f32 %v1307, %v2540
    %v2578 = vadd.f32 %v1310, %v2542
    %v2579 = vadd.f32 %v1313, %v2544
    %v2580 = vadd.f32 %v1316, %v2546
    %v2581 = vadd.f32 %v1319, %v2548
    %v2582 = vadd.f32 %v1322, %v2550
    %v2583 = vtanh.pop %v2567
    %v2584 = vtanh.pop %v2568
    %v2585 = vtanh.pop %v2569
    %v2586 = vtanh.pop %v2570
    %v2587 = vtanh.pop %v2571
    %v2588 = vtanh.pop %v2572
    %v2589 = vtanh.pop %v2573
    %v2590 = vtanh.pop %v2574
    %v2591 = vtanh.pop %v2575
    %v2592 = vtanh.pop %v2576
    %v2593 = vtanh.pop %v2577
    %v2594 = vtanh.pop %v2578
    %v2595 = vtanh.pop %v2579
    %v2596 = vtanh.pop %v2580
    %v2597 = vtanh.pop %v2581
    %v2598 = vtanh.pop %v2582
    %v2599 = vsub.f32 1.0, %v2213
    %v2600 = vsub.f32 1.0, %v2228
    %v2601 = vsub.f32 1.0, %v2243
    %v2602 = vsub.f32 1.0, %v2258
    %v2603 = vsub.f32 1.0, %v2273
    %v2604 = vsub.f32 1.0, %v2288
    %v2605 = vsub.f32 1.0, %v2303
    %v2606 = vsub.f32 1.0, %v2318
    %v2607 = vsub.f32 1.0, %v2333
    %v2608 = vsub.f32 1.0, %v2348
    %v2609 = vsub.f32 1.0, %v2363
    %v2610 = vsub.f32 1.0, %v2378
    %v2611 = vsub.f32 1.0, %v2393
    %v2612 = vsub.f32 1.0, %v2408
    %v2613 = vsub.f32 1.0, %v2423
    %v2614 = vsub.f32 1.0, %v2438
    %2631 = vrot.lane.b32.xlu0 %v2583, 112
    %v2632 = vpop.permute.xlu0 %2631
    %2633 = vrot.lane.b32.xlu0 %v2584, 112
    %v2634 = vpop.permute.xlu0 %2633
    %2635 = vrot.lane.b32.xlu0 %v2585, 112
    %v2636 = vpop.permute.xlu0 %2635
    %2637 = vrot.lane.b32.xlu0 %v2586, 112
    %v2638 = vpop.permute.xlu0 %2637
    %2639 = vrot.lane.b32.xlu0 %v2587, 112
    %v2640 = vpop.permute.xlu0 %2639
    %2641 = vrot.lane.b32.xlu0 %v2588, 112
    %v2642 = vpop.permute.xlu0 %2641
    %2643 = vrot.lane.b32.xlu0 %v2589, 112
    %v2644 = vpop.permute.xlu0 %2643
    %2645 = vrot.lane.b32.xlu0 %v2590, 112
    %v2646 = vpop.permute.xlu0 %2645
    %2647 = vrot.lane.b32.xlu0 %v2591, 112
    %v2648 = vpop.permute.xlu0 %2647
    %2649 = vrot.lane.b32.xlu0 %v2592, 112
    %v2650 = vpop.permute.xlu0 %2649
    %2651 = vrot.lane.b32.xlu0 %v2593, 112
    %v2652 = vpop.permute.xlu0 %2651
    %2653 = vrot.lane.b32.xlu0 %v2594, 112
    %v2654 = vpop.permute.xlu0 %2653
    %2655 = vrot.lane.b32.xlu0 %v2595, 112
    %v2656 = vpop.permute.xlu0 %2655
    %2657 = vrot.lane.b32.xlu0 %v2596, 112
    %v2658 = vpop.permute.xlu0 %2657
    %2659 = vrot.lane.b32.xlu0 %v2597, 112
    %v2660 = vpop.permute.xlu0 %2659
    %2661 = vrot.lane.b32.xlu0 %v2598, 112
    %v2662 = vpop.permute.xlu0 %2661
    %v2679 = vmul.f32 %v2599, %v2632
    %v2680 = vmul.f32 %v2600, %v2634
    %v2681 = vmul.f32 %v2601, %v2636
    %v2682 = vmul.f32 %v2602, %v2638
    %v2683 = vmul.f32 %v2603, %v2640
    %v2684 = vmul.f32 %v2604, %v2642
    %v2685 = vmul.f32 %v2605, %v2644
    %v2686 = vmul.f32 %v2606, %v2646
    %v2687 = vmul.f32 %v2607, %v2648
    %v2688 = vmul.f32 %v2608, %v2650
    %v2689 = vmul.f32 %v2609, %v2652
    %v2690 = vmul.f32 %v2610, %v2654
    %v2691 = vmul.f32 %v2611, %v2656
    %v2692 = vmul.f32 %v2612, %v2658
    %v2693 = vmul.f32 %v2613, %v2660
    %v2694 = vmul.f32 %v2614, %v2662
    %v2695 = vrot.slane %v2056, 7
    %v2696 = vrot.slane %v2056, 1
    %v2697 = vrot.slane %v2056, 2
    %v2698 = vrot.slane %v2056, 3
    %v2699 = vrot.slane %v2056, 4
    %v2700 = vrot.slane %v2056, 5
    %v2701 = vrot.slane %v2056, 6
    %v2702 = vrot.slane %v2057, 7
    %v2703 = vrot.slane %v2057, 1
    %v2704 = vrot.slane %v2057, 2
    %v2705 = vrot.slane %v2057, 3
    %v2706 = vrot.slane %v2057, 4
    %v2707 = vrot.slane %v2057, 5
    %v2708 = vrot.slane %v2057, 6
    %2709 = vrot.lane.b32.xlu0 %v2695, 16
    %v2710 = vpop.permute.xlu0 %2709
    %2711 = vrot.lane.b32.xlu0 %v2056, 16
    %v2712 = vpop.permute.xlu0 %2711
    %2713 = vrot.lane.b32.xlu0 %v2696, 16
    %v2714 = vpop.permute.xlu0 %2713
    %2715 = vrot.lane.b32.xlu0 %v2697, 16
    %v2716 = vpop.permute.xlu0 %2715
    %2717 = vrot.lane.b32.xlu0 %v2698, 16
    %v2718 = vpop.permute.xlu0 %2717
    %2719 = vrot.lane.b32.xlu0 %v2699, 16
    %v2720 = vpop.permute.xlu0 %2719
    %2721 = vrot.lane.b32.xlu0 %v2700, 16
    %v2722 = vpop.permute.xlu0 %2721
    %2723 = vrot.lane.b32.xlu0 %v2701, 16
    %v2724 = vpop.permute.xlu0 %2723
    %2725 = vrot.lane.b32.xlu0 %v2702, 16
    %v2726 = vpop.permute.xlu0 %2725
    %2727 = vrot.lane.b32.xlu0 %v2057, 16
    %v2728 = vpop.permute.xlu0 %2727
    %2729 = vrot.lane.b32.xlu0 %v2703, 16
    %v2730 = vpop.permute.xlu0 %2729
    %2731 = vrot.lane.b32.xlu0 %v2704, 16
    %v2732 = vpop.permute.xlu0 %2731
    %2733 = vrot.lane.b32.xlu0 %v2705, 16
    %v2734 = vpop.permute.xlu0 %2733
    %2735 = vrot.lane.b32.xlu0 %v2706, 16
    %v2736 = vpop.permute.xlu0 %2735
    %2737 = vrot.lane.b32.xlu0 %v2707, 16
    %v2738 = vpop.permute.xlu0 %2737
    %2739 = vrot.lane.b32.xlu0 %v2708, 16
    %v2740 = vpop.permute.xlu0 %2739
    %v2757 = vmul.f32 %v2213, %v2710
    %v2758 = vmul.f32 %v2228, %v2712
    %v2759 = vmul.f32 %v2243, %v2714
    %v2760 = vmul.f32 %v2258, %v2716
    %v2761 = vmul.f32 %v2273, %v2718
    %v2762 = vmul.f32 %v2288, %v2720
    %v2763 = vmul.f32 %v2303, %v2722
    %v2764 = vmul.f32 %v2318, %v2724
    %v2765 = vmul.f32 %v2333, %v2726
    %v2766 = vmul.f32 %v2348, %v2728
    %v2767 = vmul.f32 %v2363, %v2730
    %v2768 = vmul.f32 %v2378, %v2732
    %v2769 = vmul.f32 %v2393, %v2734
    %v2770 = vmul.f32 %v2408, %v2736
    %v2771 = vmul.f32 %v2423, %v2738
    %v2772 = vmul.f32 %v2438, %v2740
    %v2773 = vadd.f32 %v2679, %v2757
    %v2774 = vadd.f32 %v2680, %v2758
    %v2775 = vadd.f32 %v2681, %v2759
    %v2776 = vadd.f32 %v2682, %v2760
    %v2777 = vadd.f32 %v2683, %v2761
    %v2778 = vadd.f32 %v2684, %v2762
    %v2779 = vadd.f32 %v2685, %v2763
    %v2780 = vadd.f32 %v2686, %v2764
    %v2781 = vadd.f32 %v2687, %v2765
    %v2782 = vadd.f32 %v2688, %v2766
    %v2783 = vadd.f32 %v2689, %v2767
    %v2784 = vadd.f32 %v2690, %v2768
    %v2785 = vadd.f32 %v2691, %v2769
    %v2786 = vadd.f32 %v2692, %v2770
    %v2787 = vadd.f32 %v2693, %v2771
    %v2788 = vadd.f32 %v2694, %v2772
    %vm2789 = vcmp.gt.s32.totalorder %v197, 1
    %vm2790 = vcmp.gt.s32.totalorder %v198, 1
    %v2791 = vsel %vm2789, 1, 0
    %v2792 = vsel %vm2790, 1, 0
    %2793 = vset.pattern.permute.xlu0 0
    %2794 = vperm.xlu0 %2793, %v2791
    %v2795 = vpop.permute.xlu0 %2794
    %2796 = vset.pattern.permute.xlu0 0
    %2797 = vperm.xlu0 %2796, %v2792
    %v2798 = vpop.permute.xlu0 %2797
    %vm2799 = vcmp.eq.s32.totalorder %v2795, 1
    %vm2800 = vcmp.eq.s32.totalorder %v2798, 1
    %v2817 = vrot.slane %v2773, 1
    %v2818 = vsel %vm437, %v2774, %v2817
    %v2819 = vrot.slane %v2775, 7
    %v2820 = vsel %vm439, %v2819, %v2818
    %v2821 = vrot.slane %v2776, 6
    %v2822 = vsel %vm441, %v2821, %v2820
    %v2823 = vrot.slane %v2777, 5
    %v2824 = vsel %vm443, %v2823, %v2822
    %v2825 = vrot.slane %v2778, 4
    %v2826 = vsel %vm445, %v2825, %v2824
    %v2827 = vrot.slane %v2779, 3
    %v2828 = vsel %vm447, %v2827, %v2826
    %v2829 = vrot.slane %v2780, 2
    %v2830 = vsel %vm449, %v2829, %v2828
    %v2831 = vrot.slane %v2781, 1
    %v2832 = vsel %vm437, %v2782, %v2831
    %v2833 = vrot.slane %v2783, 7
    %v2834 = vsel %vm439, %v2833, %v2832
    %v2835 = vrot.slane %v2784, 6
    %v2836 = vsel %vm441, %v2835, %v2834
    %v2837 = vrot.slane %v2785, 5
    %v2838 = vsel %vm443, %v2837, %v2836
    %v2839 = vrot.slane %v2786, 4
    %v2840 = vsel %vm445, %v2839, %v2838
    %v2841 = vrot.slane %v2787, 3
    %v2842 = vsel %vm447, %v2841, %v2840
    %v2843 = vrot.slane %v2788, 2
    %v2844 = vsel %vm449, %v2843, %v2842
    %2845 = vrot.lane.b32.xlu0 %v2830, 112
    %v2846 = vpop.permute.xlu0 %2845
    %2847 = vrot.lane.b32.xlu0 %v2844, 112
    %v2848 = vpop.permute.xlu0 %2847
    %v2851 = vsel %vm2799, %v2846, %v2056
    %v2852 = vsel %vm2800, %v2848, %v2057
    %v2854 = vsel %vm1327, %v2851, 0
    %v2857 = vsel %vm1327, %v2852, 0
    %2859 = vmatpush.msra.mxu0 0.0
    %2860 = vmatpush.msra.mxu0 0.0
    %2861 = vmatpush.msra.mxu0 0.0
    %2862 = vmatpush.msra.mxu0 0.0
    %2863 = vmatpush.msra.mxu0 0.0
    %2864 = vmatpush.msra.mxu0 0.0
    %2865 = vmatpush.msra.mxu0 0.0
    %2866 = vmatpush.msra.mxu0 0.0
    %2867 = vmatpush.msra.mxu0 0.0
    %2868 = vmatpush.msra.mxu0 0.0
    %2869 = vmatpush.msra.mxu0 0.0
    %2870 = vmatpush.msra.mxu0 0.0
    %2871 = vmatpush.msra.mxu0 0.0
    %2872 = vmatpush.msra.mxu0 0.0
    %2873 = vmatpush.msra.mxu0 %v1325
    %2874 = vmatpush.msra.mxu0 %v1324
    %2875 = vmatmul.f32.gmra.mxu0 %v2854
    %v2876 = vpop.f32.mrf.mxu0
    %v2877 = vadd.f32 %v1326, %v2876
    %2878 = vmatmul.f32.gmra.mxu0 %v2857
    %v2879 = vpop.f32.mrf.mxu0
    %v2880 = vadd.f32 %v1326, %v2879
    %2881 = vdwg.mxu0
    %v2884 = vrot.slane %v2877, 6
    %v2885 = vrot.slane %v2877, 7
    %v2886 = vrot.slane %v2877, 1
    %v2887 = vrot.slane %v2877, 2
    %v2888 = vrot.slane %v2877, 3
    %v2889 = vrot.slane %v2877, 4
    %v2890 = vrot.slane %v2877, 5
    %v2891 = vrot.slane %v2880, 6
    %v2892 = vrot.slane %v2880, 7
    %v2893 = vrot.slane %v2880, 1
    %v2894 = vrot.slane %v2880, 2
    %v2895 = vrot.slane %v2880, 3
    %v2896 = vrot.slane %v2880, 4
    %v2897 = vrot.slane %v2880, 5
    %v2914 = vadd.f32 %v1277, %v2884
    %v2915 = vadd.f32 %v1280, %v2885
    %v2916 = vadd.f32 %v1283, %v2877
    %v2917 = vadd.f32 %v1286, %v2886
    %v2918 = vadd.f32 %v1289, %v2887
    %v2919 = vadd.f32 %v1292, %v2888
    %v2920 = vadd.f32 %v1295, %v2889
    %v2921 = vadd.f32 %v1298, %v2890
    %v2922 = vadd.f32 %v1301, %v2891
    %v2923 = vadd.f32 %v1304, %v2892
    %v2924 = vadd.f32 %v1307, %v2880
    %v2925 = vadd.f32 %v1310, %v2893
    %v2926 = vadd.f32 %v1313, %v2894
    %v2927 = vadd.f32 %v1316, %v2895
    %v2928 = vadd.f32 %v1319, %v2896
    %v2929 = vadd.f32 %v1322, %v2897
    %v2930 = vxor.u32 %v2914, 2147483648
    %v2931 = vxor.u32 %v2915, 2147483648
    %v2932 = vxor.u32 %v2916, 2147483648
    %v2933 = vxor.u32 %v2917, 2147483648
    %v2934 = vxor.u32 %v2918, 2147483648
    %v2935 = vxor.u32 %v2919, 2147483648
    %v2936 = vxor.u32 %v2920, 2147483648
    %v2937 = vxor.u32 %v2921, 2147483648
    %v2938 = vxor.u32 %v2922, 2147483648
    %v2939 = vxor.u32 %v2923, 2147483648
    %v2940 = vxor.u32 %v2924, 2147483648
    %v2941 = vxor.u32 %v2925, 2147483648
    %v2942 = vxor.u32 %v2926, 2147483648
    %v2943 = vxor.u32 %v2927, 2147483648
    %v2944 = vxor.u32 %v2928, 2147483648
    %v2945 = vxor.u32 %v2929, 2147483648
    %v2946 = vmul.f32 %v2930, 1.442695
    %v2947 = vpow.pop %v2946
    %v2948 = vmul.f32 %v2931, 1.442695
    %v2949 = vpow.pop %v2948
    %v2950 = vmul.f32 %v2932, 1.442695
    %v2951 = vpow.pop %v2950
    %v2952 = vmul.f32 %v2933, 1.442695
    %v2953 = vpow.pop %v2952
    %v2954 = vmul.f32 %v2934, 1.442695
    %v2955 = vpow.pop %v2954
    %v2956 = vmul.f32 %v2935, 1.442695
    %v2957 = vpow.pop %v2956
    %v2958 = vmul.f32 %v2936, 1.442695
    %v2959 = vpow.pop %v2958
    %v2960 = vmul.f32 %v2937, 1.442695
    %v2961 = vpow.pop %v2960
    %v2962 = vmul.f32 %v2938, 1.442695
    %v2963 = vpow.pop %v2962
    %v2964 = vmul.f32 %v2939, 1.442695
    %v2965 = vpow.pop %v2964
    %v2966 = vmul.f32 %v2940, 1.442695
    %v2967 = vpow.pop %v2966
    %v2968 = vmul.f32 %v2941, 1.442695
    %v2969 = vpow.pop %v2968
    %v2970 = vmul.f32 %v2942, 1.442695
    %v2971 = vpow.pop %v2970
    %v2972 = vmul.f32 %v2943, 1.442695
    %v2973 = vpow.pop %v2972
    %v2974 = vmul.f32 %v2944, 1.442695
    %v2975 = vpow.pop %v2974
    %v2976 = vmul.f32 %v2945, 1.442695
    %v2977 = vpow.pop %v2976
    %v2978 = vadd.f32 %v2947, 1.0
    %v2979 = vadd.f32 %v2949, 1.0
    %v2980 = vadd.f32 %v2951, 1.0
    %v2981 = vadd.f32 %v2953, 1.0
    %v2982 = vadd.f32 %v2955, 1.0
    %v2983 = vadd.f32 %v2957, 1.0
    %v2984 = vadd.f32 %v2959, 1.0
    %v2985 = vadd.f32 %v2961, 1.0
    %v2986 = vadd.f32 %v2963, 1.0
    %v2987 = vadd.f32 %v2965, 1.0
    %v2988 = vadd.f32 %v2967, 1.0
    %v2989 = vadd.f32 %v2969, 1.0
    %v2990 = vadd.f32 %v2971, 1.0
    %v2991 = vadd.f32 %v2973, 1.0
    %v2992 = vadd.f32 %v2975, 1.0
    %v2993 = vadd.f32 %v2977, 1.0
    %v2994 = vrcp.pop %v2978
    %v2995 = vmul.f32 %v2978, %v2994
    %v2996 = vsub.f32 1.0, %v2995
    %v2997 = vmul.f32 %v2994, %v2996
    %v2998 = vadd.f32 %v2994, %v2997
    %vm2999 = vweird.f32 %v2978
    %vm3000 = vweird.f32 %v2994
    %vm3001 = vmor %vm2999, %vm3000
    %v3002 = vsel %vm3001, %v2994, %v2998
    %v3003 = vand.u32 2147483647, %v2978
    %vm3004 = vcmp.eq.f32.partialorder %v3003, 8.507059e+37
    %v3005 = vand.u32 %v2978, 2147483648
    %v3006 = vor.u32 1.1754944e-38, %v3005
    %v3007 = vsel %vm3004, %v3006, %v3002
    %v3008 = vmul.f32 1.0, %v3007
    %v3009 = vrcp.pop %v2979
    %v3010 = vmul.f32 %v2979, %v3009
    %v3011 = vsub.f32 1.0, %v3010
    %v3012 = vmul.f32 %v3009, %v3011
    %v3013 = vadd.f32 %v3009, %v3012
    %vm3014 = vweird.f32 %v2979
    %vm3015 = vweird.f32 %v3009
    %vm3016 = vmor %vm3014, %vm3015
    %v3017 = vsel %vm3016, %v3009, %v3013
    %v3018 = vand.u32 2147483647, %v2979
    %vm3019 = vcmp.eq.f32.partialorder %v3018, 8.507059e+37
    %v3020 = vand.u32 %v2979, 2147483648
    %v3021 = vor.u32 1.1754944e-38, %v3020
    %v3022 = vsel %vm3019, %v3021, %v3017
    %v3023 = vmul.f32 1.0, %v3022
    %v3024 = vrcp.pop %v2980
    %v3025 = vmul.f32 %v2980, %v3024
    %v3026 = vsub.f32 1.0, %v3025
    %v3027 = vmul.f32 %v3024, %v3026
    %v3028 = vadd.f32 %v3024, %v3027
    %vm3029 = vweird.f32 %v2980
    %vm3030 = vweird.f32 %v3024
    %vm3031 = vmor %vm3029, %vm3030
    %v3032 = vsel %vm3031, %v3024, %v3028
    %v3033 = vand.u32 2147483647, %v2980
    %vm3034 = vcmp.eq.f32.partialorder %v3033, 8.507059e+37
    %v3035 = vand.u32 %v2980, 2147483648
    %v3036 = vor.u32 1.1754944e-38, %v3035
    %v3037 = vsel %vm3034, %v3036, %v3032
    %v3038 = vmul.f32 1.0, %v3037
    %v3039 = vrcp.pop %v2981
    %v3040 = vmul.f32 %v2981, %v3039
    %v3041 = vsub.f32 1.0, %v3040
    %v3042 = vmul.f32 %v3039, %v3041
    %v3043 = vadd.f32 %v3039, %v3042
    %vm3044 = vweird.f32 %v2981
    %vm3045 = vweird.f32 %v3039
    %vm3046 = vmor %vm3044, %vm3045
    %v3047 = vsel %vm3046, %v3039, %v3043
    %v3048 = vand.u32 2147483647, %v2981
    %vm3049 = vcmp.eq.f32.partialorder %v3048, 8.507059e+37
    %v3050 = vand.u32 %v2981, 2147483648
    %v3051 = vor.u32 1.1754944e-38, %v3050
    %v3052 = vsel %vm3049, %v3051, %v3047
    %v3053 = vmul.f32 1.0, %v3052
    %v3054 = vrcp.pop %v2982
    %v3055 = vmul.f32 %v2982, %v3054
    %v3056 = vsub.f32 1.0, %v3055
    %v3057 = vmul.f32 %v3054, %v3056
    %v3058 = vadd.f32 %v3054, %v3057
    %vm3059 = vweird.f32 %v2982
    %vm3060 = vweird.f32 %v3054
    %vm3061 = vmor %vm3059, %vm3060
    %v3062 = vsel %vm3061, %v3054, %v3058
    %v3063 = vand.u32 2147483647, %v2982
    %vm3064 = vcmp.eq.f32.partialorder %v3063, 8.507059e+37
    %v3065 = vand.u32 %v2982, 2147483648
    %v3066 = vor.u32 1.1754944e-38, %v3065
    %v3067 = vsel %vm3064, %v3066, %v3062
    %v3068 = vmul.f32 1.0, %v3067
    %v3069 = vrcp.pop %v2983
    %v3070 = vmul.f32 %v2983, %v3069
    %v3071 = vsub.f32 1.0, %v3070
    %v3072 = vmul.f32 %v3069, %v3071
    %v3073 = vadd.f32 %v3069, %v3072
    %vm3074 = vweird.f32 %v2983
    %vm3075 = vweird.f32 %v3069
    %vm3076 = vmor %vm3074, %vm3075
    %v3077 = vsel %vm3076, %v3069, %v3073
    %v3078 = vand.u32 2147483647, %v2983
    %vm3079 = vcmp.eq.f32.partialorder %v3078, 8.507059e+37
    %v3080 = vand.u32 %v2983, 2147483648
    %v3081 = vor.u32 1.1754944e-38, %v3080
    %v3082 = vsel %vm3079, %v3081, %v3077
    %v3083 = vmul.f32 1.0, %v3082
    %v3084 = vrcp.pop %v2984
    %v3085 = vmul.f32 %v2984, %v3084
    %v3086 = vsub.f32 1.0, %v3085
    %v3087 = vmul.f32 %v3084, %v3086
    %v3088 = vadd.f32 %v3084, %v3087
    %vm3089 = vweird.f32 %v2984
    %vm3090 = vweird.f32 %v3084
    %vm3091 = vmor %vm3089, %vm3090
    %v3092 = vsel %vm3091, %v3084, %v3088
    %v3093 = vand.u32 2147483647, %v2984
    %vm3094 = vcmp.eq.f32.partialorder %v3093, 8.507059e+37
    %v3095 = vand.u32 %v2984, 2147483648
    %v3096 = vor.u32 1.1754944e-38, %v3095
    %v3097 = vsel %vm3094, %v3096, %v3092
    %v3098 = vmul.f32 1.0, %v3097
    %v3099 = vrcp.pop %v2985
    %v3100 = vmul.f32 %v2985, %v3099
    %v3101 = vsub.f32 1.0, %v3100
    %v3102 = vmul.f32 %v3099, %v3101
    %v3103 = vadd.f32 %v3099, %v3102
    %vm3104 = vweird.f32 %v2985
    %vm3105 = vweird.f32 %v3099
    %vm3106 = vmor %vm3104, %vm3105
    %v3107 = vsel %vm3106, %v3099, %v3103
    %v3108 = vand.u32 2147483647, %v2985
    %vm3109 = vcmp.eq.f32.partialorder %v3108, 8.507059e+37
    %v3110 = vand.u32 %v2985, 2147483648
    %v3111 = vor.u32 1.1754944e-38, %v3110
    %v3112 = vsel %vm3109, %v3111, %v3107
    %v3113 = vmul.f32 1.0, %v3112
    %v3114 = vrcp.pop %v2986
    %v3115 = vmul.f32 %v2986, %v3114
    %v3116 = vsub.f32 1.0, %v3115
    %v3117 = vmul.f32 %v3114, %v3116
    %v3118 = vadd.f32 %v3114, %v3117
    %vm3119 = vweird.f32 %v2986
    %vm3120 = vweird.f32 %v3114
    %vm3121 = vmor %vm3119, %vm3120
    %v3122 = vsel %vm3121, %v3114, %v3118
    %v3123 = vand.u32 2147483647, %v2986
    %vm3124 = vcmp.eq.f32.partialorder %v3123, 8.507059e+37
    %v3125 = vand.u32 %v2986, 2147483648
    %v3126 = vor.u32 1.1754944e-38, %v3125
    %v3127 = vsel %vm3124, %v3126, %v3122
    %v3128 = vmul.f32 1.0, %v3127
    %v3129 = vrcp.pop %v2987
    %v3130 = vmul.f32 %v2987, %v3129
    %v3131 = vsub.f32 1.0, %v3130
    %v3132 = vmul.f32 %v3129, %v3131
    %v3133 = vadd.f32 %v3129, %v3132
    %vm3134 = vweird.f32 %v2987
    %vm3135 = vweird.f32 %v3129
    %vm3136 = vmor %vm3134, %vm3135
    %v3137 = vsel %vm3136, %v3129, %v3133
    %v3138 = vand.u32 2147483647, %v2987
    %vm3139 = vcmp.eq.f32.partialorder %v3138, 8.507059e+37
    %v3140 = vand.u32 %v2987, 2147483648
    %v3141 = vor.u32 1.1754944e-38, %v3140
    %v3142 = vsel %vm3139, %v3141, %v3137
    %v3143 = vmul.f32 1.0, %v3142
    %v3144 = vrcp.pop %v2988
    %v3145 = vmul.f32 %v2988, %v3144
    %v3146 = vsub.f32 1.0, %v3145
    %v3147 = vmul.f32 %v3144, %v3146
    %v3148 = vadd.f32 %v3144, %v3147
    %vm3149 = vweird.f32 %v2988
    %vm3150 = vweird.f32 %v3144
    %vm3151 = vmor %vm3149, %vm3150
    %v3152 = vsel %vm3151, %v3144, %v3148
    %v3153 = vand.u32 2147483647, %v2988
    %vm3154 = vcmp.eq.f32.partialorder %v3153, 8.507059e+37
    %v3155 = vand.u32 %v2988, 2147483648
    %v3156 = vor.u32 1.1754944e-38, %v3155
    %v3157 = vsel %vm3154, %v3156, %v3152
    %v3158 = vmul.f32 1.0, %v3157
    %v3159 = vrcp.pop %v2989
    %v3160 = vmul.f32 %v2989, %v3159
    %v3161 = vsub.f32 1.0, %v3160
    %v3162 = vmul.f32 %v3159, %v3161
    %v3163 = vadd.f32 %v3159, %v3162
    %vm3164 = vweird.f32 %v2989
    %vm3165 = vweird.f32 %v3159
    %vm3166 = vmor %vm3164, %vm3165
    %v3167 = vsel %vm3166, %v3159, %v3163
    %v3168 = vand.u32 2147483647, %v2989
    %vm3169 = vcmp.eq.f32.partialorder %v3168, 8.507059e+37
    %v3170 = vand.u32 %v2989, 2147483648
    %v3171 = vor.u32 1.1754944e-38, %v3170
    %v3172 = vsel %vm3169, %v3171, %v3167
    %v3173 = vmul.f32 1.0, %v3172
    %v3174 = vrcp.pop %v2990
    %v3175 = vmul.f32 %v2990, %v3174
    %v3176 = vsub.f32 1.0, %v3175
    %v3177 = vmul.f32 %v3174, %v3176
    %v3178 = vadd.f32 %v3174, %v3177
    %vm3179 = vweird.f32 %v2990
    %vm3180 = vweird.f32 %v3174
    %vm3181 = vmor %vm3179, %vm3180
    %v3182 = vsel %vm3181, %v3174, %v3178
    %v3183 = vand.u32 2147483647, %v2990
    %vm3184 = vcmp.eq.f32.partialorder %v3183, 8.507059e+37
    %v3185 = vand.u32 %v2990, 2147483648
    %v3186 = vor.u32 1.1754944e-38, %v3185
    %v3187 = vsel %vm3184, %v3186, %v3182
    %v3188 = vmul.f32 1.0, %v3187
    %v3189 = vrcp.pop %v2991
    %v3190 = vmul.f32 %v2991, %v3189
    %v3191 = vsub.f32 1.0, %v3190
    %v3192 = vmul.f32 %v3189, %v3191
    %v3193 = vadd.f32 %v3189, %v3192
    %vm3194 = vweird.f32 %v2991
    %vm3195 = vweird.f32 %v3189
    %vm3196 = vmor %vm3194, %vm3195
    %v3197 = vsel %vm3196, %v3189, %v3193
    %v3198 = vand.u32 2147483647, %v2991
    %vm3199 = vcmp.eq.f32.partialorder %v3198, 8.507059e+37
    %v3200 = vand.u32 %v2991, 2147483648
    %v3201 = vor.u32 1.1754944e-38, %v3200
    %v3202 = vsel %vm3199, %v3201, %v3197
    %v3203 = vmul.f32 1.0, %v3202
    %v3204 = vrcp.pop %v2992
    %v3205 = vmul.f32 %v2992, %v3204
    %v3206 = vsub.f32 1.0, %v3205
    %v3207 = vmul.f32 %v3204, %v3206
    %v3208 = vadd.f32 %v3204, %v3207
    %vm3209 = vweird.f32 %v2992
    %vm3210 = vweird.f32 %v3204
    %vm3211 = vmor %vm3209, %vm3210
    %v3212 = vsel %vm3211, %v3204, %v3208
    %v3213 = vand.u32 2147483647, %v2992
    %vm3214 = vcmp.eq.f32.partialorder %v3213, 8.507059e+37
    %v3215 = vand.u32 %v2992, 2147483648
    %v3216 = vor.u32 1.1754944e-38, %v3215
    %v3217 = vsel %vm3214, %v3216, %v3212
    %v3218 = vmul.f32 1.0, %v3217
    %v3219 = vrcp.pop %v2993
    %v3220 = vmul.f32 %v2993, %v3219
    %v3221 = vsub.f32 1.0, %v3220
    %v3222 = vmul.f32 %v3219, %v3221
    %v3223 = vadd.f32 %v3219, %v3222
    %vm3224 = vweird.f32 %v2993
    %vm3225 = vweird.f32 %v3219
    %vm3226 = vmor %vm3224, %vm3225
    %v3227 = vsel %vm3226, %v3219, %v3223
    %v3228 = vand.u32 2147483647, %v2993
    %vm3229 = vcmp.eq.f32.partialorder %v3228, 8.507059e+37
    %v3230 = vand.u32 %v2993, 2147483648
    %v3231 = vor.u32 1.1754944e-38, %v3230
    %v3232 = vsel %vm3229, %v3231, %v3227
    %v3233 = vmul.f32 1.0, %v3232
    %3234 = vrot.lane.b32.xlu0 %v2884, 96
    %v3235 = vpop.permute.xlu0 %3234
    %3236 = vrot.lane.b32.xlu0 %v2885, 96
    %v3237 = vpop.permute.xlu0 %3236
    %3238 = vrot.lane.b32.xlu0 %v2877, 96
    %v3239 = vpop.permute.xlu0 %3238
    %3240 = vrot.lane.b32.xlu0 %v2886, 96
    %v3241 = vpop.permute.xlu0 %3240
    %3242 = vrot.lane.b32.xlu0 %v2887, 96
    %v3243 = vpop.permute.xlu0 %3242
    %3244 = vrot.lane.b32.xlu0 %v2888, 96
    %v3245 = vpop.permute.xlu0 %3244
    %3246 = vrot.lane.b32.xlu0 %v2889, 96
    %v3247 = vpop.permute.xlu0 %3246
    %3248 = vrot.lane.b32.xlu0 %v2890, 96
    %v3249 = vpop.permute.xlu0 %3248
    %3250 = vrot.lane.b32.xlu0 %v2891, 96
    %v3251 = vpop.permute.xlu0 %3250
    %3252 = vrot.lane.b32.xlu0 %v2892, 96
    %v3253 = vpop.permute.xlu0 %3252
    %3254 = vrot.lane.b32.xlu0 %v2880, 96
    %v3255 = vpop.permute.xlu0 %3254
    %3256 = vrot.lane.b32.xlu0 %v2893, 96
    %v3257 = vpop.permute.xlu0 %3256
    %3258 = vrot.lane.b32.xlu0 %v2894, 96
    %v3259 = vpop.permute.xlu0 %3258
    %3260 = vrot.lane.b32.xlu0 %v2895, 96
    %v3261 = vpop.permute.xlu0 %3260
    %3262 = vrot.lane.b32.xlu0 %v2896, 96
    %v3263 = vpop.permute.xlu0 %3262
    %3264 = vrot.lane.b32.xlu0 %v2897, 96
    %v3265 = vpop.permute.xlu0 %3264
    %v3282 = vmul.f32 %v3008, %v3235
    %v3283 = vmul.f32 %v3023, %v3237
    %v3284 = vmul.f32 %v3038, %v3239
    %v3285 = vmul.f32 %v3053, %v3241
    %v3286 = vmul.f32 %v3068, %v3243
    %v3287 = vmul.f32 %v3083, %v3245
    %v3288 = vmul.f32 %v3098, %v3247
    %v3289 = vmul.f32 %v3113, %v3249
    %v3290 = vmul.f32 %v3128, %v3251
    %v3291 = vmul.f32 %v3143, %v3253
    %v3292 = vmul.f32 %v3158, %v3255
    %v3293 = vmul.f32 %v3173, %v3257
    %v3294 = vmul.f32 %v3188, %v3259
    %v3295 = vmul.f32 %v3203, %v3261
    %v3296 = vmul.f32 %v3218, %v3263
    %v3297 = vmul.f32 %v3233, %v3265
    %3314 = vrot.lane.b32.xlu0 %v3282, 32
    %v3315 = vpop.permute.xlu0 %3314
    %3316 = vrot.lane.b32.xlu0 %v3283, 32
    %v3317 = vpop.permute.xlu0 %3316
    %3318 = vrot.lane.b32.xlu0 %v3284, 32
    %v3319 = vpop.permute.xlu0 %3318
    %3320 = vrot.lane.b32.xlu0 %v3285, 32
    %v3321 = vpop.permute.xlu0 %3320
    %3322 = vrot.lane.b32.xlu0 %v3286, 32
    %v3323 = vpop.permute.xlu0 %3322
    %3324 = vrot.lane.b32.xlu0 %v3287, 32
    %v3325 = vpop.permute.xlu0 %3324
    %3326 = vrot.lane.b32.xlu0 %v3288, 32
    %v3327 = vpop.permute.xlu0 %3326
    %3328 = vrot.lane.b32.xlu0 %v3289, 32
    %v3329 = vpop.permute.xlu0 %3328
    %3330 = vrot.lane.b32.xlu0 %v3290, 32
    %v3331 = vpop.permute.xlu0 %3330
    %3332 = vrot.lane.b32.xlu0 %v3291, 32
    %v3333 = vpop.permute.xlu0 %3332
    %3334 = vrot.lane.b32.xlu0 %v3292, 32
    %v3335 = vpop.permute.xlu0 %3334
    %3336 = vrot.lane.b32.xlu0 %v3293, 32
    %v3337 = vpop.permute.xlu0 %3336
    %3338 = vrot.lane.b32.xlu0 %v3294, 32
    %v3339 = vpop.permute.xlu0 %3338
    %3340 = vrot.lane.b32.xlu0 %v3295, 32
    %v3341 = vpop.permute.xlu0 %3340
    %3342 = vrot.lane.b32.xlu0 %v3296, 32
    %v3343 = vpop.permute.xlu0 %3342
    %3344 = vrot.lane.b32.xlu0 %v3297, 32
    %v3345 = vpop.permute.xlu0 %3344
    %v3362 = vadd.f32 %v1277, %v3315
    %v3363 = vadd.f32 %v1280, %v3317
    %v3364 = vadd.f32 %v1283, %v3319
    %v3365 = vadd.f32 %v1286, %v3321
    %v3366 = vadd.f32 %v1289, %v3323
    %v3367 = vadd.f32 %v1292, %v3325
    %v3368 = vadd.f32 %v1295, %v3327
    %v3369 = vadd.f32 %v1298, %v3329
    %v3370 = vadd.f32 %v1301, %v3331
    %v3371 = vadd.f32 %v1304, %v3333
    %v3372 = vadd.f32 %v1307, %v3335
    %v3373 = vadd.f32 %v1310, %v3337
    %v3374 = vadd.f32 %v1313, %v3339
    %v3375 = vadd.f32 %v1316, %v3341
    %v3376 = vadd.f32 %v1319, %v3343
    %v3377 = vadd.f32 %v1322, %v3345
    %v3378 = vtanh.pop %v3362
    %v3379 = vtanh.pop %v3363
    %v3380 = vtanh.pop %v3364
    %v3381 = vtanh.pop %v3365
    %v3382 = vtanh.pop %v3366
    %v3383 = vtanh.pop %v3367
    %v3384 = vtanh.pop %v3368
    %v3385 = vtanh.pop %v3369
    %v3386 = vtanh.pop %v3370
    %v3387 = vtanh.pop %v3371
    %v3388 = vtanh.pop %v3372
    %v3389 = vtanh.pop %v3373
    %v3390 = vtanh.pop %v3374
    %v3391 = vtanh.pop %v3375
    %v3392 = vtanh.pop %v3376
    %v3393 = vtanh.pop %v3377
    %v3394 = vsub.f32 1.0, %v3008
    %v3395 = vsub.f32 1.0, %v3023
    %v3396 = vsub.f32 1.0, %v3038
    %v3397 = vsub.f32 1.0, %v3053
    %v3398 = vsub.f32 1.0, %v3068
    %v3399 = vsub.f32 1.0, %v3083
    %v3400 = vsub.f32 1.0, %v3098
    %v3401 = vsub.f32 1.0, %v3113
    %v3402 = vsub.f32 1.0, %v3128
    %v3403 = vsub.f32 1.0, %v3143
    %v3404 = vsub.f32 1.0, %v3158
    %v3405 = vsub.f32 1.0, %v3173
    %v3406 = vsub.f32 1.0, %v3188
    %v3407 = vsub.f32 1.0, %v3203
    %v3408 = vsub.f32 1.0, %v3218
    %v3409 = vsub.f32 1.0, %v3233
    %3426 = vrot.lane.b32.xlu0 %v3378, 112
    %v3427 = vpop.permute.xlu0 %3426
    %3428 = vrot.lane.b32.xlu0 %v3379, 112
    %v3429 = vpop.permute.xlu0 %3428
    %3430 = vrot.lane.b32.xlu0 %v3380, 112
    %v3431 = vpop.permute.xlu0 %3430
    %3432 = vrot.lane.b32.xlu0 %v3381, 112
    %v3433 = vpop.permute.xlu0 %3432
    %3434 = vrot.lane.b32.xlu0 %v3382, 112
    %v3435 = vpop.permute.xlu0 %3434
    %3436 = vrot.lane.b32.xlu0 %v3383, 112
    %v3437 = vpop.permute.xlu0 %3436
    %3438 = vrot.lane.b32.xlu0 %v3384, 112
    %v3439 = vpop.permute.xlu0 %3438
    %3440 = vrot.lane.b32.xlu0 %v3385, 112
    %v3441 = vpop.permute.xlu0 %3440
    %3442 = vrot.lane.b32.xlu0 %v3386, 112
    %v3443 = vpop.permute.xlu0 %3442
    %3444 = vrot.lane.b32.xlu0 %v3387, 112
    %v3445 = vpop.permute.xlu0 %3444
    %3446 = vrot.lane.b32.xlu0 %v3388, 112
    %v3447 = vpop.permute.xlu0 %3446
    %3448 = vrot.lane.b32.xlu0 %v3389, 112
    %v3449 = vpop.permute.xlu0 %3448
    %3450 = vrot.lane.b32.xlu0 %v3390, 112
    %v3451 = vpop.permute.xlu0 %3450
    %3452 = vrot.lane.b32.xlu0 %v3391, 112
    %v3453 = vpop.permute.xlu0 %3452
    %3454 = vrot.lane.b32.xlu0 %v3392, 112
    %v3455 = vpop.permute.xlu0 %3454
    %3456 = vrot.lane.b32.xlu0 %v3393, 112
    %v3457 = vpop.permute.xlu0 %3456
    %v3474 = vmul.f32 %v3394, %v3427
    %v3475 = vmul.f32 %v3395, %v3429
    %v3476 = vmul.f32 %v3396, %v3431
    %v3477 = vmul.f32 %v3397, %v3433
    %v3478 = vmul.f32 %v3398, %v3435
    %v3479 = vmul.f32 %v3399, %v3437
    %v3480 = vmul.f32 %v3400, %v3439
    %v3481 = vmul.f32 %v3401, %v3441
    %v3482 = vmul.f32 %v3402, %v3443
    %v3483 = vmul.f32 %v3403, %v3445
    %v3484 = vmul.f32 %v3404, %v3447
    %v3485 = vmul.f32 %v3405, %v3449
    %v3486 = vmul.f32 %v3406, %v3451
    %v3487 = vmul.f32 %v3407, %v3453
    %v3488 = vmul.f32 %v3408, %v3455
    %v3489 = vmul.f32 %v3409, %v3457
    %v3490 = vrot.slane %v2851, 6
    %v3491 = vrot.slane %v2851, 7
    %v3492 = vrot.slane %v2851, 1
    %v3493 = vrot.slane %v2851, 2
    %v3494 = vrot.slane %v2851, 3
    %v3495 = vrot.slane %v2851, 4
    %v3496 = vrot.slane %v2851, 5
    %v3497 = vrot.slane %v2852, 6
    %v3498 = vrot.slane %v2852, 7
    %v3499 = vrot.slane %v2852, 1
    %v3500 = vrot.slane %v2852, 2
    %v3501 = vrot.slane %v2852, 3
    %v3502 = vrot.slane %v2852, 4
    %v3503 = vrot.slane %v2852, 5
    %3504 = vrot.lane.b32.xlu0 %v3490, 16
    %v3505 = vpop.permute.xlu0 %3504
    %3506 = vrot.lane.b32.xlu0 %v3491, 16
    %v3507 = vpop.permute.xlu0 %3506
    %3508 = vrot.lane.b32.xlu0 %v2851, 16
    %v3509 = vpop.permute.xlu0 %3508
    %3510 = vrot.lane.b32.xlu0 %v3492, 16
    %v3511 = vpop.permute.xlu0 %3510
    %3512 = vrot.lane.b32.xlu0 %v3493, 16
    %v3513 = vpop.permute.xlu0 %3512
    %3514 = vrot.lane.b32.xlu0 %v3494, 16
    %v3515 = vpop.permute.xlu0 %3514
    %3516 = vrot.lane.b32.xlu0 %v3495, 16
    %v3517 = vpop.permute.xlu0 %3516
    %3518 = vrot.lane.b32.xlu0 %v3496, 16
    %v3519 = vpop.permute.xlu0 %3518
    %3520 = vrot.lane.b32.xlu0 %v3497, 16
    %v3521 = vpop.permute.xlu0 %3520
    %3522 = vrot.lane.b32.xlu0 %v3498, 16
    %v3523 = vpop.permute.xlu0 %3522
    %3524 = vrot.lane.b32.xlu0 %v2852, 16
    %v3525 = vpop.permute.xlu0 %3524
    %3526 = vrot.lane.b32.xlu0 %v3499, 16
    %v3527 = vpop.permute.xlu0 %3526
    %3528 = vrot.lane.b32.xlu0 %v3500, 16
    %v3529 = vpop.permute.xlu0 %3528
    %3530 = vrot.lane.b32.xlu0 %v3501, 16
    %v3531 = vpop.permute.xlu0 %3530
    %3532 = vrot.lane.b32.xlu0 %v3502, 16
    %v3533 = vpop.permute.xlu0 %3532
    %3534 = vrot.lane.b32.xlu0 %v3503, 16
    %v3535 = vpop.permute.xlu0 %3534
    %v3552 = vmul.f32 %v3008, %v3505
    %v3553 = vmul.f32 %v3023, %v3507
    %v3554 = vmul.f32 %v3038, %v3509
    %v3555 = vmul.f32 %v3053, %v3511
    %v3556 = vmul.f32 %v3068, %v3513
    %v3557 = vmul.f32 %v3083, %v3515
    %v3558 = vmul.f32 %v3098, %v3517
    %v3559 = vmul.f32 %v3113, %v3519
    %v3560 = vmul.f32 %v3128, %v3521
    %v3561 = vmul.f32 %v3143, %v3523
    %v3562 = vmul.f32 %v3158, %v3525
    %v3563 = vmul.f32 %v3173, %v3527
    %v3564 = vmul.f32 %v3188, %v3529
    %v3565 = vmul.f32 %v3203, %v3531
    %v3566 = vmul.f32 %v3218, %v3533
    %v3567 = vmul.f32 %v3233, %v3535
    %v3568 = vadd.f32 %v3474, %v3552
    %v3569 = vadd.f32 %v3475, %v3553
    %v3570 = vadd.f32 %v3476, %v3554
    %v3571 = vadd.f32 %v3477, %v3555
    %v3572 = vadd.f32 %v3478, %v3556
    %v3573 = vadd.f32 %v3479, %v3557
    %v3574 = vadd.f32 %v3480, %v3558
    %v3575 = vadd.f32 %v3481, %v3559
    %v3576 = vadd.f32 %v3482, %v3560
    %v3577 = vadd.f32 %v3483, %v3561
    %v3578 = vadd.f32 %v3484, %v3562
    %v3579 = vadd.f32 %v3485, %v3563
    %v3580 = vadd.f32 %v3486, %v3564
    %v3581 = vadd.f32 %v3487, %v3565
    %v3582 = vadd.f32 %v3488, %v3566
    %v3583 = vadd.f32 %v3489, %v3567
    %vm3584 = vcmp.gt.s32.totalorder %v197, 2
    %vm3585 = vcmp.gt.s32.totalorder %v198, 2
    %v3586 = vsel %vm3584, 1, 0
    %v3587 = vsel %vm3585, 1, 0
    %3588 = vset.pattern.permute.xlu0 0
    %3589 = vperm.xlu0 %3588, %v3586
    %v3590 = vpop.permute.xlu0 %3589
    %3591 = vset.pattern.permute.xlu0 0
    %3592 = vperm.xlu0 %3591, %v3587
    %v3593 = vpop.permute.xlu0 %3592
    %vm3594 = vcmp.eq.s32.totalorder %v3590, 1
    %vm3595 = vcmp.eq.s32.totalorder %v3593, 1
    %v3612 = vrot.slane %v3568, 2
    %v3613 = vrot.slane %v3569, 1
    %v3614 = vsel %vm437, %v3613, %v3612
    %v3615 = vsel %vm439, %v3570, %v3614
    %v3616 = vrot.slane %v3571, 7
    %v3617 = vsel %vm441, %v3616, %v3615
    %v3618 = vrot.slane %v3572, 6
    %v3619 = vsel %vm443, %v3618, %v3617
    %v3620 = vrot.slane %v3573, 5
    %v3621 = vsel %vm445, %v3620, %v3619
    %v3622 = vrot.slane %v3574, 4
    %v3623 = vsel %vm447, %v3622, %v3621
    %v3624 = vrot.slane %v3575, 3
    %v3625 = vsel %vm449, %v3624, %v3623
    %v3626 = vrot.slane %v3576, 2
    %v3627 = vrot.slane %v3577, 1
    %v3628 = vsel %vm437, %v3627, %v3626
    %v3629 = vsel %vm439, %v3578, %v3628
    %v3630 = vrot.slane %v3579, 7
    %v3631 = vsel %vm441, %v3630, %v3629
    %v3632 = vrot.slane %v3580, 6
    %v3633 = vsel %vm443, %v3632, %v3631
    %v3634 = vrot.slane %v3581, 5
    %v3635 = vsel %vm445, %v3634, %v3633
    %v3636 = vrot.slane %v3582, 4
    %v3637 = vsel %vm447, %v3636, %v3635
    %v3638 = vrot.slane %v3583, 3
    %v3639 = vsel %vm449, %v3638, %v3637
    %3640 = vrot.lane.b32.xlu0 %v3625, 112
    %v3641 = vpop.permute.xlu0 %3640
    %3642 = vrot.lane.b32.xlu0 %v3639, 112
    %v3643 = vpop.permute.xlu0 %3642
    %v3646 = vsel %vm3594, %v3641, %v2851
    %v3647 = vsel %vm3595, %v3643, %v2852
    %v3649 = vsel %vm1327, %v3646, 0
    %v3652 = vsel %vm1327, %v3647, 0
    %3654 = vmatpush.msra.mxu0 0.0
    %3655 = vmatpush.msra.mxu0 0.0
    %3656 = vmatpush.msra.mxu0 0.0
    %3657 = vmatpush.msra.mxu0 0.0
    %3658 = vmatpush.msra.mxu0 0.0
    %3659 = vmatpush.msra.mxu0 0.0
    %3660 = vmatpush.msra.mxu0 0.0
    %3661 = vmatpush.msra.mxu0 0.0
    %3662 = vmatpush.msra.mxu0 0.0
    %3663 = vmatpush.msra.mxu0 0.0
    %3664 = vmatpush.msra.mxu0 0.0
    %3665 = vmatpush.msra.mxu0 0.0
    %3666 = vmatpush.msra.mxu0 0.0
    %3667 = vmatpush.msra.mxu0 0.0
    %3668 = vmatpush.msra.mxu0 %v1325
    %3669 = vmatpush.msra.mxu0 %v1324
    %3670 = vmatmul.f32.gmra.mxu0 %v3649
    %v3671 = vpop.f32.mrf.mxu0
    %v3672 = vadd.f32 %v1326, %v3671
    %3673 = vmatmul.f32.gmra.mxu0 %v3652
    %v3674 = vpop.f32.mrf.mxu0
    %v3675 = vadd.f32 %v1326, %v3674
    %3676 = vdwg.mxu0
    %v3679 = vrot.slane %v3672, 5
    %v3680 = vrot.slane %v3672, 6
    %v3681 = vrot.slane %v3672, 7
    %v3682 = vrot.slane %v3672, 1
    %v3683 = vrot.slane %v3672, 2
    %v3684 = vrot.slane %v3672, 3
    %v3685 = vrot.slane %v3672, 4
    %v3686 = vrot.slane %v3675, 5
    %v3687 = vrot.slane %v3675, 6
    %v3688 = vrot.slane %v3675, 7
    %v3689 = vrot.slane %v3675, 1
    %v3690 = vrot.slane %v3675, 2
    %v3691 = vrot.slane %v3675, 3
    %v3692 = vrot.slane %v3675, 4
    %v3709 = vadd.f32 %v1277, %v3679
    %v3710 = vadd.f32 %v1280, %v3680
    %v3711 = vadd.f32 %v1283, %v3681
    %v3712 = vadd.f32 %v1286, %v3672
    %v3713 = vadd.f32 %v1289, %v3682
    %v3714 = vadd.f32 %v1292, %v3683
    %v3715 = vadd.f32 %v1295, %v3684
    %v3716 = vadd.f32 %v1298, %v3685
    %v3717 = vadd.f32 %v1301, %v3686
    %v3718 = vadd.f32 %v1304, %v3687
    %v3719 = vadd.f32 %v1307, %v3688
    %v3720 = vadd.f32 %v1310, %v3675
    %v3721 = vadd.f32 %v1313, %v3689
    %v3722 = vadd.f32 %v1316, %v3690
    %v3723 = vadd.f32 %v1319, %v3691
    %v3724 = vadd.f32 %v1322, %v3692
    %v3725 = vxor.u32 %v3709, 2147483648
    %v3726 = vxor.u32 %v3710, 2147483648
    %v3727 = vxor.u32 %v3711, 2147483648
    %v3728 = vxor.u32 %v3712, 2147483648
    %v3729 = vxor.u32 %v3713, 2147483648
    %v3730 = vxor.u32 %v3714, 2147483648
    %v3731 = vxor.u32 %v3715, 2147483648
    %v3732 = vxor.u32 %v3716, 2147483648
    %v3733 = vxor.u32 %v3717, 2147483648
    %v3734 = vxor.u32 %v3718, 2147483648
    %v3735 = vxor.u32 %v3719, 2147483648
    %v3736 = vxor.u32 %v3720, 2147483648
    %v3737 = vxor.u32 %v3721, 2147483648
    %v3738 = vxor.u32 %v3722, 2147483648
    %v3739 = vxor.u32 %v3723, 2147483648
    %v3740 = vxor.u32 %v3724, 2147483648
    %v3741 = vmul.f32 %v3725, 1.442695
    %v3742 = vpow.pop %v3741
    %v3743 = vmul.f32 %v3726, 1.442695
    %v3744 = vpow.pop %v3743
    %v3745 = vmul.f32 %v3727, 1.442695
    %v3746 = vpow.pop %v3745
    %v3747 = vmul.f32 %v3728, 1.442695
    %v3748 = vpow.pop %v3747
    %v3749 = vmul.f32 %v3729, 1.442695
    %v3750 = vpow.pop %v3749
    %v3751 = vmul.f32 %v3730, 1.442695
    %v3752 = vpow.pop %v3751
    %v3753 = vmul.f32 %v3731, 1.442695
    %v3754 = vpow.pop %v3753
    %v3755 = vmul.f32 %v3732, 1.442695
    %v3756 = vpow.pop %v3755
    %v3757 = vmul.f32 %v3733, 1.442695
    %v3758 = vpow.pop %v3757
    %v3759 = vmul.f32 %v3734, 1.442695
    %v3760 = vpow.pop %v3759
    %v3761 = vmul.f32 %v3735, 1.442695
    %v3762 = vpow.pop %v3761
    %v3763 = vmul.f32 %v3736, 1.442695
    %v3764 = vpow.pop %v3763
    %v3765 = vmul.f32 %v3737, 1.442695
    %v3766 = vpow.pop %v3765
    %v3767 = vmul.f32 %v3738, 1.442695
    %v3768 = vpow.pop %v3767
    %v3769 = vmul.f32 %v3739, 1.442695
    %v3770 = vpow.pop %v3769
    %v3771 = vmul.f32 %v3740, 1.442695
    %v3772 = vpow.pop %v3771
    %v3773 = vadd.f32 %v3742, 1.0
    %v3774 = vadd.f32 %v3744, 1.0
    %v3775 = vadd.f32 %v3746, 1.0
    %v3776 = vadd.f32 %v3748, 1.0
    %v3777 = vadd.f32 %v3750, 1.0
    %v3778 = vadd.f32 %v3752, 1.0
    %v3779 = vadd.f32 %v3754, 1.0
    %v3780 = vadd.f32 %v3756, 1.0
    %v3781 = vadd.f32 %v3758, 1.0
    %v3782 = vadd.f32 %v3760, 1.0
    %v3783 = vadd.f32 %v3762, 1.0
    %v3784 = vadd.f32 %v3764, 1.0
    %v3785 = vadd.f32 %v3766, 1.0
    %v3786 = vadd.f32 %v3768, 1.0
    %v3787 = vadd.f32 %v3770, 1.0
    %v3788 = vadd.f32 %v3772, 1.0
    %v3789 = vrcp.pop %v3773
    %v3790 = vmul.f32 %v3773, %v3789
    %v3791 = vsub.f32 1.0, %v3790
    %v3792 = vmul.f32 %v3789, %v3791
    %v3793 = vadd.f32 %v3789, %v3792
    %vm3794 = vweird.f32 %v3773
    %vm3795 = vweird.f32 %v3789
    %vm3796 = vmor %vm3794, %vm3795
    %v3797 = vsel %vm3796, %v3789, %v3793
    %v3798 = vand.u32 2147483647, %v3773
    %vm3799 = vcmp.eq.f32.partialorder %v3798, 8.507059e+37
    %v3800 = vand.u32 %v3773, 2147483648
    %v3801 = vor.u32 1.1754944e-38, %v3800
    %v3802 = vsel %vm3799, %v3801, %v3797
    %v3803 = vmul.f32 1.0, %v3802
    %v3804 = vrcp.pop %v3774
    %v3805 = vmul.f32 %v3774, %v3804
    %v3806 = vsub.f32 1.0, %v3805
    %v3807 = vmul.f32 %v3804, %v3806
    %v3808 = vadd.f32 %v3804, %v3807
    %vm3809 = vweird.f32 %v3774
    %vm3810 = vweird.f32 %v3804
    %vm3811 = vmor %vm3809, %vm3810
    %v3812 = vsel %vm3811, %v3804, %v3808
    %v3813 = vand.u32 2147483647, %v3774
    %vm3814 = vcmp.eq.f32.partialorder %v3813, 8.507059e+37
    %v3815 = vand.u32 %v3774, 2147483648
    %v3816 = vor.u32 1.1754944e-38, %v3815
    %v3817 = vsel %vm3814, %v3816, %v3812
    %v3818 = vmul.f32 1.0, %v3817
    %v3819 = vrcp.pop %v3775
    %v3820 = vmul.f32 %v3775, %v3819
    %v3821 = vsub.f32 1.0, %v3820
    %v3822 = vmul.f32 %v3819, %v3821
    %v3823 = vadd.f32 %v3819, %v3822
    %vm3824 = vweird.f32 %v3775
    %vm3825 = vweird.f32 %v3819
    %vm3826 = vmor %vm3824, %vm3825
    %v3827 = vsel %vm3826, %v3819, %v3823
    %v3828 = vand.u32 2147483647, %v3775
    %vm3829 = vcmp.eq.f32.partialorder %v3828, 8.507059e+37
    %v3830 = vand.u32 %v3775, 2147483648
    %v3831 = vor.u32 1.1754944e-38, %v3830
    %v3832 = vsel %vm3829, %v3831, %v3827
    %v3833 = vmul.f32 1.0, %v3832
    %v3834 = vrcp.pop %v3776
    %v3835 = vmul.f32 %v3776, %v3834
    %v3836 = vsub.f32 1.0, %v3835
    %v3837 = vmul.f32 %v3834, %v3836
    %v3838 = vadd.f32 %v3834, %v3837
    %vm3839 = vweird.f32 %v3776
    %vm3840 = vweird.f32 %v3834
    %vm3841 = vmor %vm3839, %vm3840
    %v3842 = vsel %vm3841, %v3834, %v3838
    %v3843 = vand.u32 2147483647, %v3776
    %vm3844 = vcmp.eq.f32.partialorder %v3843, 8.507059e+37
    %v3845 = vand.u32 %v3776, 2147483648
    %v3846 = vor.u32 1.1754944e-38, %v3845
    %v3847 = vsel %vm3844, %v3846, %v3842
    %v3848 = vmul.f32 1.0, %v3847
    %v3849 = vrcp.pop %v3777
    %v3850 = vmul.f32 %v3777, %v3849
    %v3851 = vsub.f32 1.0, %v3850
    %v3852 = vmul.f32 %v3849, %v3851
    %v3853 = vadd.f32 %v3849, %v3852
    %vm3854 = vweird.f32 %v3777
    %vm3855 = vweird.f32 %v3849
    %vm3856 = vmor %vm3854, %vm3855
    %v3857 = vsel %vm3856, %v3849, %v3853
    %v3858 = vand.u32 2147483647, %v3777
    %vm3859 = vcmp.eq.f32.partialorder %v3858, 8.507059e+37
    %v3860 = vand.u32 %v3777, 2147483648
    %v3861 = vor.u32 1.1754944e-38, %v3860
    %v3862 = vsel %vm3859, %v3861, %v3857
    %v3863 = vmul.f32 1.0, %v3862
    %v3864 = vrcp.pop %v3778
    %v3865 = vmul.f32 %v3778, %v3864
    %v3866 = vsub.f32 1.0, %v3865
    %v3867 = vmul.f32 %v3864, %v3866
    %v3868 = vadd.f32 %v3864, %v3867
    %vm3869 = vweird.f32 %v3778
    %vm3870 = vweird.f32 %v3864
    %vm3871 = vmor %vm3869, %vm3870
    %v3872 = vsel %vm3871, %v3864, %v3868
    %v3873 = vand.u32 2147483647, %v3778
    %vm3874 = vcmp.eq.f32.partialorder %v3873, 8.507059e+37
    %v3875 = vand.u32 %v3778, 2147483648
    %v3876 = vor.u32 1.1754944e-38, %v3875
    %v3877 = vsel %vm3874, %v3876, %v3872
    %v3878 = vmul.f32 1.0, %v3877
    %v3879 = vrcp.pop %v3779
    %v3880 = vmul.f32 %v3779, %v3879
    %v3881 = vsub.f32 1.0, %v3880
    %v3882 = vmul.f32 %v3879, %v3881
    %v3883 = vadd.f32 %v3879, %v3882
    %vm3884 = vweird.f32 %v3779
    %vm3885 = vweird.f32 %v3879
    %vm3886 = vmor %vm3884, %vm3885
    %v3887 = vsel %vm3886, %v3879, %v3883
    %v3888 = vand.u32 2147483647, %v3779
    %vm3889 = vcmp.eq.f32.partialorder %v3888, 8.507059e+37
    %v3890 = vand.u32 %v3779, 2147483648
    %v3891 = vor.u32 1.1754944e-38, %v3890
    %v3892 = vsel %vm3889, %v3891, %v3887
    %v3893 = vmul.f32 1.0, %v3892
    %v3894 = vrcp.pop %v3780
    %v3895 = vmul.f32 %v3780, %v3894
    %v3896 = vsub.f32 1.0, %v3895
    %v3897 = vmul.f32 %v3894, %v3896
    %v3898 = vadd.f32 %v3894, %v3897
    %vm3899 = vweird.f32 %v3780
    %vm3900 = vweird.f32 %v3894
    %vm3901 = vmor %vm3899, %vm3900
    %v3902 = vsel %vm3901, %v3894, %v3898
    %v3903 = vand.u32 2147483647, %v3780
    %vm3904 = vcmp.eq.f32.partialorder %v3903, 8.507059e+37
    %v3905 = vand.u32 %v3780, 2147483648
    %v3906 = vor.u32 1.1754944e-38, %v3905
    %v3907 = vsel %vm3904, %v3906, %v3902
    %v3908 = vmul.f32 1.0, %v3907
    %v3909 = vrcp.pop %v3781
    %v3910 = vmul.f32 %v3781, %v3909
    %v3911 = vsub.f32 1.0, %v3910
    %v3912 = vmul.f32 %v3909, %v3911
    %v3913 = vadd.f32 %v3909, %v3912
    %vm3914 = vweird.f32 %v3781
    %vm3915 = vweird.f32 %v3909
    %vm3916 = vmor %vm3914, %vm3915
    %v3917 = vsel %vm3916, %v3909, %v3913
    %v3918 = vand.u32 2147483647, %v3781
    %vm3919 = vcmp.eq.f32.partialorder %v3918, 8.507059e+37
    %v3920 = vand.u32 %v3781, 2147483648
    %v3921 = vor.u32 1.1754944e-38, %v3920
    %v3922 = vsel %vm3919, %v3921, %v3917
    %v3923 = vmul.f32 1.0, %v3922
    %v3924 = vrcp.pop %v3782
    %v3925 = vmul.f32 %v3782, %v3924
    %v3926 = vsub.f32 1.0, %v3925
    %v3927 = vmul.f32 %v3924, %v3926
    %v3928 = vadd.f32 %v3924, %v3927
    %vm3929 = vweird.f32 %v3782
    %vm3930 = vweird.f32 %v3924
    %vm3931 = vmor %vm3929, %vm3930
    %v3932 = vsel %vm3931, %v3924, %v3928
    %v3933 = vand.u32 2147483647, %v3782
    %vm3934 = vcmp.eq.f32.partialorder %v3933, 8.507059e+37
    %v3935 = vand.u32 %v3782, 2147483648
    %v3936 = vor.u32 1.1754944e-38, %v3935
    %v3937 = vsel %vm3934, %v3936, %v3932
    %v3938 = vmul.f32 1.0, %v3937
    %v3939 = vrcp.pop %v3783
    %v3940 = vmul.f32 %v3783, %v3939
    %v3941 = vsub.f32 1.0, %v3940
    %v3942 = vmul.f32 %v3939, %v3941
    %v3943 = vadd.f32 %v3939, %v3942
    %vm3944 = vweird.f32 %v3783
    %vm3945 = vweird.f32 %v3939
    %vm3946 = vmor %vm3944, %vm3945
    %v3947 = vsel %vm3946, %v3939, %v3943
    %v3948 = vand.u32 2147483647, %v3783
    %vm3949 = vcmp.eq.f32.partialorder %v3948, 8.507059e+37
    %v3950 = vand.u32 %v3783, 2147483648
    %v3951 = vor.u32 1.1754944e-38, %v3950
    %v3952 = vsel %vm3949, %v3951, %v3947
    %v3953 = vmul.f32 1.0, %v3952
    %v3954 = vrcp.pop %v3784
    %v3955 = vmul.f32 %v3784, %v3954
    %v3956 = vsub.f32 1.0, %v3955
    %v3957 = vmul.f32 %v3954, %v3956
    %v3958 = vadd.f32 %v3954, %v3957
    %vm3959 = vweird.f32 %v3784
    %vm3960 = vweird.f32 %v3954
    %vm3961 = vmor %vm3959, %vm3960
    %v3962 = vsel %vm3961, %v3954, %v3958
    %v3963 = vand.u32 2147483647, %v3784
    %vm3964 = vcmp.eq.f32.partialorder %v3963, 8.507059e+37
    %v3965 = vand.u32 %v3784, 2147483648
    %v3966 = vor.u32 1.1754944e-38, %v3965
    %v3967 = vsel %vm3964, %v3966, %v3962
    %v3968 = vmul.f32 1.0, %v3967
    %v3969 = vrcp.pop %v3785
    %v3970 = vmul.f32 %v3785, %v3969
    %v3971 = vsub.f32 1.0, %v3970
    %v3972 = vmul.f32 %v3969, %v3971
    %v3973 = vadd.f32 %v3969, %v3972
    %vm3974 = vweird.f32 %v3785
    %vm3975 = vweird.f32 %v3969
    %vm3976 = vmor %vm3974, %vm3975
    %v3977 = vsel %vm3976, %v3969, %v3973
    %v3978 = vand.u32 2147483647, %v3785
    %vm3979 = vcmp.eq.f32.partialorder %v3978, 8.507059e+37
    %v3980 = vand.u32 %v3785, 2147483648
    %v3981 = vor.u32 1.1754944e-38, %v3980
    %v3982 = vsel %vm3979, %v3981, %v3977
    %v3983 = vmul.f32 1.0, %v3982
    %v3984 = vrcp.pop %v3786
    %v3985 = vmul.f32 %v3786, %v3984
    %v3986 = vsub.f32 1.0, %v3985
    %v3987 = vmul.f32 %v3984, %v3986
    %v3988 = vadd.f32 %v3984, %v3987
    %vm3989 = vweird.f32 %v3786
    %vm3990 = vweird.f32 %v3984
    %vm3991 = vmor %vm3989, %vm3990
    %v3992 = vsel %vm3991, %v3984, %v3988
    %v3993 = vand.u32 2147483647, %v3786
    %vm3994 = vcmp.eq.f32.partialorder %v3993, 8.507059e+37
    %v3995 = vand.u32 %v3786, 2147483648
    %v3996 = vor.u32 1.1754944e-38, %v3995
    %v3997 = vsel %vm3994, %v3996, %v3992
    %v3998 = vmul.f32 1.0, %v3997
    %v3999 = vrcp.pop %v3787
    %v4000 = vmul.f32 %v3787, %v3999
    %v4001 = vsub.f32 1.0, %v4000
    %v4002 = vmul.f32 %v3999, %v4001
    %v4003 = vadd.f32 %v3999, %v4002
    %vm4004 = vweird.f32 %v3787
    %vm4005 = vweird.f32 %v3999
    %vm4006 = vmor %vm4004, %vm4005
    %v4007 = vsel %vm4006, %v3999, %v4003
    %v4008 = vand.u32 2147483647, %v3787
    %vm4009 = vcmp.eq.f32.partialorder %v4008, 8.507059e+37
    %v4010 = vand.u32 %v3787, 2147483648
    %v4011 = vor.u32 1.1754944e-38, %v4010
    %v4012 = vsel %vm4009, %v4011, %v4007
    %v4013 = vmul.f32 1.0, %v4012
    %v4014 = vrcp.pop %v3788
    %v4015 = vmul.f32 %v3788, %v4014
    %v4016 = vsub.f32 1.0, %v4015
    %v4017 = vmul.f32 %v4014, %v4016
    %v4018 = vadd.f32 %v4014, %v4017
    %vm4019 = vweird.f32 %v3788
    %vm4020 = vweird.f32 %v4014
    %vm4021 = vmor %vm4019, %vm4020
    %v4022 = vsel %vm4021, %v4014, %v4018
    %v4023 = vand.u32 2147483647, %v3788
    %vm4024 = vcmp.eq.f32.partialorder %v4023, 8.507059e+37
    %v4025 = vand.u32 %v3788, 2147483648
    %v4026 = vor.u32 1.1754944e-38, %v4025
    %v4027 = vsel %vm4024, %v4026, %v4022
    %v4028 = vmul.f32 1.0, %v4027
    %4029 = vrot.lane.b32.xlu0 %v3679, 96
    %v4030 = vpop.permute.xlu0 %4029
    %4031 = vrot.lane.b32.xlu0 %v3680, 96
    %v4032 = vpop.permute.xlu0 %4031
    %4033 = vrot.lane.b32.xlu0 %v3681, 96
    %v4034 = vpop.permute.xlu0 %4033
    %4035 = vrot.lane.b32.xlu0 %v3672, 96
    %v4036 = vpop.permute.xlu0 %4035
    %4037 = vrot.lane.b32.xlu0 %v3682, 96
    %v4038 = vpop.permute.xlu0 %4037
    %4039 = vrot.lane.b32.xlu0 %v3683, 96
    %v4040 = vpop.permute.xlu0 %4039
    %4041 = vrot.lane.b32.xlu0 %v3684, 96
    %v4042 = vpop.permute.xlu0 %4041
    %4043 = vrot.lane.b32.xlu0 %v3685, 96
    %v4044 = vpop.permute.xlu0 %4043
    %4045 = vrot.lane.b32.xlu0 %v3686, 96
    %v4046 = vpop.permute.xlu0 %4045
    %4047 = vrot.lane.b32.xlu0 %v3687, 96
    %v4048 = vpop.permute.xlu0 %4047
    %4049 = vrot.lane.b32.xlu0 %v3688, 96
    %v4050 = vpop.permute.xlu0 %4049
    %4051 = vrot.lane.b32.xlu0 %v3675, 96
    %v4052 = vpop.permute.xlu0 %4051
    %4053 = vrot.lane.b32.xlu0 %v3689, 96
    %v4054 = vpop.permute.xlu0 %4053
    %4055 = vrot.lane.b32.xlu0 %v3690, 96
    %v4056 = vpop.permute.xlu0 %4055
    %4057 = vrot.lane.b32.xlu0 %v3691, 96
    %v4058 = vpop.permute.xlu0 %4057
    %4059 = vrot.lane.b32.xlu0 %v3692, 96
    %v4060 = vpop.permute.xlu0 %4059
    %v4077 = vmul.f32 %v3803, %v4030
    %v4078 = vmul.f32 %v3818, %v4032
    %v4079 = vmul.f32 %v3833, %v4034
    %v4080 = vmul.f32 %v3848, %v4036
    %v4081 = vmul.f32 %v3863, %v4038
    %v4082 = vmul.f32 %v3878, %v4040
    %v4083 = vmul.f32 %v3893, %v4042
    %v4084 = vmul.f32 %v3908, %v4044
    %v4085 = vmul.f32 %v3923, %v4046
    %v4086 = vmul.f32 %v3938, %v4048
    %v4087 = vmul.f32 %v3953, %v4050
    %v4088 = vmul.f32 %v3968, %v4052
    %v4089 = vmul.f32 %v3983, %v4054
    %v4090 = vmul.f32 %v3998, %v4056
    %v4091 = vmul.f32 %v4013, %v4058
    %v4092 = vmul.f32 %v4028, %v4060
    %4109 = vrot.lane.b32.xlu0 %v4077, 32
    %v4110 = vpop.permute.xlu0 %4109
    %4111 = vrot.lane.b32.xlu0 %v4078, 32
    %v4112 = vpop.permute.xlu0 %4111
    %4113 = vrot.lane.b32.xlu0 %v4079, 32
    %v4114 = vpop.permute.xlu0 %4113
    %4115 = vrot.lane.b32.xlu0 %v4080, 32
    %v4116 = vpop.permute.xlu0 %4115
    %4117 = vrot.lane.b32.xlu0 %v4081, 32
    %v4118 = vpop.permute.xlu0 %4117
    %4119 = vrot.lane.b32.xlu0 %v4082, 32
    %v4120 = vpop.permute.xlu0 %4119
    %4121 = vrot.lane.b32.xlu0 %v4083, 32
    %v4122 = vpop.permute.xlu0 %4121
    %4123 = vrot.lane.b32.xlu0 %v4084, 32
    %v4124 = vpop.permute.xlu0 %4123
    %4125 = vrot.lane.b32.xlu0 %v4085, 32
    %v4126 = vpop.permute.xlu0 %4125
    %4127 = vrot.lane.b32.xlu0 %v4086, 32
    %v4128 = vpop.permute.xlu0 %4127
    %4129 = vrot.lane.b32.xlu0 %v4087, 32
    %v4130 = vpop.permute.xlu0 %4129
    %4131 = vrot.lane.b32.xlu0 %v4088, 32
    %v4132 = vpop.permute.xlu0 %4131
    %4133 = vrot.lane.b32.xlu0 %v4089, 32
    %v4134 = vpop.permute.xlu0 %4133
    %4135 = vrot.lane.b32.xlu0 %v4090, 32
    %v4136 = vpop.permute.xlu0 %4135
    %4137 = vrot.lane.b32.xlu0 %v4091, 32
    %v4138 = vpop.permute.xlu0 %4137
    %4139 = vrot.lane.b32.xlu0 %v4092, 32
    %v4140 = vpop.permute.xlu0 %4139
    %v4157 = vadd.f32 %v1277, %v4110
    %v4158 = vadd.f32 %v1280, %v4112
    %v4159 = vadd.f32 %v1283, %v4114
    %v4160 = vadd.f32 %v1286, %v4116
    %v4161 = vadd.f32 %v1289, %v4118
    %v4162 = vadd.f32 %v1292, %v4120
    %v4163 = vadd.f32 %v1295, %v4122
    %v4164 = vadd.f32 %v1298, %v4124
    %v4165 = vadd.f32 %v1301, %v4126
    %v4166 = vadd.f32 %v1304, %v4128
    %v4167 = vadd.f32 %v1307, %v4130
    %v4168 = vadd.f32 %v1310, %v4132
    %v4169 = vadd.f32 %v1313, %v4134
    %v4170 = vadd.f32 %v1316, %v4136
    %v4171 = vadd.f32 %v1319, %v4138
    %v4172 = vadd.f32 %v1322, %v4140
    %v4173 = vtanh.pop %v4157
    %v4174 = vtanh.pop %v4158
    %v4175 = vtanh.pop %v4159
    %v4176 = vtanh.pop %v4160
    %v4177 = vtanh.pop %v4161
    %v4178 = vtanh.pop %v4162
    %v4179 = vtanh.pop %v4163
    %v4180 = vtanh.pop %v4164
    %v4181 = vtanh.pop %v4165
    %v4182 = vtanh.pop %v4166
    %v4183 = vtanh.pop %v4167
    %v4184 = vtanh.pop %v4168
    %v4185 = vtanh.pop %v4169
    %v4186 = vtanh.pop %v4170
    %v4187 = vtanh.pop %v4171
    %v4188 = vtanh.pop %v4172
    %v4189 = vsub.f32 1.0, %v3803
    %v4190 = vsub.f32 1.0, %v3818
    %v4191 = vsub.f32 1.0, %v3833
    %v4192 = vsub.f32 1.0, %v3848
    %v4193 = vsub.f32 1.0, %v3863
    %v4194 = vsub.f32 1.0, %v3878
    %v4195 = vsub.f32 1.0, %v3893
    %v4196 = vsub.f32 1.0, %v3908
    %v4197 = vsub.f32 1.0, %v3923
    %v4198 = vsub.f32 1.0, %v3938
    %v4199 = vsub.f32 1.0, %v3953
    %v4200 = vsub.f32 1.0, %v3968
    %v4201 = vsub.f32 1.0, %v3983
    %v4202 = vsub.f32 1.0, %v3998
    %v4203 = vsub.f32 1.0, %v4013
    %v4204 = vsub.f32 1.0, %v4028
    %4221 = vrot.lane.b32.xlu0 %v4173, 112
    %v4222 = vpop.permute.xlu0 %4221
    %4223 = vrot.lane.b32.xlu0 %v4174, 112
    %v4224 = vpop.permute.xlu0 %4223
    %4225 = vrot.lane.b32.xlu0 %v4175, 112
    %v4226 = vpop.permute.xlu0 %4225
    %4227 = vrot.lane.b32.xlu0 %v4176, 112
    %v4228 = vpop.permute.xlu0 %4227
    %4229 = vrot.lane.b32.xlu0 %v4177, 112
    %v4230 = vpop.permute.xlu0 %4229
    %4231 = vrot.lane.b32.xlu0 %v4178, 112
    %v4232 = vpop.permute.xlu0 %4231
    %4233 = vrot.lane.b32.xlu0 %v4179, 112
    %v4234 = vpop.permute.xlu0 %4233
    %4235 = vrot.lane.b32.xlu0 %v4180, 112
    %v4236 = vpop.permute.xlu0 %4235
    %4237 = vrot.lane.b32.xlu0 %v4181, 112
    %v4238 = vpop.permute.xlu0 %4237
    %4239 = vrot.lane.b32.xlu0 %v4182, 112
    %v4240 = vpop.permute.xlu0 %4239
    %4241 = vrot.lane.b32.xlu0 %v4183, 112
    %v4242 = vpop.permute.xlu0 %4241
    %4243 = vrot.lane.b32.xlu0 %v4184, 112
    %v4244 = vpop.permute.xlu0 %4243
    %4245 = vrot.lane.b32.xlu0 %v4185, 112
    %v4246 = vpop.permute.xlu0 %4245
    %4247 = vrot.lane.b32.xlu0 %v4186, 112
    %v4248 = vpop.permute.xlu0 %4247
    %4249 = vrot.lane.b32.xlu0 %v4187, 112
    %v4250 = vpop.permute.xlu0 %4249
    %4251 = vrot.lane.b32.xlu0 %v4188, 112
    %v4252 = vpop.permute.xlu0 %4251
    %v4269 = vmul.f32 %v4189, %v4222
    %v4270 = vmul.f32 %v4190, %v4224
    %v4271 = vmul.f32 %v4191, %v4226
    %v4272 = vmul.f32 %v4192, %v4228
    %v4273 = vmul.f32 %v4193, %v4230
    %v4274 = vmul.f32 %v4194, %v4232
    %v4275 = vmul.f32 %v4195, %v4234
    %v4276 = vmul.f32 %v4196, %v4236
    %v4277 = vmul.f32 %v4197, %v4238
    %v4278 = vmul.f32 %v4198, %v4240
    %v4279 = vmul.f32 %v4199, %v4242
    %v4280 = vmul.f32 %v4200, %v4244
    %v4281 = vmul.f32 %v4201, %v4246
    %v4282 = vmul.f32 %v4202, %v4248
    %v4283 = vmul.f32 %v4203, %v4250
    %v4284 = vmul.f32 %v4204, %v4252
    %v4285 = vrot.slane %v3646, 5
    %v4286 = vrot.slane %v3646, 6
    %v4287 = vrot.slane %v3646, 7
    %v4288 = vrot.slane %v3646, 1
    %v4289 = vrot.slane %v3646, 2
    %v4290 = vrot.slane %v3646, 3
    %v4291 = vrot.slane %v3646, 4
    %v4292 = vrot.slane %v3647, 5
    %v4293 = vrot.slane %v3647, 6
    %v4294 = vrot.slane %v3647, 7
    %v4295 = vrot.slane %v3647, 1
    %v4296 = vrot.slane %v3647, 2
    %v4297 = vrot.slane %v3647, 3
    %v4298 = vrot.slane %v3647, 4
    %4299 = vrot.lane.b32.xlu0 %v4285, 16
    %v4300 = vpop.permute.xlu0 %4299
    %4301 = vrot.lane.b32.xlu0 %v4286, 16
    %v4302 = vpop.permute.xlu0 %4301
    %4303 = vrot.lane.b32.xlu0 %v4287, 16
    %v4304 = vpop.permute.xlu0 %4303
    %4305 = vrot.lane.b32.xlu0 %v3646, 16
    %v4306 = vpop.permute.xlu0 %4305
    %4307 = vrot.lane.b32.xlu0 %v4288, 16
    %v4308 = vpop.permute.xlu0 %4307
    %4309 = vrot.lane.b32.xlu0 %v4289, 16
    %v4310 = vpop.permute.xlu0 %4309
    %4311 = vrot.lane.b32.xlu0 %v4290, 16
    %v4312 = vpop.permute.xlu0 %4311
    %4313 = vrot.lane.b32.xlu0 %v4291, 16
    %v4314 = vpop.permute.xlu0 %4313
    %4315 = vrot.lane.b32.xlu0 %v4292, 16
    %v4316 = vpop.permute.xlu0 %4315
    %4317 = vrot.lane.b32.xlu0 %v4293, 16
    %v4318 = vpop.permute.xlu0 %4317
    %4319 = vrot.lane.b32.xlu0 %v4294, 16
    %v4320 = vpop.permute.xlu0 %4319
    %4321 = vrot.lane.b32.xlu0 %v3647, 16
    %v4322 = vpop.permute.xlu0 %4321
    %4323 = vrot.lane.b32.xlu0 %v4295, 16
    %v4324 = vpop.permute.xlu0 %4323
    %4325 = vrot.lane.b32.xlu0 %v4296, 16
    %v4326 = vpop.permute.xlu0 %4325
    %4327 = vrot.lane.b32.xlu0 %v4297, 16
    %v4328 = vpop.permute.xlu0 %4327
    %4329 = vrot.lane.b32.xlu0 %v4298, 16
    %v4330 = vpop.permute.xlu0 %4329
    %v4347 = vmul.f32 %v3803, %v4300
    %v4348 = vmul.f32 %v3818, %v4302
    %v4349 = vmul.f32 %v3833, %v4304
    %v4350 = vmul.f32 %v3848, %v4306
    %v4351 = vmul.f32 %v3863, %v4308
    %v4352 = vmul.f32 %v3878, %v4310
    %v4353 = vmul.f32 %v3893, %v4312
    %v4354 = vmul.f32 %v3908, %v4314
    %v4355 = vmul.f32 %v3923, %v4316
    %v4356 = vmul.f32 %v3938, %v4318
    %v4357 = vmul.f32 %v3953, %v4320
    %v4358 = vmul.f32 %v3968, %v4322
    %v4359 = vmul.f32 %v3983, %v4324
    %v4360 = vmul.f32 %v3998, %v4326
    %v4361 = vmul.f32 %v4013, %v4328
    %v4362 = vmul.f32 %v4028, %v4330
    %v4363 = vadd.f32 %v4269, %v4347
    %v4364 = vadd.f32 %v4270, %v4348
    %v4365 = vadd.f32 %v4271, %v4349
    %v4366 = vadd.f32 %v4272, %v4350
    %v4367 = vadd.f32 %v4273, %v4351
    %v4368 = vadd.f32 %v4274, %v4352
    %v4369 = vadd.f32 %v4275, %v4353
    %v4370 = vadd.f32 %v4276, %v4354
    %v4371 = vadd.f32 %v4277, %v4355
    %v4372 = vadd.f32 %v4278, %v4356
    %v4373 = vadd.f32 %v4279, %v4357
    %v4374 = vadd.f32 %v4280, %v4358
    %v4375 = vadd.f32 %v4281, %v4359
    %v4376 = vadd.f32 %v4282, %v4360
    %v4377 = vadd.f32 %v4283, %v4361
    %v4378 = vadd.f32 %v4284, %v4362
    %vm4379 = vcmp.gt.s32.totalorder %v197, 3
    %vm4380 = vcmp.gt.s32.totalorder %v198, 3
    %v4381 = vsel %vm4379, 1, 0
    %v4382 = vsel %vm4380, 1, 0
    %4383 = vset.pattern.permute.xlu0 0
    %4384 = vperm.xlu0 %4383, %v4381
    %v4385 = vpop.permute.xlu0 %4384
    %4386 = vset.pattern.permute.xlu0 0
    %4387 = vperm.xlu0 %4386, %v4382
    %v4388 = vpop.permute.xlu0 %4387
    %vm4389 = vcmp.eq.s32.totalorder %v4385, 1
    %vm4390 = vcmp.eq.s32.totalorder %v4388, 1
    %v4407 = vrot.slane %v4363, 3
    %v4408 = vrot.slane %v4364, 2
    %v4409 = vsel %vm437, %v4408, %v4407
    %v4410 = vrot.slane %v4365, 1
    %v4411 = vsel %vm439, %v4410, %v4409
    %v4412 = vsel %vm441, %v4366, %v4411
    %v4413 = vrot.slane %v4367, 7
    %v4414 = vsel %vm443, %v4413, %v4412
    %v4415 = vrot.slane %v4368, 6
    %v4416 = vsel %vm445, %v4415, %v4414
    %v4417 = vrot.slane %v4369, 5
    %v4418 = vsel %vm447, %v4417, %v4416
    %v4419 = vrot.slane %v4370, 4
    %v4420 = vsel %vm449, %v4419, %v4418
    %v4421 = vrot.slane %v4371, 3
    %v4422 = vrot.slane %v4372, 2
    %v4423 = vsel %vm437, %v4422, %v4421
    %v4424 = vrot.slane %v4373, 1
    %v4425 = vsel %vm439, %v4424, %v4423
    %v4426 = vsel %vm441, %v4374, %v4425
    %v4427 = vrot.slane %v4375, 7
    %v4428 = vsel %vm443, %v4427, %v4426
    %v4429 = vrot.slane %v4376, 6
    %v4430 = vsel %vm445, %v4429, %v4428
    %v4431 = vrot.slane %v4377, 5
    %v4432 = vsel %vm447, %v4431, %v4430
    %v4433 = vrot.slane %v4378, 4
    %v4434 = vsel %vm449, %v4433, %v4432
    %4435 = vrot.lane.b32.xlu0 %v4420, 112
    %v4436 = vpop.permute.xlu0 %4435
    %4437 = vrot.lane.b32.xlu0 %v4434, 112
    %v4438 = vpop.permute.xlu0 %4437
    %v4441 = vsel %vm4389, %v4436, %v3646
    %v4442 = vsel %vm4390, %v4438, %v3647
    %v4444 = vsel %vm1327, %v4441, 0
    %v4447 = vsel %vm1327, %v4442, 0
    %4449 = vmatpush.msra.mxu0 0.0
    %4450 = vmatpush.msra.mxu0 0.0
    %4451 = vmatpush.msra.mxu0 0.0
    %4452 = vmatpush.msra.mxu0 0.0
    %4453 = vmatpush.msra.mxu0 0.0
    %4454 = vmatpush.msra.mxu0 0.0
    %4455 = vmatpush.msra.mxu0 0.0
    %4456 = vmatpush.msra.mxu0 0.0
    %4457 = vmatpush.msra.mxu0 0.0
    %4458 = vmatpush.msra.mxu0 0.0
    %4459 = vmatpush.msra.mxu0 0.0
    %4460 = vmatpush.msra.mxu0 0.0
    %4461 = vmatpush.msra.mxu0 0.0
    %4462 = vmatpush.msra.mxu0 0.0
    %4463 = vmatpush.msra.mxu0 %v1325
    %4464 = vmatpush.msra.mxu0 %v1324
    %4465 = vmatmul.f32.gmra.mxu0 %v4444
    %v4466 = vpop.f32.mrf.mxu0
    %v4467 = vadd.f32 %v1326, %v4466
    %4468 = vmatmul.f32.gmra.mxu0 %v4447
    %v4469 = vpop.f32.mrf.mxu0
    %v4470 = vadd.f32 %v1326, %v4469
    %4471 = vdwg.mxu0
    %v4474 = vrot.slane %v4467, 4
    %v4475 = vrot.slane %v4467, 5
    %v4476 = vrot.slane %v4467, 6
    %v4477 = vrot.slane %v4467, 7
    %v4478 = vrot.slane %v4467, 1
    %v4479 = vrot.slane %v4467, 2
    %v4480 = vrot.slane %v4467, 3
    %v4481 = vrot.slane %v4470, 4
    %v4482 = vrot.slane %v4470, 5
    %v4483 = vrot.slane %v4470, 6
    %v4484 = vrot.slane %v4470, 7
    %v4485 = vrot.slane %v4470, 1
    %v4486 = vrot.slane %v4470, 2
    %v4487 = vrot.slane %v4470, 3
    %v4504 = vadd.f32 %v1277, %v4474
    %v4505 = vadd.f32 %v1280, %v4475
    %v4506 = vadd.f32 %v1283, %v4476
    %v4507 = vadd.f32 %v1286, %v4477
    %v4508 = vadd.f32 %v1289, %v4467
    %v4509 = vadd.f32 %v1292, %v4478
    %v4510 = vadd.f32 %v1295, %v4479
    %v4511 = vadd.f32 %v1298, %v4480
    %v4512 = vadd.f32 %v1301, %v4481
    %v4513 = vadd.f32 %v1304, %v4482
    %v4514 = vadd.f32 %v1307, %v4483
    %v4515 = vadd.f32 %v1310, %v4484
    %v4516 = vadd.f32 %v1313, %v4470
    %v4517 = vadd.f32 %v1316, %v4485
    %v4518 = vadd.f32 %v1319, %v4486
    %v4519 = vadd.f32 %v1322, %v4487
    %v4520 = vxor.u32 %v4504, 2147483648
    %v4521 = vxor.u32 %v4505, 2147483648
    %v4522 = vxor.u32 %v4506, 2147483648
    %v4523 = vxor.u32 %v4507, 2147483648
    %v4524 = vxor.u32 %v4508, 2147483648
    %v4525 = vxor.u32 %v4509, 2147483648
    %v4526 = vxor.u32 %v4510, 2147483648
    %v4527 = vxor.u32 %v4511, 2147483648
    %v4528 = vxor.u32 %v4512, 2147483648
    %v4529 = vxor.u32 %v4513, 2147483648
    %v4530 = vxor.u32 %v4514, 2147483648
    %v4531 = vxor.u32 %v4515, 2147483648
    %v4532 = vxor.u32 %v4516, 2147483648
    %v4533 = vxor.u32 %v4517, 2147483648
    %v4534 = vxor.u32 %v4518, 2147483648
    %v4535 = vxor.u32 %v4519, 2147483648
    %v4536 = vmul.f32 %v4520, 1.442695
    %v4537 = vpow.pop %v4536
    %v4538 = vmul.f32 %v4521, 1.442695
    %v4539 = vpow.pop %v4538
    %v4540 = vmul.f32 %v4522, 1.442695
    %v4541 = vpow.pop %v4540
    %v4542 = vmul.f32 %v4523, 1.442695
    %v4543 = vpow.pop %v4542
    %v4544 = vmul.f32 %v4524, 1.442695
    %v4545 = vpow.pop %v4544
    %v4546 = vmul.f32 %v4525, 1.442695
    %v4547 = vpow.pop %v4546
    %v4548 = vmul.f32 %v4526, 1.442695
    %v4549 = vpow.pop %v4548
    %v4550 = vmul.f32 %v4527, 1.442695
    %v4551 = vpow.pop %v4550
    %v4552 = vmul.f32 %v4528, 1.442695
    %v4553 = vpow.pop %v4552
    %v4554 = vmul.f32 %v4529, 1.442695
    %v4555 = vpow.pop %v4554
    %v4556 = vmul.f32 %v4530, 1.442695
    %v4557 = vpow.pop %v4556
    %v4558 = vmul.f32 %v4531, 1.442695
    %v4559 = vpow.pop %v4558
    %v4560 = vmul.f32 %v4532, 1.442695
    %v4561 = vpow.pop %v4560
    %v4562 = vmul.f32 %v4533, 1.442695
    %v4563 = vpow.pop %v4562
    %v4564 = vmul.f32 %v4534, 1.442695
    %v4565 = vpow.pop %v4564
    %v4566 = vmul.f32 %v4535, 1.442695
    %v4567 = vpow.pop %v4566
    %v4568 = vadd.f32 %v4537, 1.0
    %v4569 = vadd.f32 %v4539, 1.0
    %v4570 = vadd.f32 %v4541, 1.0
    %v4571 = vadd.f32 %v4543, 1.0
    %v4572 = vadd.f32 %v4545, 1.0
    %v4573 = vadd.f32 %v4547, 1.0
    %v4574 = vadd.f32 %v4549, 1.0
    %v4575 = vadd.f32 %v4551, 1.0
    %v4576 = vadd.f32 %v4553, 1.0
    %v4577 = vadd.f32 %v4555, 1.0
    %v4578 = vadd.f32 %v4557, 1.0
    %v4579 = vadd.f32 %v4559, 1.0
    %v4580 = vadd.f32 %v4561, 1.0
    %v4581 = vadd.f32 %v4563, 1.0
    %v4582 = vadd.f32 %v4565, 1.0
    %v4583 = vadd.f32 %v4567, 1.0
    %v4584 = vrcp.pop %v4568
    %v4585 = vmul.f32 %v4568, %v4584
    %v4586 = vsub.f32 1.0, %v4585
    %v4587 = vmul.f32 %v4584, %v4586
    %v4588 = vadd.f32 %v4584, %v4587
    %vm4589 = vweird.f32 %v4568
    %vm4590 = vweird.f32 %v4584
    %vm4591 = vmor %vm4589, %vm4590
    %v4592 = vsel %vm4591, %v4584, %v4588
    %v4593 = vand.u32 2147483647, %v4568
    %vm4594 = vcmp.eq.f32.partialorder %v4593, 8.507059e+37
    %v4595 = vand.u32 %v4568, 2147483648
    %v4596 = vor.u32 1.1754944e-38, %v4595
    %v4597 = vsel %vm4594, %v4596, %v4592
    %v4598 = vmul.f32 1.0, %v4597
    %v4599 = vrcp.pop %v4569
    %v4600 = vmul.f32 %v4569, %v4599
    %v4601 = vsub.f32 1.0, %v4600
    %v4602 = vmul.f32 %v4599, %v4601
    %v4603 = vadd.f32 %v4599, %v4602
    %vm4604 = vweird.f32 %v4569
    %vm4605 = vweird.f32 %v4599
    %vm4606 = vmor %vm4604, %vm4605
    %v4607 = vsel %vm4606, %v4599, %v4603
    %v4608 = vand.u32 2147483647, %v4569
    %vm4609 = vcmp.eq.f32.partialorder %v4608, 8.507059e+37
    %v4610 = vand.u32 %v4569, 2147483648
    %v4611 = vor.u32 1.1754944e-38, %v4610
    %v4612 = vsel %vm4609, %v4611, %v4607
    %v4613 = vmul.f32 1.0, %v4612
    %v4614 = vrcp.pop %v4570
    %v4615 = vmul.f32 %v4570, %v4614
    %v4616 = vsub.f32 1.0, %v4615
    %v4617 = vmul.f32 %v4614, %v4616
    %v4618 = vadd.f32 %v4614, %v4617
    %vm4619 = vweird.f32 %v4570
    %vm4620 = vweird.f32 %v4614
    %vm4621 = vmor %vm4619, %vm4620
    %v4622 = vsel %vm4621, %v4614, %v4618
    %v4623 = vand.u32 2147483647, %v4570
    %vm4624 = vcmp.eq.f32.partialorder %v4623, 8.507059e+37
    %v4625 = vand.u32 %v4570, 2147483648
    %v4626 = vor.u32 1.1754944e-38, %v4625
    %v4627 = vsel %vm4624, %v4626, %v4622
    %v4628 = vmul.f32 1.0, %v4627
    %v4629 = vrcp.pop %v4571
    %v4630 = vmul.f32 %v4571, %v4629
    %v4631 = vsub.f32 1.0, %v4630
    %v4632 = vmul.f32 %v4629, %v4631
    %v4633 = vadd.f32 %v4629, %v4632
    %vm4634 = vweird.f32 %v4571
    %vm4635 = vweird.f32 %v4629
    %vm4636 = vmor %vm4634, %vm4635
    %v4637 = vsel %vm4636, %v4629, %v4633
    %v4638 = vand.u32 2147483647, %v4571
    %vm4639 = vcmp.eq.f32.partialorder %v4638, 8.507059e+37
    %v4640 = vand.u32 %v4571, 2147483648
    %v4641 = vor.u32 1.1754944e-38, %v4640
    %v4642 = vsel %vm4639, %v4641, %v4637
    %v4643 = vmul.f32 1.0, %v4642
    %v4644 = vrcp.pop %v4572
    %v4645 = vmul.f32 %v4572, %v4644
    %v4646 = vsub.f32 1.0, %v4645
    %v4647 = vmul.f32 %v4644, %v4646
    %v4648 = vadd.f32 %v4644, %v4647
    %vm4649 = vweird.f32 %v4572
    %vm4650 = vweird.f32 %v4644
    %vm4651 = vmor %vm4649, %vm4650
    %v4652 = vsel %vm4651, %v4644, %v4648
    %v4653 = vand.u32 2147483647, %v4572
    %vm4654 = vcmp.eq.f32.partialorder %v4653, 8.507059e+37
    %v4655 = vand.u32 %v4572, 2147483648
    %v4656 = vor.u32 1.1754944e-38, %v4655
    %v4657 = vsel %vm4654, %v4656, %v4652
    %v4658 = vmul.f32 1.0, %v4657
    %v4659 = vrcp.pop %v4573
    %v4660 = vmul.f32 %v4573, %v4659
    %v4661 = vsub.f32 1.0, %v4660
    %v4662 = vmul.f32 %v4659, %v4661
    %v4663 = vadd.f32 %v4659, %v4662
    %vm4664 = vweird.f32 %v4573
    %vm4665 = vweird.f32 %v4659
    %vm4666 = vmor %vm4664, %vm4665
    %v4667 = vsel %vm4666, %v4659, %v4663
    %v4668 = vand.u32 2147483647, %v4573
    %vm4669 = vcmp.eq.f32.partialorder %v4668, 8.507059e+37
    %v4670 = vand.u32 %v4573, 2147483648
    %v4671 = vor.u32 1.1754944e-38, %v4670
    %v4672 = vsel %vm4669, %v4671, %v4667
    %v4673 = vmul.f32 1.0, %v4672
    %v4674 = vrcp.pop %v4574
    %v4675 = vmul.f32 %v4574, %v4674
    %v4676 = vsub.f32 1.0, %v4675
    %v4677 = vmul.f32 %v4674, %v4676
    %v4678 = vadd.f32 %v4674, %v4677
    %vm4679 = vweird.f32 %v4574
    %vm4680 = vweird.f32 %v4674
    %vm4681 = vmor %vm4679, %vm4680
    %v4682 = vsel %vm4681, %v4674, %v4678
    %v4683 = vand.u32 2147483647, %v4574
    %vm4684 = vcmp.eq.f32.partialorder %v4683, 8.507059e+37
    %v4685 = vand.u32 %v4574, 2147483648
    %v4686 = vor.u32 1.1754944e-38, %v4685
    %v4687 = vsel %vm4684, %v4686, %v4682
    %v4688 = vmul.f32 1.0, %v4687
    %v4689 = vrcp.pop %v4575
    %v4690 = vmul.f32 %v4575, %v4689
    %v4691 = vsub.f32 1.0, %v4690
    %v4692 = vmul.f32 %v4689, %v4691
    %v4693 = vadd.f32 %v4689, %v4692
    %vm4694 = vweird.f32 %v4575
    %vm4695 = vweird.f32 %v4689
    %vm4696 = vmor %vm4694, %vm4695
    %v4697 = vsel %vm4696, %v4689, %v4693
    %v4698 = vand.u32 2147483647, %v4575
    %vm4699 = vcmp.eq.f32.partialorder %v4698, 8.507059e+37
    %v4700 = vand.u32 %v4575, 2147483648
    %v4701 = vor.u32 1.1754944e-38, %v4700
    %v4702 = vsel %vm4699, %v4701, %v4697
    %v4703 = vmul.f32 1.0, %v4702
    %v4704 = vrcp.pop %v4576
    %v4705 = vmul.f32 %v4576, %v4704
    %v4706 = vsub.f32 1.0, %v4705
    %v4707 = vmul.f32 %v4704, %v4706
    %v4708 = vadd.f32 %v4704, %v4707
    %vm4709 = vweird.f32 %v4576
    %vm4710 = vweird.f32 %v4704
    %vm4711 = vmor %vm4709, %vm4710
    %v4712 = vsel %vm4711, %v4704, %v4708
    %v4713 = vand.u32 2147483647, %v4576
    %vm4714 = vcmp.eq.f32.partialorder %v4713, 8.507059e+37
    %v4715 = vand.u32 %v4576, 2147483648
    %v4716 = vor.u32 1.1754944e-38, %v4715
    %v4717 = vsel %vm4714, %v4716, %v4712
    %v4718 = vmul.f32 1.0, %v4717
    %v4719 = vrcp.pop %v4577
    %v4720 = vmul.f32 %v4577, %v4719
    %v4721 = vsub.f32 1.0, %v4720
    %v4722 = vmul.f32 %v4719, %v4721
    %v4723 = vadd.f32 %v4719, %v4722
    %vm4724 = vweird.f32 %v4577
    %vm4725 = vweird.f32 %v4719
    %vm4726 = vmor %vm4724, %vm4725
    %v4727 = vsel %vm4726, %v4719, %v4723
    %v4728 = vand.u32 2147483647, %v4577
    %vm4729 = vcmp.eq.f32.partialorder %v4728, 8.507059e+37
    %v4730 = vand.u32 %v4577, 2147483648
    %v4731 = vor.u32 1.1754944e-38, %v4730
    %v4732 = vsel %vm4729, %v4731, %v4727
    %v4733 = vmul.f32 1.0, %v4732
    %v4734 = vrcp.pop %v4578
    %v4735 = vmul.f32 %v4578, %v4734
    %v4736 = vsub.f32 1.0, %v4735
    %v4737 = vmul.f32 %v4734, %v4736
    %v4738 = vadd.f32 %v4734, %v4737
    %vm4739 = vweird.f32 %v4578
    %vm4740 = vweird.f32 %v4734
    %vm4741 = vmor %vm4739, %vm4740
    %v4742 = vsel %vm4741, %v4734, %v4738
    %v4743 = vand.u32 2147483647, %v4578
    %vm4744 = vcmp.eq.f32.partialorder %v4743, 8.507059e+37
    %v4745 = vand.u32 %v4578, 2147483648
    %v4746 = vor.u32 1.1754944e-38, %v4745
    %v4747 = vsel %vm4744, %v4746, %v4742
    %v4748 = vmul.f32 1.0, %v4747
    %v4749 = vrcp.pop %v4579
    %v4750 = vmul.f32 %v4579, %v4749
    %v4751 = vsub.f32 1.0, %v4750
    %v4752 = vmul.f32 %v4749, %v4751
    %v4753 = vadd.f32 %v4749, %v4752
    %vm4754 = vweird.f32 %v4579
    %vm4755 = vweird.f32 %v4749
    %vm4756 = vmor %vm4754, %vm4755
    %v4757 = vsel %vm4756, %v4749, %v4753
    %v4758 = vand.u32 2147483647, %v4579
    %vm4759 = vcmp.eq.f32.partialorder %v4758, 8.507059e+37
    %v4760 = vand.u32 %v4579, 2147483648
    %v4761 = vor.u32 1.1754944e-38, %v4760
    %v4762 = vsel %vm4759, %v4761, %v4757
    %v4763 = vmul.f32 1.0, %v4762
    %v4764 = vrcp.pop %v4580
    %v4765 = vmul.f32 %v4580, %v4764
    %v4766 = vsub.f32 1.0, %v4765
    %v4767 = vmul.f32 %v4764, %v4766
    %v4768 = vadd.f32 %v4764, %v4767
    %vm4769 = vweird.f32 %v4580
    %vm4770 = vweird.f32 %v4764
    %vm4771 = vmor %vm4769, %vm4770
    %v4772 = vsel %vm4771, %v4764, %v4768
    %v4773 = vand.u32 2147483647, %v4580
    %vm4774 = vcmp.eq.f32.partialorder %v4773, 8.507059e+37
    %v4775 = vand.u32 %v4580, 2147483648
    %v4776 = vor.u32 1.1754944e-38, %v4775
    %v4777 = vsel %vm4774, %v4776, %v4772
    %v4778 = vmul.f32 1.0, %v4777
    %v4779 = vrcp.pop %v4581
    %v4780 = vmul.f32 %v4581, %v4779
    %v4781 = vsub.f32 1.0, %v4780
    %v4782 = vmul.f32 %v4779, %v4781
    %v4783 = vadd.f32 %v4779, %v4782
    %vm4784 = vweird.f32 %v4581
    %vm4785 = vweird.f32 %v4779
    %vm4786 = vmor %vm4784, %vm4785
    %v4787 = vsel %vm4786, %v4779, %v4783
    %v4788 = vand.u32 2147483647, %v4581
    %vm4789 = vcmp.eq.f32.partialorder %v4788, 8.507059e+37
    %v4790 = vand.u32 %v4581, 2147483648
    %v4791 = vor.u32 1.1754944e-38, %v4790
    %v4792 = vsel %vm4789, %v4791, %v4787
    %v4793 = vmul.f32 1.0, %v4792
    %v4794 = vrcp.pop %v4582
    %v4795 = vmul.f32 %v4582, %v4794
    %v4796 = vsub.f32 1.0, %v4795
    %v4797 = vmul.f32 %v4794, %v4796
    %v4798 = vadd.f32 %v4794, %v4797
    %vm4799 = vweird.f32 %v4582
    %vm4800 = vweird.f32 %v4794
    %vm4801 = vmor %vm4799, %vm4800
    %v4802 = vsel %vm4801, %v4794, %v4798
    %v4803 = vand.u32 2147483647, %v4582
    %vm4804 = vcmp.eq.f32.partialorder %v4803, 8.507059e+37
    %v4805 = vand.u32 %v4582, 2147483648
    %v4806 = vor.u32 1.1754944e-38, %v4805
    %v4807 = vsel %vm4804, %v4806, %v4802
    %v4808 = vmul.f32 1.0, %v4807
    %v4809 = vrcp.pop %v4583
    %v4810 = vmul.f32 %v4583, %v4809
    %v4811 = vsub.f32 1.0, %v4810
    %v4812 = vmul.f32 %v4809, %v4811
    %v4813 = vadd.f32 %v4809, %v4812
    %vm4814 = vweird.f32 %v4583
    %vm4815 = vweird.f32 %v4809
    %vm4816 = vmor %vm4814, %vm4815
    %v4817 = vsel %vm4816, %v4809, %v4813
    %v4818 = vand.u32 2147483647, %v4583
    %vm4819 = vcmp.eq.f32.partialorder %v4818, 8.507059e+37
    %v4820 = vand.u32 %v4583, 2147483648
    %v4821 = vor.u32 1.1754944e-38, %v4820
    %v4822 = vsel %vm4819, %v4821, %v4817
    %v4823 = vmul.f32 1.0, %v4822
    %4824 = vrot.lane.b32.xlu0 %v4474, 96
    %v4825 = vpop.permute.xlu0 %4824
    %4826 = vrot.lane.b32.xlu0 %v4475, 96
    %v4827 = vpop.permute.xlu0 %4826
    %4828 = vrot.lane.b32.xlu0 %v4476, 96
    %v4829 = vpop.permute.xlu0 %4828
    %4830 = vrot.lane.b32.xlu0 %v4477, 96
    %v4831 = vpop.permute.xlu0 %4830
    %4832 = vrot.lane.b32.xlu0 %v4467, 96
    %v4833 = vpop.permute.xlu0 %4832
    %4834 = vrot.lane.b32.xlu0 %v4478, 96
    %v4835 = vpop.permute.xlu0 %4834
    %4836 = vrot.lane.b32.xlu0 %v4479, 96
    %v4837 = vpop.permute.xlu0 %4836
    %4838 = vrot.lane.b32.xlu0 %v4480, 96
    %v4839 = vpop.permute.xlu0 %4838
    %4840 = vrot.lane.b32.xlu0 %v4481, 96
    %v4841 = vpop.permute.xlu0 %4840
    %4842 = vrot.lane.b32.xlu0 %v4482, 96
    %v4843 = vpop.permute.xlu0 %4842
    %4844 = vrot.lane.b32.xlu0 %v4483, 96
    %v4845 = vpop.permute.xlu0 %4844
    %4846 = vrot.lane.b32.xlu0 %v4484, 96
    %v4847 = vpop.permute.xlu0 %4846
    %4848 = vrot.lane.b32.xlu0 %v4470, 96
    %v4849 = vpop.permute.xlu0 %4848
    %4850 = vrot.lane.b32.xlu0 %v4485, 96
    %v4851 = vpop.permute.xlu0 %4850
    %4852 = vrot.lane.b32.xlu0 %v4486, 96
    %v4853 = vpop.permute.xlu0 %4852
    %4854 = vrot.lane.b32.xlu0 %v4487, 96
    %v4855 = vpop.permute.xlu0 %4854
    %v4872 = vmul.f32 %v4598, %v4825
    %v4873 = vmul.f32 %v4613, %v4827
    %v4874 = vmul.f32 %v4628, %v4829
    %v4875 = vmul.f32 %v4643, %v4831
    %v4876 = vmul.f32 %v4658, %v4833
    %v4877 = vmul.f32 %v4673, %v4835
    %v4878 = vmul.f32 %v4688, %v4837
    %v4879 = vmul.f32 %v4703, %v4839
    %v4880 = vmul.f32 %v4718, %v4841
    %v4881 = vmul.f32 %v4733, %v4843
    %v4882 = vmul.f32 %v4748, %v4845
    %v4883 = vmul.f32 %v4763, %v4847
    %v4884 = vmul.f32 %v4778, %v4849
    %v4885 = vmul.f32 %v4793, %v4851
    %v4886 = vmul.f32 %v4808, %v4853
    %v4887 = vmul.f32 %v4823, %v4855
    %4904 = vrot.lane.b32.xlu0 %v4872, 32
    %v4905 = vpop.permute.xlu0 %4904
    %4906 = vrot.lane.b32.xlu0 %v4873, 32
    %v4907 = vpop.permute.xlu0 %4906
    %4908 = vrot.lane.b32.xlu0 %v4874, 32
    %v4909 = vpop.permute.xlu0 %4908
    %4910 = vrot.lane.b32.xlu0 %v4875, 32
    %v4911 = vpop.permute.xlu0 %4910
    %4912 = vrot.lane.b32.xlu0 %v4876, 32
    %v4913 = vpop.permute.xlu0 %4912
    %4914 = vrot.lane.b32.xlu0 %v4877, 32
    %v4915 = vpop.permute.xlu0 %4914
    %4916 = vrot.lane.b32.xlu0 %v4878, 32
    %v4917 = vpop.permute.xlu0 %4916
    %4918 = vrot.lane.b32.xlu0 %v4879, 32
    %v4919 = vpop.permute.xlu0 %4918
    %4920 = vrot.lane.b32.xlu0 %v4880, 32
    %v4921 = vpop.permute.xlu0 %4920
    %4922 = vrot.lane.b32.xlu0 %v4881, 32
    %v4923 = vpop.permute.xlu0 %4922
    %4924 = vrot.lane.b32.xlu0 %v4882, 32
    %v4925 = vpop.permute.xlu0 %4924
    %4926 = vrot.lane.b32.xlu0 %v4883, 32
    %v4927 = vpop.permute.xlu0 %4926
    %4928 = vrot.lane.b32.xlu0 %v4884, 32
    %v4929 = vpop.permute.xlu0 %4928
    %4930 = vrot.lane.b32.xlu0 %v4885, 32
    %v4931 = vpop.permute.xlu0 %4930
    %4932 = vrot.lane.b32.xlu0 %v4886, 32
    %v4933 = vpop.permute.xlu0 %4932
    %4934 = vrot.lane.b32.xlu0 %v4887, 32
    %v4935 = vpop.permute.xlu0 %4934
    %v4952 = vadd.f32 %v1277, %v4905
    %v4953 = vadd.f32 %v1280, %v4907
    %v4954 = vadd.f32 %v1283, %v4909
    %v4955 = vadd.f32 %v1286, %v4911
    %v4956 = vadd.f32 %v1289, %v4913
    %v4957 = vadd.f32 %v1292, %v4915
    %v4958 = vadd.f32 %v1295, %v4917
    %v4959 = vadd.f32 %v1298, %v4919
    %v4960 = vadd.f32 %v1301, %v4921
    %v4961 = vadd.f32 %v1304, %v4923
    %v4962 = vadd.f32 %v1307, %v4925
    %v4963 = vadd.f32 %v1310, %v4927
    %v4964 = vadd.f32 %v1313, %v4929
    %v4965 = vadd.f32 %v1316, %v4931
    %v4966 = vadd.f32 %v1319, %v4933
    %v4967 = vadd.f32 %v1322, %v4935
    %v4968 = vtanh.pop %v4952
    %v4969 = vtanh.pop %v4953
    %v4970 = vtanh.pop %v4954
    %v4971 = vtanh.pop %v4955
    %v4972 = vtanh.pop %v4956
    %v4973 = vtanh.pop %v4957
    %v4974 = vtanh.pop %v4958
    %v4975 = vtanh.pop %v4959
    %v4976 = vtanh.pop %v4960
    %v4977 = vtanh.pop %v4961
    %v4978 = vtanh.pop %v4962
    %v4979 = vtanh.pop %v4963
    %v4980 = vtanh.pop %v4964
    %v4981 = vtanh.pop %v4965
    %v4982 = vtanh.pop %v4966
    %v4983 = vtanh.pop %v4967
    %v4984 = vsub.f32 1.0, %v4598
    %v4985 = vsub.f32 1.0, %v4613
    %v4986 = vsub.f32 1.0, %v4628
    %v4987 = vsub.f32 1.0, %v4643
    %v4988 = vsub.f32 1.0, %v4658
    %v4989 = vsub.f32 1.0, %v4673
    %v4990 = vsub.f32 1.0, %v4688
    %v4991 = vsub.f32 1.0, %v4703
    %v4992 = vsub.f32 1.0, %v4718
    %v4993 = vsub.f32 1.0, %v4733
    %v4994 = vsub.f32 1.0, %v4748
    %v4995 = vsub.f32 1.0, %v4763
    %v4996 = vsub.f32 1.0, %v4778
    %v4997 = vsub.f32 1.0, %v4793
    %v4998 = vsub.f32 1.0, %v4808
    %v4999 = vsub.f32 1.0, %v4823
    %5016 = vrot.lane.b32.xlu0 %v4968, 112
    %v5017 = vpop.permute.xlu0 %5016
    %5018 = vrot.lane.b32.xlu0 %v4969, 112
    %v5019 = vpop.permute.xlu0 %5018
    %5020 = vrot.lane.b32.xlu0 %v4970, 112
    %v5021 = vpop.permute.xlu0 %5020
    %5022 = vrot.lane.b32.xlu0 %v4971, 112
    %v5023 = vpop.permute.xlu0 %5022
    %5024 = vrot.lane.b32.xlu0 %v4972, 112
    %v5025 = vpop.permute.xlu0 %5024
    %5026 = vrot.lane.b32.xlu0 %v4973, 112
    %v5027 = vpop.permute.xlu0 %5026
    %5028 = vrot.lane.b32.xlu0 %v4974, 112
    %v5029 = vpop.permute.xlu0 %5028
    %5030 = vrot.lane.b32.xlu0 %v4975, 112
    %v5031 = vpop.permute.xlu0 %5030
    %5032 = vrot.lane.b32.xlu0 %v4976, 112
    %v5033 = vpop.permute.xlu0 %5032
    %5034 = vrot.lane.b32.xlu0 %v4977, 112
    %v5035 = vpop.permute.xlu0 %5034
    %5036 = vrot.lane.b32.xlu0 %v4978, 112
    %v5037 = vpop.permute.xlu0 %5036
    %5038 = vrot.lane.b32.xlu0 %v4979, 112
    %v5039 = vpop.permute.xlu0 %5038
    %5040 = vrot.lane.b32.xlu0 %v4980, 112
    %v5041 = vpop.permute.xlu0 %5040
    %5042 = vrot.lane.b32.xlu0 %v4981, 112
    %v5043 = vpop.permute.xlu0 %5042
    %5044 = vrot.lane.b32.xlu0 %v4982, 112
    %v5045 = vpop.permute.xlu0 %5044
    %5046 = vrot.lane.b32.xlu0 %v4983, 112
    %v5047 = vpop.permute.xlu0 %5046
    %v5064 = vmul.f32 %v4984, %v5017
    %v5065 = vmul.f32 %v4985, %v5019
    %v5066 = vmul.f32 %v4986, %v5021
    %v5067 = vmul.f32 %v4987, %v5023
    %v5068 = vmul.f32 %v4988, %v5025
    %v5069 = vmul.f32 %v4989, %v5027
    %v5070 = vmul.f32 %v4990, %v5029
    %v5071 = vmul.f32 %v4991, %v5031
    %v5072 = vmul.f32 %v4992, %v5033
    %v5073 = vmul.f32 %v4993, %v5035
    %v5074 = vmul.f32 %v4994, %v5037
    %v5075 = vmul.f32 %v4995, %v5039
    %v5076 = vmul.f32 %v4996, %v5041
    %v5077 = vmul.f32 %v4997, %v5043
    %v5078 = vmul.f32 %v4998, %v5045
    %v5079 = vmul.f32 %v4999, %v5047
    %v5080 = vrot.slane %v4441, 4
    %v5081 = vrot.slane %v4441, 5
    %v5082 = vrot.slane %v4441, 6
    %v5083 = vrot.slane %v4441, 7
    %v5084 = vrot.slane %v4441, 1
    %v5085 = vrot.slane %v4441, 2
    %v5086 = vrot.slane %v4441, 3
    %v5087 = vrot.slane %v4442, 4
    %v5088 = vrot.slane %v4442, 5
    %v5089 = vrot.slane %v4442, 6
    %v5090 = vrot.slane %v4442, 7
    %v5091 = vrot.slane %v4442, 1
    %v5092 = vrot.slane %v4442, 2
    %v5093 = vrot.slane %v4442, 3
    %5094 = vrot.lane.b32.xlu0 %v5080, 16
    %v5095 = vpop.permute.xlu0 %5094
    %5096 = vrot.lane.b32.xlu0 %v5081, 16
    %v5097 = vpop.permute.xlu0 %5096
    %5098 = vrot.lane.b32.xlu0 %v5082, 16
    %v5099 = vpop.permute.xlu0 %5098
    %5100 = vrot.lane.b32.xlu0 %v5083, 16
    %v5101 = vpop.permute.xlu0 %5100
    %5102 = vrot.lane.b32.xlu0 %v4441, 16
    %v5103 = vpop.permute.xlu0 %5102
    %5104 = vrot.lane.b32.xlu0 %v5084, 16
    %v5105 = vpop.permute.xlu0 %5104
    %5106 = vrot.lane.b32.xlu0 %v5085, 16
    %v5107 = vpop.permute.xlu0 %5106
    %5108 = vrot.lane.b32.xlu0 %v5086, 16
    %v5109 = vpop.permute.xlu0 %5108
    %5110 = vrot.lane.b32.xlu0 %v5087, 16
    %v5111 = vpop.permute.xlu0 %5110
    %5112 = vrot.lane.b32.xlu0 %v5088, 16
    %v5113 = vpop.permute.xlu0 %5112
    %5114 = vrot.lane.b32.xlu0 %v5089, 16
    %v5115 = vpop.permute.xlu0 %5114
    %5116 = vrot.lane.b32.xlu0 %v5090, 16
    %v5117 = vpop.permute.xlu0 %5116
    %5118 = vrot.lane.b32.xlu0 %v4442, 16
    %v5119 = vpop.permute.xlu0 %5118
    %5120 = vrot.lane.b32.xlu0 %v5091, 16
    %v5121 = vpop.permute.xlu0 %5120
    %5122 = vrot.lane.b32.xlu0 %v5092, 16
    %v5123 = vpop.permute.xlu0 %5122
    %5124 = vrot.lane.b32.xlu0 %v5093, 16
    %v5125 = vpop.permute.xlu0 %5124
    %v5142 = vmul.f32 %v4598, %v5095
    %v5143 = vmul.f32 %v4613, %v5097
    %v5144 = vmul.f32 %v4628, %v5099
    %v5145 = vmul.f32 %v4643, %v5101
    %v5146 = vmul.f32 %v4658, %v5103
    %v5147 = vmul.f32 %v4673, %v5105
    %v5148 = vmul.f32 %v4688, %v5107
    %v5149 = vmul.f32 %v4703, %v5109
    %v5150 = vmul.f32 %v4718, %v5111
    %v5151 = vmul.f32 %v4733, %v5113
    %v5152 = vmul.f32 %v4748, %v5115
    %v5153 = vmul.f32 %v4763, %v5117
    %v5154 = vmul.f32 %v4778, %v5119
    %v5155 = vmul.f32 %v4793, %v5121
    %v5156 = vmul.f32 %v4808, %v5123
    %v5157 = vmul.f32 %v4823, %v5125
    %v5158 = vadd.f32 %v5064, %v5142
    %v5159 = vadd.f32 %v5065, %v5143
    %v5160 = vadd.f32 %v5066, %v5144
    %v5161 = vadd.f32 %v5067, %v5145
    %v5162 = vadd.f32 %v5068, %v5146
    %v5163 = vadd.f32 %v5069, %v5147
    %v5164 = vadd.f32 %v5070, %v5148
    %v5165 = vadd.f32 %v5071, %v5149
    %v5166 = vadd.f32 %v5072, %v5150
    %v5167 = vadd.f32 %v5073, %v5151
    %v5168 = vadd.f32 %v5074, %v5152
    %v5169 = vadd.f32 %v5075, %v5153
    %v5170 = vadd.f32 %v5076, %v5154
    %v5171 = vadd.f32 %v5077, %v5155
    %v5172 = vadd.f32 %v5078, %v5156
    %v5173 = vadd.f32 %v5079, %v5157
    %vm5174 = vcmp.gt.s32.totalorder %v197, 4
    %vm5175 = vcmp.gt.s32.totalorder %v198, 4
    %v5176 = vsel %vm5174, 1, 0
    %v5177 = vsel %vm5175, 1, 0
    %5178 = vset.pattern.permute.xlu0 0
    %5179 = vperm.xlu0 %5178, %v5176
    %v5180 = vpop.permute.xlu0 %5179
    %5181 = vset.pattern.permute.xlu0 0
    %5182 = vperm.xlu0 %5181, %v5177
    %v5183 = vpop.permute.xlu0 %5182
    %vm5184 = vcmp.eq.s32.totalorder %v5180, 1
    %vm5185 = vcmp.eq.s32.totalorder %v5183, 1
    %v5202 = vrot.slane %v5158, 4
    %v5203 = vrot.slane %v5159, 3
    %v5204 = vsel %vm437, %v5203, %v5202
    %v5205 = vrot.slane %v5160, 2
    %v5206 = vsel %vm439, %v5205, %v5204
    %v5207 = vrot.slane %v5161, 1
    %v5208 = vsel %vm441, %v5207, %v5206
    %v5209 = vsel %vm443, %v5162, %v5208
    %v5210 = vrot.slane %v5163, 7
    %v5211 = vsel %vm445, %v5210, %v5209
    %v5212 = vrot.slane %v5164, 6
    %v5213 = vsel %vm447, %v5212, %v5211
    %v5214 = vrot.slane %v5165, 5
    %v5215 = vsel %vm449, %v5214, %v5213
    %v5216 = vrot.slane %v5166, 4
    %v5217 = vrot.slane %v5167, 3
    %v5218 = vsel %vm437, %v5217, %v5216
    %v5219 = vrot.slane %v5168, 2
    %v5220 = vsel %vm439, %v5219, %v5218
    %v5221 = vrot.slane %v5169, 1
    %v5222 = vsel %vm441, %v5221, %v5220
    %v5223 = vsel %vm443, %v5170, %v5222
    %v5224 = vrot.slane %v5171, 7
    %v5225 = vsel %vm445, %v5224, %v5223
    %v5226 = vrot.slane %v5172, 6
    %v5227 = vsel %vm447, %v5226, %v5225
    %v5228 = vrot.slane %v5173, 5
    %v5229 = vsel %vm449, %v5228, %v5227
    %5230 = vrot.lane.b32.xlu0 %v5215, 112
    %v5231 = vpop.permute.xlu0 %5230
    %5232 = vrot.lane.b32.xlu0 %v5229, 112
    %v5233 = vpop.permute.xlu0 %5232
    %v5236 = vsel %vm5184, %v5231, %v4441
    %v5237 = vsel %vm5185, %v5233, %v4442
    %v5239 = vsel %vm1327, %v5236, 0
    %v5242 = vsel %vm1327, %v5237, 0
    %5244 = vmatpush.msra.mxu0 0.0
    %5245 = vmatpush.msra.mxu0 0.0
    %5246 = vmatpush.msra.mxu0 0.0
    %5247 = vmatpush.msra.mxu0 0.0
    %5248 = vmatpush.msra.mxu0 0.0
    %5249 = vmatpush.msra.mxu0 0.0
    %5250 = vmatpush.msra.mxu0 0.0
    %5251 = vmatpush.msra.mxu0 0.0
    %5252 = vmatpush.msra.mxu0 0.0
    %5253 = vmatpush.msra.mxu0 0.0
    %5254 = vmatpush.msra.mxu0 0.0
    %5255 = vmatpush.msra.mxu0 0.0
    %5256 = vmatpush.msra.mxu0 0.0
    %5257 = vmatpush.msra.mxu0 0.0
    %5258 = vmatpush.msra.mxu0 %v1325
    %5259 = vmatpush.msra.mxu0 %v1324
    %5260 = vmatmul.f32.gmra.mxu0 %v5239
    %v5261 = vpop.f32.mrf.mxu0
    %v5262 = vadd.f32 %v1326, %v5261
    %5263 = vmatmul.f32.gmra.mxu0 %v5242
    %v5264 = vpop.f32.mrf.mxu0
    %v5265 = vadd.f32 %v1326, %v5264
    %5266 = vdwg.mxu0
    %v5269 = vrot.slane %v5262, 3
    %v5270 = vrot.slane %v5262, 4
    %v5271 = vrot.slane %v5262, 5
    %v5272 = vrot.slane %v5262, 6
    %v5273 = vrot.slane %v5262, 7
    %v5274 = vrot.slane %v5262, 1
    %v5275 = vrot.slane %v5262, 2
    %v5276 = vrot.slane %v5265, 3
    %v5277 = vrot.slane %v5265, 4
    %v5278 = vrot.slane %v5265, 5
    %v5279 = vrot.slane %v5265, 6
    %v5280 = vrot.slane %v5265, 7
    %v5281 = vrot.slane %v5265, 1
    %v5282 = vrot.slane %v5265, 2
    %v5299 = vadd.f32 %v1277, %v5269
    %v5300 = vadd.f32 %v1280, %v5270
    %v5301 = vadd.f32 %v1283, %v5271
    %v5302 = vadd.f32 %v1286, %v5272
    %v5303 = vadd.f32 %v1289, %v5273
    %v5304 = vadd.f32 %v1292, %v5262
    %v5305 = vadd.f32 %v1295, %v5274
    %v5306 = vadd.f32 %v1298, %v5275
    %v5307 = vadd.f32 %v1301, %v5276
    %v5308 = vadd.f32 %v1304, %v5277
    %v5309 = vadd.f32 %v1307, %v5278
    %v5310 = vadd.f32 %v1310, %v5279
    %v5311 = vadd.f32 %v1313, %v5280
    %v5312 = vadd.f32 %v1316, %v5265
    %v5313 = vadd.f32 %v1319, %v5281
    %v5314 = vadd.f32 %v1322, %v5282
    %v5315 = vxor.u32 %v5299, 2147483648
    %v5316 = vxor.u32 %v5300, 2147483648
    %v5317 = vxor.u32 %v5301, 2147483648
    %v5318 = vxor.u32 %v5302, 2147483648
    %v5319 = vxor.u32 %v5303, 2147483648
    %v5320 = vxor.u32 %v5304, 2147483648
    %v5321 = vxor.u32 %v5305, 2147483648
    %v5322 = vxor.u32 %v5306, 2147483648
    %v5323 = vxor.u32 %v5307, 2147483648
    %v5324 = vxor.u32 %v5308, 2147483648
    %v5325 = vxor.u32 %v5309, 2147483648
    %v5326 = vxor.u32 %v5310, 2147483648
    %v5327 = vxor.u32 %v5311, 2147483648
    %v5328 = vxor.u32 %v5312, 2147483648
    %v5329 = vxor.u32 %v5313, 2147483648
    %v5330 = vxor.u32 %v5314, 2147483648
    %v5331 = vmul.f32 %v5315, 1.442695
    %v5332 = vpow.pop %v5331
    %v5333 = vmul.f32 %v5316, 1.442695
    %v5334 = vpow.pop %v5333
    %v5335 = vmul.f32 %v5317, 1.442695
    %v5336 = vpow.pop %v5335
    %v5337 = vmul.f32 %v5318, 1.442695
    %v5338 = vpow.pop %v5337
    %v5339 = vmul.f32 %v5319, 1.442695
    %v5340 = vpow.pop %v5339
    %v5341 = vmul.f32 %v5320, 1.442695
    %v5342 = vpow.pop %v5341
    %v5343 = vmul.f32 %v5321, 1.442695
    %v5344 = vpow.pop %v5343
    %v5345 = vmul.f32 %v5322, 1.442695
    %v5346 = vpow.pop %v5345
    %v5347 = vmul.f32 %v5323, 1.442695
    %v5348 = vpow.pop %v5347
    %v5349 = vmul.f32 %v5324, 1.442695
    %v5350 = vpow.pop %v5349
    %v5351 = vmul.f32 %v5325, 1.442695
    %v5352 = vpow.pop %v5351
    %v5353 = vmul.f32 %v5326, 1.442695
    %v5354 = vpow.pop %v5353
    %v5355 = vmul.f32 %v5327, 1.442695
    %v5356 = vpow.pop %v5355
    %v5357 = vmul.f32 %v5328, 1.442695
    %v5358 = vpow.pop %v5357
    %v5359 = vmul.f32 %v5329, 1.442695
    %v5360 = vpow.pop %v5359
    %v5361 = vmul.f32 %v5330, 1.442695
    %v5362 = vpow.pop %v5361
    %v5363 = vadd.f32 %v5332, 1.0
    %v5364 = vadd.f32 %v5334, 1.0
    %v5365 = vadd.f32 %v5336, 1.0
    %v5366 = vadd.f32 %v5338, 1.0
    %v5367 = vadd.f32 %v5340, 1.0
    %v5368 = vadd.f32 %v5342, 1.0
    %v5369 = vadd.f32 %v5344, 1.0
    %v5370 = vadd.f32 %v5346, 1.0
    %v5371 = vadd.f32 %v5348, 1.0
    %v5372 = vadd.f32 %v5350, 1.0
    %v5373 = vadd.f32 %v5352, 1.0
    %v5374 = vadd.f32 %v5354, 1.0
    %v5375 = vadd.f32 %v5356, 1.0
    %v5376 = vadd.f32 %v5358, 1.0
    %v5377 = vadd.f32 %v5360, 1.0
    %v5378 = vadd.f32 %v5362, 1.0
    %v5379 = vrcp.pop %v5363
    %v5380 = vmul.f32 %v5363, %v5379
    %v5381 = vsub.f32 1.0, %v5380
    %v5382 = vmul.f32 %v5379, %v5381
    %v5383 = vadd.f32 %v5379, %v5382
    %vm5384 = vweird.f32 %v5363
    %vm5385 = vweird.f32 %v5379
    %vm5386 = vmor %vm5384, %vm5385
    %v5387 = vsel %vm5386, %v5379, %v5383
    %v5388 = vand.u32 2147483647, %v5363
    %vm5389 = vcmp.eq.f32.partialorder %v5388, 8.507059e+37
    %v5390 = vand.u32 %v5363, 2147483648
    %v5391 = vor.u32 1.1754944e-38, %v5390
    %v5392 = vsel %vm5389, %v5391, %v5387
    %v5393 = vmul.f32 1.0, %v5392
    %v5394 = vrcp.pop %v5364
    %v5395 = vmul.f32 %v5364, %v5394
    %v5396 = vsub.f32 1.0, %v5395
    %v5397 = vmul.f32 %v5394, %v5396
    %v5398 = vadd.f32 %v5394, %v5397
    %vm5399 = vweird.f32 %v5364
    %vm5400 = vweird.f32 %v5394
    %vm5401 = vmor %vm5399, %vm5400
    %v5402 = vsel %vm5401, %v5394, %v5398
    %v5403 = vand.u32 2147483647, %v5364
    %vm5404 = vcmp.eq.f32.partialorder %v5403, 8.507059e+37
    %v5405 = vand.u32 %v5364, 2147483648
    %v5406 = vor.u32 1.1754944e-38, %v5405
    %v5407 = vsel %vm5404, %v5406, %v5402
    %v5408 = vmul.f32 1.0, %v5407
    %v5409 = vrcp.pop %v5365
    %v5410 = vmul.f32 %v5365, %v5409
    %v5411 = vsub.f32 1.0, %v5410
    %v5412 = vmul.f32 %v5409, %v5411
    %v5413 = vadd.f32 %v5409, %v5412
    %vm5414 = vweird.f32 %v5365
    %vm5415 = vweird.f32 %v5409
    %vm5416 = vmor %vm5414, %vm5415
    %v5417 = vsel %vm5416, %v5409, %v5413
    %v5418 = vand.u32 2147483647, %v5365
    %vm5419 = vcmp.eq.f32.partialorder %v5418, 8.507059e+37
    %v5420 = vand.u32 %v5365, 2147483648
    %v5421 = vor.u32 1.1754944e-38, %v5420
    %v5422 = vsel %vm5419, %v5421, %v5417
    %v5423 = vmul.f32 1.0, %v5422
    %v5424 = vrcp.pop %v5366
    %v5425 = vmul.f32 %v5366, %v5424
    %v5426 = vsub.f32 1.0, %v5425
    %v5427 = vmul.f32 %v5424, %v5426
    %v5428 = vadd.f32 %v5424, %v5427
    %vm5429 = vweird.f32 %v5366
    %vm5430 = vweird.f32 %v5424
    %vm5431 = vmor %vm5429, %vm5430
    %v5432 = vsel %vm5431, %v5424, %v5428
    %v5433 = vand.u32 2147483647, %v5366
    %vm5434 = vcmp.eq.f32.partialorder %v5433, 8.507059e+37
    %v5435 = vand.u32 %v5366, 2147483648
    %v5436 = vor.u32 1.1754944e-38, %v5435
    %v5437 = vsel %vm5434, %v5436, %v5432
    %v5438 = vmul.f32 1.0, %v5437
    %v5439 = vrcp.pop %v5367
    %v5440 = vmul.f32 %v5367, %v5439
    %v5441 = vsub.f32 1.0, %v5440
    %v5442 = vmul.f32 %v5439, %v5441
    %v5443 = vadd.f32 %v5439, %v5442
    %vm5444 = vweird.f32 %v5367
    %vm5445 = vweird.f32 %v5439
    %vm5446 = vmor %vm5444, %vm5445
    %v5447 = vsel %vm5446, %v5439, %v5443
    %v5448 = vand.u32 2147483647, %v5367
    %vm5449 = vcmp.eq.f32.partialorder %v5448, 8.507059e+37
    %v5450 = vand.u32 %v5367, 2147483648
    %v5451 = vor.u32 1.1754944e-38, %v5450
    %v5452 = vsel %vm5449, %v5451, %v5447
    %v5453 = vmul.f32 1.0, %v5452
    %v5454 = vrcp.pop %v5368
    %v5455 = vmul.f32 %v5368, %v5454
    %v5456 = vsub.f32 1.0, %v5455
    %v5457 = vmul.f32 %v5454, %v5456
    %v5458 = vadd.f32 %v5454, %v5457
    %vm5459 = vweird.f32 %v5368
    %vm5460 = vweird.f32 %v5454
    %vm5461 = vmor %vm5459, %vm5460
    %v5462 = vsel %vm5461, %v5454, %v5458
    %v5463 = vand.u32 2147483647, %v5368
    %vm5464 = vcmp.eq.f32.partialorder %v5463, 8.507059e+37
    %v5465 = vand.u32 %v5368, 2147483648
    %v5466 = vor.u32 1.1754944e-38, %v5465
    %v5467 = vsel %vm5464, %v5466, %v5462
    %v5468 = vmul.f32 1.0, %v5467
    %v5469 = vrcp.pop %v5369
    %v5470 = vmul.f32 %v5369, %v5469
    %v5471 = vsub.f32 1.0, %v5470
    %v5472 = vmul.f32 %v5469, %v5471
    %v5473 = vadd.f32 %v5469, %v5472
    %vm5474 = vweird.f32 %v5369
    %vm5475 = vweird.f32 %v5469
    %vm5476 = vmor %vm5474, %vm5475
    %v5477 = vsel %vm5476, %v5469, %v5473
    %v5478 = vand.u32 2147483647, %v5369
    %vm5479 = vcmp.eq.f32.partialorder %v5478, 8.507059e+37
    %v5480 = vand.u32 %v5369, 2147483648
    %v5481 = vor.u32 1.1754944e-38, %v5480
    %v5482 = vsel %vm5479, %v5481, %v5477
    %v5483 = vmul.f32 1.0, %v5482
    %v5484 = vrcp.pop %v5370
    %v5485 = vmul.f32 %v5370, %v5484
    %v5486 = vsub.f32 1.0, %v5485
    %v5487 = vmul.f32 %v5484, %v5486
    %v5488 = vadd.f32 %v5484, %v5487
    %vm5489 = vweird.f32 %v5370
    %vm5490 = vweird.f32 %v5484
    %vm5491 = vmor %vm5489, %vm5490
    %v5492 = vsel %vm5491, %v5484, %v5488
    %v5493 = vand.u32 2147483647, %v5370
    %vm5494 = vcmp.eq.f32.partialorder %v5493, 8.507059e+37
    %v5495 = vand.u32 %v5370, 2147483648
    %v5496 = vor.u32 1.1754944e-38, %v5495
    %v5497 = vsel %vm5494, %v5496, %v5492
    %v5498 = vmul.f32 1.0, %v5497
    %v5499 = vrcp.pop %v5371
    %v5500 = vmul.f32 %v5371, %v5499
    %v5501 = vsub.f32 1.0, %v5500
    %v5502 = vmul.f32 %v5499, %v5501
    %v5503 = vadd.f32 %v5499, %v5502
    %vm5504 = vweird.f32 %v5371
    %vm5505 = vweird.f32 %v5499
    %vm5506 = vmor %vm5504, %vm5505
    %v5507 = vsel %vm5506, %v5499, %v5503
    %v5508 = vand.u32 2147483647, %v5371
    %vm5509 = vcmp.eq.f32.partialorder %v5508, 8.507059e+37
    %v5510 = vand.u32 %v5371, 2147483648
    %v5511 = vor.u32 1.1754944e-38, %v5510
    %v5512 = vsel %vm5509, %v5511, %v5507
    %v5513 = vmul.f32 1.0, %v5512
    %v5514 = vrcp.pop %v5372
    %v5515 = vmul.f32 %v5372, %v5514
    %v5516 = vsub.f32 1.0, %v5515
    %v5517 = vmul.f32 %v5514, %v5516
    %v5518 = vadd.f32 %v5514, %v5517
    %vm5519 = vweird.f32 %v5372
    %vm5520 = vweird.f32 %v5514
    %vm5521 = vmor %vm5519, %vm5520
    %v5522 = vsel %vm5521, %v5514, %v5518
    %v5523 = vand.u32 2147483647, %v5372
    %vm5524 = vcmp.eq.f32.partialorder %v5523, 8.507059e+37
    %v5525 = vand.u32 %v5372, 2147483648
    %v5526 = vor.u32 1.1754944e-38, %v5525
    %v5527 = vsel %vm5524, %v5526, %v5522
    %v5528 = vmul.f32 1.0, %v5527
    %v5529 = vrcp.pop %v5373
    %v5530 = vmul.f32 %v5373, %v5529
    %v5531 = vsub.f32 1.0, %v5530
    %v5532 = vmul.f32 %v5529, %v5531
    %v5533 = vadd.f32 %v5529, %v5532
    %vm5534 = vweird.f32 %v5373
    %vm5535 = vweird.f32 %v5529
    %vm5536 = vmor %vm5534, %vm5535
    %v5537 = vsel %vm5536, %v5529, %v5533
    %v5538 = vand.u32 2147483647, %v5373
    %vm5539 = vcmp.eq.f32.partialorder %v5538, 8.507059e+37
    %v5540 = vand.u32 %v5373, 2147483648
    %v5541 = vor.u32 1.1754944e-38, %v5540
    %v5542 = vsel %vm5539, %v5541, %v5537
    %v5543 = vmul.f32 1.0, %v5542
    %v5544 = vrcp.pop %v5374
    %v5545 = vmul.f32 %v5374, %v5544
    %v5546 = vsub.f32 1.0, %v5545
    %v5547 = vmul.f32 %v5544, %v5546
    %v5548 = vadd.f32 %v5544, %v5547
    %vm5549 = vweird.f32 %v5374
    %vm5550 = vweird.f32 %v5544
    %vm5551 = vmor %vm5549, %vm5550
    %v5552 = vsel %vm5551, %v5544, %v5548
    %v5553 = vand.u32 2147483647, %v5374
    %vm5554 = vcmp.eq.f32.partialorder %v5553, 8.507059e+37
    %v5555 = vand.u32 %v5374, 2147483648
    %v5556 = vor.u32 1.1754944e-38, %v5555
    %v5557 = vsel %vm5554, %v5556, %v5552
    %v5558 = vmul.f32 1.0, %v5557
    %v5559 = vrcp.pop %v5375
    %v5560 = vmul.f32 %v5375, %v5559
    %v5561 = vsub.f32 1.0, %v5560
    %v5562 = vmul.f32 %v5559, %v5561
    %v5563 = vadd.f32 %v5559, %v5562
    %vm5564 = vweird.f32 %v5375
    %vm5565 = vweird.f32 %v5559
    %vm5566 = vmor %vm5564, %vm5565
    %v5567 = vsel %vm5566, %v5559, %v5563
    %v5568 = vand.u32 2147483647, %v5375
    %vm5569 = vcmp.eq.f32.partialorder %v5568, 8.507059e+37
    %v5570 = vand.u32 %v5375, 2147483648
    %v5571 = vor.u32 1.1754944e-38, %v5570
    %v5572 = vsel %vm5569, %v5571, %v5567
    %v5573 = vmul.f32 1.0, %v5572
    %v5574 = vrcp.pop %v5376
    %v5575 = vmul.f32 %v5376, %v5574
    %v5576 = vsub.f32 1.0, %v5575
    %v5577 = vmul.f32 %v5574, %v5576
    %v5578 = vadd.f32 %v5574, %v5577
    %vm5579 = vweird.f32 %v5376
    %vm5580 = vweird.f32 %v5574
    %vm5581 = vmor %vm5579, %vm5580
    %v5582 = vsel %vm5581, %v5574, %v5578
    %v5583 = vand.u32 2147483647, %v5376
    %vm5584 = vcmp.eq.f32.partialorder %v5583, 8.507059e+37
    %v5585 = vand.u32 %v5376, 2147483648
    %v5586 = vor.u32 1.1754944e-38, %v5585
    %v5587 = vsel %vm5584, %v5586, %v5582
    %v5588 = vmul.f32 1.0, %v5587
    %v5589 = vrcp.pop %v5377
    %v5590 = vmul.f32 %v5377, %v5589
    %v5591 = vsub.f32 1.0, %v5590
    %v5592 = vmul.f32 %v5589, %v5591
    %v5593 = vadd.f32 %v5589, %v5592
    %vm5594 = vweird.f32 %v5377
    %vm5595 = vweird.f32 %v5589
    %vm5596 = vmor %vm5594, %vm5595
    %v5597 = vsel %vm5596, %v5589, %v5593
    %v5598 = vand.u32 2147483647, %v5377
    %vm5599 = vcmp.eq.f32.partialorder %v5598, 8.507059e+37
    %v5600 = vand.u32 %v5377, 2147483648
    %v5601 = vor.u32 1.1754944e-38, %v5600
    %v5602 = vsel %vm5599, %v5601, %v5597
    %v5603 = vmul.f32 1.0, %v5602
    %v5604 = vrcp.pop %v5378
    %v5605 = vmul.f32 %v5378, %v5604
    %v5606 = vsub.f32 1.0, %v5605
    %v5607 = vmul.f32 %v5604, %v5606
    %v5608 = vadd.f32 %v5604, %v5607
    %vm5609 = vweird.f32 %v5378
    %vm5610 = vweird.f32 %v5604
    %vm5611 = vmor %vm5609, %vm5610
    %v5612 = vsel %vm5611, %v5604, %v5608
    %v5613 = vand.u32 2147483647, %v5378
    %vm5614 = vcmp.eq.f32.partialorder %v5613, 8.507059e+37
    %v5615 = vand.u32 %v5378, 2147483648
    %v5616 = vor.u32 1.1754944e-38, %v5615
    %v5617 = vsel %vm5614, %v5616, %v5612
    %v5618 = vmul.f32 1.0, %v5617
    %5619 = vrot.lane.b32.xlu0 %v5269, 96
    %v5620 = vpop.permute.xlu0 %5619
    %5621 = vrot.lane.b32.xlu0 %v5270, 96
    %v5622 = vpop.permute.xlu0 %5621
    %5623 = vrot.lane.b32.xlu0 %v5271, 96
    %v5624 = vpop.permute.xlu0 %5623
    %5625 = vrot.lane.b32.xlu0 %v5272, 96
    %v5626 = vpop.permute.xlu0 %5625
    %5627 = vrot.lane.b32.xlu0 %v5273, 96
    %v5628 = vpop.permute.xlu0 %5627
    %5629 = vrot.lane.b32.xlu0 %v5262, 96
    %v5630 = vpop.permute.xlu0 %5629
    %5631 = vrot.lane.b32.xlu0 %v5274, 96
    %v5632 = vpop.permute.xlu0 %5631
    %5633 = vrot.lane.b32.xlu0 %v5275, 96
    %v5634 = vpop.permute.xlu0 %5633
    %5635 = vrot.lane.b32.xlu0 %v5276, 96
    %v5636 = vpop.permute.xlu0 %5635
    %5637 = vrot.lane.b32.xlu0 %v5277, 96
    %v5638 = vpop.permute.xlu0 %5637
    %5639 = vrot.lane.b32.xlu0 %v5278, 96
    %v5640 = vpop.permute.xlu0 %5639
    %5641 = vrot.lane.b32.xlu0 %v5279, 96
    %v5642 = vpop.permute.xlu0 %5641
    %5643 = vrot.lane.b32.xlu0 %v5280, 96
    %v5644 = vpop.permute.xlu0 %5643
    %5645 = vrot.lane.b32.xlu0 %v5265, 96
    %v5646 = vpop.permute.xlu0 %5645
    %5647 = vrot.lane.b32.xlu0 %v5281, 96
    %v5648 = vpop.permute.xlu0 %5647
    %5649 = vrot.lane.b32.xlu0 %v5282, 96
    %v5650 = vpop.permute.xlu0 %5649
    %v5667 = vmul.f32 %v5393, %v5620
    %v5668 = vmul.f32 %v5408, %v5622
    %v5669 = vmul.f32 %v5423, %v5624
    %v5670 = vmul.f32 %v5438, %v5626
    %v5671 = vmul.f32 %v5453, %v5628
    %v5672 = vmul.f32 %v5468, %v5630
    %v5673 = vmul.f32 %v5483, %v5632
    %v5674 = vmul.f32 %v5498, %v5634
    %v5675 = vmul.f32 %v5513, %v5636
    %v5676 = vmul.f32 %v5528, %v5638
    %v5677 = vmul.f32 %v5543, %v5640
    %v5678 = vmul.f32 %v5558, %v5642
    %v5679 = vmul.f32 %v5573, %v5644
    %v5680 = vmul.f32 %v5588, %v5646
    %v5681 = vmul.f32 %v5603, %v5648
    %v5682 = vmul.f32 %v5618, %v5650
    %5699 = vrot.lane.b32.xlu0 %v5667, 32
    %v5700 = vpop.permute.xlu0 %5699
    %5701 = vrot.lane.b32.xlu0 %v5668, 32
    %v5702 = vpop.permute.xlu0 %5701
    %5703 = vrot.lane.b32.xlu0 %v5669, 32
    %v5704 = vpop.permute.xlu0 %5703
    %5705 = vrot.lane.b32.xlu0 %v5670, 32
    %v5706 = vpop.permute.xlu0 %5705
    %5707 = vrot.lane.b32.xlu0 %v5671, 32
    %v5708 = vpop.permute.xlu0 %5707
    %5709 = vrot.lane.b32.xlu0 %v5672, 32
    %v5710 = vpop.permute.xlu0 %5709
    %5711 = vrot.lane.b32.xlu0 %v5673, 32
    %v5712 = vpop.permute.xlu0 %5711
    %5713 = vrot.lane.b32.xlu0 %v5674, 32
    %v5714 = vpop.permute.xlu0 %5713
    %5715 = vrot.lane.b32.xlu0 %v5675, 32
    %v5716 = vpop.permute.xlu0 %5715
    %5717 = vrot.lane.b32.xlu0 %v5676, 32
    %v5718 = vpop.permute.xlu0 %5717
    %5719 = vrot.lane.b32.xlu0 %v5677, 32
    %v5720 = vpop.permute.xlu0 %5719
    %5721 = vrot.lane.b32.xlu0 %v5678, 32
    %v5722 = vpop.permute.xlu0 %5721
    %5723 = vrot.lane.b32.xlu0 %v5679, 32
    %v5724 = vpop.permute.xlu0 %5723
    %5725 = vrot.lane.b32.xlu0 %v5680, 32
    %v5726 = vpop.permute.xlu0 %5725
    %5727 = vrot.lane.b32.xlu0 %v5681, 32
    %v5728 = vpop.permute.xlu0 %5727
    %5729 = vrot.lane.b32.xlu0 %v5682, 32
    %v5730 = vpop.permute.xlu0 %5729
    %v5747 = vadd.f32 %v1277, %v5700
    %v5748 = vadd.f32 %v1280, %v5702
    %v5749 = vadd.f32 %v1283, %v5704
    %v5750 = vadd.f32 %v1286, %v5706
    %v5751 = vadd.f32 %v1289, %v5708
    %v5752 = vadd.f32 %v1292, %v5710
    %v5753 = vadd.f32 %v1295, %v5712
    %v5754 = vadd.f32 %v1298, %v5714
    %v5755 = vadd.f32 %v1301, %v5716
    %v5756 = vadd.f32 %v1304, %v5718
    %v5757 = vadd.f32 %v1307, %v5720
    %v5758 = vadd.f32 %v1310, %v5722
    %v5759 = vadd.f32 %v1313, %v5724
    %v5760 = vadd.f32 %v1316, %v5726
    %v5761 = vadd.f32 %v1319, %v5728
    %v5762 = vadd.f32 %v1322, %v5730
    %v5763 = vtanh.pop %v5747
    %v5764 = vtanh.pop %v5748
    %v5765 = vtanh.pop %v5749
    %v5766 = vtanh.pop %v5750
    %v5767 = vtanh.pop %v5751
    %v5768 = vtanh.pop %v5752
    %v5769 = vtanh.pop %v5753
    %v5770 = vtanh.pop %v5754
    %v5771 = vtanh.pop %v5755
    %v5772 = vtanh.pop %v5756
    %v5773 = vtanh.pop %v5757
    %v5774 = vtanh.pop %v5758
    %v5775 = vtanh.pop %v5759
    %v5776 = vtanh.pop %v5760
    %v5777 = vtanh.pop %v5761
    %v5778 = vtanh.pop %v5762
    %v5779 = vsub.f32 1.0, %v5393
    %v5780 = vsub.f32 1.0, %v5408
    %v5781 = vsub.f32 1.0, %v5423
    %v5782 = vsub.f32 1.0, %v5438
    %v5783 = vsub.f32 1.0, %v5453
    %v5784 = vsub.f32 1.0, %v5468
    %v5785 = vsub.f32 1.0, %v5483
    %v5786 = vsub.f32 1.0, %v5498
    %v5787 = vsub.f32 1.0, %v5513
    %v5788 = vsub.f32 1.0, %v5528
    %v5789 = vsub.f32 1.0, %v5543
    %v5790 = vsub.f32 1.0, %v5558
    %v5791 = vsub.f32 1.0, %v5573
    %v5792 = vsub.f32 1.0, %v5588
    %v5793 = vsub.f32 1.0, %v5603
    %v5794 = vsub.f32 1.0, %v5618
    %5811 = vrot.lane.b32.xlu0 %v5763, 112
    %v5812 = vpop.permute.xlu0 %5811
    %5813 = vrot.lane.b32.xlu0 %v5764, 112
    %v5814 = vpop.permute.xlu0 %5813
    %5815 = vrot.lane.b32.xlu0 %v5765, 112
    %v5816 = vpop.permute.xlu0 %5815
    %5817 = vrot.lane.b32.xlu0 %v5766, 112
    %v5818 = vpop.permute.xlu0 %5817
    %5819 = vrot.lane.b32.xlu0 %v5767, 112
    %v5820 = vpop.permute.xlu0 %5819
    %5821 = vrot.lane.b32.xlu0 %v5768, 112
    %v5822 = vpop.permute.xlu0 %5821
    %5823 = vrot.lane.b32.xlu0 %v5769, 112
    %v5824 = vpop.permute.xlu0 %5823
    %5825 = vrot.lane.b32.xlu0 %v5770, 112
    %v5826 = vpop.permute.xlu0 %5825
    %5827 = vrot.lane.b32.xlu0 %v5771, 112
    %v5828 = vpop.permute.xlu0 %5827
    %5829 = vrot.lane.b32.xlu0 %v5772, 112
    %v5830 = vpop.permute.xlu0 %5829
    %5831 = vrot.lane.b32.xlu0 %v5773, 112
    %v5832 = vpop.permute.xlu0 %5831
    %5833 = vrot.lane.b32.xlu0 %v5774, 112
    %v5834 = vpop.permute.xlu0 %5833
    %5835 = vrot.lane.b32.xlu0 %v5775, 112
    %v5836 = vpop.permute.xlu0 %5835
    %5837 = vrot.lane.b32.xlu0 %v5776, 112
    %v5838 = vpop.permute.xlu0 %5837
    %5839 = vrot.lane.b32.xlu0 %v5777, 112
    %v5840 = vpop.permute.xlu0 %5839
    %5841 = vrot.lane.b32.xlu0 %v5778, 112
    %v5842 = vpop.permute.xlu0 %5841
    %v5859 = vmul.f32 %v5779, %v5812
    %v5860 = vmul.f32 %v5780, %v5814
    %v5861 = vmul.f32 %v5781, %v5816
    %v5862 = vmul.f32 %v5782, %v5818
    %v5863 = vmul.f32 %v5783, %v5820
    %v5864 = vmul.f32 %v5784, %v5822
    %v5865 = vmul.f32 %v5785, %v5824
    %v5866 = vmul.f32 %v5786, %v5826
    %v5867 = vmul.f32 %v5787, %v5828
    %v5868 = vmul.f32 %v5788, %v5830
    %v5869 = vmul.f32 %v5789, %v5832
    %v5870 = vmul.f32 %v5790, %v5834
    %v5871 = vmul.f32 %v5791, %v5836
    %v5872 = vmul.f32 %v5792, %v5838
    %v5873 = vmul.f32 %v5793, %v5840
    %v5874 = vmul.f32 %v5794, %v5842
    %v5875 = vrot.slane %v5236, 3
    %v5876 = vrot.slane %v5236, 4
    %v5877 = vrot.slane %v5236, 5
    %v5878 = vrot.slane %v5236, 6
    %v5879 = vrot.slane %v5236, 7
    %v5880 = vrot.slane %v5236, 1
    %v5881 = vrot.slane %v5236, 2
    %v5882 = vrot.slane %v5237, 3
    %v5883 = vrot.slane %v5237, 4
    %v5884 = vrot.slane %v5237, 5
    %v5885 = vrot.slane %v5237, 6
    %v5886 = vrot.slane %v5237, 7
    %v5887 = vrot.slane %v5237, 1
    %v5888 = vrot.slane %v5237, 2
    %5889 = vrot.lane.b32.xlu0 %v5875, 16
    %v5890 = vpop.permute.xlu0 %5889
    %5891 = vrot.lane.b32.xlu0 %v5876, 16
    %v5892 = vpop.permute.xlu0 %5891
    %5893 = vrot.lane.b32.xlu0 %v5877, 16
    %v5894 = vpop.permute.xlu0 %5893
    %5895 = vrot.lane.b32.xlu0 %v5878, 16
    %v5896 = vpop.permute.xlu0 %5895
    %5897 = vrot.lane.b32.xlu0 %v5879, 16
    %v5898 = vpop.permute.xlu0 %5897
    %5899 = vrot.lane.b32.xlu0 %v5236, 16
    %v5900 = vpop.permute.xlu0 %5899
    %5901 = vrot.lane.b32.xlu0 %v5880, 16
    %v5902 = vpop.permute.xlu0 %5901
    %5903 = vrot.lane.b32.xlu0 %v5881, 16
    %v5904 = vpop.permute.xlu0 %5903
    %5905 = vrot.lane.b32.xlu0 %v5882, 16
    %v5906 = vpop.permute.xlu0 %5905
    %5907 = vrot.lane.b32.xlu0 %v5883, 16
    %v5908 = vpop.permute.xlu0 %5907
    %5909 = vrot.lane.b32.xlu0 %v5884, 16
    %v5910 = vpop.permute.xlu0 %5909
    %5911 = vrot.lane.b32.xlu0 %v5885, 16
    %v5912 = vpop.permute.xlu0 %5911
    %5913 = vrot.lane.b32.xlu0 %v5886, 16
    %v5914 = vpop.permute.xlu0 %5913
    %5915 = vrot.lane.b32.xlu0 %v5237, 16
    %v5916 = vpop.permute.xlu0 %5915
    %5917 = vrot.lane.b32.xlu0 %v5887, 16
    %v5918 = vpop.permute.xlu0 %5917
    %5919 = vrot.lane.b32.xlu0 %v5888, 16
    %v5920 = vpop.permute.xlu0 %5919
    %v5937 = vmul.f32 %v5393, %v5890
    %v5938 = vmul.f32 %v5408, %v5892
    %v5939 = vmul.f32 %v5423, %v5894
    %v5940 = vmul.f32 %v5438, %v5896
    %v5941 = vmul.f32 %v5453, %v5898
    %v5942 = vmul.f32 %v5468, %v5900
    %v5943 = vmul.f32 %v5483, %v5902
    %v5944 = vmul.f32 %v5498, %v5904
    %v5945 = vmul.f32 %v5513, %v5906
    %v5946 = vmul.f32 %v5528, %v5908
    %v5947 = vmul.f32 %v5543, %v5910
    %v5948 = vmul.f32 %v5558, %v5912
    %v5949 = vmul.f32 %v5573, %v5914
    %v5950 = vmul.f32 %v5588, %v5916
    %v5951 = vmul.f32 %v5603, %v5918
    %v5952 = vmul.f32 %v5618, %v5920
    %v5953 = vadd.f32 %v5859, %v5937
    %v5954 = vadd.f32 %v5860, %v5938
    %v5955 = vadd.f32 %v5861, %v5939
    %v5956 = vadd.f32 %v5862, %v5940
    %v5957 = vadd.f32 %v5863, %v5941
    %v5958 = vadd.f32 %v5864, %v5942
    %v5959 = vadd.f32 %v5865, %v5943
    %v5960 = vadd.f32 %v5866, %v5944
    %v5961 = vadd.f32 %v5867, %v5945
    %v5962 = vadd.f32 %v5868, %v5946
    %v5963 = vadd.f32 %v5869, %v5947
    %v5964 = vadd.f32 %v5870, %v5948
    %v5965 = vadd.f32 %v5871, %v5949
    %v5966 = vadd.f32 %v5872, %v5950
    %v5967 = vadd.f32 %v5873, %v5951
    %v5968 = vadd.f32 %v5874, %v5952
    %vm5969 = vcmp.gt.s32.totalorder %v197, 5
    %vm5970 = vcmp.gt.s32.totalorder %v198, 5
    %v5971 = vsel %vm5969, 1, 0
    %v5972 = vsel %vm5970, 1, 0
    %5973 = vset.pattern.permute.xlu0 0
    %5974 = vperm.xlu0 %5973, %v5971
    %v5975 = vpop.permute.xlu0 %5974
    %5976 = vset.pattern.permute.xlu0 0
    %5977 = vperm.xlu0 %5976, %v5972
    %v5978 = vpop.permute.xlu0 %5977
    %vm5979 = vcmp.eq.s32.totalorder %v5975, 1
    %vm5980 = vcmp.eq.s32.totalorder %v5978, 1
    %v5997 = vrot.slane %v5953, 5
    %v5998 = vrot.slane %v5954, 4
    %v5999 = vsel %vm437, %v5998, %v5997
    %v6000 = vrot.slane %v5955, 3
    %v6001 = vsel %vm439, %v6000, %v5999
    %v6002 = vrot.slane %v5956, 2
    %v6003 = vsel %vm441, %v6002, %v6001
    %v6004 = vrot.slane %v5957, 1
    %v6005 = vsel %vm443, %v6004, %v6003
    %v6006 = vsel %vm445, %v5958, %v6005
    %v6007 = vrot.slane %v5959, 7
    %v6008 = vsel %vm447, %v6007, %v6006
    %v6009 = vrot.slane %v5960, 6
    %v6010 = vsel %vm449, %v6009, %v6008
    %v6011 = vrot.slane %v5961, 5
    %v6012 = vrot.slane %v5962, 4
    %v6013 = vsel %vm437, %v6012, %v6011
    %v6014 = vrot.slane %v5963, 3
    %v6015 = vsel %vm439, %v6014, %v6013
    %v6016 = vrot.slane %v5964, 2
    %v6017 = vsel %vm441, %v6016, %v6015
    %v6018 = vrot.slane %v5965, 1
    %v6019 = vsel %vm443, %v6018, %v6017
    %v6020 = vsel %vm445, %v5966, %v6019
    %v6021 = vrot.slane %v5967, 7
    %v6022 = vsel %vm447, %v6021, %v6020
    %v6023 = vrot.slane %v5968, 6
    %v6024 = vsel %vm449, %v6023, %v6022
    %6025 = vrot.lane.b32.xlu0 %v6010, 112
    %v6026 = vpop.permute.xlu0 %6025
    %6027 = vrot.lane.b32.xlu0 %v6024, 112
    %v6028 = vpop.permute.xlu0 %6027
    %v6031 = vsel %vm5979, %v6026, %v5236
    %v6032 = vsel %vm5980, %v6028, %v5237
    %v6034 = vsel %vm1327, %v6031, 0
    %v6037 = vsel %vm1327, %v6032, 0
    %6039 = vmatpush.msra.mxu0 0.0
    %6040 = vmatpush.msra.mxu0 0.0
    %6041 = vmatpush.msra.mxu0 0.0
    %6042 = vmatpush.msra.mxu0 0.0
    %6043 = vmatpush.msra.mxu0 0.0
    %6044 = vmatpush.msra.mxu0 0.0
    %6045 = vmatpush.msra.mxu0 0.0
    %6046 = vmatpush.msra.mxu0 0.0
    %6047 = vmatpush.msra.mxu0 0.0
    %6048 = vmatpush.msra.mxu0 0.0
    %6049 = vmatpush.msra.mxu0 0.0
    %6050 = vmatpush.msra.mxu0 0.0
    %6051 = vmatpush.msra.mxu0 0.0
    %6052 = vmatpush.msra.mxu0 0.0
    %6053 = vmatpush.msra.mxu0 %v1325
    %6054 = vmatpush.msra.mxu0 %v1324
    %6055 = vmatmul.f32.gmra.mxu0 %v6034
    %v6056 = vpop.f32.mrf.mxu0
    %v6057 = vadd.f32 %v1326, %v6056
    %6058 = vmatmul.f32.gmra.mxu0 %v6037
    %v6059 = vpop.f32.mrf.mxu0
    %v6060 = vadd.f32 %v1326, %v6059
    %6061 = vdwg.mxu0
    %v6064 = vrot.slane %v6057, 2
    %v6065 = vrot.slane %v6057, 3
    %v6066 = vrot.slane %v6057, 4
    %v6067 = vrot.slane %v6057, 5
    %v6068 = vrot.slane %v6057, 6
    %v6069 = vrot.slane %v6057, 7
    %v6070 = vrot.slane %v6057, 1
    %v6071 = vrot.slane %v6060, 2
    %v6072 = vrot.slane %v6060, 3
    %v6073 = vrot.slane %v6060, 4
    %v6074 = vrot.slane %v6060, 5
    %v6075 = vrot.slane %v6060, 6
    %v6076 = vrot.slane %v6060, 7
    %v6077 = vrot.slane %v6060, 1
    %v6094 = vadd.f32 %v1277, %v6064
    %v6095 = vadd.f32 %v1280, %v6065
    %v6096 = vadd.f32 %v1283, %v6066
    %v6097 = vadd.f32 %v1286, %v6067
    %v6098 = vadd.f32 %v1289, %v6068
    %v6099 = vadd.f32 %v1292, %v6069
    %v6100 = vadd.f32 %v1295, %v6057
    %v6101 = vadd.f32 %v1298, %v6070
    %v6102 = vadd.f32 %v1301, %v6071
    %v6103 = vadd.f32 %v1304, %v6072
    %v6104 = vadd.f32 %v1307, %v6073
    %v6105 = vadd.f32 %v1310, %v6074
    %v6106 = vadd.f32 %v1313, %v6075
    %v6107 = vadd.f32 %v1316, %v6076
    %v6108 = vadd.f32 %v1319, %v6060
    %v6109 = vadd.f32 %v1322, %v6077
    %v6110 = vxor.u32 %v6094, 2147483648
    %v6111 = vxor.u32 %v6095, 2147483648
    %v6112 = vxor.u32 %v6096, 2147483648
    %v6113 = vxor.u32 %v6097, 2147483648
    %v6114 = vxor.u32 %v6098, 2147483648
    %v6115 = vxor.u32 %v6099, 2147483648
    %v6116 = vxor.u32 %v6100, 2147483648
    %v6117 = vxor.u32 %v6101, 2147483648
    %v6118 = vxor.u32 %v6102, 2147483648
    %v6119 = vxor.u32 %v6103, 2147483648
    %v6120 = vxor.u32 %v6104, 2147483648
    %v6121 = vxor.u32 %v6105, 2147483648
    %v6122 = vxor.u32 %v6106, 2147483648
    %v6123 = vxor.u32 %v6107, 2147483648
    %v6124 = vxor.u32 %v6108, 2147483648
    %v6125 = vxor.u32 %v6109, 2147483648
    %v6126 = vmul.f32 %v6110, 1.442695
    %v6127 = vpow.pop %v6126
    %v6128 = vmul.f32 %v6111, 1.442695
    %v6129 = vpow.pop %v6128
    %v6130 = vmul.f32 %v6112, 1.442695
    %v6131 = vpow.pop %v6130
    %v6132 = vmul.f32 %v6113, 1.442695
    %v6133 = vpow.pop %v6132
    %v6134 = vmul.f32 %v6114, 1.442695
    %v6135 = vpow.pop %v6134
    %v6136 = vmul.f32 %v6115, 1.442695
    %v6137 = vpow.pop %v6136
    %v6138 = vmul.f32 %v6116, 1.442695
    %v6139 = vpow.pop %v6138
    %v6140 = vmul.f32 %v6117, 1.442695
    %v6141 = vpow.pop %v6140
    %v6142 = vmul.f32 %v6118, 1.442695
    %v6143 = vpow.pop %v6142
    %v6144 = vmul.f32 %v6119, 1.442695
    %v6145 = vpow.pop %v6144
    %v6146 = vmul.f32 %v6120, 1.442695
    %v6147 = vpow.pop %v6146
    %v6148 = vmul.f32 %v6121, 1.442695
    %v6149 = vpow.pop %v6148
    %v6150 = vmul.f32 %v6122, 1.442695
    %v6151 = vpow.pop %v6150
    %v6152 = vmul.f32 %v6123, 1.442695
    %v6153 = vpow.pop %v6152
    %v6154 = vmul.f32 %v6124, 1.442695
    %v6155 = vpow.pop %v6154
    %v6156 = vmul.f32 %v6125, 1.442695
    %v6157 = vpow.pop %v6156
    %v6158 = vadd.f32 %v6127, 1.0
    %v6159 = vadd.f32 %v6129, 1.0
    %v6160 = vadd.f32 %v6131, 1.0
    %v6161 = vadd.f32 %v6133, 1.0
    %v6162 = vadd.f32 %v6135, 1.0
    %v6163 = vadd.f32 %v6137, 1.0
    %v6164 = vadd.f32 %v6139, 1.0
    %v6165 = vadd.f32 %v6141, 1.0
    %v6166 = vadd.f32 %v6143, 1.0
    %v6167 = vadd.f32 %v6145, 1.0
    %v6168 = vadd.f32 %v6147, 1.0
    %v6169 = vadd.f32 %v6149, 1.0
    %v6170 = vadd.f32 %v6151, 1.0
    %v6171 = vadd.f32 %v6153, 1.0
    %v6172 = vadd.f32 %v6155, 1.0
    %v6173 = vadd.f32 %v6157, 1.0
    %v6174 = vrcp.pop %v6158
    %v6175 = vmul.f32 %v6158, %v6174
    %v6176 = vsub.f32 1.0, %v6175
    %v6177 = vmul.f32 %v6174, %v6176
    %v6178 = vadd.f32 %v6174, %v6177
    %vm6179 = vweird.f32 %v6158
    %vm6180 = vweird.f32 %v6174
    %vm6181 = vmor %vm6179, %vm6180
    %v6182 = vsel %vm6181, %v6174, %v6178
    %v6183 = vand.u32 2147483647, %v6158
    %vm6184 = vcmp.eq.f32.partialorder %v6183, 8.507059e+37
    %v6185 = vand.u32 %v6158, 2147483648
    %v6186 = vor.u32 1.1754944e-38, %v6185
    %v6187 = vsel %vm6184, %v6186, %v6182
    %v6188 = vmul.f32 1.0, %v6187
    %v6189 = vrcp.pop %v6159
    %v6190 = vmul.f32 %v6159, %v6189
    %v6191 = vsub.f32 1.0, %v6190
    %v6192 = vmul.f32 %v6189, %v6191
    %v6193 = vadd.f32 %v6189, %v6192
    %vm6194 = vweird.f32 %v6159
    %vm6195 = vweird.f32 %v6189
    %vm6196 = vmor %vm6194, %vm6195
    %v6197 = vsel %vm6196, %v6189, %v6193
    %v6198 = vand.u32 2147483647, %v6159
    %vm6199 = vcmp.eq.f32.partialorder %v6198, 8.507059e+37
    %v6200 = vand.u32 %v6159, 2147483648
    %v6201 = vor.u32 1.1754944e-38, %v6200
    %v6202 = vsel %vm6199, %v6201, %v6197
    %v6203 = vmul.f32 1.0, %v6202
    %v6204 = vrcp.pop %v6160
    %v6205 = vmul.f32 %v6160, %v6204
    %v6206 = vsub.f32 1.0, %v6205
    %v6207 = vmul.f32 %v6204, %v6206
    %v6208 = vadd.f32 %v6204, %v6207
    %vm6209 = vweird.f32 %v6160
    %vm6210 = vweird.f32 %v6204
    %vm6211 = vmor %vm6209, %vm6210
    %v6212 = vsel %vm6211, %v6204, %v6208
    %v6213 = vand.u32 2147483647, %v6160
    %vm6214 = vcmp.eq.f32.partialorder %v6213, 8.507059e+37
    %v6215 = vand.u32 %v6160, 2147483648
    %v6216 = vor.u32 1.1754944e-38, %v6215
    %v6217 = vsel %vm6214, %v6216, %v6212
    %v6218 = vmul.f32 1.0, %v6217
    %v6219 = vrcp.pop %v6161
    %v6220 = vmul.f32 %v6161, %v6219
    %v6221 = vsub.f32 1.0, %v6220
    %v6222 = vmul.f32 %v6219, %v6221
    %v6223 = vadd.f32 %v6219, %v6222
    %vm6224 = vweird.f32 %v6161
    %vm6225 = vweird.f32 %v6219
    %vm6226 = vmor %vm6224, %vm6225
    %v6227 = vsel %vm6226, %v6219, %v6223
    %v6228 = vand.u32 2147483647, %v6161
    %vm6229 = vcmp.eq.f32.partialorder %v6228, 8.507059e+37
    %v6230 = vand.u32 %v6161, 2147483648
    %v6231 = vor.u32 1.1754944e-38, %v6230
    %v6232 = vsel %vm6229, %v6231, %v6227
    %v6233 = vmul.f32 1.0, %v6232
    %v6234 = vrcp.pop %v6162
    %v6235 = vmul.f32 %v6162, %v6234
    %v6236 = vsub.f32 1.0, %v6235
    %v6237 = vmul.f32 %v6234, %v6236
    %v6238 = vadd.f32 %v6234, %v6237
    %vm6239 = vweird.f32 %v6162
    %vm6240 = vweird.f32 %v6234
    %vm6241 = vmor %vm6239, %vm6240
    %v6242 = vsel %vm6241, %v6234, %v6238
    %v6243 = vand.u32 2147483647, %v6162
    %vm6244 = vcmp.eq.f32.partialorder %v6243, 8.507059e+37
    %v6245 = vand.u32 %v6162, 2147483648
    %v6246 = vor.u32 1.1754944e-38, %v6245
    %v6247 = vsel %vm6244, %v6246, %v6242
    %v6248 = vmul.f32 1.0, %v6247
    %v6249 = vrcp.pop %v6163
    %v6250 = vmul.f32 %v6163, %v6249
    %v6251 = vsub.f32 1.0, %v6250
    %v6252 = vmul.f32 %v6249, %v6251
    %v6253 = vadd.f32 %v6249, %v6252
    %vm6254 = vweird.f32 %v6163
    %vm6255 = vweird.f32 %v6249
    %vm6256 = vmor %vm6254, %vm6255
    %v6257 = vsel %vm6256, %v6249, %v6253
    %v6258 = vand.u32 2147483647, %v6163
    %vm6259 = vcmp.eq.f32.partialorder %v6258, 8.507059e+37
    %v6260 = vand.u32 %v6163, 2147483648
    %v6261 = vor.u32 1.1754944e-38, %v6260
    %v6262 = vsel %vm6259, %v6261, %v6257
    %v6263 = vmul.f32 1.0, %v6262
    %v6264 = vrcp.pop %v6164
    %v6265 = vmul.f32 %v6164, %v6264
    %v6266 = vsub.f32 1.0, %v6265
    %v6267 = vmul.f32 %v6264, %v6266
    %v6268 = vadd.f32 %v6264, %v6267
    %vm6269 = vweird.f32 %v6164
    %vm6270 = vweird.f32 %v6264
    %vm6271 = vmor %vm6269, %vm6270
    %v6272 = vsel %vm6271, %v6264, %v6268
    %v6273 = vand.u32 2147483647, %v6164
    %vm6274 = vcmp.eq.f32.partialorder %v6273, 8.507059e+37
    %v6275 = vand.u32 %v6164, 2147483648
    %v6276 = vor.u32 1.1754944e-38, %v6275
    %v6277 = vsel %vm6274, %v6276, %v6272
    %v6278 = vmul.f32 1.0, %v6277
    %v6279 = vrcp.pop %v6165
    %v6280 = vmul.f32 %v6165, %v6279
    %v6281 = vsub.f32 1.0, %v6280
    %v6282 = vmul.f32 %v6279, %v6281
    %v6283 = vadd.f32 %v6279, %v6282
    %vm6284 = vweird.f32 %v6165
    %vm6285 = vweird.f32 %v6279
    %vm6286 = vmor %vm6284, %vm6285
    %v6287 = vsel %vm6286, %v6279, %v6283
    %v6288 = vand.u32 2147483647, %v6165
    %vm6289 = vcmp.eq.f32.partialorder %v6288, 8.507059e+37
    %v6290 = vand.u32 %v6165, 2147483648
    %v6291 = vor.u32 1.1754944e-38, %v6290
    %v6292 = vsel %vm6289, %v6291, %v6287
    %v6293 = vmul.f32 1.0, %v6292
    %v6294 = vrcp.pop %v6166
    %v6295 = vmul.f32 %v6166, %v6294
    %v6296 = vsub.f32 1.0, %v6295
    %v6297 = vmul.f32 %v6294, %v6296
    %v6298 = vadd.f32 %v6294, %v6297
    %vm6299 = vweird.f32 %v6166
    %vm6300 = vweird.f32 %v6294
    %vm6301 = vmor %vm6299, %vm6300
    %v6302 = vsel %vm6301, %v6294, %v6298
    %v6303 = vand.u32 2147483647, %v6166
    %vm6304 = vcmp.eq.f32.partialorder %v6303, 8.507059e+37
    %v6305 = vand.u32 %v6166, 2147483648
    %v6306 = vor.u32 1.1754944e-38, %v6305
    %v6307 = vsel %vm6304, %v6306, %v6302
    %v6308 = vmul.f32 1.0, %v6307
    %v6309 = vrcp.pop %v6167
    %v6310 = vmul.f32 %v6167, %v6309
    %v6311 = vsub.f32 1.0, %v6310
    %v6312 = vmul.f32 %v6309, %v6311
    %v6313 = vadd.f32 %v6309, %v6312
    %vm6314 = vweird.f32 %v6167
    %vm6315 = vweird.f32 %v6309
    %vm6316 = vmor %vm6314, %vm6315
    %v6317 = vsel %vm6316, %v6309, %v6313
    %v6318 = vand.u32 2147483647, %v6167
    %vm6319 = vcmp.eq.f32.partialorder %v6318, 8.507059e+37
    %v6320 = vand.u32 %v6167, 2147483648
    %v6321 = vor.u32 1.1754944e-38, %v6320
    %v6322 = vsel %vm6319, %v6321, %v6317
    %v6323 = vmul.f32 1.0, %v6322
    %v6324 = vrcp.pop %v6168
    %v6325 = vmul.f32 %v6168, %v6324
    %v6326 = vsub.f32 1.0, %v6325
    %v6327 = vmul.f32 %v6324, %v6326
    %v6328 = vadd.f32 %v6324, %v6327
    %vm6329 = vweird.f32 %v6168
    %vm6330 = vweird.f32 %v6324
    %vm6331 = vmor %vm6329, %vm6330
    %v6332 = vsel %vm6331, %v6324, %v6328
    %v6333 = vand.u32 2147483647, %v6168
    %vm6334 = vcmp.eq.f32.partialorder %v6333, 8.507059e+37
    %v6335 = vand.u32 %v6168, 2147483648
    %v6336 = vor.u32 1.1754944e-38, %v6335
    %v6337 = vsel %vm6334, %v6336, %v6332
    %v6338 = vmul.f32 1.0, %v6337
    %v6339 = vrcp.pop %v6169
    %v6340 = vmul.f32 %v6169, %v6339
    %v6341 = vsub.f32 1.0, %v6340
    %v6342 = vmul.f32 %v6339, %v6341
    %v6343 = vadd.f32 %v6339, %v6342
    %vm6344 = vweird.f32 %v6169
    %vm6345 = vweird.f32 %v6339
    %vm6346 = vmor %vm6344, %vm6345
    %v6347 = vsel %vm6346, %v6339, %v6343
    %v6348 = vand.u32 2147483647, %v6169
    %vm6349 = vcmp.eq.f32.partialorder %v6348, 8.507059e+37
    %v6350 = vand.u32 %v6169, 2147483648
    %v6351 = vor.u32 1.1754944e-38, %v6350
    %v6352 = vsel %vm6349, %v6351, %v6347
    %v6353 = vmul.f32 1.0, %v6352
    %v6354 = vrcp.pop %v6170
    %v6355 = vmul.f32 %v6170, %v6354
    %v6356 = vsub.f32 1.0, %v6355
    %v6357 = vmul.f32 %v6354, %v6356
    %v6358 = vadd.f32 %v6354, %v6357
    %vm6359 = vweird.f32 %v6170
    %vm6360 = vweird.f32 %v6354
    %vm6361 = vmor %vm6359, %vm6360
    %v6362 = vsel %vm6361, %v6354, %v6358
    %v6363 = vand.u32 2147483647, %v6170
    %vm6364 = vcmp.eq.f32.partialorder %v6363, 8.507059e+37
    %v6365 = vand.u32 %v6170, 2147483648
    %v6366 = vor.u32 1.1754944e-38, %v6365
    %v6367 = vsel %vm6364, %v6366, %v6362
    %v6368 = vmul.f32 1.0, %v6367
    %v6369 = vrcp.pop %v6171
    %v6370 = vmul.f32 %v6171, %v6369
    %v6371 = vsub.f32 1.0, %v6370
    %v6372 = vmul.f32 %v6369, %v6371
    %v6373 = vadd.f32 %v6369, %v6372
    %vm6374 = vweird.f32 %v6171
    %vm6375 = vweird.f32 %v6369
    %vm6376 = vmor %vm6374, %vm6375
    %v6377 = vsel %vm6376, %v6369, %v6373
    %v6378 = vand.u32 2147483647, %v6171
    %vm6379 = vcmp.eq.f32.partialorder %v6378, 8.507059e+37
    %v6380 = vand.u32 %v6171, 2147483648
    %v6381 = vor.u32 1.1754944e-38, %v6380
    %v6382 = vsel %vm6379, %v6381, %v6377
    %v6383 = vmul.f32 1.0, %v6382
    %v6384 = vrcp.pop %v6172
    %v6385 = vmul.f32 %v6172, %v6384
    %v6386 = vsub.f32 1.0, %v6385
    %v6387 = vmul.f32 %v6384, %v6386
    %v6388 = vadd.f32 %v6384, %v6387
    %vm6389 = vweird.f32 %v6172
    %vm6390 = vweird.f32 %v6384
    %vm6391 = vmor %vm6389, %vm6390
    %v6392 = vsel %vm6391, %v6384, %v6388
    %v6393 = vand.u32 2147483647, %v6172
    %vm6394 = vcmp.eq.f32.partialorder %v6393, 8.507059e+37
    %v6395 = vand.u32 %v6172, 2147483648
    %v6396 = vor.u32 1.1754944e-38, %v6395
    %v6397 = vsel %vm6394, %v6396, %v6392
    %v6398 = vmul.f32 1.0, %v6397
    %v6399 = vrcp.pop %v6173
    %v6400 = vmul.f32 %v6173, %v6399
    %v6401 = vsub.f32 1.0, %v6400
    %v6402 = vmul.f32 %v6399, %v6401
    %v6403 = vadd.f32 %v6399, %v6402
    %vm6404 = vweird.f32 %v6173
    %vm6405 = vweird.f32 %v6399
    %vm6406 = vmor %vm6404, %vm6405
    %v6407 = vsel %vm6406, %v6399, %v6403
    %v6408 = vand.u32 2147483647, %v6173
    %vm6409 = vcmp.eq.f32.partialorder %v6408, 8.507059e+37
    %v6410 = vand.u32 %v6173, 2147483648
    %v6411 = vor.u32 1.1754944e-38, %v6410
    %v6412 = vsel %vm6409, %v6411, %v6407
    %v6413 = vmul.f32 1.0, %v6412
    %6414 = vrot.lane.b32.xlu0 %v6064, 96
    %v6415 = vpop.permute.xlu0 %6414
    %6416 = vrot.lane.b32.xlu0 %v6065, 96
    %v6417 = vpop.permute.xlu0 %6416
    %6418 = vrot.lane.b32.xlu0 %v6066, 96
    %v6419 = vpop.permute.xlu0 %6418
    %6420 = vrot.lane.b32.xlu0 %v6067, 96
    %v6421 = vpop.permute.xlu0 %6420
    %6422 = vrot.lane.b32.xlu0 %v6068, 96
    %v6423 = vpop.permute.xlu0 %6422
    %6424 = vrot.lane.b32.xlu0 %v6069, 96
    %v6425 = vpop.permute.xlu0 %6424
    %6426 = vrot.lane.b32.xlu0 %v6057, 96
    %v6427 = vpop.permute.xlu0 %6426
    %6428 = vrot.lane.b32.xlu0 %v6070, 96
    %v6429 = vpop.permute.xlu0 %6428
    %6430 = vrot.lane.b32.xlu0 %v6071, 96
    %v6431 = vpop.permute.xlu0 %6430
    %6432 = vrot.lane.b32.xlu0 %v6072, 96
    %v6433 = vpop.permute.xlu0 %6432
    %6434 = vrot.lane.b32.xlu0 %v6073, 96
    %v6435 = vpop.permute.xlu0 %6434
    %6436 = vrot.lane.b32.xlu0 %v6074, 96
    %v6437 = vpop.permute.xlu0 %6436
    %6438 = vrot.lane.b32.xlu0 %v6075, 96
    %v6439 = vpop.permute.xlu0 %6438
    %6440 = vrot.lane.b32.xlu0 %v6076, 96
    %v6441 = vpop.permute.xlu0 %6440
    %6442 = vrot.lane.b32.xlu0 %v6060, 96
    %v6443 = vpop.permute.xlu0 %6442
    %6444 = vrot.lane.b32.xlu0 %v6077, 96
    %v6445 = vpop.permute.xlu0 %6444
    %v6462 = vmul.f32 %v6188, %v6415
    %v6463 = vmul.f32 %v6203, %v6417
    %v6464 = vmul.f32 %v6218, %v6419
    %v6465 = vmul.f32 %v6233, %v6421
    %v6466 = vmul.f32 %v6248, %v6423
    %v6467 = vmul.f32 %v6263, %v6425
    %v6468 = vmul.f32 %v6278, %v6427
    %v6469 = vmul.f32 %v6293, %v6429
    %v6470 = vmul.f32 %v6308, %v6431
    %v6471 = vmul.f32 %v6323, %v6433
    %v6472 = vmul.f32 %v6338, %v6435
    %v6473 = vmul.f32 %v6353, %v6437
    %v6474 = vmul.f32 %v6368, %v6439
    %v6475 = vmul.f32 %v6383, %v6441
    %v6476 = vmul.f32 %v6398, %v6443
    %v6477 = vmul.f32 %v6413, %v6445
    %6494 = vrot.lane.b32.xlu0 %v6462, 32
    %v6495 = vpop.permute.xlu0 %6494
    %6496 = vrot.lane.b32.xlu0 %v6463, 32
    %v6497 = vpop.permute.xlu0 %6496
    %6498 = vrot.lane.b32.xlu0 %v6464, 32
    %v6499 = vpop.permute.xlu0 %6498
    %6500 = vrot.lane.b32.xlu0 %v6465, 32
    %v6501 = vpop.permute.xlu0 %6500
    %6502 = vrot.lane.b32.xlu0 %v6466, 32
    %v6503 = vpop.permute.xlu0 %6502
    %6504 = vrot.lane.b32.xlu0 %v6467, 32
    %v6505 = vpop.permute.xlu0 %6504
    %6506 = vrot.lane.b32.xlu0 %v6468, 32
    %v6507 = vpop.permute.xlu0 %6506
    %6508 = vrot.lane.b32.xlu0 %v6469, 32
    %v6509 = vpop.permute.xlu0 %6508
    %6510 = vrot.lane.b32.xlu0 %v6470, 32
    %v6511 = vpop.permute.xlu0 %6510
    %6512 = vrot.lane.b32.xlu0 %v6471, 32
    %v6513 = vpop.permute.xlu0 %6512
    %6514 = vrot.lane.b32.xlu0 %v6472, 32
    %v6515 = vpop.permute.xlu0 %6514
    %6516 = vrot.lane.b32.xlu0 %v6473, 32
    %v6517 = vpop.permute.xlu0 %6516
    %6518 = vrot.lane.b32.xlu0 %v6474, 32
    %v6519 = vpop.permute.xlu0 %6518
    %6520 = vrot.lane.b32.xlu0 %v6475, 32
    %v6521 = vpop.permute.xlu0 %6520
    %6522 = vrot.lane.b32.xlu0 %v6476, 32
    %v6523 = vpop.permute.xlu0 %6522
    %6524 = vrot.lane.b32.xlu0 %v6477, 32
    %v6525 = vpop.permute.xlu0 %6524
    %v6542 = vadd.f32 %v1277, %v6495
    %v6543 = vadd.f32 %v1280, %v6497
    %v6544 = vadd.f32 %v1283, %v6499
    %v6545 = vadd.f32 %v1286, %v6501
    %v6546 = vadd.f32 %v1289, %v6503
    %v6547 = vadd.f32 %v1292, %v6505
    %v6548 = vadd.f32 %v1295, %v6507
    %v6549 = vadd.f32 %v1298, %v6509
    %v6550 = vadd.f32 %v1301, %v6511
    %v6551 = vadd.f32 %v1304, %v6513
    %v6552 = vadd.f32 %v1307, %v6515
    %v6553 = vadd.f32 %v1310, %v6517
    %v6554 = vadd.f32 %v1313, %v6519
    %v6555 = vadd.f32 %v1316, %v6521
    %v6556 = vadd.f32 %v1319, %v6523
    %v6557 = vadd.f32 %v1322, %v6525
    %v6558 = vtanh.pop %v6542
    %v6559 = vtanh.pop %v6543
    %v6560 = vtanh.pop %v6544
    %v6561 = vtanh.pop %v6545
    %v6562 = vtanh.pop %v6546
    %v6563 = vtanh.pop %v6547
    %v6564 = vtanh.pop %v6548
    %v6565 = vtanh.pop %v6549
    %v6566 = vtanh.pop %v6550
    %v6567 = vtanh.pop %v6551
    %v6568 = vtanh.pop %v6552
    %v6569 = vtanh.pop %v6553
    %v6570 = vtanh.pop %v6554
    %v6571 = vtanh.pop %v6555
    %v6572 = vtanh.pop %v6556
    %v6573 = vtanh.pop %v6557
    %v6574 = vsub.f32 1.0, %v6188
    %v6575 = vsub.f32 1.0, %v6203
    %v6576 = vsub.f32 1.0, %v6218
    %v6577 = vsub.f32 1.0, %v6233
    %v6578 = vsub.f32 1.0, %v6248
    %v6579 = vsub.f32 1.0, %v6263
    %v6580 = vsub.f32 1.0, %v6278
    %v6581 = vsub.f32 1.0, %v6293
    %v6582 = vsub.f32 1.0, %v6308
    %v6583 = vsub.f32 1.0, %v6323
    %v6584 = vsub.f32 1.0, %v6338
    %v6585 = vsub.f32 1.0, %v6353
    %v6586 = vsub.f32 1.0, %v6368
    %v6587 = vsub.f32 1.0, %v6383
    %v6588 = vsub.f32 1.0, %v6398
    %v6589 = vsub.f32 1.0, %v6413
    %6606 = vrot.lane.b32.xlu0 %v6558, 112
    %v6607 = vpop.permute.xlu0 %6606
    %6608 = vrot.lane.b32.xlu0 %v6559, 112
    %v6609 = vpop.permute.xlu0 %6608
    %6610 = vrot.lane.b32.xlu0 %v6560, 112
    %v6611 = vpop.permute.xlu0 %6610
    %6612 = vrot.lane.b32.xlu0 %v6561, 112
    %v6613 = vpop.permute.xlu0 %6612
    %6614 = vrot.lane.b32.xlu0 %v6562, 112
    %v6615 = vpop.permute.xlu0 %6614
    %6616 = vrot.lane.b32.xlu0 %v6563, 112
    %v6617 = vpop.permute.xlu0 %6616
    %6618 = vrot.lane.b32.xlu0 %v6564, 112
    %v6619 = vpop.permute.xlu0 %6618
    %6620 = vrot.lane.b32.xlu0 %v6565, 112
    %v6621 = vpop.permute.xlu0 %6620
    %6622 = vrot.lane.b32.xlu0 %v6566, 112
    %v6623 = vpop.permute.xlu0 %6622
    %6624 = vrot.lane.b32.xlu0 %v6567, 112
    %v6625 = vpop.permute.xlu0 %6624
    %6626 = vrot.lane.b32.xlu0 %v6568, 112
    %v6627 = vpop.permute.xlu0 %6626
    %6628 = vrot.lane.b32.xlu0 %v6569, 112
    %v6629 = vpop.permute.xlu0 %6628
    %6630 = vrot.lane.b32.xlu0 %v6570, 112
    %v6631 = vpop.permute.xlu0 %6630
    %6632 = vrot.lane.b32.xlu0 %v6571, 112
    %v6633 = vpop.permute.xlu0 %6632
    %6634 = vrot.lane.b32.xlu0 %v6572, 112
    %v6635 = vpop.permute.xlu0 %6634
    %6636 = vrot.lane.b32.xlu0 %v6573, 112
    %v6637 = vpop.permute.xlu0 %6636
    %v6654 = vmul.f32 %v6574, %v6607
    %v6655 = vmul.f32 %v6575, %v6609
    %v6656 = vmul.f32 %v6576, %v6611
    %v6657 = vmul.f32 %v6577, %v6613
    %v6658 = vmul.f32 %v6578, %v6615
    %v6659 = vmul.f32 %v6579, %v6617
    %v6660 = vmul.f32 %v6580, %v6619
    %v6661 = vmul.f32 %v6581, %v6621
    %v6662 = vmul.f32 %v6582, %v6623
    %v6663 = vmul.f32 %v6583, %v6625
    %v6664 = vmul.f32 %v6584, %v6627
    %v6665 = vmul.f32 %v6585, %v6629
    %v6666 = vmul.f32 %v6586, %v6631
    %v6667 = vmul.f32 %v6587, %v6633
    %v6668 = vmul.f32 %v6588, %v6635
    %v6669 = vmul.f32 %v6589, %v6637
    %v6670 = vrot.slane %v6031, 2
    %v6671 = vrot.slane %v6031, 3
    %v6672 = vrot.slane %v6031, 4
    %v6673 = vrot.slane %v6031, 5
    %v6674 = vrot.slane %v6031, 6
    %v6675 = vrot.slane %v6031, 7
    %v6676 = vrot.slane %v6031, 1
    %v6677 = vrot.slane %v6032, 2
    %v6678 = vrot.slane %v6032, 3
    %v6679 = vrot.slane %v6032, 4
    %v6680 = vrot.slane %v6032, 5
    %v6681 = vrot.slane %v6032, 6
    %v6682 = vrot.slane %v6032, 7
    %v6683 = vrot.slane %v6032, 1
    %6684 = vrot.lane.b32.xlu0 %v6670, 16
    %v6685 = vpop.permute.xlu0 %6684
    %6686 = vrot.lane.b32.xlu0 %v6671, 16
    %v6687 = vpop.permute.xlu0 %6686
    %6688 = vrot.lane.b32.xlu0 %v6672, 16
    %v6689 = vpop.permute.xlu0 %6688
    %6690 = vrot.lane.b32.xlu0 %v6673, 16
    %v6691 = vpop.permute.xlu0 %6690
    %6692 = vrot.lane.b32.xlu0 %v6674, 16
    %v6693 = vpop.permute.xlu0 %6692
    %6694 = vrot.lane.b32.xlu0 %v6675, 16
    %v6695 = vpop.permute.xlu0 %6694
    %6696 = vrot.lane.b32.xlu0 %v6031, 16
    %v6697 = vpop.permute.xlu0 %6696
    %6698 = vrot.lane.b32.xlu0 %v6676, 16
    %v6699 = vpop.permute.xlu0 %6698
    %6700 = vrot.lane.b32.xlu0 %v6677, 16
    %v6701 = vpop.permute.xlu0 %6700
    %6702 = vrot.lane.b32.xlu0 %v6678, 16
    %v6703 = vpop.permute.xlu0 %6702
    %6704 = vrot.lane.b32.xlu0 %v6679, 16
    %v6705 = vpop.permute.xlu0 %6704
    %6706 = vrot.lane.b32.xlu0 %v6680, 16
    %v6707 = vpop.permute.xlu0 %6706
    %6708 = vrot.lane.b32.xlu0 %v6681, 16
    %v6709 = vpop.permute.xlu0 %6708
    %6710 = vrot.lane.b32.xlu0 %v6682, 16
    %v6711 = vpop.permute.xlu0 %6710
    %6712 = vrot.lane.b32.xlu0 %v6032, 16
    %v6713 = vpop.permute.xlu0 %6712
    %6714 = vrot.lane.b32.xlu0 %v6683, 16
    %v6715 = vpop.permute.xlu0 %6714
    %v6732 = vmul.f32 %v6188, %v6685
    %v6733 = vmul.f32 %v6203, %v6687
    %v6734 = vmul.f32 %v6218, %v6689
    %v6735 = vmul.f32 %v6233, %v6691
    %v6736 = vmul.f32 %v6248, %v6693
    %v6737 = vmul.f32 %v6263, %v6695
    %v6738 = vmul.f32 %v6278, %v6697
    %v6739 = vmul.f32 %v6293, %v6699
    %v6740 = vmul.f32 %v6308, %v6701
    %v6741 = vmul.f32 %v6323, %v6703
    %v6742 = vmul.f32 %v6338, %v6705
    %v6743 = vmul.f32 %v6353, %v6707
    %v6744 = vmul.f32 %v6368, %v6709
    %v6745 = vmul.f32 %v6383, %v6711
    %v6746 = vmul.f32 %v6398, %v6713
    %v6747 = vmul.f32 %v6413, %v6715
    %v6748 = vadd.f32 %v6654, %v6732
    %v6749 = vadd.f32 %v6655, %v6733
    %v6750 = vadd.f32 %v6656, %v6734
    %v6751 = vadd.f32 %v6657, %v6735
    %v6752 = vadd.f32 %v6658, %v6736
    %v6753 = vadd.f32 %v6659, %v6737
    %v6754 = vadd.f32 %v6660, %v6738
    %v6755 = vadd.f32 %v6661, %v6739
    %v6756 = vadd.f32 %v6662, %v6740
    %v6757 = vadd.f32 %v6663, %v6741
    %v6758 = vadd.f32 %v6664, %v6742
    %v6759 = vadd.f32 %v6665, %v6743
    %v6760 = vadd.f32 %v6666, %v6744
    %v6761 = vadd.f32 %v6667, %v6745
    %v6762 = vadd.f32 %v6668, %v6746
    %v6763 = vadd.f32 %v6669, %v6747
    %vm6764 = vcmp.gt.s32.totalorder %v197, 6
    %vm6765 = vcmp.gt.s32.totalorder %v198, 6
    %v6766 = vsel %vm6764, 1, 0
    %v6767 = vsel %vm6765, 1, 0
    %6768 = vset.pattern.permute.xlu0 0
    %6769 = vperm.xlu0 %6768, %v6766
    %v6770 = vpop.permute.xlu0 %6769
    %6771 = vset.pattern.permute.xlu0 0
    %6772 = vperm.xlu0 %6771, %v6767
    %v6773 = vpop.permute.xlu0 %6772
    %vm6774 = vcmp.eq.s32.totalorder %v6770, 1
    %vm6775 = vcmp.eq.s32.totalorder %v6773, 1
    %v6792 = vrot.slane %v6748, 6
    %v6793 = vrot.slane %v6749, 5
    %v6794 = vsel %vm437, %v6793, %v6792
    %v6795 = vrot.slane %v6750, 4
    %v6796 = vsel %vm439, %v6795, %v6794
    %v6797 = vrot.slane %v6751, 3
    %v6798 = vsel %vm441, %v6797, %v6796
    %v6799 = vrot.slane %v6752, 2
    %v6800 = vsel %vm443, %v6799, %v6798
    %v6801 = vrot.slane %v6753, 1
    %v6802 = vsel %vm445, %v6801, %v6800
    %v6803 = vsel %vm447, %v6754, %v6802
    %v6804 = vrot.slane %v6755, 7
    %v6805 = vsel %vm449, %v6804, %v6803
    %v6806 = vrot.slane %v6756, 6
    %v6807 = vrot.slane %v6757, 5
    %v6808 = vsel %vm437, %v6807, %v6806
    %v6809 = vrot.slane %v6758, 4
    %v6810 = vsel %vm439, %v6809, %v6808
    %v6811 = vrot.slane %v6759, 3
    %v6812 = vsel %vm441, %v6811, %v6810
    %v6813 = vrot.slane %v6760, 2
    %v6814 = vsel %vm443, %v6813, %v6812
    %v6815 = vrot.slane %v6761, 1
    %v6816 = vsel %vm445, %v6815, %v6814
    %v6817 = vsel %vm447, %v6762, %v6816
    %v6818 = vrot.slane %v6763, 7
    %v6819 = vsel %vm449, %v6818, %v6817
    %6820 = vrot.lane.b32.xlu0 %v6805, 112
    %v6821 = vpop.permute.xlu0 %6820
    %6822 = vrot.lane.b32.xlu0 %v6819, 112
    %v6823 = vpop.permute.xlu0 %6822
    %v6826 = vsel %vm6774, %v6821, %v6031
    %v6827 = vsel %vm6775, %v6823, %v6032
    %v6829 = vsel %vm1327, %v6826, 0
    %v6832 = vsel %vm1327, %v6827, 0
    %6834 = vmatpush.msra.mxu0 0.0
    %6835 = vmatpush.msra.mxu0 0.0
    %6836 = vmatpush.msra.mxu0 0.0
    %6837 = vmatpush.msra.mxu0 0.0
    %6838 = vmatpush.msra.mxu0 0.0
    %6839 = vmatpush.msra.mxu0 0.0
    %6840 = vmatpush.msra.mxu0 0.0
    %6841 = vmatpush.msra.mxu0 0.0
    %6842 = vmatpush.msra.mxu0 0.0
    %6843 = vmatpush.msra.mxu0 0.0
    %6844 = vmatpush.msra.mxu0 0.0
    %6845 = vmatpush.msra.mxu0 0.0
    %6846 = vmatpush.msra.mxu0 0.0
    %6847 = vmatpush.msra.mxu0 0.0
    %6848 = vmatpush.msra.mxu0 %v1325
    %6849 = vmatpush.msra.mxu0 %v1324
    %6850 = vmatmul.f32.gmra.mxu0 %v6829
    %v6851 = vpop.f32.mrf.mxu0
    %v6852 = vadd.f32 %v1326, %v6851
    %6853 = vmatmul.f32.gmra.mxu0 %v6832
    %v6854 = vpop.f32.mrf.mxu0
    %v6855 = vadd.f32 %v1326, %v6854
    %6856 = vdwg.mxu0
    %v6859 = vrot.slane %v6852, 1
    %v6860 = vrot.slane %v6852, 2
    %v6861 = vrot.slane %v6852, 3
    %v6862 = vrot.slane %v6852, 4
    %v6863 = vrot.slane %v6852, 5
    %v6864 = vrot.slane %v6852, 6
    %v6865 = vrot.slane %v6852, 7
    %v6866 = vrot.slane %v6855, 1
    %v6867 = vrot.slane %v6855, 2
    %v6868 = vrot.slane %v6855, 3
    %v6869 = vrot.slane %v6855, 4
    %v6870 = vrot.slane %v6855, 5
    %v6871 = vrot.slane %v6855, 6
    %v6872 = vrot.slane %v6855, 7
    %v6889 = vadd.f32 %v1277, %v6859
    %v6890 = vadd.f32 %v1280, %v6860
    %v6891 = vadd.f32 %v1283, %v6861
    %v6892 = vadd.f32 %v1286, %v6862
    %v6893 = vadd.f32 %v1289, %v6863
    %v6894 = vadd.f32 %v1292, %v6864
    %v6895 = vadd.f32 %v1295, %v6865
    %v6896 = vadd.f32 %v1298, %v6852
    %v6897 = vadd.f32 %v1301, %v6866
    %v6898 = vadd.f32 %v1304, %v6867
    %v6899 = vadd.f32 %v1307, %v6868
    %v6900 = vadd.f32 %v1310, %v6869
    %v6901 = vadd.f32 %v1313, %v6870
    %v6902 = vadd.f32 %v1316, %v6871
    %v6903 = vadd.f32 %v1319, %v6872
    %v6904 = vadd.f32 %v1322, %v6855
    %v6905 = vxor.u32 %v6889, 2147483648
    %v6906 = vxor.u32 %v6890, 2147483648
    %v6907 = vxor.u32 %v6891, 2147483648
    %v6908 = vxor.u32 %v6892, 2147483648
    %v6909 = vxor.u32 %v6893, 2147483648
    %v6910 = vxor.u32 %v6894, 2147483648
    %v6911 = vxor.u32 %v6895, 2147483648
    %v6912 = vxor.u32 %v6896, 2147483648
    %v6913 = vxor.u32 %v6897, 2147483648
    %v6914 = vxor.u32 %v6898, 2147483648
    %v6915 = vxor.u32 %v6899, 2147483648
    %v6916 = vxor.u32 %v6900, 2147483648
    %v6917 = vxor.u32 %v6901, 2147483648
    %v6918 = vxor.u32 %v6902, 2147483648
    %v6919 = vxor.u32 %v6903, 2147483648
    %v6920 = vxor.u32 %v6904, 2147483648
    %v6921 = vmul.f32 %v6905, 1.442695
    %v6922 = vpow.pop %v6921
    %v6923 = vmul.f32 %v6906, 1.442695
    %v6924 = vpow.pop %v6923
    %v6925 = vmul.f32 %v6907, 1.442695
    %v6926 = vpow.pop %v6925
    %v6927 = vmul.f32 %v6908, 1.442695
    %v6928 = vpow.pop %v6927
    %v6929 = vmul.f32 %v6909, 1.442695
    %v6930 = vpow.pop %v6929
    %v6931 = vmul.f32 %v6910, 1.442695
    %v6932 = vpow.pop %v6931
    %v6933 = vmul.f32 %v6911, 1.442695
    %v6934 = vpow.pop %v6933
    %v6935 = vmul.f32 %v6912, 1.442695
    %v6936 = vpow.pop %v6935
    %v6937 = vmul.f32 %v6913, 1.442695
    %v6938 = vpow.pop %v6937
    %v6939 = vmul.f32 %v6914, 1.442695
    %v6940 = vpow.pop %v6939
    %v6941 = vmul.f32 %v6915, 1.442695
    %v6942 = vpow.pop %v6941
    %v6943 = vmul.f32 %v6916, 1.442695
    %v6944 = vpow.pop %v6943
    %v6945 = vmul.f32 %v6917, 1.442695
    %v6946 = vpow.pop %v6945
    %v6947 = vmul.f32 %v6918, 1.442695
    %v6948 = vpow.pop %v6947
    %v6949 = vmul.f32 %v6919, 1.442695
    %v6950 = vpow.pop %v6949
    %v6951 = vmul.f32 %v6920, 1.442695
    %v6952 = vpow.pop %v6951
    %v6953 = vadd.f32 %v6922, 1.0
    %v6954 = vadd.f32 %v6924, 1.0
    %v6955 = vadd.f32 %v6926, 1.0
    %v6956 = vadd.f32 %v6928, 1.0
    %v6957 = vadd.f32 %v6930, 1.0
    %v6958 = vadd.f32 %v6932, 1.0
    %v6959 = vadd.f32 %v6934, 1.0
    %v6960 = vadd.f32 %v6936, 1.0
    %v6961 = vadd.f32 %v6938, 1.0
    %v6962 = vadd.f32 %v6940, 1.0
    %v6963 = vadd.f32 %v6942, 1.0
    %v6964 = vadd.f32 %v6944, 1.0
    %v6965 = vadd.f32 %v6946, 1.0
    %v6966 = vadd.f32 %v6948, 1.0
    %v6967 = vadd.f32 %v6950, 1.0
    %v6968 = vadd.f32 %v6952, 1.0
    %v6969 = vrcp.pop %v6953
    %v6970 = vmul.f32 %v6953, %v6969
    %v6971 = vsub.f32 1.0, %v6970
    %v6972 = vmul.f32 %v6969, %v6971
    %v6973 = vadd.f32 %v6969, %v6972
    %vm6974 = vweird.f32 %v6953
    %vm6975 = vweird.f32 %v6969
    %vm6976 = vmor %vm6974, %vm6975
    %v6977 = vsel %vm6976, %v6969, %v6973
    %v6978 = vand.u32 2147483647, %v6953
    %vm6979 = vcmp.eq.f32.partialorder %v6978, 8.507059e+37
    %v6980 = vand.u32 %v6953, 2147483648
    %v6981 = vor.u32 1.1754944e-38, %v6980
    %v6982 = vsel %vm6979, %v6981, %v6977
    %v6983 = vmul.f32 1.0, %v6982
    %v6984 = vrcp.pop %v6954
    %v6985 = vmul.f32 %v6954, %v6984
    %v6986 = vsub.f32 1.0, %v6985
    %v6987 = vmul.f32 %v6984, %v6986
    %v6988 = vadd.f32 %v6984, %v6987
    %vm6989 = vweird.f32 %v6954
    %vm6990 = vweird.f32 %v6984
    %vm6991 = vmor %vm6989, %vm6990
    %v6992 = vsel %vm6991, %v6984, %v6988
    %v6993 = vand.u32 2147483647, %v6954
    %vm6994 = vcmp.eq.f32.partialorder %v6993, 8.507059e+37
    %v6995 = vand.u32 %v6954, 2147483648
    %v6996 = vor.u32 1.1754944e-38, %v6995
    %v6997 = vsel %vm6994, %v6996, %v6992
    %v6998 = vmul.f32 1.0, %v6997
    %v6999 = vrcp.pop %v6955
    %v7000 = vmul.f32 %v6955, %v6999
    %v7001 = vsub.f32 1.0, %v7000
    %v7002 = vmul.f32 %v6999, %v7001
    %v7003 = vadd.f32 %v6999, %v7002
    %vm7004 = vweird.f32 %v6955
    %vm7005 = vweird.f32 %v6999
    %vm7006 = vmor %vm7004, %vm7005
    %v7007 = vsel %vm7006, %v6999, %v7003
    %v7008 = vand.u32 2147483647, %v6955
    %vm7009 = vcmp.eq.f32.partialorder %v7008, 8.507059e+37
    %v7010 = vand.u32 %v6955, 2147483648
    %v7011 = vor.u32 1.1754944e-38, %v7010
    %v7012 = vsel %vm7009, %v7011, %v7007
    %v7013 = vmul.f32 1.0, %v7012
    %v7014 = vrcp.pop %v6956
    %v7015 = vmul.f32 %v6956, %v7014
    %v7016 = vsub.f32 1.0, %v7015
    %v7017 = vmul.f32 %v7014, %v7016
    %v7018 = vadd.f32 %v7014, %v7017
    %vm7019 = vweird.f32 %v6956
    %vm7020 = vweird.f32 %v7014
    %vm7021 = vmor %vm7019, %vm7020
    %v7022 = vsel %vm7021, %v7014, %v7018
    %v7023 = vand.u32 2147483647, %v6956
    %vm7024 = vcmp.eq.f32.partialorder %v7023, 8.507059e+37
    %v7025 = vand.u32 %v6956, 2147483648
    %v7026 = vor.u32 1.1754944e-38, %v7025
    %v7027 = vsel %vm7024, %v7026, %v7022
    %v7028 = vmul.f32 1.0, %v7027
    %v7029 = vrcp.pop %v6957
    %v7030 = vmul.f32 %v6957, %v7029
    %v7031 = vsub.f32 1.0, %v7030
    %v7032 = vmul.f32 %v7029, %v7031
    %v7033 = vadd.f32 %v7029, %v7032
    %vm7034 = vweird.f32 %v6957
    %vm7035 = vweird.f32 %v7029
    %vm7036 = vmor %vm7034, %vm7035
    %v7037 = vsel %vm7036, %v7029, %v7033
    %v7038 = vand.u32 2147483647, %v6957
    %vm7039 = vcmp.eq.f32.partialorder %v7038, 8.507059e+37
    %v7040 = vand.u32 %v6957, 2147483648
    %v7041 = vor.u32 1.1754944e-38, %v7040
    %v7042 = vsel %vm7039, %v7041, %v7037
    %v7043 = vmul.f32 1.0, %v7042
    %v7044 = vrcp.pop %v6958
    %v7045 = vmul.f32 %v6958, %v7044
    %v7046 = vsub.f32 1.0, %v7045
    %v7047 = vmul.f32 %v7044, %v7046
    %v7048 = vadd.f32 %v7044, %v7047
    %vm7049 = vweird.f32 %v6958
    %vm7050 = vweird.f32 %v7044
    %vm7051 = vmor %vm7049, %vm7050
    %v7052 = vsel %vm7051, %v7044, %v7048
    %v7053 = vand.u32 2147483647, %v6958
    %vm7054 = vcmp.eq.f32.partialorder %v7053, 8.507059e+37
    %v7055 = vand.u32 %v6958, 2147483648
    %v7056 = vor.u32 1.1754944e-38, %v7055
    %v7057 = vsel %vm7054, %v7056, %v7052
    %v7058 = vmul.f32 1.0, %v7057
    %v7059 = vrcp.pop %v6959
    %v7060 = vmul.f32 %v6959, %v7059
    %v7061 = vsub.f32 1.0, %v7060
    %v7062 = vmul.f32 %v7059, %v7061
    %v7063 = vadd.f32 %v7059, %v7062
    %vm7064 = vweird.f32 %v6959
    %vm7065 = vweird.f32 %v7059
    %vm7066 = vmor %vm7064, %vm7065
    %v7067 = vsel %vm7066, %v7059, %v7063
    %v7068 = vand.u32 2147483647, %v6959
    %vm7069 = vcmp.eq.f32.partialorder %v7068, 8.507059e+37
    %v7070 = vand.u32 %v6959, 2147483648
    %v7071 = vor.u32 1.1754944e-38, %v7070
    %v7072 = vsel %vm7069, %v7071, %v7067
    %v7073 = vmul.f32 1.0, %v7072
    %v7074 = vrcp.pop %v6960
    %v7075 = vmul.f32 %v6960, %v7074
    %v7076 = vsub.f32 1.0, %v7075
    %v7077 = vmul.f32 %v7074, %v7076
    %v7078 = vadd.f32 %v7074, %v7077
    %vm7079 = vweird.f32 %v6960
    %vm7080 = vweird.f32 %v7074
    %vm7081 = vmor %vm7079, %vm7080
    %v7082 = vsel %vm7081, %v7074, %v7078
    %v7083 = vand.u32 2147483647, %v6960
    %vm7084 = vcmp.eq.f32.partialorder %v7083, 8.507059e+37
    %v7085 = vand.u32 %v6960, 2147483648
    %v7086 = vor.u32 1.1754944e-38, %v7085
    %v7087 = vsel %vm7084, %v7086, %v7082
    %v7088 = vmul.f32 1.0, %v7087
    %v7089 = vrcp.pop %v6961
    %v7090 = vmul.f32 %v6961, %v7089
    %v7091 = vsub.f32 1.0, %v7090
    %v7092 = vmul.f32 %v7089, %v7091
    %v7093 = vadd.f32 %v7089, %v7092
    %vm7094 = vweird.f32 %v6961
    %vm7095 = vweird.f32 %v7089
    %vm7096 = vmor %vm7094, %vm7095
    %v7097 = vsel %vm7096, %v7089, %v7093
    %v7098 = vand.u32 2147483647, %v6961
    %vm7099 = vcmp.eq.f32.partialorder %v7098, 8.507059e+37
    %v7100 = vand.u32 %v6961, 2147483648
    %v7101 = vor.u32 1.1754944e-38, %v7100
    %v7102 = vsel %vm7099, %v7101, %v7097
    %v7103 = vmul.f32 1.0, %v7102
    %v7104 = vrcp.pop %v6962
    %v7105 = vmul.f32 %v6962, %v7104
    %v7106 = vsub.f32 1.0, %v7105
    %v7107 = vmul.f32 %v7104, %v7106
    %v7108 = vadd.f32 %v7104, %v7107
    %vm7109 = vweird.f32 %v6962
    %vm7110 = vweird.f32 %v7104
    %vm7111 = vmor %vm7109, %vm7110
    %v7112 = vsel %vm7111, %v7104, %v7108
    %v7113 = vand.u32 2147483647, %v6962
    %vm7114 = vcmp.eq.f32.partialorder %v7113, 8.507059e+37
    %v7115 = vand.u32 %v6962, 2147483648
    %v7116 = vor.u32 1.1754944e-38, %v7115
    %v7117 = vsel %vm7114, %v7116, %v7112
    %v7118 = vmul.f32 1.0, %v7117
    %v7119 = vrcp.pop %v6963
    %v7120 = vmul.f32 %v6963, %v7119
    %v7121 = vsub.f32 1.0, %v7120
    %v7122 = vmul.f32 %v7119, %v7121
    %v7123 = vadd.f32 %v7119, %v7122
    %vm7124 = vweird.f32 %v6963
    %vm7125 = vweird.f32 %v7119
    %vm7126 = vmor %vm7124, %vm7125
    %v7127 = vsel %vm7126, %v7119, %v7123
    %v7128 = vand.u32 2147483647, %v6963
    %vm7129 = vcmp.eq.f32.partialorder %v7128, 8.507059e+37
    %v7130 = vand.u32 %v6963, 2147483648
    %v7131 = vor.u32 1.1754944e-38, %v7130
    %v7132 = vsel %vm7129, %v7131, %v7127
    %v7133 = vmul.f32 1.0, %v7132
    %v7134 = vrcp.pop %v6964
    %v7135 = vmul.f32 %v6964, %v7134
    %v7136 = vsub.f32 1.0, %v7135
    %v7137 = vmul.f32 %v7134, %v7136
    %v7138 = vadd.f32 %v7134, %v7137
    %vm7139 = vweird.f32 %v6964
    %vm7140 = vweird.f32 %v7134
    %vm7141 = vmor %vm7139, %vm7140
    %v7142 = vsel %vm7141, %v7134, %v7138
    %v7143 = vand.u32 2147483647, %v6964
    %vm7144 = vcmp.eq.f32.partialorder %v7143, 8.507059e+37
    %v7145 = vand.u32 %v6964, 2147483648
    %v7146 = vor.u32 1.1754944e-38, %v7145
    %v7147 = vsel %vm7144, %v7146, %v7142
    %v7148 = vmul.f32 1.0, %v7147
    %v7149 = vrcp.pop %v6965
    %v7150 = vmul.f32 %v6965, %v7149
    %v7151 = vsub.f32 1.0, %v7150
    %v7152 = vmul.f32 %v7149, %v7151
    %v7153 = vadd.f32 %v7149, %v7152
    %vm7154 = vweird.f32 %v6965
    %vm7155 = vweird.f32 %v7149
    %vm7156 = vmor %vm7154, %vm7155
    %v7157 = vsel %vm7156, %v7149, %v7153
    %v7158 = vand.u32 2147483647, %v6965
    %vm7159 = vcmp.eq.f32.partialorder %v7158, 8.507059e+37
    %v7160 = vand.u32 %v6965, 2147483648
    %v7161 = vor.u32 1.1754944e-38, %v7160
    %v7162 = vsel %vm7159, %v7161, %v7157
    %v7163 = vmul.f32 1.0, %v7162
    %v7164 = vrcp.pop %v6966
    %v7165 = vmul.f32 %v6966, %v7164
    %v7166 = vsub.f32 1.0, %v7165
    %v7167 = vmul.f32 %v7164, %v7166
    %v7168 = vadd.f32 %v7164, %v7167
    %vm7169 = vweird.f32 %v6966
    %vm7170 = vweird.f32 %v7164
    %vm7171 = vmor %vm7169, %vm7170
    %v7172 = vsel %vm7171, %v7164, %v7168
    %v7173 = vand.u32 2147483647, %v6966
    %vm7174 = vcmp.eq.f32.partialorder %v7173, 8.507059e+37
    %v7175 = vand.u32 %v6966, 2147483648
    %v7176 = vor.u32 1.1754944e-38, %v7175
    %v7177 = vsel %vm7174, %v7176, %v7172
    %v7178 = vmul.f32 1.0, %v7177
    %v7179 = vrcp.pop %v6967
    %v7180 = vmul.f32 %v6967, %v7179
    %v7181 = vsub.f32 1.0, %v7180
    %v7182 = vmul.f32 %v7179, %v7181
    %v7183 = vadd.f32 %v7179, %v7182
    %vm7184 = vweird.f32 %v6967
    %vm7185 = vweird.f32 %v7179
    %vm7186 = vmor %vm7184, %vm7185
    %v7187 = vsel %vm7186, %v7179, %v7183
    %v7188 = vand.u32 2147483647, %v6967
    %vm7189 = vcmp.eq.f32.partialorder %v7188, 8.507059e+37
    %v7190 = vand.u32 %v6967, 2147483648
    %v7191 = vor.u32 1.1754944e-38, %v7190
    %v7192 = vsel %vm7189, %v7191, %v7187
    %v7193 = vmul.f32 1.0, %v7192
    %v7194 = vrcp.pop %v6968
    %v7195 = vmul.f32 %v6968, %v7194
    %v7196 = vsub.f32 1.0, %v7195
    %v7197 = vmul.f32 %v7194, %v7196
    %v7198 = vadd.f32 %v7194, %v7197
    %vm7199 = vweird.f32 %v6968
    %vm7200 = vweird.f32 %v7194
    %vm7201 = vmor %vm7199, %vm7200
    %v7202 = vsel %vm7201, %v7194, %v7198
    %v7203 = vand.u32 2147483647, %v6968
    %vm7204 = vcmp.eq.f32.partialorder %v7203, 8.507059e+37
    %v7205 = vand.u32 %v6968, 2147483648
    %v7206 = vor.u32 1.1754944e-38, %v7205
    %v7207 = vsel %vm7204, %v7206, %v7202
    %v7208 = vmul.f32 1.0, %v7207
    %7209 = vrot.lane.b32.xlu0 %v6859, 96
    %v7210 = vpop.permute.xlu0 %7209
    %7211 = vrot.lane.b32.xlu0 %v6860, 96
    %v7212 = vpop.permute.xlu0 %7211
    %7213 = vrot.lane.b32.xlu0 %v6861, 96
    %v7214 = vpop.permute.xlu0 %7213
    %7215 = vrot.lane.b32.xlu0 %v6862, 96
    %v7216 = vpop.permute.xlu0 %7215
    %7217 = vrot.lane.b32.xlu0 %v6863, 96
    %v7218 = vpop.permute.xlu0 %7217
    %7219 = vrot.lane.b32.xlu0 %v6864, 96
    %v7220 = vpop.permute.xlu0 %7219
    %7221 = vrot.lane.b32.xlu0 %v6865, 96
    %v7222 = vpop.permute.xlu0 %7221
    %7223 = vrot.lane.b32.xlu0 %v6852, 96
    %v7224 = vpop.permute.xlu0 %7223
    %7225 = vrot.lane.b32.xlu0 %v6866, 96
    %v7226 = vpop.permute.xlu0 %7225
    %7227 = vrot.lane.b32.xlu0 %v6867, 96
    %v7228 = vpop.permute.xlu0 %7227
    %7229 = vrot.lane.b32.xlu0 %v6868, 96
    %v7230 = vpop.permute.xlu0 %7229
    %7231 = vrot.lane.b32.xlu0 %v6869, 96
    %v7232 = vpop.permute.xlu0 %7231
    %7233 = vrot.lane.b32.xlu0 %v6870, 96
    %v7234 = vpop.permute.xlu0 %7233
    %7235 = vrot.lane.b32.xlu0 %v6871, 96
    %v7236 = vpop.permute.xlu0 %7235
    %7237 = vrot.lane.b32.xlu0 %v6872, 96
    %v7238 = vpop.permute.xlu0 %7237
    %7239 = vrot.lane.b32.xlu0 %v6855, 96
    %v7240 = vpop.permute.xlu0 %7239
    %v7257 = vmul.f32 %v6983, %v7210
    %v7258 = vmul.f32 %v6998, %v7212
    %v7259 = vmul.f32 %v7013, %v7214
    %v7260 = vmul.f32 %v7028, %v7216
    %v7261 = vmul.f32 %v7043, %v7218
    %v7262 = vmul.f32 %v7058, %v7220
    %v7263 = vmul.f32 %v7073, %v7222
    %v7264 = vmul.f32 %v7088, %v7224
    %v7265 = vmul.f32 %v7103, %v7226
    %v7266 = vmul.f32 %v7118, %v7228
    %v7267 = vmul.f32 %v7133, %v7230
    %v7268 = vmul.f32 %v7148, %v7232
    %v7269 = vmul.f32 %v7163, %v7234
    %v7270 = vmul.f32 %v7178, %v7236
    %v7271 = vmul.f32 %v7193, %v7238
    %v7272 = vmul.f32 %v7208, %v7240
    %7289 = vrot.lane.b32.xlu0 %v7257, 32
    %v7290 = vpop.permute.xlu0 %7289
    %7291 = vrot.lane.b32.xlu0 %v7258, 32
    %v7292 = vpop.permute.xlu0 %7291
    %7293 = vrot.lane.b32.xlu0 %v7259, 32
    %v7294 = vpop.permute.xlu0 %7293
    %7295 = vrot.lane.b32.xlu0 %v7260, 32
    %v7296 = vpop.permute.xlu0 %7295
    %7297 = vrot.lane.b32.xlu0 %v7261, 32
    %v7298 = vpop.permute.xlu0 %7297
    %7299 = vrot.lane.b32.xlu0 %v7262, 32
    %v7300 = vpop.permute.xlu0 %7299
    %7301 = vrot.lane.b32.xlu0 %v7263, 32
    %v7302 = vpop.permute.xlu0 %7301
    %7303 = vrot.lane.b32.xlu0 %v7264, 32
    %v7304 = vpop.permute.xlu0 %7303
    %7305 = vrot.lane.b32.xlu0 %v7265, 32
    %v7306 = vpop.permute.xlu0 %7305
    %7307 = vrot.lane.b32.xlu0 %v7266, 32
    %v7308 = vpop.permute.xlu0 %7307
    %7309 = vrot.lane.b32.xlu0 %v7267, 32
    %v7310 = vpop.permute.xlu0 %7309
    %7311 = vrot.lane.b32.xlu0 %v7268, 32
    %v7312 = vpop.permute.xlu0 %7311
    %7313 = vrot.lane.b32.xlu0 %v7269, 32
    %v7314 = vpop.permute.xlu0 %7313
    %7315 = vrot.lane.b32.xlu0 %v7270, 32
    %v7316 = vpop.permute.xlu0 %7315
    %7317 = vrot.lane.b32.xlu0 %v7271, 32
    %v7318 = vpop.permute.xlu0 %7317
    %7319 = vrot.lane.b32.xlu0 %v7272, 32
    %v7320 = vpop.permute.xlu0 %7319
    %v7337 = vadd.f32 %v1277, %v7290
    %v7338 = vadd.f32 %v1280, %v7292
    %v7339 = vadd.f32 %v1283, %v7294
    %v7340 = vadd.f32 %v1286, %v7296
    %v7341 = vadd.f32 %v1289, %v7298
    %v7342 = vadd.f32 %v1292, %v7300
    %v7343 = vadd.f32 %v1295, %v7302
    %v7344 = vadd.f32 %v1298, %v7304
    %v7345 = vadd.f32 %v1301, %v7306
    %v7346 = vadd.f32 %v1304, %v7308
    %v7347 = vadd.f32 %v1307, %v7310
    %v7348 = vadd.f32 %v1310, %v7312
    %v7349 = vadd.f32 %v1313, %v7314
    %v7350 = vadd.f32 %v1316, %v7316
    %v7351 = vadd.f32 %v1319, %v7318
    %v7352 = vadd.f32 %v1322, %v7320
    %v7353 = vtanh.pop %v7337
    %v7354 = vtanh.pop %v7338
    %v7355 = vtanh.pop %v7339
    %v7356 = vtanh.pop %v7340
    %v7357 = vtanh.pop %v7341
    %v7358 = vtanh.pop %v7342
    %v7359 = vtanh.pop %v7343
    %v7360 = vtanh.pop %v7344
    %v7361 = vtanh.pop %v7345
    %v7362 = vtanh.pop %v7346
    %v7363 = vtanh.pop %v7347
    %v7364 = vtanh.pop %v7348
    %v7365 = vtanh.pop %v7349
    %v7366 = vtanh.pop %v7350
    %v7367 = vtanh.pop %v7351
    %v7368 = vtanh.pop %v7352
    %v7369 = vsub.f32 1.0, %v6983
    %v7370 = vsub.f32 1.0, %v6998
    %v7371 = vsub.f32 1.0, %v7013
    %v7372 = vsub.f32 1.0, %v7028
    %v7373 = vsub.f32 1.0, %v7043
    %v7374 = vsub.f32 1.0, %v7058
    %v7375 = vsub.f32 1.0, %v7073
    %v7376 = vsub.f32 1.0, %v7088
    %v7377 = vsub.f32 1.0, %v7103
    %v7378 = vsub.f32 1.0, %v7118
    %v7379 = vsub.f32 1.0, %v7133
    %v7380 = vsub.f32 1.0, %v7148
    %v7381 = vsub.f32 1.0, %v7163
    %v7382 = vsub.f32 1.0, %v7178
    %v7383 = vsub.f32 1.0, %v7193
    %v7384 = vsub.f32 1.0, %v7208
    %7401 = vrot.lane.b32.xlu0 %v7353, 112
    %v7402 = vpop.permute.xlu0 %7401
    %7403 = vrot.lane.b32.xlu0 %v7354, 112
    %v7404 = vpop.permute.xlu0 %7403
    %7405 = vrot.lane.b32.xlu0 %v7355, 112
    %v7406 = vpop.permute.xlu0 %7405
    %7407 = vrot.lane.b32.xlu0 %v7356, 112
    %v7408 = vpop.permute.xlu0 %7407
    %7409 = vrot.lane.b32.xlu0 %v7357, 112
    %v7410 = vpop.permute.xlu0 %7409
    %7411 = vrot.lane.b32.xlu0 %v7358, 112
    %v7412 = vpop.permute.xlu0 %7411
    %7413 = vrot.lane.b32.xlu0 %v7359, 112
    %v7414 = vpop.permute.xlu0 %7413
    %7415 = vrot.lane.b32.xlu0 %v7360, 112
    %v7416 = vpop.permute.xlu0 %7415
    %7417 = vrot.lane.b32.xlu0 %v7361, 112
    %v7418 = vpop.permute.xlu0 %7417
    %7419 = vrot.lane.b32.xlu0 %v7362, 112
    %v7420 = vpop.permute.xlu0 %7419
    %7421 = vrot.lane.b32.xlu0 %v7363, 112
    %v7422 = vpop.permute.xlu0 %7421
    %7423 = vrot.lane.b32.xlu0 %v7364, 112
    %v7424 = vpop.permute.xlu0 %7423
    %7425 = vrot.lane.b32.xlu0 %v7365, 112
    %v7426 = vpop.permute.xlu0 %7425
    %7427 = vrot.lane.b32.xlu0 %v7366, 112
    %v7428 = vpop.permute.xlu0 %7427
    %7429 = vrot.lane.b32.xlu0 %v7367, 112
    %v7430 = vpop.permute.xlu0 %7429
    %7431 = vrot.lane.b32.xlu0 %v7368, 112
    %v7432 = vpop.permute.xlu0 %7431
    %v7449 = vmul.f32 %v7369, %v7402
    %v7450 = vmul.f32 %v7370, %v7404
    %v7451 = vmul.f32 %v7371, %v7406
    %v7452 = vmul.f32 %v7372, %v7408
    %v7453 = vmul.f32 %v7373, %v7410
    %v7454 = vmul.f32 %v7374, %v7412
    %v7455 = vmul.f32 %v7375, %v7414
    %v7456 = vmul.f32 %v7376, %v7416
    %v7457 = vmul.f32 %v7377, %v7418
    %v7458 = vmul.f32 %v7378, %v7420
    %v7459 = vmul.f32 %v7379, %v7422
    %v7460 = vmul.f32 %v7380, %v7424
    %v7461 = vmul.f32 %v7381, %v7426
    %v7462 = vmul.f32 %v7382, %v7428
    %v7463 = vmul.f32 %v7383, %v7430
    %v7464 = vmul.f32 %v7384, %v7432
    %v7465 = vrot.slane %v6826, 1
    %v7466 = vrot.slane %v6826, 2
    %v7467 = vrot.slane %v6826, 3
    %v7468 = vrot.slane %v6826, 4
    %v7469 = vrot.slane %v6826, 5
    %v7470 = vrot.slane %v6826, 6
    %v7471 = vrot.slane %v6826, 7
    %v7472 = vrot.slane %v6827, 1
    %v7473 = vrot.slane %v6827, 2
    %v7474 = vrot.slane %v6827, 3
    %v7475 = vrot.slane %v6827, 4
    %v7476 = vrot.slane %v6827, 5
    %v7477 = vrot.slane %v6827, 6
    %v7478 = vrot.slane %v6827, 7
    %7479 = vrot.lane.b32.xlu0 %v7465, 16
    %v7480 = vpop.permute.xlu0 %7479
    %7481 = vrot.lane.b32.xlu0 %v7466, 16
    %v7482 = vpop.permute.xlu0 %7481
    %7483 = vrot.lane.b32.xlu0 %v7467, 16
    %v7484 = vpop.permute.xlu0 %7483
    %7485 = vrot.lane.b32.xlu0 %v7468, 16
    %v7486 = vpop.permute.xlu0 %7485
    %7487 = vrot.lane.b32.xlu0 %v7469, 16
    %v7488 = vpop.permute.xlu0 %7487
    %7489 = vrot.lane.b32.xlu0 %v7470, 16
    %v7490 = vpop.permute.xlu0 %7489
    %7491 = vrot.lane.b32.xlu0 %v7471, 16
    %v7492 = vpop.permute.xlu0 %7491
    %7493 = vrot.lane.b32.xlu0 %v6826, 16
    %v7494 = vpop.permute.xlu0 %7493
    %7495 = vrot.lane.b32.xlu0 %v7472, 16
    %v7496 = vpop.permute.xlu0 %7495
    %7497 = vrot.lane.b32.xlu0 %v7473, 16
    %v7498 = vpop.permute.xlu0 %7497
    %7499 = vrot.lane.b32.xlu0 %v7474, 16
    %v7500 = vpop.permute.xlu0 %7499
    %7501 = vrot.lane.b32.xlu0 %v7475, 16
    %v7502 = vpop.permute.xlu0 %7501
    %7503 = vrot.lane.b32.xlu0 %v7476, 16
    %v7504 = vpop.permute.xlu0 %7503
    %7505 = vrot.lane.b32.xlu0 %v7477, 16
    %v7506 = vpop.permute.xlu0 %7505
    %7507 = vrot.lane.b32.xlu0 %v7478, 16
    %v7508 = vpop.permute.xlu0 %7507
    %7509 = vrot.lane.b32.xlu0 %v6827, 16
    %v7510 = vpop.permute.xlu0 %7509
    %v7527 = vmul.f32 %v6983, %v7480
    %v7528 = vmul.f32 %v6998, %v7482
    %v7529 = vmul.f32 %v7013, %v7484
    %v7530 = vmul.f32 %v7028, %v7486
    %v7531 = vmul.f32 %v7043, %v7488
    %v7532 = vmul.f32 %v7058, %v7490
    %v7533 = vmul.f32 %v7073, %v7492
    %v7534 = vmul.f32 %v7088, %v7494
    %v7535 = vmul.f32 %v7103, %v7496
    %v7536 = vmul.f32 %v7118, %v7498
    %v7537 = vmul.f32 %v7133, %v7500
    %v7538 = vmul.f32 %v7148, %v7502
    %v7539 = vmul.f32 %v7163, %v7504
    %v7540 = vmul.f32 %v7178, %v7506
    %v7541 = vmul.f32 %v7193, %v7508
    %v7542 = vmul.f32 %v7208, %v7510
    %v7543 = vadd.f32 %v7449, %v7527
    %v7544 = vadd.f32 %v7450, %v7528
    %v7545 = vadd.f32 %v7451, %v7529
    %v7546 = vadd.f32 %v7452, %v7530
    %v7547 = vadd.f32 %v7453, %v7531
    %v7548 = vadd.f32 %v7454, %v7532
    %v7549 = vadd.f32 %v7455, %v7533
    %v7550 = vadd.f32 %v7456, %v7534
    %v7551 = vadd.f32 %v7457, %v7535
    %v7552 = vadd.f32 %v7458, %v7536
    %v7553 = vadd.f32 %v7459, %v7537
    %v7554 = vadd.f32 %v7460, %v7538
    %v7555 = vadd.f32 %v7461, %v7539
    %v7556 = vadd.f32 %v7462, %v7540
    %v7557 = vadd.f32 %v7463, %v7541
    %v7558 = vadd.f32 %v7464, %v7542
    %vm7559 = vcmp.gt.s32.totalorder %v197, 7
    %vm7560 = vcmp.gt.s32.totalorder %v198, 7
    %v7561 = vsel %vm7559, 1, 0
    %v7562 = vsel %vm7560, 1, 0
    %7563 = vset.pattern.permute.xlu0 0
    %7564 = vperm.xlu0 %7563, %v7561
    %v7565 = vpop.permute.xlu0 %7564
    %7566 = vset.pattern.permute.xlu0 0
    %7567 = vperm.xlu0 %7566, %v7562
    %v7568 = vpop.permute.xlu0 %7567
    %vm7569 = vcmp.eq.s32.totalorder %v7565, 1
    %vm7570 = vcmp.eq.s32.totalorder %v7568, 1
    %v7587 = vrot.slane %v7543, 7
    %v7588 = vrot.slane %v7544, 6
    %v7589 = vsel %vm437, %v7588, %v7587
    %v7590 = vrot.slane %v7545, 5
    %v7591 = vsel %vm439, %v7590, %v7589
    %v7592 = vrot.slane %v7546, 4
    %v7593 = vsel %vm441, %v7592, %v7591
    %v7594 = vrot.slane %v7547, 3
    %v7595 = vsel %vm443, %v7594, %v7593
    %v7596 = vrot.slane %v7548, 2
    %v7597 = vsel %vm445, %v7596, %v7595
    %v7598 = vrot.slane %v7549, 1
    %v7599 = vsel %vm447, %v7598, %v7597
    %v7600 = vsel %vm449, %v7550, %v7599
    %v7601 = vrot.slane %v7551, 7
    %v7602 = vrot.slane %v7552, 6
    %v7603 = vsel %vm437, %v7602, %v7601
    %v7604 = vrot.slane %v7553, 5
    %v7605 = vsel %vm439, %v7604, %v7603
    %v7606 = vrot.slane %v7554, 4
    %v7607 = vsel %vm441, %v7606, %v7605
    %v7608 = vrot.slane %v7555, 3
    %v7609 = vsel %vm443, %v7608, %v7607
    %v7610 = vrot.slane %v7556, 2
    %v7611 = vsel %vm445, %v7610, %v7609
    %v7612 = vrot.slane %v7557, 1
    %v7613 = vsel %vm447, %v7612, %v7611
    %v7614 = vsel %vm449, %v7558, %v7613
    %7615 = vrot.lane.b32.xlu0 %v7600, 112
    %v7616 = vpop.permute.xlu0 %7615
    %7617 = vrot.lane.b32.xlu0 %v7614, 112
    %v7618 = vpop.permute.xlu0 %7617
    %v7621 = vsel %vm7569, %v7616, %v6826
    %v7622 = vsel %vm7570, %v7618, %v6827
    %v7623 = vsel %vm1327, %v7621, %v1204
    %v7624 = vsel %vm1327, %v7622, %v1205
    %v7625 = vadd.f32 %v813, %v7623
    %v7626 = vadd.f32 %v816, %v7624
    %7627 = vst.msk [vmem:[#allocation16] sm:$0xff] %vm203, %v7625
    %7628 = vst.msk [vmem:[#allocation16 + $0x8] sm:$0xff] %vm203, %v7626
    // Predicated region
    $region82: #{tpu_custom_call.1} parent=1 // pred_check
      _
    $region83: #{tpu_custom_call.1} parent=1 // pred_check_branch
      %7630 = sbr.rel (0) target = $region85
    $region84: #{tpu_custom_call.1} parent=1 // pred_region
      %7632 = vsyncadd [#allocation4], 0
      %s7633 = sshll.u32 [#allocation16], 4
      %s7634 = int_to_ptr.vmem [resolvable:$true] %s7633
      %s7635 = sshll.u32 %s12, 4
      %s7636 = int_to_ptr.hbm [resolvable:$true] %s7635
      %7641 = dma.vmem_to_hbm [thread:$0]  %s7634, 256, %s7636, [#allocation4], 128, 128, 8
    $region85: #{tpu_custom_call.1} parent=1 // pred_fallthru
      _
    // Predicated region
    $region86: #{tpu_custom_call.1} parent=1 // pred_check
      _
    $region87: #{tpu_custom_call.1} parent=1 // pred_check_branch
      %7643 = sbr.rel (0) target = $region89
    $region88: #{tpu_custom_call.1} parent=1 // pred_region
      _
    $region89: #{tpu_custom_call.1} parent=1 // pred_fallthru
      _
    // Predicated region
    $region90: #{tpu_custom_call.1} parent=1 // pred_check
      _
    $region91: #{tpu_custom_call.1} parent=1 // pred_check_branch
      %7645 = sbr.rel (0) target = $region93
    $region92: #{tpu_custom_call.1} parent=1 // pred_region
      %7647 = dma.done [#allocation4], 256
    $region93: #{tpu_custom_call.1} parent=1 // pred_fallthru
      _
    // Predicated region
    $region94: #{tpu_custom_call.1} parent=1 // pred_check
      _
    $region95: #{tpu_custom_call.1} parent=1 // pred_check_branch
      %7649 = sbr.rel (0) target = $region97
    $region96: #{tpu_custom_call.1} parent=1 // pred_region
      _
    $region97: #{tpu_custom_call.1} parent=1 // pred_fallthru
      _
    %7650 = vsyncpa [#allocation3], 1
    %7651 = vsyncpa [#allocation6], 1
    %7652 = vsyncpa [#allocation9], 1
    %7653 = vsyncpa [#allocation12], 1
    %7654 = vsyncpa [#allocation15], 1
    %7655 = vsyncpa [#allocation4], 1

</llo_original>
